<compile_context>
chip_gen: v7x
topology: tpu7x:2x2x1
jax: 0.10.0
libtpu: 0.0.40
codegen_flags: <defaults>
</compile_context>

<pallas_src>
import functools

import numpy as np
import jax
import jax.numpy as jnp
from jax import lax
from jax.experimental import pallas as pl
from jax.experimental.pallas import tpu as pltpu

_K = 7        # Conv1d kernel size
_PAD = 3      # Conv1d padding
_STRIDE = 2   # Conv1d stride


def _rup(x, m):
    return ((x + m - 1) // m) * m


def _conv_len(n):
    return (n + 2 * _PAD - _K) // _STRIDE + 1


def _fc_kblock(c1p):
    # Number of conv3 output rows folded into one FC K tile (tk = c * C1p).
    return max(1, min(16, 4096 // c1p))


def _runs(offsets, fold):
    """Group consecutive taps whose folded row offset `a` is identical.

    offsets[k] (consecutive ints) is the folded flat offset of tap k.  Returns
    tuples (a, t0, k0, m): taps k0..k0+m-1 all read stored row `base + a` and
    lanes [t0*C, (t0+m)*C) -- one contiguous lane slice -> one wide-K matmul.
    """
    runs, k = [], 0
    while k < len(offsets):
        a, t = divmod(offsets[k], fold)
        m = 1
        while k + m < len(offsets) and offsets[k + m] // fold == a:
            m += 1
        runs.append((a, t, k, m))
        k += m
    return tuple(runs)


# ----------------------------------------------------------------------------
# Fused conv1+conv2+conv3 (+ReLU) kernel: one batch block per grid step.
# ----------------------------------------------------------------------------
def _fused_convs_kernel(xf_ref, w1_ref, b1_ref, w2_ref, b2_ref, w3_ref, b3_ref,
                        out_ref, s1_ref, s2_ref, *,
                        Bblk, L3, L3p, C0p, C1p, n1, n2, runs1, runs2, runs3):
    """Folded (space-to-depth) layouts with zero left padding baked in:

      xf_ref : input  folded by 8 -> position p stored at [ p//8 + 1, (p%8)*C0p ]
      s1_ref : conv1  folded by 4 -> position p stored at [ p//4 + 1, (p%4)*C1p ]
      s2_ref : conv2  folded by 2 -> position p stored at [ p//2 + 2, (p%2)*C1p ]
      out    : conv3  natural rows [0, L3); rows [L3, L3p) are FC K-padding.
    """
    f32 = jnp.float32
    R1 = s1_ref.shape[0]
    R2 = s2_ref.shape[0]

    # Zero ONLY the scratch rows/slots that are read as the convolutions' zero
    # padding (leading pad rows + per-slot tails).  Valid rows are fully
    # overwritten below for every batch element -> no full-buffer memset.
    s1_ref[pl.ds(0, 1), :] = jnp.zeros((1, 4 * C1p), s1_ref.dtype)
    for r in range(4):
        lo = 1 + n1[r]
        if lo < R1:
            s1_ref[pl.ds(lo, R1 - lo), pl.ds(r * C1p, C1p)] = jnp.zeros(
                (R1 - lo, C1p), s1_ref.dtype)
    s2_ref[pl.ds(0, 2), :] = jnp.zeros((2, 2 * C1p), s2_ref.dtype)
    for g in range(2):
        lo = 2 + n2[g]
        if lo < R2:
            s2_ref[pl.ds(lo, R2 - lo), pl.ds(g * C1p, C1p)] = jnp.zeros(
                (R2 - lo, C1p), s2_ref.dtype)

    def conv_slot(read, w_ref, b_ref, runs, base, n, cin_p):
        # Taps sharing one row offset are fused into a single wide-K MXU dot.
        acc = None
        for a, t0, k0, m in runs:
            xs = read(base + a, n, t0 * cin_p, m * cin_p)
            ws = w_ref[pl.ds(k0 * cin_p, m * cin_p), :]
            d = jnp.dot(xs, ws, preferred_element_type=f32)
            acc = d if acc is None else acc + d
        return jnp.maximum(acc + b_ref[...], 0.0)

    for bi in range(Bblk):
        # ---- conv1: input (fold 8) -> s1 (fold 4), rows offset by 1 ----
        for r in range(4):
            n = n1[r]
            if n <= 0:
                continue
            y = conv_slot(
                lambda row, nn, lane, w: xf_ref[bi, pl.ds(row, nn), pl.ds(lane, w)],
                w1_ref, b1_ref, runs1[r], 1, n, C0p)
            s1_ref[pl.ds(1, n), pl.ds(r * C1p, C1p)] = y.astype(s1_ref.dtype)

        # ---- conv2: s1 (fold 4) -> s2 (fold 2), rows offset by 2 ----
        for g in range(2):
            n = n2[g]
            if n <= 0:
                continue
            y = conv_slot(
                lambda row, nn, lane, w: s1_ref[pl.ds(row, nn), pl.ds(lane, w)],
                w2_ref, b2_ref, runs2[g], 2, n, C1p)
            s2_ref[pl.ds(2, n), pl.ds(g * C1p, C1p)] = y.astype(s2_ref.dtype)

        # ---- conv3: s2 (fold 2) -> natural (L3, C1p); pad rows are zeros ----
        y = conv_slot(
            lambda row, nn, lane, w: s2_ref[pl.ds(row, nn), pl.ds(lane, w)],
            w3_ref, b3_ref, runs3, 0, L3, C1p)
        out_ref[bi, pl.ds(0, L3), :] = y.astype(out_ref.dtype)
        if L3p > L3:
            out_ref[bi, pl.ds(L3, L3p - L3), :] = jnp.zeros(
                (L3p - L3, C1p), out_ref.dtype)


def _fused_convs(xf, w1, b1, w2, b2, w3, b3, *, Bblk, L3, L3p, C0p, C1p,
                 n1, n2, R1, R2, runs1, runs2, runs3, out_dtype):
    Mp, R0, _ = xf.shape
    kernel = functools.partial(
        _fused_convs_kernel, Bblk=Bblk, L3=L3, L3p=L3p, C0p=C0p, C1p=C1p,
        n1=n1, n2=n2, runs1=runs1, runs2=runs2, runs3=runs3)
    flops = 2 * _K * Mp * (sum(n1) * C0p * C1p + (sum(n2) + L3) * C1p * C1p)
    nbytes = (int(xf.size) * xf.dtype.itemsize
              + sum(int(a.size) * a.dtype.itemsize
                    for a in (w1, b1, w2, b2, w3, b3))
              + Mp * L3p * C1p * int(np.dtype(out_dtype).itemsize))
    return pl.pallas_call(
        kernel,
        out_shape=jax.ShapeDtypeStruct((Mp, L3p, C1p), out_dtype),
        grid=(Mp // Bblk,),
        in_specs=[
            pl.BlockSpec((Bblk, R0, 8 * C0p), lambda b: (b, 0, 0)),
            pl.BlockSpec((_K * C0p, C1p), lambda b: (0, 0)),
            pl.BlockSpec((1, C1p), lambda b: (0, 0)),
            pl.BlockSpec((_K * C1p, C1p), lambda b: (0, 0)),
            pl.BlockSpec((1, C1p), lambda b: (0, 0)),
            pl.BlockSpec((_K * C1p, C1p), lambda b: (0, 0)),
            pl.BlockSpec((1, C1p), lambda b: (0, 0)),
        ],
        out_specs=pl.BlockSpec((Bblk, L3p, C1p), lambda b: (b, 0, 0)),
        scratch_shapes=[
            pltpu.VMEM((R1, 4 * C1p), out_dtype),   # conv1 output (fold 4), bf16
            pltpu.VMEM((R2, 2 * C1p), out_dtype),   # conv2 output (fold 2), bf16
        ],
        compiler_params=pltpu.CompilerParams(dimension_semantics=("parallel",)),
        cost_estimate=pl.CostEstimate(flops=int(flops), transcendentals=0,
                                      bytes_accessed=int(nbytes)),
    )(xf, w1, b1, w2, b2, w3, b3)


# ----------------------------------------------------------------------------
# Tiled matmul + bias (the FC layer): f32 VMEM accumulator over the K grid axis.
# ----------------------------------------------------------------------------
def _matmul_bias_kernel(x_ref, w_ref, b_ref, o_ref, acc_ref):
    @pl.when(pl.program_id(2) == 0)
    def _init():
        acc_ref[...] = jnp.zeros_like(acc_ref)

    acc_ref[...] += jnp.dot(x_ref[...], w_ref[...],
                            preferred_element_type=jnp.float32)

    @pl.when(pl.program_id(2) == pl.num_programs(2) - 1)
    def _finalize():
        o_ref[...] = (acc_ref[...] + b_ref[...]).astype(o_ref.dtype)


def _matmul_bias(x, w, b, *, tm, tn, tk):
    """(M, K) @ (K, N) + bias -> float32, K innermost ("arbitrary") grid axis."""
    M, Kd = x.shape
    _, N = w.shape
    assert M % tm == 0 and N % tn == 0 and Kd % tk == 0
    cost = pl.CostEstimate(
        flops=int(2 * M * N * Kd), transcendentals=0,
        bytes_accessed=int((M * Kd + Kd * N) * x.dtype.itemsize + M * N * 4 + 4 * N))
    return pl.pallas_call(
        _matmul_bias_kernel,
        out_shape=jax.ShapeDtypeStruct((M, N), jnp.float32),
        grid=(M // tm, N // tn, Kd // tk),
        in_specs=[
            pl.BlockSpec((tm, tk), lambda i, j, k: (i, k)),
            pl.BlockSpec((tk, tn), lambda i, j, k: (k, j)),
            pl.BlockSpec((1, tn), lambda i, j, k: (0, j)),
        ],
        out_specs=pl.BlockSpec((tm, tn), lambda i, j, k: (i, j)),
        scratch_shapes=[pltpu.VMEM((tm, tn), jnp.float32)],
        compiler_params=pltpu.CompilerParams(
            dimension_semantics=("parallel", "parallel", "arbitrary")),
        cost_estimate=cost,
    )(x, w, b)


# ----------------------------------------------------------------------------
# One-time weight preprocessing (hoisted out of the per-forward path).
# ----------------------------------------------------------------------------
def prepare_params(params, seq_len, *, compute_dtype=jnp.bfloat16):
    """Conv weights -> (7*Cin_p, Cout_p) bf16 tap-major with zero channel pad;
    FC weight -> channel-major-flatten-permuted, (L3p*C1p, Np) bf16 zero-padded
    so the FC needs no activation transpose and its K axis is tile-aligned."""
    w1, w2, w3 = params["w1"], params["w2"], params["w3"]
    b1, b2, b3 = params["b1"], params["b2"], params["b3"]
    wfc, bfc = params["wfc"], params["bfc"]

    Ch, C0 = w1.shape[0], w1.shape[1]
    latent = wfc.shape[0]
    C0p, C1p, Np = _rup(C0, 128), _rup(Ch, 128), _rup(latent, 128)
    L3 = _conv_len(_conv_len(_conv_len(seq_len)))
    assert wfc.shape[1] == Ch * L3, "wfc does not match seq_len"
    # TODO(synk): on v5e (conv stage MXU-bound) conv1 could split C0=130 into a
    # 128-lane main matmul + tiny correction instead of padding C0 up to 256.
    c = _fc_kblock(C1p)
    L3p = _rup(L3, c)

    def prep_conv_w(w, cin_p, cout_p):
        co, ci, kk = w.shape
        wp = jnp.zeros((kk, cin_p, cout_p), compute_dtype)
        wp = wp.at[:, :ci, :co].set(
            jnp.transpose(w, (2, 1, 0)).astype(compute_dtype))
        return wp.reshape(kk * cin_p, cout_p)

    def prep_bias(b, cp):
        return jnp.zeros((1, cp), jnp.float32).at[:, :b.shape[0]].set(
            b.astype(jnp.float32))

    # Fold PyTorch's channel-major flatten (index = ch*L3 + l) into a permuted,
    # zero-padded FC weight: activation flat index is l*C1p + ch.
    wfc3 = jnp.transpose(wfc.reshape(latent, Ch, L3), (2, 1, 0))     # (L3, Ch, n)
    wperm = jnp.zeros((L3p, C1p, Np), compute_dtype)
    wperm = wperm.at[:L3, :Ch, :latent].set(wfc3.astype(compute_dtype))
    wperm = wperm.reshape(L3p * C1p, Np)

    return {
        "w1": prep_conv_w(w1, C0p, C1p), "b1": prep_bias(b1, C1p),
        "w2": prep_conv_w(w2, C1p, C1p), "b2": prep_bias(b2, C1p),
        "w3": prep_conv_w(w3, C1p, C1p), "b3": prep_bias(b3, C1p),
        "wfc": wperm,
        "bfc": bfc.astype(jnp.float32),   # kept unpadded: shape carries latent
    }


# ----------------------------------------------------------------------------
# Encoder forward
# ----------------------------------------------------------------------------
def encoder_forward(x, prep, *, compute_dtype=jnp.bfloat16):
    """x: (B, L, C_in) -> (B, latent).  Matches PyTorch Encoder.forward.
    `prep` comes from prepare_params (weights are preprocessed once, not per
    forward)."""
    B, L0, C0 = x.shape
    w1, b1 = prep["w1"], prep["b1"]
    w2, b2 = prep["w2"], prep["b2"]
    w3, b3 = prep["w3"], prep["b3"]
    wfc, bfc = prep["wfc"], prep["bfc"]

    C0p = w1.shape[0] // _K
    C1p = w1.shape[1]
    Kpad, Np = wfc.shape
    latent = bfc.shape[0]
    assert C0 <= C0p

    L1 = _conv_len(L0)
    L2 = _conv_len(L1)
    L3 = _conv_len(L2)
    c = _fc_kblock(C1p)
    L3p = Kpad // C1p
    assert L3p == _rup(L3, c), "prep was built for a different sequence length"

    # Valid output-row counts per fold slot (so no garbage is ever written).
    n1 = tuple((L1 + 3 - r) // 4 for r in range(4))
    n2 = tuple((L2 + 3 - g) // 2 - 1 for g in range(2))

    # Static tap -> (row offset, lane slot) runs for the wide-K merged matmuls.
    runs1 = tuple(_runs([2 * r + k - _PAD for k in range(_K)], 8) for r in range(4))
    runs2 = tuple(_runs([2 * g + k - _PAD - 4 for k in range(_K)], 4) for g in range(2))
    runs3 = _runs([k - _PAD + 4 for k in range(_K)], 2)

    # Buffer row counts: hold all valid data AND cover every static tap read.
    R0 = (L0 + 8 + 7) // 8
    for r in range(4):
        for k in range(_K):
            R0 = max(R0, 1 + (2 * r + k - _PAD) // 8 + n1[r])
    R1 = 1 + max(n1)
    for g in range(2):
        for k in range(_K):
            R1 = max(R1, 2 + (2 * g + k - _PAD - 4) // 4 + n2[g])
    R2 = 2 + max(n2)
    for k in range(_K):
        R2 = max(R2, (k - _PAD + 4) // 2 + L3)

    # Batch blocking (amortizes per-grid-step overhead) and batch padding so the
    # FC's M tile divides evenly -- no jnp.pad of the flattened activation.
    Bblk = max(1, min(4, B))
    Mp = _rup(B, Bblk)
    if Mp > 256:
        Mp = _rup(B, 8)          # still a multiple of Bblk (==4 here)
    if Mp <= 256:
        tm = Mp
    else:
        tm = 256
        while Mp % tm:
            tm //= 2

    # ---- input prep: bf16 cast, channel pad, left pad by 8, fold by 8,
    #      batch pad to Mp.  Unwritten rows/slots stay zero = conv padding. ----
    # TODO(synk): this is one extra XLA-side HBM pass over the input; a manual
    # in-kernel DMA/staging fold would remove it (most visible on v5e).
    xbuf = jnp.zeros((Mp, R0 * 8, C0p), compute_dtype)
    xbuf = xbuf.at[:B, 8:8 + L0, :C0].set(x.astype(compute_dtype))
    xf = xbuf.reshape(Mp, R0, 8 * C0p)

    y3 = _fused_convs(
        xf, w1, b1, w2, b2, w3, b3,
        Bblk=Bblk, L3=L3, L3p=L3p, C0p=C0p, C1p=C1p, n1=n1, n2=n2,
        R1=R1, R2=R2, runs1=runs1, runs2=runs2, runs3=runs3,
        out_dtype=compute_dtype)                                # (Mp, L3p, C1p)

    # FC: activation rows are already (l, ch)-ordered and K-padded by the conv
    # kernel; the flatten permutation lives in the pre-built weight.
    flat = y3.reshape(Mp, Kpad)
    bias = jnp.zeros((1, Np), jnp.float32).at[:, :latent].set(bfc)

    tn = 128                 # >=2 output tiles when latent>128 -> both v7x cores
    tk = c * C1p             # large, lane-dense K tiles (<= 4096), few K steps
    out = _matmul_bias(flat, wfc, bias, tm=tm, tn=tn, tk=tk)    # (Mp, Np) f32
    return out[:B, :latent]


# ----------------------------------------------------------------------------
# Pure-JAX reference (same bf16 activation hand-off points as the kernel path).
# ----------------------------------------------------------------------------
def _encoder_reference(x, params):
    h = x
    for i in (1, 2, 3):
        w, b = params[f"w{i}"], params[f"b{i}"]
        h = lax.conv_general_dilated(
            h, jnp.transpose(w, (2, 1, 0)), window_strides=(_STRIDE,),
            padding=[(_PAD, _PAD)], dimension_numbers=("NWC", "WIO", "NWC"))
        h = jax.nn.relu(h + b[None, None, :])
        h = h.astype(jnp.bfloat16).astype(jnp.float32)  # mirror kernel hand-off
    bq, l3q, cq = h.shape
    flat = jnp.transpose(h, (0, 2, 1)).reshape(bq, cq * l3q)  # PyTorch flatten order
    return flat @ params["wfc"].T + params["bfc"][None, :]


def init_params(key, in_channels, hidden_channels, latent_dim, flatten_dim):
    ks = jax.random.split(key, 8)

    def u(k, shape, fan_in):
        bound = 1.0 / jnp.sqrt(fan_in)
        return jax.random.uniform(k, shape, jnp.float32, -bound, bound)

    return {
        "w1": u(ks[0], (hidden_channels, in_channels, _K), in_channels * _K),
        "b1": u(ks[1], (hidden_channels,), in_channels * _K),
        "w2": u(ks[2], (hidden_channels, hidden_channels, _K), hidden_channels * _K),
        "b2": u(ks[3], (hidden_channels,), hidden_channels * _K),
        "w3": u(ks[4], (hidden_channels, hidden_channels, _K), hidden_channels * _K),
        "b3": u(ks[5], (hidden_channels,), hidden_channels * _K),
        "wfc": u(ks[6], (latent_dim, flatten_dim), flatten_dim),
        "bfc": u(ks[7], (latent_dim,), flatten_dim),
    }


if __name__ == "__main__":
    # Small shapes consistent with the module (original: L=1164, C_in=130,
    # hidden=220, latent=200 -- scaled down here).
    B, L, C_in = 2, 32, 4
    hidden, latent = 8, 16

    L3 = _conv_len(_conv_len(_conv_len(L)))
    flatten_dim = hidden * L3

    key = jax.random.PRNGKey(0)
    k_x, k_p = jax.random.split(key)
    x = jax.random.normal(k_x, (B, L, C_in), dtype=jnp.float32)
    params = init_params(k_p, C_in, hidden, latent, flatten_dim)

    # Snap inputs/weights onto the bf16 grid so the bf16-MXU kernel path and the
    # f32 reference agree to ~f32-accumulation noise (keeps the check tight).
    snap = lambda a: a.astype(jnp.bfloat16).astype(jnp.float32)
    x = snap(x)
    params = jax.tree_util.tree_map(snap, params)

    prep = prepare_params(params, L)          # one-time weight prep (hoisted)
    fwd = jax.jit(encoder_forward)
    out = jax.block_until_ready(fwd(x, prep))
    assert out.shape == (B, latent), out.shape
    assert out.dtype == jnp.float32

    ref = _encoder_reference(x, params)
    err = float(jnp.max(jnp.abs(out - ref)))
    assert err < 2e-2, f"max abs error vs reference: {err}"
    print("KERNEL_OK")
</pallas_src>

<mosaic_0001>
module attributes {stable_mosaic.version = 11 : i64} {
  func.func @_fused_convs_kernel(%arg0: i32, %arg1: memref<2x6x1024xbf16, #tpu.memory_space<vmem>>, %arg2: memref<896x128xbf16, #tpu.memory_space<vmem>>, %arg3: memref<1x128xf32, #tpu.memory_space<vmem>>, %arg4: memref<896x128xbf16, #tpu.memory_space<vmem>>, %arg5: memref<1x128xf32, #tpu.memory_space<vmem>>, %arg6: memref<896x128xbf16, #tpu.memory_space<vmem>>, %arg7: memref<1x128xf32, #tpu.memory_space<vmem>>, %arg8: memref<2x16x128xbf16, #tpu.memory_space<vmem>>, %arg9: memref<6x512xbf16, #tpu.memory_space<vmem>>, %arg10: memref<7x256xbf16, #tpu.memory_space<vmem>>) attributes {dimension_semantics = [#tpu.dimension_semantics<parallel>], iteration_bounds = array<i64: 1>, scalar_prefetch = 0 : i64, scratch_operands = 2 : i64, tpu.core_type = #tpu.core_type<tc>, window_params = [{transform_indices = @transform_0, window_bounds = array<i64: 2, 6, 1024>}, {pipeline_mode = #tpu.pipeline_mode<synchronous>, transform_indices = @transform_1, window_bounds = array<i64: 896, 128>}, {pipeline_mode = #tpu.pipeline_mode<synchronous>, transform_indices = @transform_2, window_bounds = array<i64: 1, 128>}, {pipeline_mode = #tpu.pipeline_mode<synchronous>, transform_indices = @transform_3, window_bounds = array<i64: 896, 128>}, {pipeline_mode = #tpu.pipeline_mode<synchronous>, transform_indices = @transform_4, window_bounds = array<i64: 1, 128>}, {pipeline_mode = #tpu.pipeline_mode<synchronous>, transform_indices = @transform_5, window_bounds = array<i64: 896, 128>}, {pipeline_mode = #tpu.pipeline_mode<synchronous>, transform_indices = @transform_6, window_bounds = array<i64: 1, 128>}, {transform_indices = @transform_7, window_bounds = array<i64: 2, 16, 128>}]} {
    %cst = arith.constant 0.000000e+00 : bf16
    %0 = vector.broadcast %cst : bf16 to vector<1x512xbf16>
    %c0 = arith.constant 0 : index
    %c0_0 = arith.constant 0 : index
    %1 = vector.load %arg9[%c0, %c0_0] : memref<6x512xbf16, #tpu.memory_space<vmem>>, vector<1x512xbf16>
    tpu.vector_store %arg9[%c0, %c0_0], %0 {strides = array<i32>} : memref<6x512xbf16, #tpu.memory_space<vmem>>, vector<1x512xbf16>,
    %cst_1 = arith.constant 0.000000e+00 : bf16
    %2 = vector.broadcast %cst_1 : bf16 to vector<1x128xbf16>
    %c5 = arith.constant 5 : index
    %c0_2 = arith.constant 0 : index
    %3 = vector.load %arg9[%c5, %c0_2] : memref<6x512xbf16, #tpu.memory_space<vmem>>, vector<1x128xbf16>
    tpu.vector_store %arg9[%c5, %c0_2], %2 {strides = array<i32>} : memref<6x512xbf16, #tpu.memory_space<vmem>>, vector<1x128xbf16>,
    %cst_3 = arith.constant 0.000000e+00 : bf16
    %4 = vector.broadcast %cst_3 : bf16 to vector<1x128xbf16>
    %c5_4 = arith.constant 5 : index
    %c128 = arith.constant 128 : index
    %5 = vector.load %arg9[%c5_4, %c128] : memref<6x512xbf16, #tpu.memory_space<vmem>>, vector<1x128xbf16>
    tpu.vector_store %arg9[%c5_4, %c128], %4 {strides = array<i32>} : memref<6x512xbf16, #tpu.memory_space<vmem>>, vector<1x128xbf16>,
    %cst_5 = arith.constant 0.000000e+00 : bf16
    %6 = vector.broadcast %cst_5 : bf16 to vector<1x128xbf16>
    %c5_6 = arith.constant 5 : index
    %c256 = arith.constant 256 : index
    %7 = vector.load %arg9[%c5_6, %c256] : memref<6x512xbf16, #tpu.memory_space<vmem>>, vector<1x128xbf16>
    tpu.vector_store %arg9[%c5_6, %c256], %6 {strides = array<i32>} : memref<6x512xbf16, #tpu.memory_space<vmem>>, vector<1x128xbf16>,
    %cst_7 = arith.constant 0.000000e+00 : bf16
    %8 = vector.broadcast %cst_7 : bf16 to vector<1x128xbf16>
    %c5_8 = arith.constant 5 : index
    %c384 = arith.constant 384 : index
    %9 = vector.load %arg9[%c5_8, %c384] : memref<6x512xbf16, #tpu.memory_space<vmem>>, vector<1x128xbf16>
    tpu.vector_store %arg9[%c5_8, %c384], %8 {strides = array<i32>} : memref<6x512xbf16, #tpu.memory_space<vmem>>, vector<1x128xbf16>,
    %cst_9 = arith.constant 0.000000e+00 : bf16
    %10 = vector.broadcast %cst_9 : bf16 to vector<2x256xbf16>
    %c0_10 = arith.constant 0 : index
    %c0_11 = arith.constant 0 : index
    %11 = vector.load %arg10[%c0_10, %c0_11] : memref<7x256xbf16, #tpu.memory_space<vmem>>, vector<2x256xbf16>
    tpu.vector_store %arg10[%c0_10, %c0_11], %10 {strides = array<i32>} : memref<7x256xbf16, #tpu.memory_space<vmem>>, vector<2x256xbf16>,
    %cst_12 = arith.constant 0.000000e+00 : bf16
    %12 = vector.broadcast %cst_12 : bf16 to vector<1x128xbf16>
    %c6 = arith.constant 6 : index
    %c0_13 = arith.constant 0 : index
    %13 = vector.load %arg10[%c6, %c0_13] : memref<7x256xbf16, #tpu.memory_space<vmem>>, vector<1x128xbf16>
    tpu.vector_store %arg10[%c6, %c0_13], %12 {strides = array<i32>} : memref<7x256xbf16, #tpu.memory_space<vmem>>, vector<1x128xbf16>,
    %cst_14 = arith.constant 0.000000e+00 : bf16
    %14 = vector.broadcast %cst_14 : bf16 to vector<1x128xbf16>
    %c6_15 = arith.constant 6 : index
    %c128_16 = arith.constant 128 : index
    %15 = vector.load %arg10[%c6_15, %c128_16] : memref<7x256xbf16, #tpu.memory_space<vmem>>, vector<1x128xbf16>
    tpu.vector_store %arg10[%c6_15, %c128_16], %14 {strides = array<i32>} : memref<7x256xbf16, #tpu.memory_space<vmem>>, vector<1x128xbf16>,
    %c0_17 = arith.constant 0 : index
    %c0_18 = arith.constant 0 : index
    %c640 = arith.constant 640 : index
    %16 = vector.load %arg1[%c0_17, %c0_18, %c640] : memref<2x6x1024xbf16, #tpu.memory_space<vmem>>, vector<1x4x384xbf16>
    %17 = vector.shape_cast %16 : vector<1x4x384xbf16> to vector<4x384xbf16>
    %c0_19 = arith.constant 0 : index
    %c0_20 = arith.constant 0 : index
    %18 = vector.load %arg2[%c0_19, %c0_20] : memref<896x128xbf16, #tpu.memory_space<vmem>>, vector<384x128xbf16>
    %cst_21 = arith.constant dense<0.000000e+00> : vector<4x128xf32>
    %19 = tpu.matmul %17, %18, %cst_21 {dimension_numbers = #tpu.dot_dimension_numbers<[1], [0], [0], [1], [0, 0, 1, 1], [], []>} : vector<4x384xbf16>, vector<384x128xbf16>, vector<4x128xf32> -> vector<4x128xf32>
    %c0_22 = arith.constant 0 : index
    %c1 = arith.constant 1 : index
    %c0_23 = arith.constant 0 : index
    %20 = vector.load %arg1[%c0_22, %c1, %c0_23] : memref<2x6x1024xbf16, #tpu.memory_space<vmem>>, vector<1x4x512xbf16>
    %21 = vector.shape_cast %20 : vector<1x4x512xbf16> to vector<4x512xbf16>
    %c384_24 = arith.constant 384 : index
    %c0_25 = arith.constant 0 : index
    %22 = vector.load %arg2[%c384_24, %c0_25] : memref<896x128xbf16, #tpu.memory_space<vmem>>, vector<512x128xbf16>
    %cst_26 = arith.constant dense<0.000000e+00> : vector<4x128xf32>
    %23 = tpu.matmul %21, %22, %cst_26 {dimension_numbers = #tpu.dot_dimension_numbers<[1], [0], [0], [1], [0, 0, 1, 1], [], []>} : vector<4x512xbf16>, vector<512x128xbf16>, vector<4x128xf32> -> vector<4x128xf32>
    %24 = arith.addf %19, %23 : vector<4x128xf32>
    %c0_27 = arith.constant 0 : index
    %c0_28 = arith.constant 0 : index
    %25 = vector.load %arg3[%c0_27, %c0_28] : memref<1x128xf32, #tpu.memory_space<vmem>>, vector<1x128xf32>
    %26 = vector.broadcast %25 : vector<1x128xf32> to vector<4x128xf32>
    %27 = arith.addf %24, %26 : vector<4x128xf32>
    %cst_29 = arith.constant 0.000000e+00 : f32
    %28 = vector.broadcast %cst_29 : f32 to vector<4x128xf32>
    %29 = arith.maximumf %27, %28 : vector<4x128xf32>
    %30 = arith.truncf %29 : vector<4x128xf32> to vector<4x128xbf16>
    %c1_30 = arith.constant 1 : index
    %c0_31 = arith.constant 0 : index
    %31 = vector.load %arg9[%c1_30, %c0_31] : memref<6x512xbf16, #tpu.memory_space<vmem>>, vector<4x128xbf16>
    tpu.vector_store %arg9[%c1_30, %c0_31], %30 {strides = array<i32>} : memref<6x512xbf16, #tpu.memory_space<vmem>>, vector<4x128xbf16>,
    %c0_32 = arith.constant 0 : index
    %c0_33 = arith.constant 0 : index
    %c896 = arith.constant 896 : index
    %32 = vector.load %arg1[%c0_32, %c0_33, %c896] : memref<2x6x1024xbf16, #tpu.memory_space<vmem>>, vector<1x4x128xbf16>
    %33 = vector.shape_cast %32 : vector<1x4x128xbf16> to vector<4x128xbf16>
    %c0_34 = arith.constant 0 : index
    %c0_35 = arith.constant 0 : index
    %34 = vector.load %arg2[%c0_34, %c0_35] : memref<896x128xbf16, #tpu.memory_space<vmem>>, vector<128x128xbf16>
    %cst_36 = arith.constant dense<0.000000e+00> : vector<4x128xf32>
    %35 = tpu.matmul %33, %34, %cst_36 {dimension_numbers = #tpu.dot_dimension_numbers<[1], [0], [0], [1], [0, 0, 1, 1], [], []>} : vector<4x128xbf16>, vector<128x128xbf16>, vector<4x128xf32> -> vector<4x128xf32>
    %c0_37 = arith.constant 0 : index
    %c1_38 = arith.constant 1 : index
    %c0_39 = arith.constant 0 : index
    %36 = vector.load %arg1[%c0_37, %c1_38, %c0_39] : memref<2x6x1024xbf16, #tpu.memory_space<vmem>>, vector<1x4x768xbf16>
    %37 = vector.shape_cast %36 : vector<1x4x768xbf16> to vector<4x768xbf16>
    %c128_40 = arith.constant 128 : index
    %c0_41 = arith.constant 0 : index
    %38 = vector.load %arg2[%c128_40, %c0_41] : memref<896x128xbf16, #tpu.memory_space<vmem>>, vector<768x128xbf16>
    %cst_42 = arith.constant dense<0.000000e+00> : vector<4x128xf32>
    %39 = tpu.matmul %37, %38, %cst_42 {dimension_numbers = #tpu.dot_dimension_numbers<[1], [0], [0], [1], [0, 0, 1, 1], [], []>} : vector<4x768xbf16>, vector<768x128xbf16>, vector<4x128xf32> -> vector<4x128xf32>
    %40 = arith.addf %35, %39 : vector<4x128xf32>
    %c0_43 = arith.constant 0 : index
    %c0_44 = arith.constant 0 : index
    %41 = vector.load %arg3[%c0_43, %c0_44] : memref<1x128xf32, #tpu.memory_space<vmem>>, vector<1x128xf32>
    %42 = vector.broadcast %41 : vector<1x128xf32> to vector<4x128xf32>
    %43 = arith.addf %40, %42 : vector<4x128xf32>
    %cst_45 = arith.constant 0.000000e+00 : f32
    %44 = vector.broadcast %cst_45 : f32 to vector<4x128xf32>
    %45 = arith.maximumf %43, %44 : vector<4x128xf32>
    %46 = arith.truncf %45 : vector<4x128xf32> to vector<4x128xbf16>
    %c1_46 = arith.constant 1 : index
    %c128_47 = arith.constant 128 : index
    %47 = vector.load %arg9[%c1_46, %c128_47] : memref<6x512xbf16, #tpu.memory_space<vmem>>, vector<4x128xbf16>
    tpu.vector_store %arg9[%c1_46, %c128_47], %46 {strides = array<i32>} : memref<6x512xbf16, #tpu.memory_space<vmem>>, vector<4x128xbf16>,
    %c0_48 = arith.constant 0 : index
    %c1_49 = arith.constant 1 : index
    %c128_50 = arith.constant 128 : index
    %48 = vector.load %arg1[%c0_48, %c1_49, %c128_50] : memref<2x6x1024xbf16, #tpu.memory_space<vmem>>, vector<1x4x896xbf16>
    %49 = vector.shape_cast %48 : vector<1x4x896xbf16> to vector<4x896xbf16>
    %c0_51 = arith.constant 0 : index
    %c0_52 = arith.constant 0 : index
    %50 = vector.load %arg2[%c0_51, %c0_52] : memref<896x128xbf16, #tpu.memory_space<vmem>>, vector<896x128xbf16>
    %cst_53 = arith.constant dense<0.000000e+00> : vector<4x128xf32>
    %51 = tpu.matmul %49, %50, %cst_53 {dimension_numbers = #tpu.dot_dimension_numbers<[1], [0], [0], [1], [0, 0, 1, 1], [], []>} : vector<4x896xbf16>, vector<896x128xbf16>, vector<4x128xf32> -> vector<4x128xf32>
    %c0_54 = arith.constant 0 : index
    %c0_55 = arith.constant 0 : index
    %52 = vector.load %arg3[%c0_54, %c0_55] : memref<1x128xf32, #tpu.memory_space<vmem>>, vector<1x128xf32>
    %53 = vector.broadcast %52 : vector<1x128xf32> to vector<4x128xf32>
    %54 = arith.addf %51, %53 : vector<4x128xf32>
    %cst_56 = arith.constant 0.000000e+00 : f32
    %55 = vector.broadcast %cst_56 : f32 to vector<4x128xf32>
    %56 = arith.maximumf %54, %55 : vector<4x128xf32>
    %57 = arith.truncf %56 : vector<4x128xf32> to vector<4x128xbf16>
    %c1_57 = arith.constant 1 : index
    %c256_58 = arith.constant 256 : index
    %58 = vector.load %arg9[%c1_57, %c256_58] : memref<6x512xbf16, #tpu.memory_space<vmem>>, vector<4x128xbf16>
    tpu.vector_store %arg9[%c1_57, %c256_58], %57 {strides = array<i32>} : memref<6x512xbf16, #tpu.memory_space<vmem>>, vector<4x128xbf16>,
    %c0_59 = arith.constant 0 : index
    %c1_60 = arith.constant 1 : index
    %c384_61 = arith.constant 384 : index
    %59 = vector.load %arg1[%c0_59, %c1_60, %c384_61] : memref<2x6x1024xbf16, #tpu.memory_space<vmem>>, vector<1x4x640xbf16>
    %60 = vector.shape_cast %59 : vector<1x4x640xbf16> to vector<4x640xbf16>
    %c0_62 = arith.constant 0 : index
    %c0_63 = arith.constant 0 : index
    %61 = vector.load %arg2[%c0_62, %c0_63] : memref<896x128xbf16, #tpu.memory_space<vmem>>, vector<640x128xbf16>
    %cst_64 = arith.constant dense<0.000000e+00> : vector<4x128xf32>
    %62 = tpu.matmul %60, %61, %cst_64 {dimension_numbers = #tpu.dot_dimension_numbers<[1], [0], [0], [1], [0, 0, 1, 1], [], []>} : vector<4x640xbf16>, vector<640x128xbf16>, vector<4x128xf32> -> vector<4x128xf32>
    %c0_65 = arith.constant 0 : index
    %c2 = arith.constant 2 : index
    %c0_66 = arith.constant 0 : index
    %63 = vector.load %arg1[%c0_65, %c2, %c0_66] : memref<2x6x1024xbf16, #tpu.memory_space<vmem>>, vector<1x4x256xbf16>
    %64 = vector.shape_cast %63 : vector<1x4x256xbf16> to vector<4x256xbf16>
    %c640_67 = arith.constant 640 : index
    %c0_68 = arith.constant 0 : index
    %65 = vector.load %arg2[%c640_67, %c0_68] : memref<896x128xbf16, #tpu.memory_space<vmem>>, vector<256x128xbf16>
    %cst_69 = arith.constant dense<0.000000e+00> : vector<4x128xf32>
    %66 = tpu.matmul %64, %65, %cst_69 {dimension_numbers = #tpu.dot_dimension_numbers<[1], [0], [0], [1], [0, 0, 1, 1], [], []>} : vector<4x256xbf16>, vector<256x128xbf16>, vector<4x128xf32> -> vector<4x128xf32>
    %67 = arith.addf %62, %66 : vector<4x128xf32>
    %c0_70 = arith.constant 0 : index
    %c0_71 = arith.constant 0 : index
    %68 = vector.load %arg3[%c0_70, %c0_71] : memref<1x128xf32, #tpu.memory_space<vmem>>, vector<1x128xf32>
    %69 = vector.broadcast %68 : vector<1x128xf32> to vector<4x128xf32>
    %70 = arith.addf %67, %69 : vector<4x128xf32>
    %cst_72 = arith.constant 0.000000e+00 : f32
    %71 = vector.broadcast %cst_72 : f32 to vector<4x128xf32>
    %72 = arith.maximumf %70, %71 : vector<4x128xf32>
    %73 = arith.truncf %72 : vector<4x128xf32> to vector<4x128xbf16>
    %c1_73 = arith.constant 1 : index
    %c384_74 = arith.constant 384 : index
    %74 = vector.load %arg9[%c1_73, %c384_74] : memref<6x512xbf16, #tpu.memory_space<vmem>>, vector<4x128xbf16>
    tpu.vector_store %arg9[%c1_73, %c384_74], %73 {strides = array<i32>} : memref<6x512xbf16, #tpu.memory_space<vmem>>, vector<4x128xbf16>,
    %c0_75 = arith.constant 0 : index
    %c128_76 = arith.constant 128 : index
    %75 = vector.load %arg9[%c0_75, %c128_76] : memref<6x512xbf16, #tpu.memory_space<vmem>>, vector<4x384xbf16>
    %c0_77 = arith.constant 0 : index
    %c0_78 = arith.constant 0 : index
    %76 = vector.load %arg4[%c0_77, %c0_78] : memref<896x128xbf16, #tpu.memory_space<vmem>>, vector<384x128xbf16>
    %cst_79 = arith.constant dense<0.000000e+00> : vector<4x128xf32>
    %77 = tpu.matmul %75, %76, %cst_79 {dimension_numbers = #tpu.dot_dimension_numbers<[1], [0], [0], [1], [0, 0, 1, 1], [], []>} : vector<4x384xbf16>, vector<384x128xbf16>, vector<4x128xf32> -> vector<4x128xf32>
    %c1_80 = arith.constant 1 : index
    %c0_81 = arith.constant 0 : index
    %78 = vector.load %arg9[%c1_80, %c0_81] : memref<6x512xbf16, #tpu.memory_space<vmem>>, vector<4x512xbf16>
    %c384_82 = arith.constant 384 : index
    %c0_83 = arith.constant 0 : index
    %79 = vector.load %arg4[%c384_82, %c0_83] : memref<896x128xbf16, #tpu.memory_space<vmem>>, vector<512x128xbf16>
    %cst_84 = arith.constant dense<0.000000e+00> : vector<4x128xf32>
    %80 = tpu.matmul %78, %79, %cst_84 {dimension_numbers = #tpu.dot_dimension_numbers<[1], [0], [0], [1], [0, 0, 1, 1], [], []>} : vector<4x512xbf16>, vector<512x128xbf16>, vector<4x128xf32> -> vector<4x128xf32>
    %81 = arith.addf %77, %80 : vector<4x128xf32>
    %c0_85 = arith.constant 0 : index
    %c0_86 = arith.constant 0 : index
    %82 = vector.load %arg5[%c0_85, %c0_86] : memref<1x128xf32, #tpu.memory_space<vmem>>, vector<1x128xf32>
    %83 = vector.broadcast %82 : vector<1x128xf32> to vector<4x128xf32>
    %84 = arith.addf %81, %83 : vector<4x128xf32>
    %cst_87 = arith.constant 0.000000e+00 : f32
    %85 = vector.broadcast %cst_87 : f32 to vector<4x128xf32>
    %86 = arith.maximumf %84, %85 : vector<4x128xf32>
    %87 = arith.truncf %86 : vector<4x128xf32> to vector<4x128xbf16>
    %c2_88 = arith.constant 2 : index
    %c0_89 = arith.constant 0 : index
    %88 = vector.load %arg10[%c2_88, %c0_89] : memref<7x256xbf16, #tpu.memory_space<vmem>>, vector<4x128xbf16>
    tpu.vector_store %arg10[%c2_88, %c0_89], %87 {strides = array<i32>} : memref<7x256xbf16, #tpu.memory_space<vmem>>, vector<4x128xbf16>,
    %c0_90 = arith.constant 0 : index
    %c384_91 = arith.constant 384 : index
    %89 = vector.load %arg9[%c0_90, %c384_91] : memref<6x512xbf16, #tpu.memory_space<vmem>>, vector<4x128xbf16>
    %c0_92 = arith.constant 0 : index
    %c0_93 = arith.constant 0 : index
    %90 = vector.load %arg4[%c0_92, %c0_93] : memref<896x128xbf16, #tpu.memory_space<vmem>>, vector<128x128xbf16>
    %cst_94 = arith.constant dense<0.000000e+00> : vector<4x128xf32>
    %91 = tpu.matmul %89, %90, %cst_94 {dimension_numbers = #tpu.dot_dimension_numbers<[1], [0], [0], [1], [0, 0, 1, 1], [], []>} : vector<4x128xbf16>, vector<128x128xbf16>, vector<4x128xf32> -> vector<4x128xf32>
    %c1_95 = arith.constant 1 : index
    %c0_96 = arith.constant 0 : index
    %92 = vector.load %arg9[%c1_95, %c0_96] : memref<6x512xbf16, #tpu.memory_space<vmem>>, vector<4x512xbf16>
    %c128_97 = arith.constant 128 : index
    %c0_98 = arith.constant 0 : index
    %93 = vector.load %arg4[%c128_97, %c0_98] : memref<896x128xbf16, #tpu.memory_space<vmem>>, vector<512x128xbf16>
    %cst_99 = arith.constant dense<0.000000e+00> : vector<4x128xf32>
    %94 = tpu.matmul %92, %93, %cst_99 {dimension_numbers = #tpu.dot_dimension_numbers<[1], [0], [0], [1], [0, 0, 1, 1], [], []>} : vector<4x512xbf16>, vector<512x128xbf16>, vector<4x128xf32> -> vector<4x128xf32>
    %95 = arith.addf %91, %94 : vector<4x128xf32>
    %c2_100 = arith.constant 2 : index
    %c0_101 = arith.constant 0 : index
    %96 = vector.load %arg9[%c2_100, %c0_101] : memref<6x512xbf16, #tpu.memory_space<vmem>>, vector<4x256xbf16>
    %c640_102 = arith.constant 640 : index
    %c0_103 = arith.constant 0 : index
    %97 = vector.load %arg4[%c640_102, %c0_103] : memref<896x128xbf16, #tpu.memory_space<vmem>>, vector<256x128xbf16>
    %cst_104 = arith.constant dense<0.000000e+00> : vector<4x128xf32>
    %98 = tpu.matmul %96, %97, %cst_104 {dimension_numbers = #tpu.dot_dimension_numbers<[1], [0], [0], [1], [0, 0, 1, 1], [], []>} : vector<4x256xbf16>, vector<256x128xbf16>, vector<4x128xf32> -> vector<4x128xf32>
    %99 = arith.addf %95, %98 : vector<4x128xf32>
    %c0_105 = arith.constant 0 : index
    %c0_106 = arith.constant 0 : index
    %100 = vector.load %arg5[%c0_105, %c0_106] : memref<1x128xf32, #tpu.memory_space<vmem>>, vector<1x128xf32>
    %101 = vector.broadcast %100 : vector<1x128xf32> to vector<4x128xf32>
    %102 = arith.addf %99, %101 : vector<4x128xf32>
    %cst_107 = arith.constant 0.000000e+00 : f32
    %103 = vector.broadcast %cst_107 : f32 to vector<4x128xf32>
    %104 = arith.maximumf %102, %103 : vector<4x128xf32>
    %105 = arith.truncf %104 : vector<4x128xf32> to vector<4x128xbf16>
    %c2_108 = arith.constant 2 : index
    %c128_109 = arith.constant 128 : index
    %106 = vector.load %arg10[%c2_108, %c128_109] : memref<7x256xbf16, #tpu.memory_space<vmem>>, vector<4x128xbf16>
    tpu.vector_store %arg10[%c2_108, %c128_109], %105 {strides = array<i32>} : memref<7x256xbf16, #tpu.memory_space<vmem>>, vector<4x128xbf16>,
    %c0_110 = arith.constant 0 : index
    %c128_111 = arith.constant 128 : index
    %107 = vector.load %arg10[%c0_110, %c128_111] : memref<7x256xbf16, #tpu.memory_space<vmem>>, vector<4x128xbf16>
    %c0_112 = arith.constant 0 : index
    %c0_113 = arith.constant 0 : index
    %108 = vector.load %arg6[%c0_112, %c0_113] : memref<896x128xbf16, #tpu.memory_space<vmem>>, vector<128x128xbf16>
    %cst_114 = arith.constant dense<0.000000e+00> : vector<4x128xf32>
    %109 = tpu.matmul %107, %108, %cst_114 {dimension_numbers = #tpu.dot_dimension_numbers<[1], [0], [0], [1], [0, 0, 1, 1], [], []>} : vector<4x128xbf16>, vector<128x128xbf16>, vector<4x128xf32> -> vector<4x128xf32>
    %c1_115 = arith.constant 1 : index
    %c0_116 = arith.constant 0 : index
    %110 = vector.load %arg10[%c1_115, %c0_116] : memref<7x256xbf16, #tpu.memory_space<vmem>>, vector<4x256xbf16>
    %c128_117 = arith.constant 128 : index
    %c0_118 = arith.constant 0 : index
    %111 = vector.load %arg6[%c128_117, %c0_118] : memref<896x128xbf16, #tpu.memory_space<vmem>>, vector<256x128xbf16>
    %cst_119 = arith.constant dense<0.000000e+00> : vector<4x128xf32>
    %112 = tpu.matmul %110, %111, %cst_119 {dimension_numbers = #tpu.dot_dimension_numbers<[1], [0], [0], [1], [0, 0, 1, 1], [], []>} : vector<4x256xbf16>, vector<256x128xbf16>, vector<4x128xf32> -> vector<4x128xf32>
    %113 = arith.addf %109, %112 : vector<4x128xf32>
    %c2_120 = arith.constant 2 : index
    %c0_121 = arith.constant 0 : index
    %114 = vector.load %arg10[%c2_120, %c0_121] : memref<7x256xbf16, #tpu.memory_space<vmem>>, vector<4x256xbf16>
    %c384_122 = arith.constant 384 : index
    %c0_123 = arith.constant 0 : index
    %115 = vector.load %arg6[%c384_122, %c0_123] : memref<896x128xbf16, #tpu.memory_space<vmem>>, vector<256x128xbf16>
    %cst_124 = arith.constant dense<0.000000e+00> : vector<4x128xf32>
    %116 = tpu.matmul %114, %115, %cst_124 {dimension_numbers = #tpu.dot_dimension_numbers<[1], [0], [0], [1], [0, 0, 1, 1], [], []>} : vector<4x256xbf16>, vector<256x128xbf16>, vector<4x128xf32> -> vector<4x128xf32>
    %117 = arith.addf %113, %116 : vector<4x128xf32>
    %c3 = arith.constant 3 : index
    %c0_125 = arith.constant 0 : index
    %118 = vector.load %arg10[%c3, %c0_125] : memref<7x256xbf16, #tpu.memory_space<vmem>>, vector<4x256xbf16>
    %c640_126 = arith.constant 640 : index
    %c0_127 = arith.constant 0 : index
    %119 = vector.load %arg6[%c640_126, %c0_127] : memref<896x128xbf16, #tpu.memory_space<vmem>>, vector<256x128xbf16>
    %cst_128 = arith.constant dense<0.000000e+00> : vector<4x128xf32>
    %120 = tpu.matmul %118, %119, %cst_128 {dimension_numbers = #tpu.dot_dimension_numbers<[1], [0], [0], [1], [0, 0, 1, 1], [], []>} : vector<4x256xbf16>, vector<256x128xbf16>, vector<4x128xf32> -> vector<4x128xf32>
    %121 = arith.addf %117, %120 : vector<4x128xf32>
    %c0_129 = arith.constant 0 : index
    %c0_130 = arith.constant 0 : index
    %122 = vector.load %arg7[%c0_129, %c0_130] : memref<1x128xf32, #tpu.memory_space<vmem>>, vector<1x128xf32>
    %123 = vector.broadcast %122 : vector<1x128xf32> to vector<4x128xf32>
    %124 = arith.addf %121, %123 : vector<4x128xf32>
    %cst_131 = arith.constant 0.000000e+00 : f32
    %125 = vector.broadcast %cst_131 : f32 to vector<4x128xf32>
    %126 = arith.maximumf %124, %125 : vector<4x128xf32>
    %127 = arith.truncf %126 : vector<4x128xf32> to vector<4x128xbf16>
    %c0_132 = arith.constant 0 : index
    %c0_133 = arith.constant 0 : index
    %c0_134 = arith.constant 0 : index
    %128 = vector.load %arg8[%c0_132, %c0_133, %c0_134] : memref<2x16x128xbf16, #tpu.memory_space<vmem>>, vector<1x4x128xbf16>
    %129 = vector.shape_cast %128 : vector<1x4x128xbf16> to vector<4x128xbf16>
    %130 = vector.shape_cast %127 : vector<4x128xbf16> to vector<1x4x128xbf16>
    tpu.vector_store %arg8[%c0_132, %c0_133, %c0_134], %130 {strides = array<i32>} : memref<2x16x128xbf16, #tpu.memory_space<vmem>>, vector<1x4x128xbf16>,
    %cst_135 = arith.constant 0.000000e+00 : bf16
    %131 = vector.broadcast %cst_135 : bf16 to vector<12x128xbf16>
    %c0_136 = arith.constant 0 : index
    %c4 = arith.constant 4 : index
    %c0_137 = arith.constant 0 : index
    %132 = vector.load %arg8[%c0_136, %c4, %c0_137] : memref<2x16x128xbf16, #tpu.memory_space<vmem>>, vector<1x12x128xbf16>
    %133 = vector.shape_cast %132 : vector<1x12x128xbf16> to vector<12x128xbf16>
    %134 = vector.shape_cast %131 : vector<12x128xbf16> to vector<1x12x128xbf16>
    tpu.vector_store %arg8[%c0_136, %c4, %c0_137], %134 {strides = array<i32>} : memref<2x16x128xbf16, #tpu.memory_space<vmem>>, vector<1x12x128xbf16>,
    %c1_138 = arith.constant 1 : index
    %c0_139 = arith.constant 0 : index
    %c640_140 = arith.constant 640 : index
    %135 = vector.load %arg1[%c1_138, %c0_139, %c640_140] : memref<2x6x1024xbf16, #tpu.memory_space<vmem>>, vector<1x4x384xbf16>
    %136 = vector.shape_cast %135 : vector<1x4x384xbf16> to vector<4x384xbf16>
    %c0_141 = arith.constant 0 : index
    %c0_142 = arith.constant 0 : index
    %137 = vector.load %arg2[%c0_141, %c0_142] : memref<896x128xbf16, #tpu.memory_space<vmem>>, vector<384x128xbf16>
    %cst_143 = arith.constant dense<0.000000e+00> : vector<4x128xf32>
    %138 = tpu.matmul %136, %137, %cst_143 {dimension_numbers = #tpu.dot_dimension_numbers<[1], [0], [0], [1], [0, 0, 1, 1], [], []>} : vector<4x384xbf16>, vector<384x128xbf16>, vector<4x128xf32> -> vector<4x128xf32>
    %c1_144 = arith.constant 1 : index
    %c1_145 = arith.constant 1 : index
    %c0_146 = arith.constant 0 : index
    %139 = vector.load %arg1[%c1_144, %c1_145, %c0_146] : memref<2x6x1024xbf16, #tpu.memory_space<vmem>>, vector<1x4x512xbf16>
    %140 = vector.shape_cast %139 : vector<1x4x512xbf16> to vector<4x512xbf16>
    %c384_147 = arith.constant 384 : index
    %c0_148 = arith.constant 0 : index
    %141 = vector.load %arg2[%c384_147, %c0_148] : memref<896x128xbf16, #tpu.memory_space<vmem>>, vector<512x128xbf16>
    %cst_149 = arith.constant dense<0.000000e+00> : vector<4x128xf32>
    %142 = tpu.matmul %140, %141, %cst_149 {dimension_numbers = #tpu.dot_dimension_numbers<[1], [0], [0], [1], [0, 0, 1, 1], [], []>} : vector<4x512xbf16>, vector<512x128xbf16>, vector<4x128xf32> -> vector<4x128xf32>
    %143 = arith.addf %138, %142 : vector<4x128xf32>
    %c0_150 = arith.constant 0 : index
    %c0_151 = arith.constant 0 : index
    %144 = vector.load %arg3[%c0_150, %c0_151] : memref<1x128xf32, #tpu.memory_space<vmem>>, vector<1x128xf32>
    %145 = vector.broadcast %144 : vector<1x128xf32> to vector<4x128xf32>
    %146 = arith.addf %143, %145 : vector<4x128xf32>
    %cst_152 = arith.constant 0.000000e+00 : f32
    %147 = vector.broadcast %cst_152 : f32 to vector<4x128xf32>
    %148 = arith.maximumf %146, %147 : vector<4x128xf32>
    %149 = arith.truncf %148 : vector<4x128xf32> to vector<4x128xbf16>
    %c1_153 = arith.constant 1 : index
    %c0_154 = arith.constant 0 : index
    %150 = vector.load %arg9[%c1_153, %c0_154] : memref<6x512xbf16, #tpu.memory_space<vmem>>, vector<4x128xbf16>
    tpu.vector_store %arg9[%c1_153, %c0_154], %149 {strides = array<i32>} : memref<6x512xbf16, #tpu.memory_space<vmem>>, vector<4x128xbf16>,
    %c1_155 = arith.constant 1 : index
    %c0_156 = arith.constant 0 : index
    %c896_157 = arith.constant 896 : index
    %151 = vector.load %arg1[%c1_155, %c0_156, %c896_157] : memref<2x6x1024xbf16, #tpu.memory_space<vmem>>, vector<1x4x128xbf16>
    %152 = vector.shape_cast %151 : vector<1x4x128xbf16> to vector<4x128xbf16>
    %c0_158 = arith.constant 0 : index
    %c0_159 = arith.constant 0 : index
    %153 = vector.load %arg2[%c0_158, %c0_159] : memref<896x128xbf16, #tpu.memory_space<vmem>>, vector<128x128xbf16>
    %cst_160 = arith.constant dense<0.000000e+00> : vector<4x128xf32>
    %154 = tpu.matmul %152, %153, %cst_160 {dimension_numbers = #tpu.dot_dimension_numbers<[1], [0], [0], [1], [0, 0, 1, 1], [], []>} : vector<4x128xbf16>, vector<128x128xbf16>, vector<4x128xf32> -> vector<4x128xf32>
    %c1_161 = arith.constant 1 : index
    %c1_162 = arith.constant 1 : index
    %c0_163 = arith.constant 0 : index
    %155 = vector.load %arg1[%c1_161, %c1_162, %c0_163] : memref<2x6x1024xbf16, #tpu.memory_space<vmem>>, vector<1x4x768xbf16>
    %156 = vector.shape_cast %155 : vector<1x4x768xbf16> to vector<4x768xbf16>
    %c128_164 = arith.constant 128 : index
    %c0_165 = arith.constant 0 : index
    %157 = vector.load %arg2[%c128_164, %c0_165] : memref<896x128xbf16, #tpu.memory_space<vmem>>, vector<768x128xbf16>
    %cst_166 = arith.constant dense<0.000000e+00> : vector<4x128xf32>
    %158 = tpu.matmul %156, %157, %cst_166 {dimension_numbers = #tpu.dot_dimension_numbers<[1], [0], [0], [1], [0, 0, 1, 1], [], []>} : vector<4x768xbf16>, vector<768x128xbf16>, vector<4x128xf32> -> vector<4x128xf32>
    %159 = arith.addf %154, %158 : vector<4x128xf32>
    %c0_167 = arith.constant 0 : index
    %c0_168 = arith.constant 0 : index
    %160 = vector.load %arg3[%c0_167, %c0_168] : memref<1x128xf32, #tpu.memory_space<vmem>>, vector<1x128xf32>
    %161 = vector.broadcast %160 : vector<1x128xf32> to vector<4x128xf32>
    %162 = arith.addf %159, %161 : vector<4x128xf32>
    %cst_169 = arith.constant 0.000000e+00 : f32
    %163 = vector.broadcast %cst_169 : f32 to vector<4x128xf32>
    %164 = arith.maximumf %162, %163 : vector<4x128xf32>
    %165 = arith.truncf %164 : vector<4x128xf32> to vector<4x128xbf16>
    %c1_170 = arith.constant 1 : index
    %c128_171 = arith.constant 128 : index
    %166 = vector.load %arg9[%c1_170, %c128_171] : memref<6x512xbf16, #tpu.memory_space<vmem>>, vector<4x128xbf16>
    tpu.vector_store %arg9[%c1_170, %c128_171], %165 {strides = array<i32>} : memref<6x512xbf16, #tpu.memory_space<vmem>>, vector<4x128xbf16>,
    %c1_172 = arith.constant 1 : index
    %c1_173 = arith.constant 1 : index
    %c128_174 = arith.constant 128 : index
    %167 = vector.load %arg1[%c1_172, %c1_173, %c128_174] : memref<2x6x1024xbf16, #tpu.memory_space<vmem>>, vector<1x4x896xbf16>
    %168 = vector.shape_cast %167 : vector<1x4x896xbf16> to vector<4x896xbf16>
    %c0_175 = arith.constant 0 : index
    %c0_176 = arith.constant 0 : index
    %169 = vector.load %arg2[%c0_175, %c0_176] : memref<896x128xbf16, #tpu.memory_space<vmem>>, vector<896x128xbf16>
    %cst_177 = arith.constant dense<0.000000e+00> : vector<4x128xf32>
    %170 = tpu.matmul %168, %169, %cst_177 {dimension_numbers = #tpu.dot_dimension_numbers<[1], [0], [0], [1], [0, 0, 1, 1], [], []>} : vector<4x896xbf16>, vector<896x128xbf16>, vector<4x128xf32> -> vector<4x128xf32>
    %c0_178 = arith.constant 0 : index
    %c0_179 = arith.constant 0 : index
    %171 = vector.load %arg3[%c0_178, %c0_179] : memref<1x128xf32, #tpu.memory_space<vmem>>, vector<1x128xf32>
    %172 = vector.broadcast %171 : vector<1x128xf32> to vector<4x128xf32>
    %173 = arith.addf %170, %172 : vector<4x128xf32>
    %cst_180 = arith.constant 0.000000e+00 : f32
    %174 = vector.broadcast %cst_180 : f32 to vector<4x128xf32>
    %175 = arith.maximumf %173, %174 : vector<4x128xf32>
    %176 = arith.truncf %175 : vector<4x128xf32> to vector<4x128xbf16>
    %c1_181 = arith.constant 1 : index
    %c256_182 = arith.constant 256 : index
    %177 = vector.load %arg9[%c1_181, %c256_182] : memref<6x512xbf16, #tpu.memory_space<vmem>>, vector<4x128xbf16>
    tpu.vector_store %arg9[%c1_181, %c256_182], %176 {strides = array<i32>} : memref<6x512xbf16, #tpu.memory_space<vmem>>, vector<4x128xbf16>,
    %c1_183 = arith.constant 1 : index
    %c1_184 = arith.constant 1 : index
    %c384_185 = arith.constant 384 : index
    %178 = vector.load %arg1[%c1_183, %c1_184, %c384_185] : memref<2x6x1024xbf16, #tpu.memory_space<vmem>>, vector<1x4x640xbf16>
    %179 = vector.shape_cast %178 : vector<1x4x640xbf16> to vector<4x640xbf16>
    %c0_186 = arith.constant 0 : index
    %c0_187 = arith.constant 0 : index
    %180 = vector.load %arg2[%c0_186, %c0_187] : memref<896x128xbf16, #tpu.memory_space<vmem>>, vector<640x128xbf16>
    %cst_188 = arith.constant dense<0.000000e+00> : vector<4x128xf32>
    %181 = tpu.matmul %179, %180, %cst_188 {dimension_numbers = #tpu.dot_dimension_numbers<[1], [0], [0], [1], [0, 0, 1, 1], [], []>} : vector<4x640xbf16>, vector<640x128xbf16>, vector<4x128xf32> -> vector<4x128xf32>
    %c1_189 = arith.constant 1 : index
    %c2_190 = arith.constant 2 : index
    %c0_191 = arith.constant 0 : index
    %182 = vector.load %arg1[%c1_189, %c2_190, %c0_191] : memref<2x6x1024xbf16, #tpu.memory_space<vmem>>, vector<1x4x256xbf16>
    %183 = vector.shape_cast %182 : vector<1x4x256xbf16> to vector<4x256xbf16>
    %c640_192 = arith.constant 640 : index
    %c0_193 = arith.constant 0 : index
    %184 = vector.load %arg2[%c640_192, %c0_193] : memref<896x128xbf16, #tpu.memory_space<vmem>>, vector<256x128xbf16>
    %cst_194 = arith.constant dense<0.000000e+00> : vector<4x128xf32>
    %185 = tpu.matmul %183, %184, %cst_194 {dimension_numbers = #tpu.dot_dimension_numbers<[1], [0], [0], [1], [0, 0, 1, 1], [], []>} : vector<4x256xbf16>, vector<256x128xbf16>, vector<4x128xf32> -> vector<4x128xf32>
    %186 = arith.addf %181, %185 : vector<4x128xf32>
    %c0_195 = arith.constant 0 : index
    %c0_196 = arith.constant 0 : index
    %187 = vector.load %arg3[%c0_195, %c0_196] : memref<1x128xf32, #tpu.memory_space<vmem>>, vector<1x128xf32>
    %188 = vector.broadcast %187 : vector<1x128xf32> to vector<4x128xf32>
    %189 = arith.addf %186, %188 : vector<4x128xf32>
    %cst_197 = arith.constant 0.000000e+00 : f32
    %190 = vector.broadcast %cst_197 : f32 to vector<4x128xf32>
    %191 = arith.maximumf %189, %190 : vector<4x128xf32>
    %192 = arith.truncf %191 : vector<4x128xf32> to vector<4x128xbf16>
    %c1_198 = arith.constant 1 : index
    %c384_199 = arith.constant 384 : index
    %193 = vector.load %arg9[%c1_198, %c384_199] : memref<6x512xbf16, #tpu.memory_space<vmem>>, vector<4x128xbf16>
    tpu.vector_store %arg9[%c1_198, %c384_199], %192 {strides = array<i32>} : memref<6x512xbf16, #tpu.memory_space<vmem>>, vector<4x128xbf16>,
    %c0_200 = arith.constant 0 : index
    %c128_201 = arith.constant 128 : index
    %194 = vector.load %arg9[%c0_200, %c128_201] : memref<6x512xbf16, #tpu.memory_space<vmem>>, vector<4x384xbf16>
    %c0_202 = arith.constant 0 : index
    %c0_203 = arith.constant 0 : index
    %195 = vector.load %arg4[%c0_202, %c0_203] : memref<896x128xbf16, #tpu.memory_space<vmem>>, vector<384x128xbf16>
    %cst_204 = arith.constant dense<0.000000e+00> : vector<4x128xf32>
    %196 = tpu.matmul %194, %195, %cst_204 {dimension_numbers = #tpu.dot_dimension_numbers<[1], [0], [0], [1], [0, 0, 1, 1], [], []>} : vector<4x384xbf16>, vector<384x128xbf16>, vector<4x128xf32> -> vector<4x128xf32>
    %c1_205 = arith.constant 1 : index
    %c0_206 = arith.constant 0 : index
    %197 = vector.load %arg9[%c1_205, %c0_206] : memref<6x512xbf16, #tpu.memory_space<vmem>>, vector<4x512xbf16>
    %c384_207 = arith.constant 384 : index
    %c0_208 = arith.constant 0 : index
    %198 = vector.load %arg4[%c384_207, %c0_208] : memref<896x128xbf16, #tpu.memory_space<vmem>>, vector<512x128xbf16>
    %cst_209 = arith.constant dense<0.000000e+00> : vector<4x128xf32>
    %199 = tpu.matmul %197, %198, %cst_209 {dimension_numbers = #tpu.dot_dimension_numbers<[1], [0], [0], [1], [0, 0, 1, 1], [], []>} : vector<4x512xbf16>, vector<512x128xbf16>, vector<4x128xf32> -> vector<4x128xf32>
    %200 = arith.addf %196, %199 : vector<4x128xf32>
    %c0_210 = arith.constant 0 : index
    %c0_211 = arith.constant 0 : index
    %201 = vector.load %arg5[%c0_210, %c0_211] : memref<1x128xf32, #tpu.memory_space<vmem>>, vector<1x128xf32>
    %202 = vector.broadcast %201 : vector<1x128xf32> to vector<4x128xf32>
    %203 = arith.addf %200, %202 : vector<4x128xf32>
    %cst_212 = arith.constant 0.000000e+00 : f32
    %204 = vector.broadcast %cst_212 : f32 to vector<4x128xf32>
    %205 = arith.maximumf %203, %204 : vector<4x128xf32>
    %206 = arith.truncf %205 : vector<4x128xf32> to vector<4x128xbf16>
    %c2_213 = arith.constant 2 : index
    %c0_214 = arith.constant 0 : index
    %207 = vector.load %arg10[%c2_213, %c0_214] : memref<7x256xbf16, #tpu.memory_space<vmem>>, vector<4x128xbf16>
    tpu.vector_store %arg10[%c2_213, %c0_214], %206 {strides = array<i32>} : memref<7x256xbf16, #tpu.memory_space<vmem>>, vector<4x128xbf16>,
    %c0_215 = arith.constant 0 : index
    %c384_216 = arith.constant 384 : index
    %208 = vector.load %arg9[%c0_215, %c384_216] : memref<6x512xbf16, #tpu.memory_space<vmem>>, vector<4x128xbf16>
    %c0_217 = arith.constant 0 : index
    %c0_218 = arith.constant 0 : index
    %209 = vector.load %arg4[%c0_217, %c0_218] : memref<896x128xbf16, #tpu.memory_space<vmem>>, vector<128x128xbf16>
    %cst_219 = arith.constant dense<0.000000e+00> : vector<4x128xf32>
    %210 = tpu.matmul %208, %209, %cst_219 {dimension_numbers = #tpu.dot_dimension_numbers<[1], [0], [0], [1], [0, 0, 1, 1], [], []>} : vector<4x128xbf16>, vector<128x128xbf16>, vector<4x128xf32> -> vector<4x128xf32>
    %c1_220 = arith.constant 1 : index
    %c0_221 = arith.constant 0 : index
    %211 = vector.load %arg9[%c1_220, %c0_221] : memref<6x512xbf16, #tpu.memory_space<vmem>>, vector<4x512xbf16>
    %c128_222 = arith.constant 128 : index
    %c0_223 = arith.constant 0 : index
    %212 = vector.load %arg4[%c128_222, %c0_223] : memref<896x128xbf16, #tpu.memory_space<vmem>>, vector<512x128xbf16>
    %cst_224 = arith.constant dense<0.000000e+00> : vector<4x128xf32>
    %213 = tpu.matmul %211, %212, %cst_224 {dimension_numbers = #tpu.dot_dimension_numbers<[1], [0], [0], [1], [0, 0, 1, 1], [], []>} : vector<4x512xbf16>, vector<512x128xbf16>, vector<4x128xf32> -> vector<4x128xf32>
    %214 = arith.addf %210, %213 : vector<4x128xf32>
    %c2_225 = arith.constant 2 : index
    %c0_226 = arith.constant 0 : index
    %215 = vector.load %arg9[%c2_225, %c0_226] : memref<6x512xbf16, #tpu.memory_space<vmem>>, vector<4x256xbf16>
    %c640_227 = arith.constant 640 : index
    %c0_228 = arith.constant 0 : index
    %216 = vector.load %arg4[%c640_227, %c0_228] : memref<896x128xbf16, #tpu.memory_space<vmem>>, vector<256x128xbf16>
    %cst_229 = arith.constant dense<0.000000e+00> : vector<4x128xf32>
    %217 = tpu.matmul %215, %216, %cst_229 {dimension_numbers = #tpu.dot_dimension_numbers<[1], [0], [0], [1], [0, 0, 1, 1], [], []>} : vector<4x256xbf16>, vector<256x128xbf16>, vector<4x128xf32> -> vector<4x128xf32>
    %218 = arith.addf %214, %217 : vector<4x128xf32>
    %c0_230 = arith.constant 0 : index
    %c0_231 = arith.constant 0 : index
    %219 = vector.load %arg5[%c0_230, %c0_231] : memref<1x128xf32, #tpu.memory_space<vmem>>, vector<1x128xf32>
    %220 = vector.broadcast %219 : vector<1x128xf32> to vector<4x128xf32>
    %221 = arith.addf %218, %220 : vector<4x128xf32>
    %cst_232 = arith.constant 0.000000e+00 : f32
    %222 = vector.broadcast %cst_232 : f32 to vector<4x128xf32>
    %223 = arith.maximumf %221, %222 : vector<4x128xf32>
    %224 = arith.truncf %223 : vector<4x128xf32> to vector<4x128xbf16>
    %c2_233 = arith.constant 2 : index
    %c128_234 = arith.constant 128 : index
    %225 = vector.load %arg10[%c2_233, %c128_234] : memref<7x256xbf16, #tpu.memory_space<vmem>>, vector<4x128xbf16>
    tpu.vector_store %arg10[%c2_233, %c128_234], %224 {strides = array<i32>} : memref<7x256xbf16, #tpu.memory_space<vmem>>, vector<4x128xbf16>,
    %c0_235 = arith.constant 0 : index
    %c128_236 = arith.constant 128 : index
    %226 = vector.load %arg10[%c0_235, %c128_236] : memref<7x256xbf16, #tpu.memory_space<vmem>>, vector<4x128xbf16>
    %c0_237 = arith.constant 0 : index
    %c0_238 = arith.constant 0 : index
    %227 = vector.load %arg6[%c0_237, %c0_238] : memref<896x128xbf16, #tpu.memory_space<vmem>>, vector<128x128xbf16>
    %cst_239 = arith.constant dense<0.000000e+00> : vector<4x128xf32>
    %228 = tpu.matmul %226, %227, %cst_239 {dimension_numbers = #tpu.dot_dimension_numbers<[1], [0], [0], [1], [0, 0, 1, 1], [], []>} : vector<4x128xbf16>, vector<128x128xbf16>, vector<4x128xf32> -> vector<4x128xf32>
    %c1_240 = arith.constant 1 : index
    %c0_241 = arith.constant 0 : index
    %229 = vector.load %arg10[%c1_240, %c0_241] : memref<7x256xbf16, #tpu.memory_space<vmem>>, vector<4x256xbf16>
    %c128_242 = arith.constant 128 : index
    %c0_243 = arith.constant 0 : index
    %230 = vector.load %arg6[%c128_242, %c0_243] : memref<896x128xbf16, #tpu.memory_space<vmem>>, vector<256x128xbf16>
    %cst_244 = arith.constant dense<0.000000e+00> : vector<4x128xf32>
    %231 = tpu.matmul %229, %230, %cst_244 {dimension_numbers = #tpu.dot_dimension_numbers<[1], [0], [0], [1], [0, 0, 1, 1], [], []>} : vector<4x256xbf16>, vector<256x128xbf16>, vector<4x128xf32> -> vector<4x128xf32>
    %232 = arith.addf %228, %231 : vector<4x128xf32>
    %c2_245 = arith.constant 2 : index
    %c0_246 = arith.constant 0 : index
    %233 = vector.load %arg10[%c2_245, %c0_246] : memref<7x256xbf16, #tpu.memory_space<vmem>>, vector<4x256xbf16>
    %c384_247 = arith.constant 384 : index
    %c0_248 = arith.constant 0 : index
    %234 = vector.load %arg6[%c384_247, %c0_248] : memref<896x128xbf16, #tpu.memory_space<vmem>>, vector<256x128xbf16>
    %cst_249 = arith.constant dense<0.000000e+00> : vector<4x128xf32>
    %235 = tpu.matmul %233, %234, %cst_249 {dimension_numbers = #tpu.dot_dimension_numbers<[1], [0], [0], [1], [0, 0, 1, 1], [], []>} : vector<4x256xbf16>, vector<256x128xbf16>, vector<4x128xf32> -> vector<4x128xf32>
    %236 = arith.addf %232, %235 : vector<4x128xf32>
    %c3_250 = arith.constant 3 : index
    %c0_251 = arith.constant 0 : index
    %237 = vector.load %arg10[%c3_250, %c0_251] : memref<7x256xbf16, #tpu.memory_space<vmem>>, vector<4x256xbf16>
    %c640_252 = arith.constant 640 : index
    %c0_253 = arith.constant 0 : index
    %238 = vector.load %arg6[%c640_252, %c0_253] : memref<896x128xbf16, #tpu.memory_space<vmem>>, vector<256x128xbf16>
    %cst_254 = arith.constant dense<0.000000e+00> : vector<4x128xf32>
    %239 = tpu.matmul %237, %238, %cst_254 {dimension_numbers = #tpu.dot_dimension_numbers<[1], [0], [0], [1], [0, 0, 1, 1], [], []>} : vector<4x256xbf16>, vector<256x128xbf16>, vector<4x128xf32> -> vector<4x128xf32>
    %240 = arith.addf %236, %239 : vector<4x128xf32>
    %c0_255 = arith.constant 0 : index
    %c0_256 = arith.constant 0 : index
    %241 = vector.load %arg7[%c0_255, %c0_256] : memref<1x128xf32, #tpu.memory_space<vmem>>, vector<1x128xf32>
    %242 = vector.broadcast %241 : vector<1x128xf32> to vector<4x128xf32>
    %243 = arith.addf %240, %242 : vector<4x128xf32>
    %cst_257 = arith.constant 0.000000e+00 : f32
    %244 = vector.broadcast %cst_257 : f32 to vector<4x128xf32>
    %245 = arith.maximumf %243, %244 : vector<4x128xf32>
    %246 = arith.truncf %245 : vector<4x128xf32> to vector<4x128xbf16>
    %c1_258 = arith.constant 1 : index
    %c0_259 = arith.constant 0 : index
    %c0_260 = arith.constant 0 : index
    %247 = vector.load %arg8[%c1_258, %c0_259, %c0_260] : memref<2x16x128xbf16, #tpu.memory_space<vmem>>, vector<1x4x128xbf16>
    %248 = vector.shape_cast %247 : vector<1x4x128xbf16> to vector<4x128xbf16>
    %249 = vector.shape_cast %246 : vector<4x128xbf16> to vector<1x4x128xbf16>
    tpu.vector_store %arg8[%c1_258, %c0_259, %c0_260], %249 {strides = array<i32>} : memref<2x16x128xbf16, #tpu.memory_space<vmem>>, vector<1x4x128xbf16>,
    %cst_261 = arith.constant 0.000000e+00 : bf16
    %250 = vector.broadcast %cst_261 : bf16 to vector<12x128xbf16>
    %c1_262 = arith.constant 1 : index
    %c4_263 = arith.constant 4 : index
    %c0_264 = arith.constant 0 : index
    %251 = vector.load %arg8[%c1_262, %c4_263, %c0_264] : memref<2x16x128xbf16, #tpu.memory_space<vmem>>, vector<1x12x128xbf16>
    %252 = vector.shape_cast %251 : vector<1x12x128xbf16> to vector<12x128xbf16>
    %253 = vector.shape_cast %250 : vector<12x128xbf16> to vector<1x12x128xbf16>
    tpu.vector_store %arg8[%c1_262, %c4_263, %c0_264], %253 {strides = array<i32>} : memref<2x16x128xbf16, #tpu.memory_space<vmem>>, vector<1x12x128xbf16>,
    return
  }
  func.func @transform_0(%arg0: i32) -> (i32, i32, i32) {
    %c0_i32 = arith.constant 0 : i32
    %c0_i32_0 = arith.constant 0 : i32
    %c0_i32_1 = arith.constant 0 : i32
    return %arg0, %c0_i32, %c0_i32_0 : i32, i32, i32
  }
  func.func @transform_1(%arg0: i32) -> (i32, i32) {
    %c0_i32 = arith.constant 0 : i32
    %c0_i32_0 = arith.constant 0 : i32
    %c0_i32_1 = arith.constant 0 : i32
    return %c0_i32, %c0_i32_0 : i32, i32
  }
  func.func @transform_2(%arg0: i32) -> (i32, i32) {
    %c0_i32 = arith.constant 0 : i32
    %c0_i32_0 = arith.constant 0 : i32
    %c0_i32_1 = arith.constant 0 : i32
    return %c0_i32, %c0_i32_0 : i32, i32
  }
  func.func @transform_3(%arg0: i32) -> (i32, i32) {
    %c0_i32 = arith.constant 0 : i32
    %c0_i32_0 = arith.constant 0 : i32
    %c0_i32_1 = arith.constant 0 : i32
    return %c0_i32, %c0_i32_0 : i32, i32
  }
  func.func @transform_4(%arg0: i32) -> (i32, i32) {
    %c0_i32 = arith.constant 0 : i32
    %c0_i32_0 = arith.constant 0 : i32
    %c0_i32_1 = arith.constant 0 : i32
    return %c0_i32, %c0_i32_0 : i32, i32
  }
  func.func @transform_5(%arg0: i32) -> (i32, i32) {
    %c0_i32 = arith.constant 0 : i32
    %c0_i32_0 = arith.constant 0 : i32
    %c0_i32_1 = arith.constant 0 : i32
    return %c0_i32, %c0_i32_0 : i32, i32
  }
  func.func @transform_6(%arg0: i32) -> (i32, i32) {
    %c0_i32 = arith.constant 0 : i32
    %c0_i32_0 = arith.constant 0 : i32
    %c0_i32_1 = arith.constant 0 : i32
    return %c0_i32, %c0_i32_0 : i32, i32
  }
  func.func @transform_7(%arg0: i32) -> (i32, i32, i32) {
    %c0_i32 = arith.constant 0 : i32
    %c0_i32_0 = arith.constant 0 : i32
    %c0_i32_1 = arith.constant 0 : i32
    return %arg0, %c0_i32, %c0_i32_0 : i32, i32, i32
  }
}

module attributes {stable_mosaic.version = 11 : i64} {
  func.func @_matmul_bias_kernel(%arg0: i32, %arg1: i32, %arg2: i32, %arg3: memref<2x2048xbf16, #tpu.memory_space<vmem>>, %arg4: memref<2048x128xbf16, #tpu.memory_space<vmem>>, %arg5: memref<1x128xf32, #tpu.memory_space<vmem>>, %arg6: memref<2x128xf32, #tpu.memory_space<vmem>>, %arg7: memref<2x128xf32, #tpu.memory_space<vmem>>) attributes {dimension_semantics = [#tpu.dimension_semantics<parallel>, #tpu.dimension_semantics<parallel>, #tpu.dimension_semantics<arbitrary>], iteration_bounds = array<i64: 1, 1, 1>, scalar_prefetch = 0 : i64, scratch_operands = 1 : i64, tpu.core_type = #tpu.core_type<tc>, window_params = [{transform_indices = @transform_0, window_bounds = array<i64: 2, 2048>}, {transform_indices = @transform_1, window_bounds = array<i64: 2048, 128>}, {transform_indices = @transform_2, window_bounds = array<i64: 1, 128>}, {transform_indices = @transform_3, window_bounds = array<i64: 2, 128>}]} {
    %c0_i32 = arith.constant 0 : i32
    %0 = arith.cmpi eq, %arg2, %c0_i32 : i32
    %1 = arith.extui %0 : i1 to i32
    %c0_i32_0 = arith.constant 0 : i32
    %2 = arith.cmpi ne, %1, %c0_i32_0 : i32
    scf.if %2 {
      %cst_10 = arith.constant 0.000000e+00 : f32
      %12 = vector.broadcast %cst_10 : f32 to vector<2x128xf32>
      %c0_11 = arith.constant 0 : index
      %c0_12 = arith.constant 0 : index
      %13 = vector.load %arg7[%c0_11, %c0_12] : memref<2x128xf32, #tpu.memory_space<vmem>>, vector<2x128xf32>
      tpu.vector_store %arg7[%c0_11, %c0_12], %12 {strides = array<i32>} : memref<2x128xf32, #tpu.memory_space<vmem>>, vector<2x128xf32>,
    } else {
    }
    %c0 = arith.constant 0 : index
    %c0_1 = arith.constant 0 : index
    %3 = vector.load %arg7[%c0, %c0_1] : memref<2x128xf32, #tpu.memory_space<vmem>>, vector<2x128xf32>
    %c0_2 = arith.constant 0 : index
    %c0_3 = arith.constant 0 : index
    %4 = vector.load %arg3[%c0_2, %c0_3] : memref<2x2048xbf16, #tpu.memory_space<vmem>>, vector<2x2048xbf16>
    %c0_4 = arith.constant 0 : index
    %c0_5 = arith.constant 0 : index
    %5 = vector.load %arg4[%c0_4, %c0_5] : memref<2048x128xbf16, #tpu.memory_space<vmem>>, vector<2048x128xbf16>
    %cst = arith.constant dense<0.000000e+00> : vector<2x128xf32>
    %6 = tpu.matmul %4, %5, %cst {dimension_numbers = #tpu.dot_dimension_numbers<[1], [0], [0], [1], [0, 0, 1, 1], [], []>} : vector<2x2048xbf16>, vector<2048x128xbf16>, vector<2x128xf32> -> vector<2x128xf32>
    %7 = arith.addf %3, %6 : vector<2x128xf32>
    %c0_6 = arith.constant 0 : index
    %c0_7 = arith.constant 0 : index
    %8 = vector.load %arg7[%c0_6, %c0_7] : memref<2x128xf32, #tpu.memory_space<vmem>>, vector<2x128xf32>
    tpu.vector_store %arg7[%c0_6, %c0_7], %7 {strides = array<i32>} : memref<2x128xf32, #tpu.memory_space<vmem>>, vector<2x128xf32>,
    %c0_i32_8 = arith.constant 0 : i32
    %9 = arith.cmpi eq, %arg2, %c0_i32_8 : i32
    %10 = arith.extui %9 : i1 to i32
    %c0_i32_9 = arith.constant 0 : i32
    %11 = arith.cmpi ne, %10, %c0_i32_9 : i32
    scf.if %11 {
      %c0_10 = arith.constant 0 : index
      %c0_11 = arith.constant 0 : index
      %12 = vector.load %arg7[%c0_10, %c0_11] : memref<2x128xf32, #tpu.memory_space<vmem>>, vector<2x128xf32>
      %c0_12 = arith.constant 0 : index
      %c0_13 = arith.constant 0 : index
      %13 = vector.load %arg5[%c0_12, %c0_13] : memref<1x128xf32, #tpu.memory_space<vmem>>, vector<1x128xf32>
      %14 = vector.broadcast %13 : vector<1x128xf32> to vector<2x128xf32>
      %15 = arith.addf %12, %14 : vector<2x128xf32>
      %c0_14 = arith.constant 0 : index
      %c0_15 = arith.constant 0 : index
      %16 = vector.load %arg6[%c0_14, %c0_15] : memref<2x128xf32, #tpu.memory_space<vmem>>, vector<2x128xf32>
      tpu.vector_store %arg6[%c0_14, %c0_15], %15 {strides = array<i32>} : memref<2x128xf32, #tpu.memory_space<vmem>>, vector<2x128xf32>,
    } else {
    }
    return
  }
  func.func @transform_0(%arg0: i32, %arg1: i32, %arg2: i32) -> (i32, i32) {
    %c0_i32 = arith.constant 0 : i32
    return %arg0, %arg2 : i32, i32
  }
  func.func @transform_1(%arg0: i32, %arg1: i32, %arg2: i32) -> (i32, i32) {
    %c0_i32 = arith.constant 0 : i32
    return %arg2, %arg1 : i32, i32
  }
  func.func @transform_2(%arg0: i32, %arg1: i32, %arg2: i32) -> (i32, i32) {
    %c0_i32 = arith.constant 0 : i32
    %c0_i32_0 = arith.constant 0 : i32
    return %c0_i32, %arg1 : i32, i32
  }
  func.func @transform_3(%arg0: i32, %arg1: i32, %arg2: i32) -> (i32, i32) {
    %c0_i32 = arith.constant 0 : i32
    return %arg0, %arg1 : i32, i32
  }
}

</mosaic_0001>

<llo_original>
// kernel: encoder_forward.3
$region0: #{encoder_forward.3}
  #allocation0 [shape = 'u32[]', space=smem, size = 0x4, offset = 0x4, fixed_abs, tag = 'smem constant byte address 0x4 - core index']
  #allocation1 [shape = 'u32[144,128]{1,0:T(1,128)}', space=vmem, size = 0x12000, scoped, tag = 'internal scratch']
  #allocation2 [shape = 'f32[2,128]{1,0:T(2,128)}', space=vmem, size = 0x400, scoped, tag = 'scratch operand']
  %s0 = inlined_call_operand.vmem [shape: bf16[2,2048], index: 0, kind: input, shape index: {}]
  %s1 = inlined_call_operand.vmem [shape: bf16[2048,128], index: 1, kind: input, shape index: {}]
  %s2 = inlined_call_operand.vmem [shape: f32[1,128], index: 2, kind: input, shape index: {}]
  %s3 = inlined_call_operand.hbm [shape: f32[2,128], index: 3, kind: output, shape index: {}]
  %s4 = sld [smem:[#allocation0]]
  $region30: #{encoder_forward.3} parent=0
    _
  %s6 = ssub.s32 1, %s4
  %s7 = scalar_select 0, %s6, %s4
  $region1: #{encoder_forward.3} parent=0
    #allocation3 [shape = 'u8[1024]{0}', space=vmem, size = 0x400, scoped, tag = 'output window, operand 0, single buffered']
    #allocation4 [shape = 's32[1]{0}', space=sflag, size = 0x4, scoped, tag = 'scoped memory for encoder_forward.3']
    %8 = vsyncpa [#allocation4], 0
    // Predicated region
    $region2: #{encoder_forward.3} parent=1 // pred_check
      _
    $region3: #{encoder_forward.3} parent=1 // pred_check_branch
      %10 = sbr.rel (0) target = $region5
    $region4: #{encoder_forward.3} parent=1 // pred_region
      _
    $region5: #{encoder_forward.3} parent=1 // pred_fallthru
      _
    // Predicated region
    $region6: #{encoder_forward.3} parent=1 // pred_check
      _
    $region7: #{encoder_forward.3} parent=1 // pred_check_branch
      %12 = sbr.rel (0) target = $region9
    $region8: #{encoder_forward.3} parent=1 // pred_region
      _
    $region9: #{encoder_forward.3} parent=1 // pred_fallthru
      _
    // Predicated region
    $region10: #{encoder_forward.3} parent=1 // pred_check
      _
    $region11: #{encoder_forward.3} parent=1 // pred_check_branch
      %14 = sbr.rel (0) target = $region13
    $region12: #{encoder_forward.3} parent=1 // pred_region
      _
    $region13: #{encoder_forward.3} parent=1 // pred_fallthru
      _
    %p16 = scmp.eq.s32.totalorder 0, 0
    // Predicated region
    $region14: #{encoder_forward.3} parent=1 // pred_check
      %p17 = pneg %p16
    $region15: #{encoder_forward.3} parent=1 // pred_check_branch
      %19 = sbr.rel (%p17) target = $region17
    $region16: #{encoder_forward.3} parent=1 // pred_region
      %20 = vst [vmem:[#allocation2] sm:$0x3] 0.0
    $region17: #{encoder_forward.3} parent=1 // pred_fallthru
      _
    %v21 = vld [vmem:[#allocation2] sm:$0x3]
    %v22 = vld [vmem:[%s0] sm:$0xff]
    %v23 = vld [vmem:[%s0 + $0x8] sm:$0xff]
    %v24 = vld [vmem:[%s1] sm:$0xf]
    %v25 = vld [vmem:[%s1 + $0x4] sm:$0xf]
    %v26 = vld [vmem:[%s1 + $0x8] sm:$0xf]
    %v27 = vld [vmem:[%s1 + $0xc] sm:$0xf]
    %v28 = vld [vmem:[%s1 + $0x10] sm:$0xf]
    %v29 = vld [vmem:[%s1 + $0x14] sm:$0xf]
    %v30 = vld [vmem:[%s1 + $0x18] sm:$0xf]
    %v31 = vld [vmem:[%s1 + $0x1c] sm:$0xf]
    %v32 = vld [vmem:[%s1 + $0x20] sm:$0xf]
    %v33 = vld [vmem:[%s1 + $0x24] sm:$0xf]
    %v34 = vld [vmem:[%s1 + $0x28] sm:$0xf]
    %v35 = vld [vmem:[%s1 + $0x2c] sm:$0xf]
    %v36 = vld [vmem:[%s1 + $0x30] sm:$0xf]
    %v37 = vld [vmem:[%s1 + $0x34] sm:$0xf]
    %v38 = vld [vmem:[%s1 + $0x38] sm:$0xf]
    %v39 = vld [vmem:[%s1 + $0x3c] sm:$0xf]
    %v40 = vld [vmem:[%s1 + $0x40] sm:$0xf]
    %v41 = vld [vmem:[%s1 + $0x44] sm:$0xf]
    %v42 = vld [vmem:[%s1 + $0x48] sm:$0xf]
    %v43 = vld [vmem:[%s1 + $0x4c] sm:$0xf]
    %v44 = vld [vmem:[%s1 + $0x50] sm:$0xf]
    %v45 = vld [vmem:[%s1 + $0x54] sm:$0xf]
    %v46 = vld [vmem:[%s1 + $0x58] sm:$0xf]
    %v47 = vld [vmem:[%s1 + $0x5c] sm:$0xf]
    %v48 = vld [vmem:[%s1 + $0x60] sm:$0xf]
    %v49 = vld [vmem:[%s1 + $0x64] sm:$0xf]
    %v50 = vld [vmem:[%s1 + $0x68] sm:$0xf]
    %v51 = vld [vmem:[%s1 + $0x6c] sm:$0xf]
    %v52 = vld [vmem:[%s1 + $0x70] sm:$0xf]
    %v53 = vld [vmem:[%s1 + $0x74] sm:$0xf]
    %v54 = vld [vmem:[%s1 + $0x78] sm:$0xf]
    %v55 = vld [vmem:[%s1 + $0x7c] sm:$0xf]
    %v56 = vld [vmem:[%s1 + $0x80] sm:$0xf]
    %v57 = vld [vmem:[%s1 + $0x84] sm:$0xf]
    %v58 = vld [vmem:[%s1 + $0x88] sm:$0xf]
    %v59 = vld [vmem:[%s1 + $0x8c] sm:$0xf]
    %v60 = vld [vmem:[%s1 + $0x90] sm:$0xf]
    %v61 = vld [vmem:[%s1 + $0x94] sm:$0xf]
    %v62 = vld [vmem:[%s1 + $0x98] sm:$0xf]
    %v63 = vld [vmem:[%s1 + $0x9c] sm:$0xf]
    %v64 = vld [vmem:[%s1 + $0xa0] sm:$0xf]
    %v65 = vld [vmem:[%s1 + $0xa4] sm:$0xf]
    %v66 = vld [vmem:[%s1 + $0xa8] sm:$0xf]
    %v67 = vld [vmem:[%s1 + $0xac] sm:$0xf]
    %v68 = vld [vmem:[%s1 + $0xb0] sm:$0xf]
    %v69 = vld [vmem:[%s1 + $0xb4] sm:$0xf]
    %v70 = vld [vmem:[%s1 + $0xb8] sm:$0xf]
    %v71 = vld [vmem:[%s1 + $0xbc] sm:$0xf]
    %v72 = vld [vmem:[%s1 + $0xc0] sm:$0xf]
    %v73 = vld [vmem:[%s1 + $0xc4] sm:$0xf]
    %v74 = vld [vmem:[%s1 + $0xc8] sm:$0xf]
    %v75 = vld [vmem:[%s1 + $0xcc] sm:$0xf]
    %v76 = vld [vmem:[%s1 + $0xd0] sm:$0xf]
    %v77 = vld [vmem:[%s1 + $0xd4] sm:$0xf]
    %v78 = vld [vmem:[%s1 + $0xd8] sm:$0xf]
    %v79 = vld [vmem:[%s1 + $0xdc] sm:$0xf]
    %v80 = vld [vmem:[%s1 + $0xe0] sm:$0xf]
    %v81 = vld [vmem:[%s1 + $0xe4] sm:$0xf]
    %v82 = vld [vmem:[%s1 + $0xe8] sm:$0xf]
    %v83 = vld [vmem:[%s1 + $0xec] sm:$0xf]
    %v84 = vld [vmem:[%s1 + $0xf0] sm:$0xf]
    %v85 = vld [vmem:[%s1 + $0xf4] sm:$0xf]
    %v86 = vld [vmem:[%s1 + $0xf8] sm:$0xf]
    %v87 = vld [vmem:[%s1 + $0xfc] sm:$0xf]
    %v88 = vld [vmem:[%s1 + $0x100] sm:$0xf]
    %v89 = vld [vmem:[%s1 + $0x104] sm:$0xf]
    %v90 = vld [vmem:[%s1 + $0x108] sm:$0xf]
    %v91 = vld [vmem:[%s1 + $0x10c] sm:$0xf]
    %v92 = vld [vmem:[%s1 + $0x110] sm:$0xf]
    %v93 = vld [vmem:[%s1 + $0x114] sm:$0xf]
    %v94 = vld [vmem:[%s1 + $0x118] sm:$0xf]
    %v95 = vld [vmem:[%s1 + $0x11c] sm:$0xf]
    %v96 = vld [vmem:[%s1 + $0x120] sm:$0xf]
    %v97 = vld [vmem:[%s1 + $0x124] sm:$0xf]
    %v98 = vld [vmem:[%s1 + $0x128] sm:$0xf]
    %v99 = vld [vmem:[%s1 + $0x12c] sm:$0xf]
    %v100 = vld [vmem:[%s1 + $0x130] sm:$0xf]
    %v101 = vld [vmem:[%s1 + $0x134] sm:$0xf]
    %v102 = vld [vmem:[%s1 + $0x138] sm:$0xf]
    %v103 = vld [vmem:[%s1 + $0x13c] sm:$0xf]
    %v104 = vld [vmem:[%s1 + $0x140] sm:$0xf]
    %v105 = vld [vmem:[%s1 + $0x144] sm:$0xf]
    %v106 = vld [vmem:[%s1 + $0x148] sm:$0xf]
    %v107 = vld [vmem:[%s1 + $0x14c] sm:$0xf]
    %v108 = vld [vmem:[%s1 + $0x150] sm:$0xf]
    %v109 = vld [vmem:[%s1 + $0x154] sm:$0xf]
    %v110 = vld [vmem:[%s1 + $0x158] sm:$0xf]
    %v111 = vld [vmem:[%s1 + $0x15c] sm:$0xf]
    %v112 = vld [vmem:[%s1 + $0x160] sm:$0xf]
    %v113 = vld [vmem:[%s1 + $0x164] sm:$0xf]
    %v114 = vld [vmem:[%s1 + $0x168] sm:$0xf]
    %v115 = vld [vmem:[%s1 + $0x16c] sm:$0xf]
    %v116 = vld [vmem:[%s1 + $0x170] sm:$0xf]
    %v117 = vld [vmem:[%s1 + $0x174] sm:$0xf]
    %v118 = vld [vmem:[%s1 + $0x178] sm:$0xf]
    %v119 = vld [vmem:[%s1 + $0x17c] sm:$0xf]
    %v120 = vld [vmem:[%s1 + $0x180] sm:$0xf]
    %v121 = vld [vmem:[%s1 + $0x184] sm:$0xf]
    %v122 = vld [vmem:[%s1 + $0x188] sm:$0xf]
    %v123 = vld [vmem:[%s1 + $0x18c] sm:$0xf]
    %v124 = vld [vmem:[%s1 + $0x190] sm:$0xf]
    %v125 = vld [vmem:[%s1 + $0x194] sm:$0xf]
    %v126 = vld [vmem:[%s1 + $0x198] sm:$0xf]
    %v127 = vld [vmem:[%s1 + $0x19c] sm:$0xf]
    %v128 = vld [vmem:[%s1 + $0x1a0] sm:$0xf]
    %v129 = vld [vmem:[%s1 + $0x1a4] sm:$0xf]
    %v130 = vld [vmem:[%s1 + $0x1a8] sm:$0xf]
    %v131 = vld [vmem:[%s1 + $0x1ac] sm:$0xf]
    %v132 = vld [vmem:[%s1 + $0x1b0] sm:$0xf]
    %v133 = vld [vmem:[%s1 + $0x1b4] sm:$0xf]
    %v134 = vld [vmem:[%s1 + $0x1b8] sm:$0xf]
    %v135 = vld [vmem:[%s1 + $0x1bc] sm:$0xf]
    %v136 = vld [vmem:[%s1 + $0x1c0] sm:$0xf]
    %v137 = vld [vmem:[%s1 + $0x1c4] sm:$0xf]
    %v138 = vld [vmem:[%s1 + $0x1c8] sm:$0xf]
    %v139 = vld [vmem:[%s1 + $0x1cc] sm:$0xf]
    %v140 = vld [vmem:[%s1 + $0x1d0] sm:$0xf]
    %v141 = vld [vmem:[%s1 + $0x1d4] sm:$0xf]
    %v142 = vld [vmem:[%s1 + $0x1d8] sm:$0xf]
    %v143 = vld [vmem:[%s1 + $0x1dc] sm:$0xf]
    %v144 = vld [vmem:[%s1 + $0x1e0] sm:$0xf]
    %v145 = vld [vmem:[%s1 + $0x1e4] sm:$0xf]
    %v146 = vld [vmem:[%s1 + $0x1e8] sm:$0xf]
    %v147 = vld [vmem:[%s1 + $0x1ec] sm:$0xf]
    %v148 = vld [vmem:[%s1 + $0x1f0] sm:$0xf]
    %v149 = vld [vmem:[%s1 + $0x1f4] sm:$0xf]
    %v150 = vld [vmem:[%s1 + $0x1f8] sm:$0xf]
    %v151 = vld [vmem:[%s1 + $0x1fc] sm:$0xf]
    %v152 = vld [vmem:[%s1 + $0x200] sm:$0xf]
    %v153 = vld [vmem:[%s1 + $0x204] sm:$0xf]
    %v154 = vld [vmem:[%s1 + $0x208] sm:$0xf]
    %v155 = vld [vmem:[%s1 + $0x20c] sm:$0xf]
    %v156 = vld [vmem:[%s1 + $0x210] sm:$0xf]
    %v157 = vld [vmem:[%s1 + $0x214] sm:$0xf]
    %v158 = vld [vmem:[%s1 + $0x218] sm:$0xf]
    %v159 = vld [vmem:[%s1 + $0x21c] sm:$0xf]
    %v160 = vld [vmem:[%s1 + $0x220] sm:$0xf]
    %v161 = vld [vmem:[%s1 + $0x224] sm:$0xf]
    %v162 = vld [vmem:[%s1 + $0x228] sm:$0xf]
    %v163 = vld [vmem:[%s1 + $0x22c] sm:$0xf]
    %v164 = vld [vmem:[%s1 + $0x230] sm:$0xf]
    %v165 = vld [vmem:[%s1 + $0x234] sm:$0xf]
    %v166 = vld [vmem:[%s1 + $0x238] sm:$0xf]
    %v167 = vld [vmem:[%s1 + $0x23c] sm:$0xf]
    %v168 = vld [vmem:[%s1 + $0x240] sm:$0xf]
    %v169 = vld [vmem:[%s1 + $0x244] sm:$0xf]
    %v170 = vld [vmem:[%s1 + $0x248] sm:$0xf]
    %v171 = vld [vmem:[%s1 + $0x24c] sm:$0xf]
    %v172 = vld [vmem:[%s1 + $0x250] sm:$0xf]
    %v173 = vld [vmem:[%s1 + $0x254] sm:$0xf]
    %v174 = vld [vmem:[%s1 + $0x258] sm:$0xf]
    %v175 = vld [vmem:[%s1 + $0x25c] sm:$0xf]
    %v176 = vld [vmem:[%s1 + $0x260] sm:$0xf]
    %v177 = vld [vmem:[%s1 + $0x264] sm:$0xf]
    %v178 = vld [vmem:[%s1 + $0x268] sm:$0xf]
    %v179 = vld [vmem:[%s1 + $0x26c] sm:$0xf]
    %v180 = vld [vmem:[%s1 + $0x270] sm:$0xf]
    %v181 = vld [vmem:[%s1 + $0x274] sm:$0xf]
    %v182 = vld [vmem:[%s1 + $0x278] sm:$0xf]
    %v183 = vld [vmem:[%s1 + $0x27c] sm:$0xf]
    %v184 = vld [vmem:[%s1 + $0x280] sm:$0xf]
    %v185 = vld [vmem:[%s1 + $0x284] sm:$0xf]
    %v186 = vld [vmem:[%s1 + $0x288] sm:$0xf]
    %v187 = vld [vmem:[%s1 + $0x28c] sm:$0xf]
    %v188 = vld [vmem:[%s1 + $0x290] sm:$0xf]
    %v189 = vld [vmem:[%s1 + $0x294] sm:$0xf]
    %v190 = vld [vmem:[%s1 + $0x298] sm:$0xf]
    %v191 = vld [vmem:[%s1 + $0x29c] sm:$0xf]
    %v192 = vld [vmem:[%s1 + $0x2a0] sm:$0xf]
    %v193 = vld [vmem:[%s1 + $0x2a4] sm:$0xf]
    %v194 = vld [vmem:[%s1 + $0x2a8] sm:$0xf]
    %v195 = vld [vmem:[%s1 + $0x2ac] sm:$0xf]
    %v196 = vld [vmem:[%s1 + $0x2b0] sm:$0xf]
    %v197 = vld [vmem:[%s1 + $0x2b4] sm:$0xf]
    %v198 = vld [vmem:[%s1 + $0x2b8] sm:$0xf]
    %v199 = vld [vmem:[%s1 + $0x2bc] sm:$0xf]
    %v200 = vld [vmem:[%s1 + $0x2c0] sm:$0xf]
    %v201 = vld [vmem:[%s1 + $0x2c4] sm:$0xf]
    %v202 = vld [vmem:[%s1 + $0x2c8] sm:$0xf]
    %v203 = vld [vmem:[%s1 + $0x2cc] sm:$0xf]
    %v204 = vld [vmem:[%s1 + $0x2d0] sm:$0xf]
    %v205 = vld [vmem:[%s1 + $0x2d4] sm:$0xf]
    %v206 = vld [vmem:[%s1 + $0x2d8] sm:$0xf]
    %v207 = vld [vmem:[%s1 + $0x2dc] sm:$0xf]
    %v208 = vld [vmem:[%s1 + $0x2e0] sm:$0xf]
    %v209 = vld [vmem:[%s1 + $0x2e4] sm:$0xf]
    %v210 = vld [vmem:[%s1 + $0x2e8] sm:$0xf]
    %v211 = vld [vmem:[%s1 + $0x2ec] sm:$0xf]
    %v212 = vld [vmem:[%s1 + $0x2f0] sm:$0xf]
    %v213 = vld [vmem:[%s1 + $0x2f4] sm:$0xf]
    %v214 = vld [vmem:[%s1 + $0x2f8] sm:$0xf]
    %v215 = vld [vmem:[%s1 + $0x2fc] sm:$0xf]
    %v216 = vld [vmem:[%s1 + $0x300] sm:$0xf]
    %v217 = vld [vmem:[%s1 + $0x304] sm:$0xf]
    %v218 = vld [vmem:[%s1 + $0x308] sm:$0xf]
    %v219 = vld [vmem:[%s1 + $0x30c] sm:$0xf]
    %v220 = vld [vmem:[%s1 + $0x310] sm:$0xf]
    %v221 = vld [vmem:[%s1 + $0x314] sm:$0xf]
    %v222 = vld [vmem:[%s1 + $0x318] sm:$0xf]
    %v223 = vld [vmem:[%s1 + $0x31c] sm:$0xf]
    %v224 = vld [vmem:[%s1 + $0x320] sm:$0xf]
    %v225 = vld [vmem:[%s1 + $0x324] sm:$0xf]
    %v226 = vld [vmem:[%s1 + $0x328] sm:$0xf]
    %v227 = vld [vmem:[%s1 + $0x32c] sm:$0xf]
    %v228 = vld [vmem:[%s1 + $0x330] sm:$0xf]
    %v229 = vld [vmem:[%s1 + $0x334] sm:$0xf]
    %v230 = vld [vmem:[%s1 + $0x338] sm:$0xf]
    %v231 = vld [vmem:[%s1 + $0x33c] sm:$0xf]
    %v232 = vld [vmem:[%s1 + $0x340] sm:$0xf]
    %v233 = vld [vmem:[%s1 + $0x344] sm:$0xf]
    %v234 = vld [vmem:[%s1 + $0x348] sm:$0xf]
    %v235 = vld [vmem:[%s1 + $0x34c] sm:$0xf]
    %v236 = vld [vmem:[%s1 + $0x350] sm:$0xf]
    %v237 = vld [vmem:[%s1 + $0x354] sm:$0xf]
    %v238 = vld [vmem:[%s1 + $0x358] sm:$0xf]
    %v239 = vld [vmem:[%s1 + $0x35c] sm:$0xf]
    %v240 = vld [vmem:[%s1 + $0x360] sm:$0xf]
    %v241 = vld [vmem:[%s1 + $0x364] sm:$0xf]
    %v242 = vld [vmem:[%s1 + $0x368] sm:$0xf]
    %v243 = vld [vmem:[%s1 + $0x36c] sm:$0xf]
    %v244 = vld [vmem:[%s1 + $0x370] sm:$0xf]
    %v245 = vld [vmem:[%s1 + $0x374] sm:$0xf]
    %v246 = vld [vmem:[%s1 + $0x378] sm:$0xf]
    %v247 = vld [vmem:[%s1 + $0x37c] sm:$0xf]
    %v248 = vld [vmem:[%s1 + $0x380] sm:$0xf]
    %v249 = vld [vmem:[%s1 + $0x384] sm:$0xf]
    %v250 = vld [vmem:[%s1 + $0x388] sm:$0xf]
    %v251 = vld [vmem:[%s1 + $0x38c] sm:$0xf]
    %v252 = vld [vmem:[%s1 + $0x390] sm:$0xf]
    %v253 = vld [vmem:[%s1 + $0x394] sm:$0xf]
    %v254 = vld [vmem:[%s1 + $0x398] sm:$0xf]
    %v255 = vld [vmem:[%s1 + $0x39c] sm:$0xf]
    %v256 = vld [vmem:[%s1 + $0x3a0] sm:$0xf]
    %v257 = vld [vmem:[%s1 + $0x3a4] sm:$0xf]
    %v258 = vld [vmem:[%s1 + $0x3a8] sm:$0xf]
    %v259 = vld [vmem:[%s1 + $0x3ac] sm:$0xf]
    %v260 = vld [vmem:[%s1 + $0x3b0] sm:$0xf]
    %v261 = vld [vmem:[%s1 + $0x3b4] sm:$0xf]
    %v262 = vld [vmem:[%s1 + $0x3b8] sm:$0xf]
    %v263 = vld [vmem:[%s1 + $0x3bc] sm:$0xf]
    %v264 = vld [vmem:[%s1 + $0x3c0] sm:$0xf]
    %v265 = vld [vmem:[%s1 + $0x3c4] sm:$0xf]
    %v266 = vld [vmem:[%s1 + $0x3c8] sm:$0xf]
    %v267 = vld [vmem:[%s1 + $0x3cc] sm:$0xf]
    %v268 = vld [vmem:[%s1 + $0x3d0] sm:$0xf]
    %v269 = vld [vmem:[%s1 + $0x3d4] sm:$0xf]
    %v270 = vld [vmem:[%s1 + $0x3d8] sm:$0xf]
    %v271 = vld [vmem:[%s1 + $0x3dc] sm:$0xf]
    %v272 = vld [vmem:[%s1 + $0x3e0] sm:$0xf]
    %v273 = vld [vmem:[%s1 + $0x3e4] sm:$0xf]
    %v274 = vld [vmem:[%s1 + $0x3e8] sm:$0xf]
    %v275 = vld [vmem:[%s1 + $0x3ec] sm:$0xf]
    %v276 = vld [vmem:[%s1 + $0x3f0] sm:$0xf]
    %v277 = vld [vmem:[%s1 + $0x3f4] sm:$0xf]
    %v278 = vld [vmem:[%s1 + $0x3f8] sm:$0xf]
    %v279 = vld [vmem:[%s1 + $0x3fc] sm:$0xf]
    %v282 = vcombine.high %v22, %v22
    %v284 = vunpack.c.l.s4 1966171168
    %v285 = vunpack.c.0.s8 %v284
    %v286 = vlaneseq
    %v287 = vshrl.u32 %v286, 7
    %v288 = vsub.s32 %v285, %v287
    %v289 = vrot.slane %v22, %v288
    %v291 = vunpack.c.l.s4 1966171168
    %v292 = vunpack.c.0.s8 %v291
    %v293 = vlaneseq
    %v294 = vshrl.u32 %v293, 7
    %v295 = vsub.s32 %v292, %v294
    %v296 = vrot.slane %v282, %v295
    %v297 = vcombine.high %v289, %v289
    %v298 = vcombine.high %v296, %v296
    %v300 = vunpack.c.l.s4 1966171168
    %v301 = vunpack.c.0.s8 %v300
    %v302 = vlaneseq
    %v303 = vshrl.u32 %v302, 7
    %v304 = vsub.s32 %v301, %v303
    %v305 = vrot.slane %v289, %v304
    %v307 = vunpack.c.l.s4 1966171168
    %v308 = vunpack.c.0.s8 %v307
    %v309 = vlaneseq
    %v310 = vshrl.u32 %v309, 7
    %v311 = vsub.s32 %v308, %v310
    %v312 = vrot.slane %v296, %v311
    %v314 = vunpack.c.l.s4 1966171168
    %v315 = vunpack.c.0.s8 %v314
    %v316 = vlaneseq
    %v317 = vshrl.u32 %v316, 7
    %v318 = vsub.s32 %v315, %v317
    %v319 = vrot.slane %v297, %v318
    %v321 = vunpack.c.l.s4 1966171168
    %v322 = vunpack.c.0.s8 %v321
    %v323 = vlaneseq
    %v324 = vshrl.u32 %v323, 7
    %v325 = vsub.s32 %v322, %v324
    %v326 = vrot.slane %v298, %v325
    %v327 = vcombine.high %v305, %v305
    %v328 = vcombine.high %v312, %v312
    %v329 = vcombine.high %v319, %v319
    %v330 = vcombine.high %v326, %v326
    %v331 = vcombine.high %v23, %v23
    %v333 = vunpack.c.l.s4 1966171168
    %v334 = vunpack.c.0.s8 %v333
    %v335 = vlaneseq
    %v336 = vshrl.u32 %v335, 7
    %v337 = vsub.s32 %v334, %v336
    %v338 = vrot.slane %v23, %v337
    %v340 = vunpack.c.l.s4 1966171168
    %v341 = vunpack.c.0.s8 %v340
    %v342 = vlaneseq
    %v343 = vshrl.u32 %v342, 7
    %v344 = vsub.s32 %v341, %v343
    %v345 = vrot.slane %v331, %v344
    %v346 = vcombine.high %v338, %v338
    %v347 = vcombine.high %v345, %v345
    %v349 = vunpack.c.l.s4 1966171168
    %v350 = vunpack.c.0.s8 %v349
    %v351 = vlaneseq
    %v352 = vshrl.u32 %v351, 7
    %v353 = vsub.s32 %v350, %v352
    %v354 = vrot.slane %v338, %v353
    %v356 = vunpack.c.l.s4 1966171168
    %v357 = vunpack.c.0.s8 %v356
    %v358 = vlaneseq
    %v359 = vshrl.u32 %v358, 7
    %v360 = vsub.s32 %v357, %v359
    %v361 = vrot.slane %v345, %v360
    %v363 = vunpack.c.l.s4 1966171168
    %v364 = vunpack.c.0.s8 %v363
    %v365 = vlaneseq
    %v366 = vshrl.u32 %v365, 7
    %v367 = vsub.s32 %v364, %v366
    %v368 = vrot.slane %v346, %v367
    %v370 = vunpack.c.l.s4 1966171168
    %v371 = vunpack.c.0.s8 %v370
    %v372 = vlaneseq
    %v373 = vshrl.u32 %v372, 7
    %v374 = vsub.s32 %v371, %v373
    %v375 = vrot.slane %v347, %v374
    %v376 = vcombine.high %v354, %v354
    %v377 = vcombine.high %v361, %v361
    %v378 = vcombine.high %v368, %v368
    %v379 = vcombine.high %v375, %v375
    %v652 = vunpack.c.l.b16 %v24
    %v653 = vunpack.c.l.b16 %v25
    %v654 = vunpack.c.l.b16 %v26
    %v655 = vunpack.c.l.b16 %v27
    %v656 = vunpack.c.l.b16 %v28
    %v657 = vunpack.c.l.b16 %v29
    %v658 = vunpack.c.l.b16 %v30
    %v659 = vunpack.c.l.b16 %v31
    %v660 = vunpack.c.l.b16 %v32
    %v661 = vunpack.c.l.b16 %v33
    %v662 = vunpack.c.l.b16 %v34
    %v663 = vunpack.c.l.b16 %v35
    %v664 = vunpack.c.l.b16 %v36
    %v665 = vunpack.c.l.b16 %v37
    %v666 = vunpack.c.l.b16 %v38
    %v667 = vunpack.c.l.b16 %v39
    %v668 = vunpack.c.l.b16 %v40
    %v669 = vunpack.c.l.b16 %v41
    %v670 = vunpack.c.l.b16 %v42
    %v671 = vunpack.c.l.b16 %v43
    %v672 = vunpack.c.l.b16 %v44
    %v673 = vunpack.c.l.b16 %v45
    %v674 = vunpack.c.l.b16 %v46
    %v675 = vunpack.c.l.b16 %v47
    %v676 = vunpack.c.l.b16 %v48
    %v677 = vunpack.c.l.b16 %v49
    %v678 = vunpack.c.l.b16 %v50
    %v679 = vunpack.c.l.b16 %v51
    %v680 = vunpack.c.l.b16 %v52
    %v681 = vunpack.c.l.b16 %v53
    %v682 = vunpack.c.l.b16 %v54
    %v683 = vunpack.c.l.b16 %v55
    %v684 = vunpack.c.l.b16 %v56
    %v685 = vunpack.c.l.b16 %v57
    %v686 = vunpack.c.l.b16 %v58
    %v687 = vunpack.c.l.b16 %v59
    %v688 = vunpack.c.l.b16 %v60
    %v689 = vunpack.c.l.b16 %v61
    %v690 = vunpack.c.l.b16 %v62
    %v691 = vunpack.c.l.b16 %v63
    %v692 = vunpack.c.l.b16 %v64
    %v693 = vunpack.c.l.b16 %v65
    %v694 = vunpack.c.l.b16 %v66
    %v695 = vunpack.c.l.b16 %v67
    %v696 = vunpack.c.l.b16 %v68
    %v697 = vunpack.c.l.b16 %v69
    %v698 = vunpack.c.l.b16 %v70
    %v699 = vunpack.c.l.b16 %v71
    %v700 = vunpack.c.l.b16 %v72
    %v701 = vunpack.c.l.b16 %v73
    %v702 = vunpack.c.l.b16 %v74
    %v703 = vunpack.c.l.b16 %v75
    %v704 = vunpack.c.l.b16 %v76
    %v705 = vunpack.c.l.b16 %v77
    %v706 = vunpack.c.l.b16 %v78
    %v707 = vunpack.c.l.b16 %v79
    %v708 = vunpack.c.l.b16 %v80
    %v709 = vunpack.c.l.b16 %v81
    %v710 = vunpack.c.l.b16 %v82
    %v711 = vunpack.c.l.b16 %v83
    %v712 = vunpack.c.l.b16 %v84
    %v713 = vunpack.c.l.b16 %v85
    %v714 = vunpack.c.l.b16 %v86
    %v715 = vunpack.c.l.b16 %v87
    %v716 = vunpack.c.l.b16 %v88
    %v717 = vunpack.c.l.b16 %v89
    %v718 = vunpack.c.l.b16 %v90
    %v719 = vunpack.c.l.b16 %v91
    %v720 = vunpack.c.l.b16 %v92
    %v721 = vunpack.c.l.b16 %v93
    %v722 = vunpack.c.l.b16 %v94
    %v723 = vunpack.c.l.b16 %v95
    %v724 = vunpack.c.l.b16 %v96
    %v725 = vunpack.c.l.b16 %v97
    %v726 = vunpack.c.l.b16 %v98
    %v727 = vunpack.c.l.b16 %v99
    %v728 = vunpack.c.l.b16 %v100
    %v729 = vunpack.c.l.b16 %v101
    %v730 = vunpack.c.l.b16 %v102
    %v731 = vunpack.c.l.b16 %v103
    %v732 = vunpack.c.l.b16 %v104
    %v733 = vunpack.c.l.b16 %v105
    %v734 = vunpack.c.l.b16 %v106
    %v735 = vunpack.c.l.b16 %v107
    %v736 = vunpack.c.l.b16 %v108
    %v737 = vunpack.c.l.b16 %v109
    %v738 = vunpack.c.l.b16 %v110
    %v739 = vunpack.c.l.b16 %v111
    %v740 = vunpack.c.l.b16 %v112
    %v741 = vunpack.c.l.b16 %v113
    %v742 = vunpack.c.l.b16 %v114
    %v743 = vunpack.c.l.b16 %v115
    %v744 = vunpack.c.l.b16 %v116
    %v745 = vunpack.c.l.b16 %v117
    %v746 = vunpack.c.l.b16 %v118
    %v747 = vunpack.c.l.b16 %v119
    %v748 = vunpack.c.l.b16 %v120
    %v749 = vunpack.c.l.b16 %v121
    %v750 = vunpack.c.l.b16 %v122
    %v751 = vunpack.c.l.b16 %v123
    %v752 = vunpack.c.l.b16 %v124
    %v753 = vunpack.c.l.b16 %v125
    %v754 = vunpack.c.l.b16 %v126
    %v755 = vunpack.c.l.b16 %v127
    %v756 = vunpack.c.l.b16 %v128
    %v757 = vunpack.c.l.b16 %v129
    %v758 = vunpack.c.l.b16 %v130
    %v759 = vunpack.c.l.b16 %v131
    %v760 = vunpack.c.l.b16 %v132
    %v761 = vunpack.c.l.b16 %v133
    %v762 = vunpack.c.l.b16 %v134
    %v763 = vunpack.c.l.b16 %v135
    %v764 = vunpack.c.l.b16 %v136
    %v765 = vunpack.c.l.b16 %v137
    %v766 = vunpack.c.l.b16 %v138
    %v767 = vunpack.c.l.b16 %v139
    %v768 = vunpack.c.l.b16 %v140
    %v769 = vunpack.c.l.b16 %v141
    %v770 = vunpack.c.l.b16 %v142
    %v771 = vunpack.c.l.b16 %v143
    %v772 = vunpack.c.l.b16 %v144
    %v773 = vunpack.c.l.b16 %v145
    %v774 = vunpack.c.l.b16 %v146
    %v775 = vunpack.c.l.b16 %v147
    %v776 = vunpack.c.l.b16 %v148
    %v777 = vunpack.c.l.b16 %v149
    %v778 = vunpack.c.l.b16 %v150
    %v779 = vunpack.c.l.b16 %v151
    %v780 = vunpack.c.l.b16 %v152
    %v781 = vunpack.c.l.b16 %v153
    %v782 = vunpack.c.l.b16 %v154
    %v783 = vunpack.c.l.b16 %v155
    %v784 = vunpack.c.l.b16 %v156
    %v785 = vunpack.c.l.b16 %v157
    %v786 = vunpack.c.l.b16 %v158
    %v787 = vunpack.c.l.b16 %v159
    %v788 = vunpack.c.l.b16 %v160
    %v789 = vunpack.c.l.b16 %v161
    %v790 = vunpack.c.l.b16 %v162
    %v791 = vunpack.c.l.b16 %v163
    %v792 = vunpack.c.l.b16 %v164
    %v793 = vunpack.c.l.b16 %v165
    %v794 = vunpack.c.l.b16 %v166
    %v795 = vunpack.c.l.b16 %v167
    %v796 = vunpack.c.l.b16 %v168
    %v797 = vunpack.c.l.b16 %v169
    %v798 = vunpack.c.l.b16 %v170
    %v799 = vunpack.c.l.b16 %v171
    %v800 = vunpack.c.l.b16 %v172
    %v801 = vunpack.c.l.b16 %v173
    %v802 = vunpack.c.l.b16 %v174
    %v803 = vunpack.c.l.b16 %v175
    %v804 = vunpack.c.l.b16 %v176
    %v805 = vunpack.c.l.b16 %v177
    %v806 = vunpack.c.l.b16 %v178
    %v807 = vunpack.c.l.b16 %v179
    %v808 = vunpack.c.l.b16 %v180
    %v809 = vunpack.c.l.b16 %v181
    %v810 = vunpack.c.l.b16 %v182
    %v811 = vunpack.c.l.b16 %v183
    %v812 = vunpack.c.l.b16 %v184
    %v813 = vunpack.c.l.b16 %v185
    %v814 = vunpack.c.l.b16 %v186
    %v815 = vunpack.c.l.b16 %v187
    %v816 = vunpack.c.l.b16 %v188
    %v817 = vunpack.c.l.b16 %v189
    %v818 = vunpack.c.l.b16 %v190
    %v819 = vunpack.c.l.b16 %v191
    %v820 = vunpack.c.l.b16 %v192
    %v821 = vunpack.c.l.b16 %v193
    %v822 = vunpack.c.l.b16 %v194
    %v823 = vunpack.c.l.b16 %v195
    %v824 = vunpack.c.l.b16 %v196
    %v825 = vunpack.c.l.b16 %v197
    %v826 = vunpack.c.l.b16 %v198
    %v827 = vunpack.c.l.b16 %v199
    %v828 = vunpack.c.l.b16 %v200
    %v829 = vunpack.c.l.b16 %v201
    %v830 = vunpack.c.l.b16 %v202
    %v831 = vunpack.c.l.b16 %v203
    %v832 = vunpack.c.l.b16 %v204
    %v833 = vunpack.c.l.b16 %v205
    %v834 = vunpack.c.l.b16 %v206
    %v835 = vunpack.c.l.b16 %v207
    %v836 = vunpack.c.l.b16 %v208
    %v837 = vunpack.c.l.b16 %v209
    %v838 = vunpack.c.l.b16 %v210
    %v839 = vunpack.c.l.b16 %v211
    %v840 = vunpack.c.l.b16 %v212
    %v841 = vunpack.c.l.b16 %v213
    %v842 = vunpack.c.l.b16 %v214
    %v843 = vunpack.c.l.b16 %v215
    %v844 = vunpack.c.l.b16 %v216
    %v845 = vunpack.c.l.b16 %v217
    %v846 = vunpack.c.l.b16 %v218
    %v847 = vunpack.c.l.b16 %v219
    %v848 = vunpack.c.l.b16 %v220
    %v849 = vunpack.c.l.b16 %v221
    %v850 = vunpack.c.l.b16 %v222
    %v851 = vunpack.c.l.b16 %v223
    %v852 = vunpack.c.l.b16 %v224
    %v853 = vunpack.c.l.b16 %v225
    %v854 = vunpack.c.l.b16 %v226
    %v855 = vunpack.c.l.b16 %v227
    %v856 = vunpack.c.l.b16 %v228
    %v857 = vunpack.c.l.b16 %v229
    %v858 = vunpack.c.l.b16 %v230
    %v859 = vunpack.c.l.b16 %v231
    %v860 = vunpack.c.l.b16 %v232
    %v861 = vunpack.c.l.b16 %v233
    %v862 = vunpack.c.l.b16 %v234
    %v863 = vunpack.c.l.b16 %v235
    %v864 = vunpack.c.l.b16 %v236
    %v865 = vunpack.c.l.b16 %v237
    %v866 = vunpack.c.l.b16 %v238
    %v867 = vunpack.c.l.b16 %v239
    %v868 = vunpack.c.l.b16 %v240
    %v869 = vunpack.c.l.b16 %v241
    %v870 = vunpack.c.l.b16 %v242
    %v871 = vunpack.c.l.b16 %v243
    %v872 = vunpack.c.l.b16 %v244
    %v873 = vunpack.c.l.b16 %v245
    %v874 = vunpack.c.l.b16 %v246
    %v875 = vunpack.c.l.b16 %v247
    %v876 = vunpack.c.l.b16 %v248
    %v877 = vunpack.c.l.b16 %v249
    %v878 = vunpack.c.l.b16 %v250
    %v879 = vunpack.c.l.b16 %v251
    %v880 = vunpack.c.l.b16 %v252
    %v881 = vunpack.c.l.b16 %v253
    %v882 = vunpack.c.l.b16 %v254
    %v883 = vunpack.c.l.b16 %v255
    %v884 = vunpack.c.l.b16 %v256
    %v885 = vunpack.c.l.b16 %v257
    %v886 = vunpack.c.l.b16 %v258
    %v887 = vunpack.c.l.b16 %v259
    %v888 = vunpack.c.l.b16 %v260
    %v889 = vunpack.c.l.b16 %v261
    %v890 = vunpack.c.l.b16 %v262
    %v891 = vunpack.c.l.b16 %v263
    %v892 = vunpack.c.l.b16 %v264
    %v893 = vunpack.c.l.b16 %v265
    %v894 = vunpack.c.l.b16 %v266
    %v895 = vunpack.c.l.b16 %v267
    %v896 = vunpack.c.l.b16 %v268
    %v897 = vunpack.c.l.b16 %v269
    %v898 = vunpack.c.l.b16 %v270
    %v899 = vunpack.c.l.b16 %v271
    %v900 = vunpack.c.l.b16 %v272
    %v901 = vunpack.c.l.b16 %v273
    %v902 = vunpack.c.l.b16 %v274
    %v903 = vunpack.c.l.b16 %v275
    %v904 = vunpack.c.l.b16 %v276
    %v905 = vunpack.c.l.b16 %v277
    %v906 = vunpack.c.l.b16 %v278
    %v907 = vunpack.c.l.b16 %v279
    %v908 = vpack.c.b16 %v653, %v652
    %v909 = vpack.c.b16 %v655, %v654
    %v910 = vpack.c.b16 %v657, %v656
    %v911 = vpack.c.b16 %v659, %v658
    %v912 = vpack.c.b16 %v661, %v660
    %v913 = vpack.c.b16 %v663, %v662
    %v914 = vpack.c.b16 %v665, %v664
    %v915 = vpack.c.b16 %v667, %v666
    %v916 = vpack.c.b16 %v669, %v668
    %v917 = vpack.c.b16 %v671, %v670
    %v918 = vpack.c.b16 %v673, %v672
    %v919 = vpack.c.b16 %v675, %v674
    %v920 = vpack.c.b16 %v677, %v676
    %v921 = vpack.c.b16 %v679, %v678
    %v922 = vpack.c.b16 %v681, %v680
    %v923 = vpack.c.b16 %v683, %v682
    %v924 = vpack.c.b16 %v685, %v684
    %v925 = vpack.c.b16 %v687, %v686
    %v926 = vpack.c.b16 %v689, %v688
    %v927 = vpack.c.b16 %v691, %v690
    %v928 = vpack.c.b16 %v693, %v692
    %v929 = vpack.c.b16 %v695, %v694
    %v930 = vpack.c.b16 %v697, %v696
    %v931 = vpack.c.b16 %v699, %v698
    %v932 = vpack.c.b16 %v701, %v700
    %v933 = vpack.c.b16 %v703, %v702
    %v934 = vpack.c.b16 %v705, %v704
    %v935 = vpack.c.b16 %v707, %v706
    %v936 = vpack.c.b16 %v709, %v708
    %v937 = vpack.c.b16 %v711, %v710
    %v938 = vpack.c.b16 %v713, %v712
    %v939 = vpack.c.b16 %v715, %v714
    %v940 = vpack.c.b16 %v717, %v716
    %v941 = vpack.c.b16 %v719, %v718
    %v942 = vpack.c.b16 %v721, %v720
    %v943 = vpack.c.b16 %v723, %v722
    %v944 = vpack.c.b16 %v725, %v724
    %v945 = vpack.c.b16 %v727, %v726
    %v946 = vpack.c.b16 %v729, %v728
    %v947 = vpack.c.b16 %v731, %v730
    %v948 = vpack.c.b16 %v733, %v732
    %v949 = vpack.c.b16 %v735, %v734
    %v950 = vpack.c.b16 %v737, %v736
    %v951 = vpack.c.b16 %v739, %v738
    %v952 = vpack.c.b16 %v741, %v740
    %v953 = vpack.c.b16 %v743, %v742
    %v954 = vpack.c.b16 %v745, %v744
    %v955 = vpack.c.b16 %v747, %v746
    %v956 = vpack.c.b16 %v749, %v748
    %v957 = vpack.c.b16 %v751, %v750
    %v958 = vpack.c.b16 %v753, %v752
    %v959 = vpack.c.b16 %v755, %v754
    %v960 = vpack.c.b16 %v757, %v756
    %v961 = vpack.c.b16 %v759, %v758
    %v962 = vpack.c.b16 %v761, %v760
    %v963 = vpack.c.b16 %v763, %v762
    %v964 = vpack.c.b16 %v765, %v764
    %v965 = vpack.c.b16 %v767, %v766
    %v966 = vpack.c.b16 %v769, %v768
    %v967 = vpack.c.b16 %v771, %v770
    %v968 = vpack.c.b16 %v773, %v772
    %v969 = vpack.c.b16 %v775, %v774
    %v970 = vpack.c.b16 %v777, %v776
    %v971 = vpack.c.b16 %v779, %v778
    %v972 = vpack.c.b16 %v781, %v780
    %v973 = vpack.c.b16 %v783, %v782
    %v974 = vpack.c.b16 %v785, %v784
    %v975 = vpack.c.b16 %v787, %v786
    %v976 = vpack.c.b16 %v789, %v788
    %v977 = vpack.c.b16 %v791, %v790
    %v978 = vpack.c.b16 %v793, %v792
    %v979 = vpack.c.b16 %v795, %v794
    %v980 = vpack.c.b16 %v797, %v796
    %v981 = vpack.c.b16 %v799, %v798
    %v982 = vpack.c.b16 %v801, %v800
    %v983 = vpack.c.b16 %v803, %v802
    %v984 = vpack.c.b16 %v805, %v804
    %v985 = vpack.c.b16 %v807, %v806
    %v986 = vpack.c.b16 %v809, %v808
    %v987 = vpack.c.b16 %v811, %v810
    %v988 = vpack.c.b16 %v813, %v812
    %v989 = vpack.c.b16 %v815, %v814
    %v990 = vpack.c.b16 %v817, %v816
    %v991 = vpack.c.b16 %v819, %v818
    %v992 = vpack.c.b16 %v821, %v820
    %v993 = vpack.c.b16 %v823, %v822
    %v994 = vpack.c.b16 %v825, %v824
    %v995 = vpack.c.b16 %v827, %v826
    %v996 = vpack.c.b16 %v829, %v828
    %v997 = vpack.c.b16 %v831, %v830
    %v998 = vpack.c.b16 %v833, %v832
    %v999 = vpack.c.b16 %v835, %v834
    %v1000 = vpack.c.b16 %v837, %v836
    %v1001 = vpack.c.b16 %v839, %v838
    %v1002 = vpack.c.b16 %v841, %v840
    %v1003 = vpack.c.b16 %v843, %v842
    %v1004 = vpack.c.b16 %v845, %v844
    %v1005 = vpack.c.b16 %v847, %v846
    %v1006 = vpack.c.b16 %v849, %v848
    %v1007 = vpack.c.b16 %v851, %v850
    %v1008 = vpack.c.b16 %v853, %v852
    %v1009 = vpack.c.b16 %v855, %v854
    %v1010 = vpack.c.b16 %v857, %v856
    %v1011 = vpack.c.b16 %v859, %v858
    %v1012 = vpack.c.b16 %v861, %v860
    %v1013 = vpack.c.b16 %v863, %v862
    %v1014 = vpack.c.b16 %v865, %v864
    %v1015 = vpack.c.b16 %v867, %v866
    %v1016 = vpack.c.b16 %v869, %v868
    %v1017 = vpack.c.b16 %v871, %v870
    %v1018 = vpack.c.b16 %v873, %v872
    %v1019 = vpack.c.b16 %v875, %v874
    %v1020 = vpack.c.b16 %v877, %v876
    %v1021 = vpack.c.b16 %v879, %v878
    %v1022 = vpack.c.b16 %v881, %v880
    %v1023 = vpack.c.b16 %v883, %v882
    %v1024 = vpack.c.b16 %v885, %v884
    %v1025 = vpack.c.b16 %v887, %v886
    %v1026 = vpack.c.b16 %v889, %v888
    %v1027 = vpack.c.b16 %v891, %v890
    %v1028 = vpack.c.b16 %v893, %v892
    %v1029 = vpack.c.b16 %v895, %v894
    %v1030 = vpack.c.b16 %v897, %v896
    %v1031 = vpack.c.b16 %v899, %v898
    %v1032 = vpack.c.b16 %v901, %v900
    %v1033 = vpack.c.b16 %v903, %v902
    %v1034 = vpack.c.b16 %v905, %v904
    %v1035 = vpack.c.b16 %v907, %v906
    %1164 = vmatprep.subr.bf16.mxu0 0
    %1165 = vmatpush1.bf16.msra.mxu0 %v908
    %1166 = vmatprep.subr.bf16.mxu0 0
    %1167 = vmatpush1.bf16.msra.mxu0 %v909
    %1168 = vmatprep.subr.bf16.mxu0 0
    %1169 = vmatpush1.bf16.msra.mxu0 %v910
    %1170 = vmatprep.subr.bf16.mxu0 0
    %1171 = vmatpush1.bf16.msra.mxu0 %v911
    %1172 = vmatprep.subr.bf16.mxu0 0
    %1173 = vmatpush1.bf16.msra.mxu0 %v912
    %1174 = vmatprep.subr.bf16.mxu0 0
    %1175 = vmatpush1.bf16.msra.mxu0 %v913
    %1176 = vmatprep.subr.bf16.mxu0 0
    %1177 = vmatpush1.bf16.msra.mxu0 %v914
    %1178 = vmatprep.subr.bf16.mxu0 0
    %1179 = vmatpush1.bf16.msra.mxu0 %v915
    %1180 = vmatprep.subr.bf16.mxu0 0
    %1181 = vmatpush1.bf16.msra.mxu0 %v916
    %1182 = vmatprep.subr.bf16.mxu0 0
    %1183 = vmatpush1.bf16.msra.mxu0 %v917
    %1184 = vmatprep.subr.bf16.mxu0 0
    %1185 = vmatpush1.bf16.msra.mxu0 %v918
    %1186 = vmatprep.subr.bf16.mxu0 0
    %1187 = vmatpush1.bf16.msra.mxu0 %v919
    %1188 = vmatprep.subr.bf16.mxu0 0
    %1189 = vmatpush1.bf16.msra.mxu0 %v920
    %1190 = vmatprep.subr.bf16.mxu0 0
    %1191 = vmatpush1.bf16.msra.mxu0 %v921
    %1192 = vmatprep.subr.bf16.mxu0 0
    %1193 = vmatpush1.bf16.msra.mxu0 %v922
    %1194 = vmatprep.subr.bf16.mxu0 0
    %1195 = vmatpush1.bf16.msra.mxu0 %v923
    %1196 = vmatprep.mubr.bf16.mxu0 %v319
    %1197 = vmatmul.mubr.bf16.gmra.mrb[0].mxu0 %v305
    %v1198 = vpop.f32.mrb[0].mxu0
    %v1199 = vadd.f32 0.0, %v1198
    %v1200 = vpop.f32.mrb[0].mxu0
    %v1201 = vpop.f32.mrb[0].mxu0
    %v1202 = vpop.f32.mrb[0].mxu0
    %1203 = vdwg.mxu0
    %1204 = vmatprep.subr.bf16.mxu0 0
    %1205 = vmatpush1.bf16.msra.mxu0 %v924
    %1206 = vmatprep.subr.bf16.mxu0 0
    %1207 = vmatpush1.bf16.msra.mxu0 %v925
    %1208 = vmatprep.subr.bf16.mxu0 0
    %1209 = vmatpush1.bf16.msra.mxu0 %v926
    %1210 = vmatprep.subr.bf16.mxu0 0
    %1211 = vmatpush1.bf16.msra.mxu0 %v927
    %1212 = vmatprep.subr.bf16.mxu0 0
    %1213 = vmatpush1.bf16.msra.mxu0 %v928
    %1214 = vmatprep.subr.bf16.mxu0 0
    %1215 = vmatpush1.bf16.msra.mxu0 %v929
    %1216 = vmatprep.subr.bf16.mxu0 0
    %1217 = vmatpush1.bf16.msra.mxu0 %v930
    %1218 = vmatprep.subr.bf16.mxu0 0
    %1219 = vmatpush1.bf16.msra.mxu0 %v931
    %1220 = vmatprep.subr.bf16.mxu0 0
    %1221 = vmatpush1.bf16.msra.mxu0 %v932
    %1222 = vmatprep.subr.bf16.mxu0 0
    %1223 = vmatpush1.bf16.msra.mxu0 %v933
    %1224 = vmatprep.subr.bf16.mxu0 0
    %1225 = vmatpush1.bf16.msra.mxu0 %v934
    %1226 = vmatprep.subr.bf16.mxu0 0
    %1227 = vmatpush1.bf16.msra.mxu0 %v935
    %1228 = vmatprep.subr.bf16.mxu0 0
    %1229 = vmatpush1.bf16.msra.mxu0 %v936
    %1230 = vmatprep.subr.bf16.mxu0 0
    %1231 = vmatpush1.bf16.msra.mxu0 %v937
    %1232 = vmatprep.subr.bf16.mxu0 0
    %1233 = vmatpush1.bf16.msra.mxu0 %v938
    %1234 = vmatprep.subr.bf16.mxu0 0
    %1235 = vmatpush1.bf16.msra.mxu0 %v939
    %1236 = vmatprep.mubr.bf16.mxu0 %v329
    %1237 = vmatmul.mubr.bf16.gmra.mrb[0].mxu0 %v327
    %v1238 = vpop.f32.mrb[0].mxu0
    %v1239 = vadd.f32 %v1199, %v1238
    %v1240 = vpop.f32.mrb[0].mxu0
    %v1241 = vpop.f32.mrb[0].mxu0
    %v1242 = vpop.f32.mrb[0].mxu0
    %1243 = vdwg.mxu0
    %1244 = vmatprep.subr.bf16.mxu0 0
    %1245 = vmatpush1.bf16.msra.mxu0 %v940
    %1246 = vmatprep.subr.bf16.mxu0 0
    %1247 = vmatpush1.bf16.msra.mxu0 %v941
    %1248 = vmatprep.subr.bf16.mxu0 0
    %1249 = vmatpush1.bf16.msra.mxu0 %v942
    %1250 = vmatprep.subr.bf16.mxu0 0
    %1251 = vmatpush1.bf16.msra.mxu0 %v943
    %1252 = vmatprep.subr.bf16.mxu0 0
    %1253 = vmatpush1.bf16.msra.mxu0 %v944
    %1254 = vmatprep.subr.bf16.mxu0 0
    %1255 = vmatpush1.bf16.msra.mxu0 %v945
    %1256 = vmatprep.subr.bf16.mxu0 0
    %1257 = vmatpush1.bf16.msra.mxu0 %v946
    %1258 = vmatprep.subr.bf16.mxu0 0
    %1259 = vmatpush1.bf16.msra.mxu0 %v947
    %1260 = vmatprep.subr.bf16.mxu0 0
    %1261 = vmatpush1.bf16.msra.mxu0 %v948
    %1262 = vmatprep.subr.bf16.mxu0 0
    %1263 = vmatpush1.bf16.msra.mxu0 %v949
    %1264 = vmatprep.subr.bf16.mxu0 0
    %1265 = vmatpush1.bf16.msra.mxu0 %v950
    %1266 = vmatprep.subr.bf16.mxu0 0
    %1267 = vmatpush1.bf16.msra.mxu0 %v951
    %1268 = vmatprep.subr.bf16.mxu0 0
    %1269 = vmatpush1.bf16.msra.mxu0 %v952
    %1270 = vmatprep.subr.bf16.mxu0 0
    %1271 = vmatpush1.bf16.msra.mxu0 %v953
    %1272 = vmatprep.subr.bf16.mxu0 0
    %1273 = vmatpush1.bf16.msra.mxu0 %v954
    %1274 = vmatprep.subr.bf16.mxu0 0
    %1275 = vmatpush1.bf16.msra.mxu0 %v955
    %1276 = vmatprep.mubr.bf16.mxu0 %v326
    %1277 = vmatmul.mubr.bf16.gmra.mrb[0].mxu0 %v312
    %v1278 = vpop.f32.mrb[0].mxu0
    %v1279 = vadd.f32 %v1239, %v1278
    %v1280 = vpop.f32.mrb[0].mxu0
    %v1281 = vpop.f32.mrb[0].mxu0
    %v1282 = vpop.f32.mrb[0].mxu0
    %1283 = vdwg.mxu0
    %1284 = vmatprep.subr.bf16.mxu0 0
    %1285 = vmatpush1.bf16.msra.mxu0 %v956
    %1286 = vmatprep.subr.bf16.mxu0 0
    %1287 = vmatpush1.bf16.msra.mxu0 %v957
    %1288 = vmatprep.subr.bf16.mxu0 0
    %1289 = vmatpush1.bf16.msra.mxu0 %v958
    %1290 = vmatprep.subr.bf16.mxu0 0
    %1291 = vmatpush1.bf16.msra.mxu0 %v959
    %1292 = vmatprep.subr.bf16.mxu0 0
    %1293 = vmatpush1.bf16.msra.mxu0 %v960
    %1294 = vmatprep.subr.bf16.mxu0 0
    %1295 = vmatpush1.bf16.msra.mxu0 %v961
    %1296 = vmatprep.subr.bf16.mxu0 0
    %1297 = vmatpush1.bf16.msra.mxu0 %v962
    %1298 = vmatprep.subr.bf16.mxu0 0
    %1299 = vmatpush1.bf16.msra.mxu0 %v963
    %1300 = vmatprep.subr.bf16.mxu0 0
    %1301 = vmatpush1.bf16.msra.mxu0 %v964
    %1302 = vmatprep.subr.bf16.mxu0 0
    %1303 = vmatpush1.bf16.msra.mxu0 %v965
    %1304 = vmatprep.subr.bf16.mxu0 0
    %1305 = vmatpush1.bf16.msra.mxu0 %v966
    %1306 = vmatprep.subr.bf16.mxu0 0
    %1307 = vmatpush1.bf16.msra.mxu0 %v967
    %1308 = vmatprep.subr.bf16.mxu0 0
    %1309 = vmatpush1.bf16.msra.mxu0 %v968
    %1310 = vmatprep.subr.bf16.mxu0 0
    %1311 = vmatpush1.bf16.msra.mxu0 %v969
    %1312 = vmatprep.subr.bf16.mxu0 0
    %1313 = vmatpush1.bf16.msra.mxu0 %v970
    %1314 = vmatprep.subr.bf16.mxu0 0
    %1315 = vmatpush1.bf16.msra.mxu0 %v971
    %1316 = vmatprep.mubr.bf16.mxu0 %v330
    %1317 = vmatmul.mubr.bf16.gmra.mrb[0].mxu0 %v328
    %v1318 = vpop.f32.mrb[0].mxu0
    %v1319 = vadd.f32 %v1279, %v1318
    %v1320 = vpop.f32.mrb[0].mxu0
    %v1321 = vpop.f32.mrb[0].mxu0
    %v1322 = vpop.f32.mrb[0].mxu0
    %1323 = vdwg.mxu0
    %1324 = vmatprep.subr.bf16.mxu0 0
    %1325 = vmatpush1.bf16.msra.mxu0 %v972
    %1326 = vmatprep.subr.bf16.mxu0 0
    %1327 = vmatpush1.bf16.msra.mxu0 %v973
    %1328 = vmatprep.subr.bf16.mxu0 0
    %1329 = vmatpush1.bf16.msra.mxu0 %v974
    %1330 = vmatprep.subr.bf16.mxu0 0
    %1331 = vmatpush1.bf16.msra.mxu0 %v975
    %1332 = vmatprep.subr.bf16.mxu0 0
    %1333 = vmatpush1.bf16.msra.mxu0 %v976
    %1334 = vmatprep.subr.bf16.mxu0 0
    %1335 = vmatpush1.bf16.msra.mxu0 %v977
    %1336 = vmatprep.subr.bf16.mxu0 0
    %1337 = vmatpush1.bf16.msra.mxu0 %v978
    %1338 = vmatprep.subr.bf16.mxu0 0
    %1339 = vmatpush1.bf16.msra.mxu0 %v979
    %1340 = vmatprep.subr.bf16.mxu0 0
    %1341 = vmatpush1.bf16.msra.mxu0 %v980
    %1342 = vmatprep.subr.bf16.mxu0 0
    %1343 = vmatpush1.bf16.msra.mxu0 %v981
    %1344 = vmatprep.subr.bf16.mxu0 0
    %1345 = vmatpush1.bf16.msra.mxu0 %v982
    %1346 = vmatprep.subr.bf16.mxu0 0
    %1347 = vmatpush1.bf16.msra.mxu0 %v983
    %1348 = vmatprep.subr.bf16.mxu0 0
    %1349 = vmatpush1.bf16.msra.mxu0 %v984
    %1350 = vmatprep.subr.bf16.mxu0 0
    %1351 = vmatpush1.bf16.msra.mxu0 %v985
    %1352 = vmatprep.subr.bf16.mxu0 0
    %1353 = vmatpush1.bf16.msra.mxu0 %v986
    %1354 = vmatprep.subr.bf16.mxu0 0
    %1355 = vmatpush1.bf16.msra.mxu0 %v987
    %1356 = vmatprep.mubr.bf16.mxu0 %v368
    %1357 = vmatmul.mubr.bf16.gmra.mrb[0].mxu0 %v354
    %v1358 = vpop.f32.mrb[0].mxu0
    %v1359 = vadd.f32 %v1319, %v1358
    %v1360 = vpop.f32.mrb[0].mxu0
    %v1361 = vpop.f32.mrb[0].mxu0
    %v1362 = vpop.f32.mrb[0].mxu0
    %1363 = vdwg.mxu0
    %1364 = vmatprep.subr.bf16.mxu0 0
    %1365 = vmatpush1.bf16.msra.mxu0 %v988
    %1366 = vmatprep.subr.bf16.mxu0 0
    %1367 = vmatpush1.bf16.msra.mxu0 %v989
    %1368 = vmatprep.subr.bf16.mxu0 0
    %1369 = vmatpush1.bf16.msra.mxu0 %v990
    %1370 = vmatprep.subr.bf16.mxu0 0
    %1371 = vmatpush1.bf16.msra.mxu0 %v991
    %1372 = vmatprep.subr.bf16.mxu0 0
    %1373 = vmatpush1.bf16.msra.mxu0 %v992
    %1374 = vmatprep.subr.bf16.mxu0 0
    %1375 = vmatpush1.bf16.msra.mxu0 %v993
    %1376 = vmatprep.subr.bf16.mxu0 0
    %1377 = vmatpush1.bf16.msra.mxu0 %v994
    %1378 = vmatprep.subr.bf16.mxu0 0
    %1379 = vmatpush1.bf16.msra.mxu0 %v995
    %1380 = vmatprep.subr.bf16.mxu0 0
    %1381 = vmatpush1.bf16.msra.mxu0 %v996
    %1382 = vmatprep.subr.bf16.mxu0 0
    %1383 = vmatpush1.bf16.msra.mxu0 %v997
    %1384 = vmatprep.subr.bf16.mxu0 0
    %1385 = vmatpush1.bf16.msra.mxu0 %v998
    %1386 = vmatprep.subr.bf16.mxu0 0
    %1387 = vmatpush1.bf16.msra.mxu0 %v999
    %1388 = vmatprep.subr.bf16.mxu0 0
    %1389 = vmatpush1.bf16.msra.mxu0 %v1000
    %1390 = vmatprep.subr.bf16.mxu0 0
    %1391 = vmatpush1.bf16.msra.mxu0 %v1001
    %1392 = vmatprep.subr.bf16.mxu0 0
    %1393 = vmatpush1.bf16.msra.mxu0 %v1002
    %1394 = vmatprep.subr.bf16.mxu0 0
    %1395 = vmatpush1.bf16.msra.mxu0 %v1003
    %1396 = vmatprep.mubr.bf16.mxu0 %v378
    %1397 = vmatmul.mubr.bf16.gmra.mrb[0].mxu0 %v376
    %v1398 = vpop.f32.mrb[0].mxu0
    %v1399 = vadd.f32 %v1359, %v1398
    %v1400 = vpop.f32.mrb[0].mxu0
    %v1401 = vpop.f32.mrb[0].mxu0
    %v1402 = vpop.f32.mrb[0].mxu0
    %1403 = vdwg.mxu0
    %1404 = vmatprep.subr.bf16.mxu0 0
    %1405 = vmatpush1.bf16.msra.mxu0 %v1004
    %1406 = vmatprep.subr.bf16.mxu0 0
    %1407 = vmatpush1.bf16.msra.mxu0 %v1005
    %1408 = vmatprep.subr.bf16.mxu0 0
    %1409 = vmatpush1.bf16.msra.mxu0 %v1006
    %1410 = vmatprep.subr.bf16.mxu0 0
    %1411 = vmatpush1.bf16.msra.mxu0 %v1007
    %1412 = vmatprep.subr.bf16.mxu0 0
    %1413 = vmatpush1.bf16.msra.mxu0 %v1008
    %1414 = vmatprep.subr.bf16.mxu0 0
    %1415 = vmatpush1.bf16.msra.mxu0 %v1009
    %1416 = vmatprep.subr.bf16.mxu0 0
    %1417 = vmatpush1.bf16.msra.mxu0 %v1010
    %1418 = vmatprep.subr.bf16.mxu0 0
    %1419 = vmatpush1.bf16.msra.mxu0 %v1011
    %1420 = vmatprep.subr.bf16.mxu0 0
    %1421 = vmatpush1.bf16.msra.mxu0 %v1012
    %1422 = vmatprep.subr.bf16.mxu0 0
    %1423 = vmatpush1.bf16.msra.mxu0 %v1013
    %1424 = vmatprep.subr.bf16.mxu0 0
    %1425 = vmatpush1.bf16.msra.mxu0 %v1014
    %1426 = vmatprep.subr.bf16.mxu0 0
    %1427 = vmatpush1.bf16.msra.mxu0 %v1015
    %1428 = vmatprep.subr.bf16.mxu0 0
    %1429 = vmatpush1.bf16.msra.mxu0 %v1016
    %1430 = vmatprep.subr.bf16.mxu0 0
    %1431 = vmatpush1.bf16.msra.mxu0 %v1017
    %1432 = vmatprep.subr.bf16.mxu0 0
    %1433 = vmatpush1.bf16.msra.mxu0 %v1018
    %1434 = vmatprep.subr.bf16.mxu0 0
    %1435 = vmatpush1.bf16.msra.mxu0 %v1019
    %1436 = vmatprep.mubr.bf16.mxu0 %v375
    %1437 = vmatmul.mubr.bf16.gmra.mrb[0].mxu0 %v361
    %v1438 = vpop.f32.mrb[0].mxu0
    %v1439 = vadd.f32 %v1399, %v1438
    %v1440 = vpop.f32.mrb[0].mxu0
    %v1441 = vpop.f32.mrb[0].mxu0
    %v1442 = vpop.f32.mrb[0].mxu0
    %1443 = vdwg.mxu0
    %1444 = vmatprep.subr.bf16.mxu0 0
    %1445 = vmatpush1.bf16.msra.mxu0 %v1020
    %1446 = vmatprep.subr.bf16.mxu0 0
    %1447 = vmatpush1.bf16.msra.mxu0 %v1021
    %1448 = vmatprep.subr.bf16.mxu0 0
    %1449 = vmatpush1.bf16.msra.mxu0 %v1022
    %1450 = vmatprep.subr.bf16.mxu0 0
    %1451 = vmatpush1.bf16.msra.mxu0 %v1023
    %1452 = vmatprep.subr.bf16.mxu0 0
    %1453 = vmatpush1.bf16.msra.mxu0 %v1024
    %1454 = vmatprep.subr.bf16.mxu0 0
    %1455 = vmatpush1.bf16.msra.mxu0 %v1025
    %1456 = vmatprep.subr.bf16.mxu0 0
    %1457 = vmatpush1.bf16.msra.mxu0 %v1026
    %1458 = vmatprep.subr.bf16.mxu0 0
    %1459 = vmatpush1.bf16.msra.mxu0 %v1027
    %1460 = vmatprep.subr.bf16.mxu0 0
    %1461 = vmatpush1.bf16.msra.mxu0 %v1028
    %1462 = vmatprep.subr.bf16.mxu0 0
    %1463 = vmatpush1.bf16.msra.mxu0 %v1029
    %1464 = vmatprep.subr.bf16.mxu0 0
    %1465 = vmatpush1.bf16.msra.mxu0 %v1030
    %1466 = vmatprep.subr.bf16.mxu0 0
    %1467 = vmatpush1.bf16.msra.mxu0 %v1031
    %1468 = vmatprep.subr.bf16.mxu0 0
    %1469 = vmatpush1.bf16.msra.mxu0 %v1032
    %1470 = vmatprep.subr.bf16.mxu0 0
    %1471 = vmatpush1.bf16.msra.mxu0 %v1033
    %1472 = vmatprep.subr.bf16.mxu0 0
    %1473 = vmatpush1.bf16.msra.mxu0 %v1034
    %1474 = vmatprep.subr.bf16.mxu0 0
    %1475 = vmatpush1.bf16.msra.mxu0 %v1035
    %1476 = vmatprep.mubr.bf16.mxu0 %v379
    %1477 = vmatmul.mubr.bf16.gmra.mrb[0].mxu0 %v377
    %v1478 = vpop.f32.mrb[0].mxu0
    %v1479 = vadd.f32 %v1439, %v1478
    %v1480 = vpop.f32.mrb[0].mxu0
    %v1481 = vpop.f32.mrb[0].mxu0
    %v1482 = vpop.f32.mrb[0].mxu0
    %1483 = vdwg.mxu0
    %v1484 = vadd.f32 %v21, %v1479
    %1485 = vst [vmem:[#allocation2] sm:$0x3] %v1484
    // Predicated region
    $region18: #{encoder_forward.3} parent=1 // pred_check
      %p1486 = pneg %p16
    $region19: #{encoder_forward.3} parent=1 // pred_check_branch
      %1488 = sbr.rel (%p1486) target = $region21
    $region20: #{encoder_forward.3} parent=1 // pred_region
      %v1489 = vld [vmem:[#allocation2] sm:$0x3]
      %v1490 = vld [vmem:[%s2] sm:$0x1]
      %v1492 = vlaneseq
      %v1493 = vshrl.u32 %v1492, 7
      %v1494 = vsub.s32 0, %v1493
      %v1495 = vrot.slane %v1490, %v1494
      %v1497 = vadd.f32 %v1489, %v1495
      %1498 = vst [vmem:[#allocation3] sm:$0x3] %v1497
    $region21: #{encoder_forward.3} parent=1 // pred_fallthru
      _
    // Predicated region
    $region22: #{encoder_forward.3} parent=1 // pred_check
      _
    $region23: #{encoder_forward.3} parent=1 // pred_check_branch
      %1500 = sbr.rel (0) target = $region25
    $region24: #{encoder_forward.3} parent=1 // pred_region
      %s1502 = ssub.s32 32, 32
      %1503 = vsyncadd [#allocation4], %s1502
      %s1505 = sshll.u32 [#allocation3], 4
      %s1506 = int_to_ptr.vmem [resolvable:$true] %s1505
      %1508 = dma.vmem_to_hbm [thread:$0]  %s1506, 32, %s3, [#allocation4]
    $region25: #{encoder_forward.3} parent=1 // pred_fallthru
      _
    // Predicated region
    $region26: #{encoder_forward.3} parent=1 // pred_check
      _
    $region27: #{encoder_forward.3} parent=1 // pred_check_branch
      %1510 = sbr.rel (0) target = $region29
    $region28: #{encoder_forward.3} parent=1 // pred_region
      %1511 = dma.done [#allocation4], 32
    $region29: #{encoder_forward.3} parent=1 // pred_fallthru
      _
    %1512 = vsyncpa [#allocation4], 1

// kernel: encoder_forward.2
$region0: #{encoder_forward.2}
  #allocation0 [shape = 'u32[]', space=smem, size = 0x4, offset = 0x4, fixed_abs, tag = 'smem constant byte address 0x4 - core index']
  #allocation1 [shape = 'u32[144,128]{1,0:T(1,128)}', space=vmem, size = 0x12000, scoped, tag = 'internal scratch']
  #allocation2 [shape = 'bf16[6,512]{1,0:T(8,128)(2,1)}', space=vmem, size = 0x2000, scoped, tag = 'scratch operand']
  #allocation3 [shape = 'bf16[7,256]{1,0:T(8,128)(2,1)}', space=vmem, size = 0x1000, scoped, tag = 'scratch operand']
  %s0 = inlined_call_operand.vmem [shape: bf16[2,6,1024], index: 0, kind: input, shape index: {}]
  %s1 = inlined_call_operand.hbm [shape: bf16[896,128], index: 1, kind: input, shape index: {}]
  %s2 = inlined_call_operand.vmem [shape: f32[1,128], index: 2, kind: input, shape index: {}]
  %s3 = inlined_call_operand.hbm [shape: bf16[896,128], index: 3, kind: input, shape index: {}]
  %s4 = inlined_call_operand.vmem [shape: f32[1,128], index: 4, kind: input, shape index: {}]
  %s5 = inlined_call_operand.hbm [shape: bf16[896,128], index: 5, kind: input, shape index: {}]
  %s6 = inlined_call_operand.vmem [shape: f32[1,128], index: 6, kind: input, shape index: {}]
  %s7 = inlined_call_operand.vmem [shape: bf16[2,16,128], index: 7, kind: output, shape index: {}]
  %s8 = sld [smem:[#allocation0]]
  $region50: #{encoder_forward.2} parent=0
    _
  %s10 = ssub.s32 1, %s8
  %s11 = scalar_select 0, %s10, %s8
  $region1: #{encoder_forward.2} parent=0
    #allocation4 [shape = 'u8[229376]{0}', space=vmem, size = 0x38000, scoped, tag = 'input window, operand 1, single buffered']
    #allocation5 [shape = 's32[1]{0}', space=sflag, size = 0x4, scoped, tag = 'scoped memory for encoder_forward.2']
    #allocation6 [shape = 'u8[229376]{0}', space=vmem, size = 0x38000, scoped, tag = 'input window, operand 3, single buffered']
    #allocation7 [shape = 's32[1]{0}', space=sflag, size = 0x4, scoped, tag = 'scoped memory for encoder_forward.2']
    #allocation8 [shape = 'u8[229376]{0}', space=vmem, size = 0x38000, scoped, tag = 'input window, operand 5, single buffered']
    %12 = vsyncpa [#allocation5], 0
    %13 = vsyncpa [#allocation7], 0
    // Predicated region
    $region2: #{encoder_forward.2} parent=1 // pred_check
      _
    $region3: #{encoder_forward.2} parent=1 // pred_check_branch
      %15 = sbr.rel (0) target = $region5
    $region4: #{encoder_forward.2} parent=1 // pred_region
      _
    $region5: #{encoder_forward.2} parent=1 // pred_fallthru
      _
    // Predicated region
    $region6: #{encoder_forward.2} parent=1 // pred_check
      _
    $region7: #{encoder_forward.2} parent=1 // pred_check_branch
      %17 = sbr.rel (0) target = $region9
    $region8: #{encoder_forward.2} parent=1 // pred_region
      %s19 = ssub.s32 7168, 7168
      %20 = vsyncadd [#allocation5], %s19
      %s21 = sshll.u32 [#allocation4], 4
      %s22 = int_to_ptr.vmem [resolvable:$true] %s21
      %27 = dma.hbm_to_vmem [thread:$0]  %s1, 7168, %s22, [#allocation5], 64, 64, 4
    $region9: #{encoder_forward.2} parent=1 // pred_fallthru
      _
    // Predicated region
    $region10: #{encoder_forward.2} parent=1 // pred_check
      _
    $region11: #{encoder_forward.2} parent=1 // pred_check_branch
      %29 = sbr.rel (0) target = $region13
    $region12: #{encoder_forward.2} parent=1 // pred_region
      _
    $region13: #{encoder_forward.2} parent=1 // pred_fallthru
      _
    // Predicated region
    $region14: #{encoder_forward.2} parent=1 // pred_check
      _
    $region15: #{encoder_forward.2} parent=1 // pred_check_branch
      %31 = sbr.rel (0) target = $region17
    $region16: #{encoder_forward.2} parent=1 // pred_region
      %s33 = ssub.s32 7168, 7168
      %34 = vsyncadd [#allocation7], %s33
      %s35 = sshll.u32 [#allocation6], 4
      %s36 = int_to_ptr.vmem [resolvable:$true] %s35
      %41 = dma.hbm_to_vmem [thread:$0]  %s3, 7168, %s36, [#allocation7], 64, 64, 4
    $region17: #{encoder_forward.2} parent=1 // pred_fallthru
      _
    // Predicated region
    $region18: #{encoder_forward.2} parent=1 // pred_check
      _
    $region19: #{encoder_forward.2} parent=1 // pred_check_branch
      %43 = sbr.rel (0) target = $region21
    $region20: #{encoder_forward.2} parent=1 // pred_region
      _
    $region21: #{encoder_forward.2} parent=1 // pred_fallthru
      _
    // Predicated region
    $region22: #{encoder_forward.2} parent=1 // pred_check
      _
    $region23: #{encoder_forward.2} parent=1 // pred_check_branch
      %45 = sbr.rel (0) target = $region25
    $region24: #{encoder_forward.2} parent=1 // pred_region
      %s47 = ssub.s32 7168, 7168
      %48 = vsyncadd [#allocation7], %s47
      %s49 = sshll.u32 [#allocation8], 4
      %s50 = int_to_ptr.vmem [resolvable:$true] %s49
      %55 = dma.hbm_to_vmem [thread:$0]  %s5, 7168, %s50, [#allocation7], 64, 64, 4
    $region25: #{encoder_forward.2} parent=1 // pred_fallthru
      _
    // Predicated region
    $region26: #{encoder_forward.2} parent=1 // pred_check
      _
    $region27: #{encoder_forward.2} parent=1 // pred_check_branch
      %57 = sbr.rel (0) target = $region29
    $region28: #{encoder_forward.2} parent=1 // pred_region
      _
    $region29: #{encoder_forward.2} parent=1 // pred_fallthru
      _
    // Predicated region
    $region30: #{encoder_forward.2} parent=1 // pred_check
      _
    $region31: #{encoder_forward.2} parent=1 // pred_check_branch
      %59 = sbr.rel (0) target = $region33
    $region32: #{encoder_forward.2} parent=1 // pred_region
      %60 = dma.done [#allocation5], 7168
    $region33: #{encoder_forward.2} parent=1 // pred_fallthru
      _
    // Predicated region
    $region34: #{encoder_forward.2} parent=1 // pred_check
      _
    $region35: #{encoder_forward.2} parent=1 // pred_check_branch
      %62 = sbr.rel (0) target = $region37
    $region36: #{encoder_forward.2} parent=1 // pred_region
      %63 = dma.done [#allocation7], 7168
    $region37: #{encoder_forward.2} parent=1 // pred_fallthru
      _
    // Predicated region
    $region38: #{encoder_forward.2} parent=1 // pred_check
      _
    $region39: #{encoder_forward.2} parent=1 // pred_check_branch
      %65 = sbr.rel (0) target = $region41
    $region40: #{encoder_forward.2} parent=1 // pred_region
      %66 = dma.done [#allocation7], 7168
    $region41: #{encoder_forward.2} parent=1 // pred_fallthru
      _
    %vm68 = vcmask 1040384
    %vm69 = vsmask.f32 256
    %vm70 = vmand %vm68, %vm69
    %vm71 = vcmask 1044484
    %vm72 = vsmask.f32 4352
    %vm73 = vmand %vm71, %vm72
    %vm74 = vmor %vm73, %vm70
    %v75 = vld [vmem:[#allocation2] sm:$0x11]
    %v76 = vsel %vm74, 0, %v75
    %77 = vst [vmem:[#allocation2] sm:$0x11] %v76
    %v78 = vld [vmem:[#allocation2 + $0x8] sm:$0x11]
    %v79 = vsel %vm74, 0, %v78
    %80 = vst [vmem:[#allocation2 + $0x8] sm:$0x11] %v79
    %vm81 = vcmask 1042434
    %vm82 = vsmask.f32 7946
    %vm83 = vmand %vm81, %vm82
    %v84 = vld [vmem:[#allocation2] sm:$0x4]
    %v85 = vsel %vm83, 0, %v84
    %86 = vst [vmem:[#allocation2] sm:$0x4] %v85
    %v87 = vld [vmem:[#allocation2 + $0x4] sm:$0x4]
    %v88 = vsel %vm83, 0, %v87
    %89 = vst [vmem:[#allocation2 + $0x4] sm:$0x4] %v88
    %v90 = vld [vmem:[#allocation2 + $0x8] sm:$0x4]
    %v91 = vsel %vm83, 0, %v90
    %92 = vst [vmem:[#allocation2 + $0x8] sm:$0x4] %v91
    %v93 = vld [vmem:[#allocation2 + $0xc] sm:$0x4]
    %v94 = vsel %vm83, 0, %v93
    %95 = vst [vmem:[#allocation2 + $0xc] sm:$0x4] %v94
    %96 = vst [vmem:[#allocation3] sm:$0x11] 0
    %vm97 = vcmask 1043459
    %vm98 = vsmask.f32 3328
    %vm99 = vmand %vm97, %vm98
    %v100 = vld [vmem:[#allocation3] sm:$0x8]
    %v101 = vsel %vm99, 0, %v100
    %102 = vst [vmem:[#allocation3] sm:$0x8] %v101
    %v103 = vld [vmem:[#allocation3 + $0x4] sm:$0x8]
    %v104 = vsel %vm99, 0, %v103
    %105 = vst [vmem:[#allocation3 + $0x4] sm:$0x8] %v104
    %v106 = vld [vmem:[%s0 + $0x14] sm:$0x33]
    %v107 = vld [vmem:[%s0 + $0x1c] sm:$0x3]
    %v108 = vld [vmem:[#allocation4] sm:$0xf]
    %v109 = vld [vmem:[#allocation4 + $0x4] sm:$0xf]
    %v110 = vld [vmem:[#allocation4 + $0x8] sm:$0xf]
    %v111 = vld [vmem:[#allocation4 + $0xc] sm:$0xf]
    %v112 = vld [vmem:[#allocation4 + $0x10] sm:$0xf]
    %v113 = vld [vmem:[#allocation4 + $0x14] sm:$0xf]
    %v114 = vld [vmem:[#allocation4 + $0x18] sm:$0xf]
    %v115 = vld [vmem:[#allocation4 + $0x1c] sm:$0xf]
    %v116 = vld [vmem:[#allocation4 + $0x20] sm:$0xf]
    %v117 = vld [vmem:[#allocation4 + $0x24] sm:$0xf]
    %v118 = vld [vmem:[#allocation4 + $0x28] sm:$0xf]
    %v119 = vld [vmem:[#allocation4 + $0x2c] sm:$0xf]
    %v120 = vld [vmem:[#allocation4 + $0x30] sm:$0xf]
    %v121 = vld [vmem:[#allocation4 + $0x34] sm:$0xf]
    %v122 = vld [vmem:[#allocation4 + $0x38] sm:$0xf]
    %v123 = vld [vmem:[#allocation4 + $0x3c] sm:$0xf]
    %v124 = vld [vmem:[#allocation4 + $0x40] sm:$0xf]
    %v125 = vld [vmem:[#allocation4 + $0x44] sm:$0xf]
    %v126 = vld [vmem:[#allocation4 + $0x48] sm:$0xf]
    %v127 = vld [vmem:[#allocation4 + $0x4c] sm:$0xf]
    %v128 = vld [vmem:[#allocation4 + $0x50] sm:$0xf]
    %v129 = vld [vmem:[#allocation4 + $0x54] sm:$0xf]
    %v130 = vld [vmem:[#allocation4 + $0x58] sm:$0xf]
    %v131 = vld [vmem:[#allocation4 + $0x5c] sm:$0xf]
    %v132 = vld [vmem:[#allocation4 + $0x60] sm:$0xf]
    %v133 = vld [vmem:[#allocation4 + $0x64] sm:$0xf]
    %v134 = vld [vmem:[#allocation4 + $0x68] sm:$0xf]
    %v135 = vld [vmem:[#allocation4 + $0x6c] sm:$0xf]
    %v136 = vld [vmem:[#allocation4 + $0x70] sm:$0xf]
    %v137 = vld [vmem:[#allocation4 + $0x74] sm:$0xf]
    %v138 = vld [vmem:[#allocation4 + $0x78] sm:$0xf]
    %v139 = vld [vmem:[#allocation4 + $0x7c] sm:$0xf]
    %v140 = vld [vmem:[#allocation4 + $0x80] sm:$0xf]
    %v141 = vld [vmem:[#allocation4 + $0x84] sm:$0xf]
    %v142 = vld [vmem:[#allocation4 + $0x88] sm:$0xf]
    %v143 = vld [vmem:[#allocation4 + $0x8c] sm:$0xf]
    %v144 = vld [vmem:[#allocation4 + $0x90] sm:$0xf]
    %v145 = vld [vmem:[#allocation4 + $0x94] sm:$0xf]
    %v146 = vld [vmem:[#allocation4 + $0x98] sm:$0xf]
    %v147 = vld [vmem:[#allocation4 + $0x9c] sm:$0xf]
    %v148 = vld [vmem:[#allocation4 + $0xa0] sm:$0xf]
    %v149 = vld [vmem:[#allocation4 + $0xa4] sm:$0xf]
    %v150 = vld [vmem:[#allocation4 + $0xa8] sm:$0xf]
    %v151 = vld [vmem:[#allocation4 + $0xac] sm:$0xf]
    %v152 = vld [vmem:[#allocation4 + $0xb0] sm:$0xf]
    %v153 = vld [vmem:[#allocation4 + $0xb4] sm:$0xf]
    %v154 = vld [vmem:[#allocation4 + $0xb8] sm:$0xf]
    %v155 = vld [vmem:[#allocation4 + $0xbc] sm:$0xf]
    %v156 = vld [vmem:[%s0] sm:$0x77]
    %v157 = vld [vmem:[%s0 + $0x8] sm:$0x77]
    %v158 = vld [vmem:[#allocation4 + $0xc0] sm:$0xf]
    %v159 = vld [vmem:[#allocation4 + $0xc4] sm:$0xf]
    %v160 = vld [vmem:[#allocation4 + $0xc8] sm:$0xf]
    %v161 = vld [vmem:[#allocation4 + $0xcc] sm:$0xf]
    %v162 = vld [vmem:[#allocation4 + $0xd0] sm:$0xf]
    %v163 = vld [vmem:[#allocation4 + $0xd4] sm:$0xf]
    %v164 = vld [vmem:[#allocation4 + $0xd8] sm:$0xf]
    %v165 = vld [vmem:[#allocation4 + $0xdc] sm:$0xf]
    %v166 = vld [vmem:[#allocation4 + $0xe0] sm:$0xf]
    %v167 = vld [vmem:[#allocation4 + $0xe4] sm:$0xf]
    %v168 = vld [vmem:[#allocation4 + $0xe8] sm:$0xf]
    %v169 = vld [vmem:[#allocation4 + $0xec] sm:$0xf]
    %v170 = vld [vmem:[#allocation4 + $0xf0] sm:$0xf]
    %v171 = vld [vmem:[#allocation4 + $0xf4] sm:$0xf]
    %v172 = vld [vmem:[#allocation4 + $0xf8] sm:$0xf]
    %v173 = vld [vmem:[#allocation4 + $0xfc] sm:$0xf]
    %v174 = vld [vmem:[#allocation4 + $0x100] sm:$0xf]
    %v175 = vld [vmem:[#allocation4 + $0x104] sm:$0xf]
    %v176 = vld [vmem:[#allocation4 + $0x108] sm:$0xf]
    %v177 = vld [vmem:[#allocation4 + $0x10c] sm:$0xf]
    %v178 = vld [vmem:[#allocation4 + $0x110] sm:$0xf]
    %v179 = vld [vmem:[#allocation4 + $0x114] sm:$0xf]
    %v180 = vld [vmem:[#allocation4 + $0x118] sm:$0xf]
    %v181 = vld [vmem:[#allocation4 + $0x11c] sm:$0xf]
    %v182 = vld [vmem:[#allocation4 + $0x120] sm:$0xf]
    %v183 = vld [vmem:[#allocation4 + $0x124] sm:$0xf]
    %v184 = vld [vmem:[#allocation4 + $0x128] sm:$0xf]
    %v185 = vld [vmem:[#allocation4 + $0x12c] sm:$0xf]
    %v186 = vld [vmem:[#allocation4 + $0x130] sm:$0xf]
    %v187 = vld [vmem:[#allocation4 + $0x134] sm:$0xf]
    %v188 = vld [vmem:[#allocation4 + $0x138] sm:$0xf]
    %v189 = vld [vmem:[#allocation4 + $0x13c] sm:$0xf]
    %v190 = vld [vmem:[#allocation4 + $0x140] sm:$0xf]
    %v191 = vld [vmem:[#allocation4 + $0x144] sm:$0xf]
    %v192 = vld [vmem:[#allocation4 + $0x148] sm:$0xf]
    %v193 = vld [vmem:[#allocation4 + $0x14c] sm:$0xf]
    %v194 = vld [vmem:[#allocation4 + $0x150] sm:$0xf]
    %v195 = vld [vmem:[#allocation4 + $0x154] sm:$0xf]
    %v196 = vld [vmem:[#allocation4 + $0x158] sm:$0xf]
    %v197 = vld [vmem:[#allocation4 + $0x15c] sm:$0xf]
    %v198 = vld [vmem:[#allocation4 + $0x160] sm:$0xf]
    %v199 = vld [vmem:[#allocation4 + $0x164] sm:$0xf]
    %v200 = vld [vmem:[#allocation4 + $0x168] sm:$0xf]
    %v201 = vld [vmem:[#allocation4 + $0x16c] sm:$0xf]
    %v202 = vld [vmem:[#allocation4 + $0x170] sm:$0xf]
    %v203 = vld [vmem:[#allocation4 + $0x174] sm:$0xf]
    %v204 = vld [vmem:[#allocation4 + $0x178] sm:$0xf]
    %v205 = vld [vmem:[#allocation4 + $0x17c] sm:$0xf]
    %v206 = vld [vmem:[#allocation4 + $0x180] sm:$0xf]
    %v207 = vld [vmem:[#allocation4 + $0x184] sm:$0xf]
    %v208 = vld [vmem:[#allocation4 + $0x188] sm:$0xf]
    %v209 = vld [vmem:[#allocation4 + $0x18c] sm:$0xf]
    %v210 = vld [vmem:[#allocation4 + $0x190] sm:$0xf]
    %v211 = vld [vmem:[#allocation4 + $0x194] sm:$0xf]
    %v212 = vld [vmem:[#allocation4 + $0x198] sm:$0xf]
    %v213 = vld [vmem:[#allocation4 + $0x19c] sm:$0xf]
    %v214 = vld [vmem:[#allocation4 + $0x1a0] sm:$0xf]
    %v215 = vld [vmem:[#allocation4 + $0x1a4] sm:$0xf]
    %v216 = vld [vmem:[#allocation4 + $0x1a8] sm:$0xf]
    %v217 = vld [vmem:[#allocation4 + $0x1ac] sm:$0xf]
    %v218 = vld [vmem:[#allocation4 + $0x1b0] sm:$0xf]
    %v219 = vld [vmem:[#allocation4 + $0x1b4] sm:$0xf]
    %v220 = vld [vmem:[#allocation4 + $0x1b8] sm:$0xf]
    %v221 = vld [vmem:[#allocation4 + $0x1bc] sm:$0xf]
    %v224 = vunpack.c.l.b16 %v156
    %v225 = vunpack.c.h.b16 %v156
    %v226 = vunpack.c.l.b16 %v157
    %v227 = vunpack.c.h.b16 %v157
    %v228 = vpack.c.b16 %v224, %v224
    %v229 = vpack.c.b16 %v225, %v225
    %v230 = vpack.c.b16 %v226, %v226
    %v231 = vpack.c.b16 %v227, %v227
    %v233 = vshrl.u32 %v228, 16
    %v235 = vshll.u32 %v228, 16
    %v237 = vrot.slane %v235, 1
    %v238 = vor.u32 %v233, %v237
    %v240 = vshrl.u32 %v229, 16
    %v242 = vshll.u32 %v229, 16
    %v244 = vrot.slane %v242, 1
    %v245 = vor.u32 %v240, %v244
    %v247 = vshrl.u32 %v230, 16
    %v249 = vshll.u32 %v230, 16
    %v251 = vrot.slane %v249, 1
    %v252 = vor.u32 %v247, %v251
    %v254 = vshrl.u32 %v231, 16
    %v256 = vshll.u32 %v231, 16
    %v258 = vrot.slane %v256, 1
    %v259 = vor.u32 %v254, %v258
    %v328 = vunpack.c.l.b16 %v158
    %v329 = vunpack.c.l.b16 %v159
    %v330 = vunpack.c.l.b16 %v160
    %v331 = vunpack.c.l.b16 %v161
    %v332 = vunpack.c.l.b16 %v162
    %v333 = vunpack.c.l.b16 %v163
    %v334 = vunpack.c.l.b16 %v164
    %v335 = vunpack.c.l.b16 %v165
    %v336 = vunpack.c.l.b16 %v166
    %v337 = vunpack.c.l.b16 %v167
    %v338 = vunpack.c.l.b16 %v168
    %v339 = vunpack.c.l.b16 %v169
    %v340 = vunpack.c.l.b16 %v170
    %v341 = vunpack.c.l.b16 %v171
    %v342 = vunpack.c.l.b16 %v172
    %v343 = vunpack.c.l.b16 %v173
    %v344 = vunpack.c.l.b16 %v174
    %v345 = vunpack.c.l.b16 %v175
    %v346 = vunpack.c.l.b16 %v176
    %v347 = vunpack.c.l.b16 %v177
    %v348 = vunpack.c.l.b16 %v178
    %v349 = vunpack.c.l.b16 %v179
    %v350 = vunpack.c.l.b16 %v180
    %v351 = vunpack.c.l.b16 %v181
    %v352 = vunpack.c.l.b16 %v182
    %v353 = vunpack.c.l.b16 %v183
    %v354 = vunpack.c.l.b16 %v184
    %v355 = vunpack.c.l.b16 %v185
    %v356 = vunpack.c.l.b16 %v186
    %v357 = vunpack.c.l.b16 %v187
    %v358 = vunpack.c.l.b16 %v188
    %v359 = vunpack.c.l.b16 %v189
    %v360 = vunpack.c.l.b16 %v190
    %v361 = vunpack.c.l.b16 %v191
    %v362 = vunpack.c.l.b16 %v192
    %v363 = vunpack.c.l.b16 %v193
    %v364 = vunpack.c.l.b16 %v194
    %v365 = vunpack.c.l.b16 %v195
    %v366 = vunpack.c.l.b16 %v196
    %v367 = vunpack.c.l.b16 %v197
    %v368 = vunpack.c.l.b16 %v198
    %v369 = vunpack.c.l.b16 %v199
    %v370 = vunpack.c.l.b16 %v200
    %v371 = vunpack.c.l.b16 %v201
    %v372 = vunpack.c.l.b16 %v202
    %v373 = vunpack.c.l.b16 %v203
    %v374 = vunpack.c.l.b16 %v204
    %v375 = vunpack.c.l.b16 %v205
    %v376 = vunpack.c.l.b16 %v206
    %v377 = vunpack.c.l.b16 %v207
    %v378 = vunpack.c.l.b16 %v208
    %v379 = vunpack.c.l.b16 %v209
    %v380 = vunpack.c.l.b16 %v210
    %v381 = vunpack.c.l.b16 %v211
    %v382 = vunpack.c.l.b16 %v212
    %v383 = vunpack.c.l.b16 %v213
    %v384 = vunpack.c.l.b16 %v214
    %v385 = vunpack.c.l.b16 %v215
    %v386 = vunpack.c.l.b16 %v216
    %v387 = vunpack.c.l.b16 %v217
    %v388 = vunpack.c.l.b16 %v218
    %v389 = vunpack.c.l.b16 %v219
    %v390 = vunpack.c.l.b16 %v220
    %v391 = vunpack.c.l.b16 %v221
    %v392 = vpack.c.b16 %v329, %v328
    %v393 = vpack.c.b16 %v331, %v330
    %v394 = vpack.c.b16 %v333, %v332
    %v395 = vpack.c.b16 %v335, %v334
    %v396 = vpack.c.b16 %v337, %v336
    %v397 = vpack.c.b16 %v339, %v338
    %v398 = vpack.c.b16 %v341, %v340
    %v399 = vpack.c.b16 %v343, %v342
    %v400 = vpack.c.b16 %v345, %v344
    %v401 = vpack.c.b16 %v347, %v346
    %v402 = vpack.c.b16 %v349, %v348
    %v403 = vpack.c.b16 %v351, %v350
    %v404 = vpack.c.b16 %v353, %v352
    %v405 = vpack.c.b16 %v355, %v354
    %v406 = vpack.c.b16 %v357, %v356
    %v407 = vpack.c.b16 %v359, %v358
    %v408 = vpack.c.b16 %v361, %v360
    %v409 = vpack.c.b16 %v363, %v362
    %v410 = vpack.c.b16 %v365, %v364
    %v411 = vpack.c.b16 %v367, %v366
    %v412 = vpack.c.b16 %v369, %v368
    %v413 = vpack.c.b16 %v371, %v370
    %v414 = vpack.c.b16 %v373, %v372
    %v415 = vpack.c.b16 %v375, %v374
    %v416 = vpack.c.b16 %v377, %v376
    %v417 = vpack.c.b16 %v379, %v378
    %v418 = vpack.c.b16 %v381, %v380
    %v419 = vpack.c.b16 %v383, %v382
    %v420 = vpack.c.b16 %v385, %v384
    %v421 = vpack.c.b16 %v387, %v386
    %v422 = vpack.c.b16 %v389, %v388
    %v423 = vpack.c.b16 %v391, %v390
    %456 = vmatprep.subr.bf16.mxu0 0
    %457 = vmatpush1.bf16.msra.mxu0 %v392
    %458 = vmatprep.subr.bf16.mxu0 0
    %459 = vmatpush1.bf16.msra.mxu0 %v393
    %460 = vmatprep.subr.bf16.mxu0 0
    %461 = vmatpush1.bf16.msra.mxu0 %v394
    %462 = vmatprep.subr.bf16.mxu0 0
    %463 = vmatpush1.bf16.msra.mxu0 %v395
    %464 = vmatprep.subr.bf16.mxu0 0
    %465 = vmatpush1.bf16.msra.mxu0 %v396
    %466 = vmatprep.subr.bf16.mxu0 0
    %467 = vmatpush1.bf16.msra.mxu0 %v397
    %468 = vmatprep.subr.bf16.mxu0 0
    %469 = vmatpush1.bf16.msra.mxu0 %v398
    %470 = vmatprep.subr.bf16.mxu0 0
    %471 = vmatpush1.bf16.msra.mxu0 %v399
    %472 = vmatprep.subr.bf16.mxu0 0
    %473 = vmatpush1.bf16.msra.mxu0 %v400
    %474 = vmatprep.subr.bf16.mxu0 0
    %475 = vmatpush1.bf16.msra.mxu0 %v401
    %476 = vmatprep.subr.bf16.mxu0 0
    %477 = vmatpush1.bf16.msra.mxu0 %v402
    %478 = vmatprep.subr.bf16.mxu0 0
    %479 = vmatpush1.bf16.msra.mxu0 %v403
    %480 = vmatprep.subr.bf16.mxu0 0
    %481 = vmatpush1.bf16.msra.mxu0 %v404
    %482 = vmatprep.subr.bf16.mxu0 0
    %483 = vmatpush1.bf16.msra.mxu0 %v405
    %484 = vmatprep.subr.bf16.mxu0 0
    %485 = vmatpush1.bf16.msra.mxu0 %v406
    %486 = vmatprep.subr.bf16.mxu0 0
    %487 = vmatpush1.bf16.msra.mxu0 %v407
    %488 = vmatprep.mubr.bf16.mxu0 %v245
    %489 = vmatmul.mubr.bf16.gmra.mrb[0].mxu0 %v238
    %v490 = vpop.f32.mrb[0].mxu0
    %v491 = vadd.f32 0.0, %v490
    %v492 = vpop.f32.mrb[0].mxu0
    %v493 = vpop.f32.mrb[0].mxu0
    %v494 = vpop.f32.mrb[0].mxu0
    %495 = vdwg.mxu0
    %496 = vmatprep.subr.bf16.mxu0 0
    %497 = vmatpush1.bf16.msra.mxu0 %v408
    %498 = vmatprep.subr.bf16.mxu0 0
    %499 = vmatpush1.bf16.msra.mxu0 %v409
    %500 = vmatprep.subr.bf16.mxu0 0
    %501 = vmatpush1.bf16.msra.mxu0 %v410
    %502 = vmatprep.subr.bf16.mxu0 0
    %503 = vmatpush1.bf16.msra.mxu0 %v411
    %504 = vmatprep.subr.bf16.mxu0 0
    %505 = vmatpush1.bf16.msra.mxu0 %v412
    %506 = vmatprep.subr.bf16.mxu0 0
    %507 = vmatpush1.bf16.msra.mxu0 %v413
    %508 = vmatprep.subr.bf16.mxu0 0
    %509 = vmatpush1.bf16.msra.mxu0 %v414
    %510 = vmatprep.subr.bf16.mxu0 0
    %511 = vmatpush1.bf16.msra.mxu0 %v415
    %512 = vmatprep.subr.bf16.mxu0 0
    %513 = vmatpush1.bf16.msra.mxu0 %v416
    %514 = vmatprep.subr.bf16.mxu0 0
    %515 = vmatpush1.bf16.msra.mxu0 %v417
    %516 = vmatprep.subr.bf16.mxu0 0
    %517 = vmatpush1.bf16.msra.mxu0 %v418
    %518 = vmatprep.subr.bf16.mxu0 0
    %519 = vmatpush1.bf16.msra.mxu0 %v419
    %520 = vmatprep.subr.bf16.mxu0 0
    %521 = vmatpush1.bf16.msra.mxu0 %v420
    %522 = vmatprep.subr.bf16.mxu0 0
    %523 = vmatpush1.bf16.msra.mxu0 %v421
    %524 = vmatprep.subr.bf16.mxu0 0
    %525 = vmatpush1.bf16.msra.mxu0 %v422
    %526 = vmatprep.subr.bf16.mxu0 0
    %527 = vmatpush1.bf16.msra.mxu0 %v423
    %528 = vmatprep.mubr.bf16.mxu0 %v259
    %529 = vmatmul.mubr.bf16.gmra.mrb[0].mxu0 %v252
    %v530 = vpop.f32.mrb[0].mxu0
    %v531 = vadd.f32 %v491, %v530
    %v532 = vpop.f32.mrb[0].mxu0
    %v533 = vpop.f32.mrb[0].mxu0
    %v534 = vpop.f32.mrb[0].mxu0
    %535 = vdwg.mxu0
    %v538 = vunpack.c.l.b16 %v106
    %v539 = vunpack.c.h.b16 %v106
    %v540 = vunpack.c.l.b16 %v107
    %v541 = vpack.c.b16 %v538, %v538
    %v542 = vpack.c.b16 %v539, %v539
    %v543 = vpack.c.b16 %v540, %v540
    %v595 = vunpack.c.l.b16 %v108
    %v596 = vunpack.c.l.b16 %v109
    %v597 = vunpack.c.l.b16 %v110
    %v598 = vunpack.c.l.b16 %v111
    %v599 = vunpack.c.l.b16 %v112
    %v600 = vunpack.c.l.b16 %v113
    %v601 = vunpack.c.l.b16 %v114
    %v602 = vunpack.c.l.b16 %v115
    %v603 = vunpack.c.l.b16 %v116
    %v604 = vunpack.c.l.b16 %v117
    %v605 = vunpack.c.l.b16 %v118
    %v606 = vunpack.c.l.b16 %v119
    %v607 = vunpack.c.l.b16 %v120
    %v608 = vunpack.c.l.b16 %v121
    %v609 = vunpack.c.l.b16 %v122
    %v610 = vunpack.c.l.b16 %v123
    %v611 = vunpack.c.l.b16 %v124
    %v612 = vunpack.c.l.b16 %v125
    %v613 = vunpack.c.l.b16 %v126
    %v614 = vunpack.c.l.b16 %v127
    %v615 = vunpack.c.l.b16 %v128
    %v616 = vunpack.c.l.b16 %v129
    %v617 = vunpack.c.l.b16 %v130
    %v618 = vunpack.c.l.b16 %v131
    %v619 = vunpack.c.l.b16 %v132
    %v620 = vunpack.c.l.b16 %v133
    %v621 = vunpack.c.l.b16 %v134
    %v622 = vunpack.c.l.b16 %v135
    %v623 = vunpack.c.l.b16 %v136
    %v624 = vunpack.c.l.b16 %v137
    %v625 = vunpack.c.l.b16 %v138
    %v626 = vunpack.c.l.b16 %v139
    %v627 = vunpack.c.l.b16 %v140
    %v628 = vunpack.c.l.b16 %v141
    %v629 = vunpack.c.l.b16 %v142
    %v630 = vunpack.c.l.b16 %v143
    %v631 = vunpack.c.l.b16 %v144
    %v632 = vunpack.c.l.b16 %v145
    %v633 = vunpack.c.l.b16 %v146
    %v634 = vunpack.c.l.b16 %v147
    %v635 = vunpack.c.l.b16 %v148
    %v636 = vunpack.c.l.b16 %v149
    %v637 = vunpack.c.l.b16 %v150
    %v638 = vunpack.c.l.b16 %v151
    %v639 = vunpack.c.l.b16 %v152
    %v640 = vunpack.c.l.b16 %v153
    %v641 = vunpack.c.l.b16 %v154
    %v642 = vunpack.c.l.b16 %v155
    %v643 = vpack.c.b16 %v596, %v595
    %v644 = vpack.c.b16 %v598, %v597
    %v645 = vpack.c.b16 %v600, %v599
    %v646 = vpack.c.b16 %v602, %v601
    %v647 = vpack.c.b16 %v604, %v603
    %v648 = vpack.c.b16 %v606, %v605
    %v649 = vpack.c.b16 %v608, %v607
    %v650 = vpack.c.b16 %v610, %v609
    %v651 = vpack.c.b16 %v612, %v611
    %v652 = vpack.c.b16 %v614, %v613
    %v653 = vpack.c.b16 %v616, %v615
    %v654 = vpack.c.b16 %v618, %v617
    %v655 = vpack.c.b16 %v620, %v619
    %v656 = vpack.c.b16 %v622, %v621
    %v657 = vpack.c.b16 %v624, %v623
    %v658 = vpack.c.b16 %v626, %v625
    %v659 = vpack.c.b16 %v628, %v627
    %v660 = vpack.c.b16 %v630, %v629
    %v661 = vpack.c.b16 %v632, %v631
    %v662 = vpack.c.b16 %v634, %v633
    %v663 = vpack.c.b16 %v636, %v635
    %v664 = vpack.c.b16 %v638, %v637
    %v665 = vpack.c.b16 %v640, %v639
    %v666 = vpack.c.b16 %v642, %v641
    %691 = vmatprep.subr.bf16.mxu0 0
    %692 = vmatpush1.bf16.msra.mxu0 %v643
    %693 = vmatprep.subr.bf16.mxu0 0
    %694 = vmatpush1.bf16.msra.mxu0 %v644
    %695 = vmatprep.subr.bf16.mxu0 0
    %696 = vmatpush1.bf16.msra.mxu0 %v645
    %697 = vmatprep.subr.bf16.mxu0 0
    %698 = vmatpush1.bf16.msra.mxu0 %v646
    %699 = vmatprep.subr.bf16.mxu0 0
    %700 = vmatpush1.bf16.msra.mxu0 %v647
    %701 = vmatprep.subr.bf16.mxu0 0
    %702 = vmatpush1.bf16.msra.mxu0 %v648
    %703 = vmatprep.subr.bf16.mxu0 0
    %704 = vmatpush1.bf16.msra.mxu0 %v649
    %705 = vmatprep.subr.bf16.mxu0 0
    %706 = vmatpush1.bf16.msra.mxu0 %v650
    %707 = vmatprep.subr.bf16.mxu0 0
    %708 = vmatpush1.bf16.msra.mxu0 %v651
    %709 = vmatprep.subr.bf16.mxu0 0
    %710 = vmatpush1.bf16.msra.mxu0 %v652
    %711 = vmatprep.subr.bf16.mxu0 0
    %712 = vmatpush1.bf16.msra.mxu0 %v653
    %713 = vmatprep.subr.bf16.mxu0 0
    %714 = vmatpush1.bf16.msra.mxu0 %v654
    %715 = vmatprep.subr.bf16.mxu0 0
    %716 = vmatpush1.bf16.msra.mxu0 %v655
    %717 = vmatprep.subr.bf16.mxu0 0
    %718 = vmatpush1.bf16.msra.mxu0 %v656
    %719 = vmatprep.subr.bf16.mxu0 0
    %720 = vmatpush1.bf16.msra.mxu0 %v657
    %721 = vmatprep.subr.bf16.mxu0 0
    %722 = vmatpush1.bf16.msra.mxu0 %v658
    %723 = vmatprep.mubr.bf16.mxu0 %v542
    %724 = vmatmul.mubr.bf16.gmra.mrb[0].mxu0 %v541
    %v725 = vpop.f32.mrb[0].mxu0
    %v726 = vadd.f32 %v531, %v725
    %v727 = vpop.f32.mrb[0].mxu0
    %v728 = vpop.f32.mrb[0].mxu0
    %v729 = vpop.f32.mrb[0].mxu0
    %730 = vdwg.mxu0
    %731 = vmatprep.subr.bf16.mxu0 0
    %732 = vmatpush1.bf16.msra.mxu0 %v659
    %733 = vmatprep.subr.bf16.mxu0 0
    %734 = vmatpush1.bf16.msra.mxu0 %v660
    %735 = vmatprep.subr.bf16.mxu0 0
    %736 = vmatpush1.bf16.msra.mxu0 %v661
    %737 = vmatprep.subr.bf16.mxu0 0
    %738 = vmatpush1.bf16.msra.mxu0 %v662
    %739 = vmatprep.subr.bf16.mxu0 0
    %740 = vmatpush1.bf16.msra.mxu0 %v663
    %741 = vmatprep.subr.bf16.mxu0 0
    %742 = vmatpush1.bf16.msra.mxu0 %v664
    %743 = vmatprep.subr.bf16.mxu0 0
    %744 = vmatpush1.bf16.msra.mxu0 %v665
    %745 = vmatprep.subr.bf16.mxu0 0
    %746 = vmatpush1.bf16.msra.mxu0 %v666
    %747 = vmatprep.subr.bf16.mxu0 0
    %748 = vmatpush1.bf16.msra.mxu0 0
    %749 = vmatprep.subr.bf16.mxu0 0
    %750 = vmatpush1.bf16.msra.mxu0 0
    %751 = vmatprep.subr.bf16.mxu0 0
    %752 = vmatpush1.bf16.msra.mxu0 0
    %753 = vmatprep.subr.bf16.mxu0 0
    %754 = vmatpush1.bf16.msra.mxu0 0
    %755 = vmatprep.subr.bf16.mxu0 0
    %756 = vmatpush1.bf16.msra.mxu0 0
    %757 = vmatprep.subr.bf16.mxu0 0
    %758 = vmatpush1.bf16.msra.mxu0 0
    %759 = vmatprep.subr.bf16.mxu0 0
    %760 = vmatpush1.bf16.msra.mxu0 0
    %761 = vmatprep.subr.bf16.mxu0 0
    %762 = vmatpush1.bf16.msra.mxu0 0
    %763 = vmatprep.mubr.bf16.mxu0 0
    %764 = vmatmul.mubr.bf16.gmra.mrb[0].mxu0 %v543
    %v765 = vpop.f32.mrb[0].mxu0
    %v766 = vadd.f32 %v726, %v765
    %v767 = vpop.f32.mrb[0].mxu0
    %v768 = vpop.f32.mrb[0].mxu0
    %v769 = vpop.f32.mrb[0].mxu0
    %770 = vdwg.mxu0
    %v771 = vld [vmem:[%s2] sm:$0x1]
    %v773 = vlaneseq
    %v774 = vshrl.u32 %v773, 7
    %v775 = vsub.s32 0, %v774
    %v776 = vrot.slane %v771, %v775
    %v778 = vadd.f32 %v766, %v776
    %v779 = vmax.f32 %v778, 0.0
    %v780 = vpack.c.bf16 %v779, %v779
    %v782 = vunpack.c.l.b16 %v780
    %v783 = vpack.c.b16 %v782, %v782
    %v785 = vshrl.u32 %v783, 16
    %v787 = vrot.slane %v785, 7
    %v788 = vshll.u32 %v783, 16
    %v790 = vor.u32 %v787, %v788
    %vm792 = vcmask 1042432
    %vm793 = vsmask.f32 2306
    %vm794 = vmand %vm792, %vm793
    %v795 = vld [vmem:[#allocation2] sm:$0x7]
    %v796 = vsel %vm794, %v790, %v795
    %797 = vst [vmem:[#allocation2] sm:$0x7] %v796
    %v798 = vld [vmem:[%s0 + $0x1c] sm:$0x3]
    %v799 = vld [vmem:[#allocation4] sm:$0xf]
    %v800 = vld [vmem:[#allocation4 + $0x4] sm:$0xf]
    %v801 = vld [vmem:[#allocation4 + $0x8] sm:$0xf]
    %v802 = vld [vmem:[#allocation4 + $0xc] sm:$0xf]
    %v803 = vld [vmem:[#allocation4 + $0x10] sm:$0xf]
    %v804 = vld [vmem:[#allocation4 + $0x14] sm:$0xf]
    %v805 = vld [vmem:[#allocation4 + $0x18] sm:$0xf]
    %v806 = vld [vmem:[#allocation4 + $0x1c] sm:$0xf]
    %v807 = vld [vmem:[#allocation4 + $0x20] sm:$0xf]
    %v808 = vld [vmem:[#allocation4 + $0x24] sm:$0xf]
    %v809 = vld [vmem:[#allocation4 + $0x28] sm:$0xf]
    %v810 = vld [vmem:[#allocation4 + $0x2c] sm:$0xf]
    %v811 = vld [vmem:[#allocation4 + $0x30] sm:$0xf]
    %v812 = vld [vmem:[#allocation4 + $0x34] sm:$0xf]
    %v813 = vld [vmem:[#allocation4 + $0x38] sm:$0xf]
    %v814 = vld [vmem:[#allocation4 + $0x3c] sm:$0xf]
    %v815 = vld [vmem:[%s0] sm:$0x77]
    %v816 = vld [vmem:[%s0 + $0x8] sm:$0x77]
    %v817 = vld [vmem:[%s0 + $0x10] sm:$0x77]
    %v818 = vld [vmem:[#allocation4 + $0x40] sm:$0xf]
    %v819 = vld [vmem:[#allocation4 + $0x44] sm:$0xf]
    %v820 = vld [vmem:[#allocation4 + $0x48] sm:$0xf]
    %v821 = vld [vmem:[#allocation4 + $0x4c] sm:$0xf]
    %v822 = vld [vmem:[#allocation4 + $0x50] sm:$0xf]
    %v823 = vld [vmem:[#allocation4 + $0x54] sm:$0xf]
    %v824 = vld [vmem:[#allocation4 + $0x58] sm:$0xf]
    %v825 = vld [vmem:[#allocation4 + $0x5c] sm:$0xf]
    %v826 = vld [vmem:[#allocation4 + $0x60] sm:$0xf]
    %v827 = vld [vmem:[#allocation4 + $0x64] sm:$0xf]
    %v828 = vld [vmem:[#allocation4 + $0x68] sm:$0xf]
    %v829 = vld [vmem:[#allocation4 + $0x6c] sm:$0xf]
    %v830 = vld [vmem:[#allocation4 + $0x70] sm:$0xf]
    %v831 = vld [vmem:[#allocation4 + $0x74] sm:$0xf]
    %v832 = vld [vmem:[#allocation4 + $0x78] sm:$0xf]
    %v833 = vld [vmem:[#allocation4 + $0x7c] sm:$0xf]
    %v834 = vld [vmem:[#allocation4 + $0x80] sm:$0xf]
    %v835 = vld [vmem:[#allocation4 + $0x84] sm:$0xf]
    %v836 = vld [vmem:[#allocation4 + $0x88] sm:$0xf]
    %v837 = vld [vmem:[#allocation4 + $0x8c] sm:$0xf]
    %v838 = vld [vmem:[#allocation4 + $0x90] sm:$0xf]
    %v839 = vld [vmem:[#allocation4 + $0x94] sm:$0xf]
    %v840 = vld [vmem:[#allocation4 + $0x98] sm:$0xf]
    %v841 = vld [vmem:[#allocation4 + $0x9c] sm:$0xf]
    %v842 = vld [vmem:[#allocation4 + $0xa0] sm:$0xf]
    %v843 = vld [vmem:[#allocation4 + $0xa4] sm:$0xf]
    %v844 = vld [vmem:[#allocation4 + $0xa8] sm:$0xf]
    %v845 = vld [vmem:[#allocation4 + $0xac] sm:$0xf]
    %v846 = vld [vmem:[#allocation4 + $0xb0] sm:$0xf]
    %v847 = vld [vmem:[#allocation4 + $0xb4] sm:$0xf]
    %v848 = vld [vmem:[#allocation4 + $0xb8] sm:$0xf]
    %v849 = vld [vmem:[#allocation4 + $0xbc] sm:$0xf]
    %v850 = vld [vmem:[#allocation4 + $0xc0] sm:$0xf]
    %v851 = vld [vmem:[#allocation4 + $0xc4] sm:$0xf]
    %v852 = vld [vmem:[#allocation4 + $0xc8] sm:$0xf]
    %v853 = vld [vmem:[#allocation4 + $0xcc] sm:$0xf]
    %v854 = vld [vmem:[#allocation4 + $0xd0] sm:$0xf]
    %v855 = vld [vmem:[#allocation4 + $0xd4] sm:$0xf]
    %v856 = vld [vmem:[#allocation4 + $0xd8] sm:$0xf]
    %v857 = vld [vmem:[#allocation4 + $0xdc] sm:$0xf]
    %v858 = vld [vmem:[#allocation4 + $0xe0] sm:$0xf]
    %v859 = vld [vmem:[#allocation4 + $0xe4] sm:$0xf]
    %v860 = vld [vmem:[#allocation4 + $0xe8] sm:$0xf]
    %v861 = vld [vmem:[#allocation4 + $0xec] sm:$0xf]
    %v862 = vld [vmem:[#allocation4 + $0xf0] sm:$0xf]
    %v863 = vld [vmem:[#allocation4 + $0xf4] sm:$0xf]
    %v864 = vld [vmem:[#allocation4 + $0xf8] sm:$0xf]
    %v865 = vld [vmem:[#allocation4 + $0xfc] sm:$0xf]
    %v866 = vld [vmem:[#allocation4 + $0x100] sm:$0xf]
    %v867 = vld [vmem:[#allocation4 + $0x104] sm:$0xf]
    %v868 = vld [vmem:[#allocation4 + $0x108] sm:$0xf]
    %v869 = vld [vmem:[#allocation4 + $0x10c] sm:$0xf]
    %v870 = vld [vmem:[#allocation4 + $0x110] sm:$0xf]
    %v871 = vld [vmem:[#allocation4 + $0x114] sm:$0xf]
    %v872 = vld [vmem:[#allocation4 + $0x118] sm:$0xf]
    %v873 = vld [vmem:[#allocation4 + $0x11c] sm:$0xf]
    %v874 = vld [vmem:[#allocation4 + $0x120] sm:$0xf]
    %v875 = vld [vmem:[#allocation4 + $0x124] sm:$0xf]
    %v876 = vld [vmem:[#allocation4 + $0x128] sm:$0xf]
    %v877 = vld [vmem:[#allocation4 + $0x12c] sm:$0xf]
    %v878 = vld [vmem:[#allocation4 + $0x130] sm:$0xf]
    %v879 = vld [vmem:[#allocation4 + $0x134] sm:$0xf]
    %v880 = vld [vmem:[#allocation4 + $0x138] sm:$0xf]
    %v881 = vld [vmem:[#allocation4 + $0x13c] sm:$0xf]
    %v882 = vld [vmem:[#allocation4 + $0x140] sm:$0xf]
    %v883 = vld [vmem:[#allocation4 + $0x144] sm:$0xf]
    %v884 = vld [vmem:[#allocation4 + $0x148] sm:$0xf]
    %v885 = vld [vmem:[#allocation4 + $0x14c] sm:$0xf]
    %v886 = vld [vmem:[#allocation4 + $0x150] sm:$0xf]
    %v887 = vld [vmem:[#allocation4 + $0x154] sm:$0xf]
    %v888 = vld [vmem:[#allocation4 + $0x158] sm:$0xf]
    %v889 = vld [vmem:[#allocation4 + $0x15c] sm:$0xf]
    %v890 = vld [vmem:[#allocation4 + $0x160] sm:$0xf]
    %v891 = vld [vmem:[#allocation4 + $0x164] sm:$0xf]
    %v892 = vld [vmem:[#allocation4 + $0x168] sm:$0xf]
    %v893 = vld [vmem:[#allocation4 + $0x16c] sm:$0xf]
    %v894 = vld [vmem:[#allocation4 + $0x170] sm:$0xf]
    %v895 = vld [vmem:[#allocation4 + $0x174] sm:$0xf]
    %v896 = vld [vmem:[#allocation4 + $0x178] sm:$0xf]
    %v897 = vld [vmem:[#allocation4 + $0x17c] sm:$0xf]
    %v898 = vld [vmem:[#allocation4 + $0x180] sm:$0xf]
    %v899 = vld [vmem:[#allocation4 + $0x184] sm:$0xf]
    %v900 = vld [vmem:[#allocation4 + $0x188] sm:$0xf]
    %v901 = vld [vmem:[#allocation4 + $0x18c] sm:$0xf]
    %v902 = vld [vmem:[#allocation4 + $0x190] sm:$0xf]
    %v903 = vld [vmem:[#allocation4 + $0x194] sm:$0xf]
    %v904 = vld [vmem:[#allocation4 + $0x198] sm:$0xf]
    %v905 = vld [vmem:[#allocation4 + $0x19c] sm:$0xf]
    %v906 = vld [vmem:[#allocation4 + $0x1a0] sm:$0xf]
    %v907 = vld [vmem:[#allocation4 + $0x1a4] sm:$0xf]
    %v908 = vld [vmem:[#allocation4 + $0x1a8] sm:$0xf]
    %v909 = vld [vmem:[#allocation4 + $0x1ac] sm:$0xf]
    %v910 = vld [vmem:[#allocation4 + $0x1b0] sm:$0xf]
    %v911 = vld [vmem:[#allocation4 + $0x1b4] sm:$0xf]
    %v912 = vld [vmem:[#allocation4 + $0x1b8] sm:$0xf]
    %v913 = vld [vmem:[#allocation4 + $0x1bc] sm:$0xf]
    %v917 = vunpack.c.l.b16 %v815
    %v918 = vunpack.c.h.b16 %v815
    %v919 = vunpack.c.l.b16 %v816
    %v920 = vunpack.c.h.b16 %v816
    %v921 = vunpack.c.l.b16 %v817
    %v922 = vunpack.c.h.b16 %v817
    %v923 = vpack.c.b16 %v917, %v917
    %v924 = vpack.c.b16 %v918, %v918
    %v925 = vpack.c.b16 %v919, %v919
    %v926 = vpack.c.b16 %v920, %v920
    %v927 = vpack.c.b16 %v921, %v921
    %v928 = vpack.c.b16 %v922, %v922
    %v930 = vshrl.u32 %v923, 16
    %v932 = vshll.u32 %v923, 16
    %v934 = vrot.slane %v932, 1
    %v935 = vor.u32 %v930, %v934
    %v937 = vshrl.u32 %v924, 16
    %v939 = vshll.u32 %v924, 16
    %v941 = vrot.slane %v939, 1
    %v942 = vor.u32 %v937, %v941
    %v944 = vshrl.u32 %v925, 16
    %v946 = vshll.u32 %v925, 16
    %v948 = vrot.slane %v946, 1
    %v949 = vor.u32 %v944, %v948
    %v951 = vshrl.u32 %v926, 16
    %v953 = vshll.u32 %v926, 16
    %v955 = vrot.slane %v953, 1
    %v956 = vor.u32 %v951, %v955
    %v958 = vshrl.u32 %v927, 16
    %v960 = vshll.u32 %v927, 16
    %v962 = vrot.slane %v960, 1
    %v963 = vor.u32 %v958, %v962
    %v965 = vshrl.u32 %v928, 16
    %v967 = vshll.u32 %v928, 16
    %v969 = vrot.slane %v967, 1
    %v970 = vor.u32 %v965, %v969
    %v1073 = vunpack.c.l.b16 %v818
    %v1074 = vunpack.c.l.b16 %v819
    %v1075 = vunpack.c.l.b16 %v820
    %v1076 = vunpack.c.l.b16 %v821
    %v1077 = vunpack.c.l.b16 %v822
    %v1078 = vunpack.c.l.b16 %v823
    %v1079 = vunpack.c.l.b16 %v824
    %v1080 = vunpack.c.l.b16 %v825
    %v1081 = vunpack.c.l.b16 %v826
    %v1082 = vunpack.c.l.b16 %v827
    %v1083 = vunpack.c.l.b16 %v828
    %v1084 = vunpack.c.l.b16 %v829
    %v1085 = vunpack.c.l.b16 %v830
    %v1086 = vunpack.c.l.b16 %v831
    %v1087 = vunpack.c.l.b16 %v832
    %v1088 = vunpack.c.l.b16 %v833
    %v1089 = vunpack.c.l.b16 %v834
    %v1090 = vunpack.c.l.b16 %v835
    %v1091 = vunpack.c.l.b16 %v836
    %v1092 = vunpack.c.l.b16 %v837
    %v1093 = vunpack.c.l.b16 %v838
    %v1094 = vunpack.c.l.b16 %v839
    %v1095 = vunpack.c.l.b16 %v840
    %v1096 = vunpack.c.l.b16 %v841
    %v1097 = vunpack.c.l.b16 %v842
    %v1098 = vunpack.c.l.b16 %v843
    %v1099 = vunpack.c.l.b16 %v844
    %v1100 = vunpack.c.l.b16 %v845
    %v1101 = vunpack.c.l.b16 %v846
    %v1102 = vunpack.c.l.b16 %v847
    %v1103 = vunpack.c.l.b16 %v848
    %v1104 = vunpack.c.l.b16 %v849
    %v1105 = vunpack.c.l.b16 %v850
    %v1106 = vunpack.c.l.b16 %v851
    %v1107 = vunpack.c.l.b16 %v852
    %v1108 = vunpack.c.l.b16 %v853
    %v1109 = vunpack.c.l.b16 %v854
    %v1110 = vunpack.c.l.b16 %v855
    %v1111 = vunpack.c.l.b16 %v856
    %v1112 = vunpack.c.l.b16 %v857
    %v1113 = vunpack.c.l.b16 %v858
    %v1114 = vunpack.c.l.b16 %v859
    %v1115 = vunpack.c.l.b16 %v860
    %v1116 = vunpack.c.l.b16 %v861
    %v1117 = vunpack.c.l.b16 %v862
    %v1118 = vunpack.c.l.b16 %v863
    %v1119 = vunpack.c.l.b16 %v864
    %v1120 = vunpack.c.l.b16 %v865
    %v1121 = vunpack.c.l.b16 %v866
    %v1122 = vunpack.c.l.b16 %v867
    %v1123 = vunpack.c.l.b16 %v868
    %v1124 = vunpack.c.l.b16 %v869
    %v1125 = vunpack.c.l.b16 %v870
    %v1126 = vunpack.c.l.b16 %v871
    %v1127 = vunpack.c.l.b16 %v872
    %v1128 = vunpack.c.l.b16 %v873
    %v1129 = vunpack.c.l.b16 %v874
    %v1130 = vunpack.c.l.b16 %v875
    %v1131 = vunpack.c.l.b16 %v876
    %v1132 = vunpack.c.l.b16 %v877
    %v1133 = vunpack.c.l.b16 %v878
    %v1134 = vunpack.c.l.b16 %v879
    %v1135 = vunpack.c.l.b16 %v880
    %v1136 = vunpack.c.l.b16 %v881
    %v1137 = vunpack.c.l.b16 %v882
    %v1138 = vunpack.c.l.b16 %v883
    %v1139 = vunpack.c.l.b16 %v884
    %v1140 = vunpack.c.l.b16 %v885
    %v1141 = vunpack.c.l.b16 %v886
    %v1142 = vunpack.c.l.b16 %v887
    %v1143 = vunpack.c.l.b16 %v888
    %v1144 = vunpack.c.l.b16 %v889
    %v1145 = vunpack.c.l.b16 %v890
    %v1146 = vunpack.c.l.b16 %v891
    %v1147 = vunpack.c.l.b16 %v892
    %v1148 = vunpack.c.l.b16 %v893
    %v1149 = vunpack.c.l.b16 %v894
    %v1150 = vunpack.c.l.b16 %v895
    %v1151 = vunpack.c.l.b16 %v896
    %v1152 = vunpack.c.l.b16 %v897
    %v1153 = vunpack.c.l.b16 %v898
    %v1154 = vunpack.c.l.b16 %v899
    %v1155 = vunpack.c.l.b16 %v900
    %v1156 = vunpack.c.l.b16 %v901
    %v1157 = vunpack.c.l.b16 %v902
    %v1158 = vunpack.c.l.b16 %v903
    %v1159 = vunpack.c.l.b16 %v904
    %v1160 = vunpack.c.l.b16 %v905
    %v1161 = vunpack.c.l.b16 %v906
    %v1162 = vunpack.c.l.b16 %v907
    %v1163 = vunpack.c.l.b16 %v908
    %v1164 = vunpack.c.l.b16 %v909
    %v1165 = vunpack.c.l.b16 %v910
    %v1166 = vunpack.c.l.b16 %v911
    %v1167 = vunpack.c.l.b16 %v912
    %v1168 = vunpack.c.l.b16 %v913
    %v1169 = vpack.c.b16 %v1074, %v1073
    %v1170 = vpack.c.b16 %v1076, %v1075
    %v1171 = vpack.c.b16 %v1078, %v1077
    %v1172 = vpack.c.b16 %v1080, %v1079
    %v1173 = vpack.c.b16 %v1082, %v1081
    %v1174 = vpack.c.b16 %v1084, %v1083
    %v1175 = vpack.c.b16 %v1086, %v1085
    %v1176 = vpack.c.b16 %v1088, %v1087
    %v1177 = vpack.c.b16 %v1090, %v1089
    %v1178 = vpack.c.b16 %v1092, %v1091
    %v1179 = vpack.c.b16 %v1094, %v1093
    %v1180 = vpack.c.b16 %v1096, %v1095
    %v1181 = vpack.c.b16 %v1098, %v1097
    %v1182 = vpack.c.b16 %v1100, %v1099
    %v1183 = vpack.c.b16 %v1102, %v1101
    %v1184 = vpack.c.b16 %v1104, %v1103
    %v1185 = vpack.c.b16 %v1106, %v1105
    %v1186 = vpack.c.b16 %v1108, %v1107
    %v1187 = vpack.c.b16 %v1110, %v1109
    %v1188 = vpack.c.b16 %v1112, %v1111
    %v1189 = vpack.c.b16 %v1114, %v1113
    %v1190 = vpack.c.b16 %v1116, %v1115
    %v1191 = vpack.c.b16 %v1118, %v1117
    %v1192 = vpack.c.b16 %v1120, %v1119
    %v1193 = vpack.c.b16 %v1122, %v1121
    %v1194 = vpack.c.b16 %v1124, %v1123
    %v1195 = vpack.c.b16 %v1126, %v1125
    %v1196 = vpack.c.b16 %v1128, %v1127
    %v1197 = vpack.c.b16 %v1130, %v1129
    %v1198 = vpack.c.b16 %v1132, %v1131
    %v1199 = vpack.c.b16 %v1134, %v1133
    %v1200 = vpack.c.b16 %v1136, %v1135
    %v1201 = vpack.c.b16 %v1138, %v1137
    %v1202 = vpack.c.b16 %v1140, %v1139
    %v1203 = vpack.c.b16 %v1142, %v1141
    %v1204 = vpack.c.b16 %v1144, %v1143
    %v1205 = vpack.c.b16 %v1146, %v1145
    %v1206 = vpack.c.b16 %v1148, %v1147
    %v1207 = vpack.c.b16 %v1150, %v1149
    %v1208 = vpack.c.b16 %v1152, %v1151
    %v1209 = vpack.c.b16 %v1154, %v1153
    %v1210 = vpack.c.b16 %v1156, %v1155
    %v1211 = vpack.c.b16 %v1158, %v1157
    %v1212 = vpack.c.b16 %v1160, %v1159
    %v1213 = vpack.c.b16 %v1162, %v1161
    %v1214 = vpack.c.b16 %v1164, %v1163
    %v1215 = vpack.c.b16 %v1166, %v1165
    %v1216 = vpack.c.b16 %v1168, %v1167
    %1265 = vmatprep.subr.bf16.mxu0 0
    %1266 = vmatpush1.bf16.msra.mxu0 %v1169
    %1267 = vmatprep.subr.bf16.mxu0 0
    %1268 = vmatpush1.bf16.msra.mxu0 %v1170
    %1269 = vmatprep.subr.bf16.mxu0 0
    %1270 = vmatpush1.bf16.msra.mxu0 %v1171
    %1271 = vmatprep.subr.bf16.mxu0 0
    %1272 = vmatpush1.bf16.msra.mxu0 %v1172
    %1273 = vmatprep.subr.bf16.mxu0 0
    %1274 = vmatpush1.bf16.msra.mxu0 %v1173
    %1275 = vmatprep.subr.bf16.mxu0 0
    %1276 = vmatpush1.bf16.msra.mxu0 %v1174
    %1277 = vmatprep.subr.bf16.mxu0 0
    %1278 = vmatpush1.bf16.msra.mxu0 %v1175
    %1279 = vmatprep.subr.bf16.mxu0 0
    %1280 = vmatpush1.bf16.msra.mxu0 %v1176
    %1281 = vmatprep.subr.bf16.mxu0 0
    %1282 = vmatpush1.bf16.msra.mxu0 %v1177
    %1283 = vmatprep.subr.bf16.mxu0 0
    %1284 = vmatpush1.bf16.msra.mxu0 %v1178
    %1285 = vmatprep.subr.bf16.mxu0 0
    %1286 = vmatpush1.bf16.msra.mxu0 %v1179
    %1287 = vmatprep.subr.bf16.mxu0 0
    %1288 = vmatpush1.bf16.msra.mxu0 %v1180
    %1289 = vmatprep.subr.bf16.mxu0 0
    %1290 = vmatpush1.bf16.msra.mxu0 %v1181
    %1291 = vmatprep.subr.bf16.mxu0 0
    %1292 = vmatpush1.bf16.msra.mxu0 %v1182
    %1293 = vmatprep.subr.bf16.mxu0 0
    %1294 = vmatpush1.bf16.msra.mxu0 %v1183
    %1295 = vmatprep.subr.bf16.mxu0 0
    %1296 = vmatpush1.bf16.msra.mxu0 %v1184
    %1297 = vmatprep.mubr.bf16.mxu0 %v942
    %1298 = vmatmul.mubr.bf16.gmra.mrb[0].mxu0 %v935
    %v1299 = vpop.f32.mrb[0].mxu0
    %v1300 = vadd.f32 0.0, %v1299
    %v1301 = vpop.f32.mrb[0].mxu0
    %v1302 = vpop.f32.mrb[0].mxu0
    %v1303 = vpop.f32.mrb[0].mxu0
    %1304 = vdwg.mxu0
    %1305 = vmatprep.subr.bf16.mxu0 0
    %1306 = vmatpush1.bf16.msra.mxu0 %v1185
    %1307 = vmatprep.subr.bf16.mxu0 0
    %1308 = vmatpush1.bf16.msra.mxu0 %v1186
    %1309 = vmatprep.subr.bf16.mxu0 0
    %1310 = vmatpush1.bf16.msra.mxu0 %v1187
    %1311 = vmatprep.subr.bf16.mxu0 0
    %1312 = vmatpush1.bf16.msra.mxu0 %v1188
    %1313 = vmatprep.subr.bf16.mxu0 0
    %1314 = vmatpush1.bf16.msra.mxu0 %v1189
    %1315 = vmatprep.subr.bf16.mxu0 0
    %1316 = vmatpush1.bf16.msra.mxu0 %v1190
    %1317 = vmatprep.subr.bf16.mxu0 0
    %1318 = vmatpush1.bf16.msra.mxu0 %v1191
    %1319 = vmatprep.subr.bf16.mxu0 0
    %1320 = vmatpush1.bf16.msra.mxu0 %v1192
    %1321 = vmatprep.subr.bf16.mxu0 0
    %1322 = vmatpush1.bf16.msra.mxu0 %v1193
    %1323 = vmatprep.subr.bf16.mxu0 0
    %1324 = vmatpush1.bf16.msra.mxu0 %v1194
    %1325 = vmatprep.subr.bf16.mxu0 0
    %1326 = vmatpush1.bf16.msra.mxu0 %v1195
    %1327 = vmatprep.subr.bf16.mxu0 0
    %1328 = vmatpush1.bf16.msra.mxu0 %v1196
    %1329 = vmatprep.subr.bf16.mxu0 0
    %1330 = vmatpush1.bf16.msra.mxu0 %v1197
    %1331 = vmatprep.subr.bf16.mxu0 0
    %1332 = vmatpush1.bf16.msra.mxu0 %v1198
    %1333 = vmatprep.subr.bf16.mxu0 0
    %1334 = vmatpush1.bf16.msra.mxu0 %v1199
    %1335 = vmatprep.subr.bf16.mxu0 0
    %1336 = vmatpush1.bf16.msra.mxu0 %v1200
    %1337 = vmatprep.mubr.bf16.mxu0 %v956
    %1338 = vmatmul.mubr.bf16.gmra.mrb[0].mxu0 %v949
    %v1339 = vpop.f32.mrb[0].mxu0
    %v1340 = vadd.f32 %v1300, %v1339
    %v1341 = vpop.f32.mrb[0].mxu0
    %v1342 = vpop.f32.mrb[0].mxu0
    %v1343 = vpop.f32.mrb[0].mxu0
    %1344 = vdwg.mxu0
    %1345 = vmatprep.subr.bf16.mxu0 0
    %1346 = vmatpush1.bf16.msra.mxu0 %v1201
    %1347 = vmatprep.subr.bf16.mxu0 0
    %1348 = vmatpush1.bf16.msra.mxu0 %v1202
    %1349 = vmatprep.subr.bf16.mxu0 0
    %1350 = vmatpush1.bf16.msra.mxu0 %v1203
    %1351 = vmatprep.subr.bf16.mxu0 0
    %1352 = vmatpush1.bf16.msra.mxu0 %v1204
    %1353 = vmatprep.subr.bf16.mxu0 0
    %1354 = vmatpush1.bf16.msra.mxu0 %v1205
    %1355 = vmatprep.subr.bf16.mxu0 0
    %1356 = vmatpush1.bf16.msra.mxu0 %v1206
    %1357 = vmatprep.subr.bf16.mxu0 0
    %1358 = vmatpush1.bf16.msra.mxu0 %v1207
    %1359 = vmatprep.subr.bf16.mxu0 0
    %1360 = vmatpush1.bf16.msra.mxu0 %v1208
    %1361 = vmatprep.subr.bf16.mxu0 0
    %1362 = vmatpush1.bf16.msra.mxu0 %v1209
    %1363 = vmatprep.subr.bf16.mxu0 0
    %1364 = vmatpush1.bf16.msra.mxu0 %v1210
    %1365 = vmatprep.subr.bf16.mxu0 0
    %1366 = vmatpush1.bf16.msra.mxu0 %v1211
    %1367 = vmatprep.subr.bf16.mxu0 0
    %1368 = vmatpush1.bf16.msra.mxu0 %v1212
    %1369 = vmatprep.subr.bf16.mxu0 0
    %1370 = vmatpush1.bf16.msra.mxu0 %v1213
    %1371 = vmatprep.subr.bf16.mxu0 0
    %1372 = vmatpush1.bf16.msra.mxu0 %v1214
    %1373 = vmatprep.subr.bf16.mxu0 0
    %1374 = vmatpush1.bf16.msra.mxu0 %v1215
    %1375 = vmatprep.subr.bf16.mxu0 0
    %1376 = vmatpush1.bf16.msra.mxu0 %v1216
    %1377 = vmatprep.mubr.bf16.mxu0 %v970
    %1378 = vmatmul.mubr.bf16.gmra.mrb[0].mxu0 %v963
    %v1379 = vpop.f32.mrb[0].mxu0
    %v1380 = vadd.f32 %v1340, %v1379
    %v1381 = vpop.f32.mrb[0].mxu0
    %v1382 = vpop.f32.mrb[0].mxu0
    %v1383 = vpop.f32.mrb[0].mxu0
    %1384 = vdwg.mxu0
    %v1401 = vunpack.c.l.b16 %v799
    %v1402 = vunpack.c.l.b16 %v800
    %v1403 = vunpack.c.l.b16 %v801
    %v1404 = vunpack.c.l.b16 %v802
    %v1405 = vunpack.c.l.b16 %v803
    %v1406 = vunpack.c.l.b16 %v804
    %v1407 = vunpack.c.l.b16 %v805
    %v1408 = vunpack.c.l.b16 %v806
    %v1409 = vunpack.c.l.b16 %v807
    %v1410 = vunpack.c.l.b16 %v808
    %v1411 = vunpack.c.l.b16 %v809
    %v1412 = vunpack.c.l.b16 %v810
    %v1413 = vunpack.c.l.b16 %v811
    %v1414 = vunpack.c.l.b16 %v812
    %v1415 = vunpack.c.l.b16 %v813
    %v1416 = vunpack.c.l.b16 %v814
    %v1417 = vpack.c.b16 %v1402, %v1401
    %v1418 = vpack.c.b16 %v1404, %v1403
    %v1419 = vpack.c.b16 %v1406, %v1405
    %v1420 = vpack.c.b16 %v1408, %v1407
    %v1421 = vpack.c.b16 %v1410, %v1409
    %v1422 = vpack.c.b16 %v1412, %v1411
    %v1423 = vpack.c.b16 %v1414, %v1413
    %v1424 = vpack.c.b16 %v1416, %v1415
    %1433 = vmatprep.subr.bf16.mxu0 0
    %1434 = vmatpush1.bf16.msra.mxu0 %v1417
    %1435 = vmatprep.subr.bf16.mxu0 0
    %1436 = vmatpush1.bf16.msra.mxu0 %v1418
    %1437 = vmatprep.subr.bf16.mxu0 0
    %1438 = vmatpush1.bf16.msra.mxu0 %v1419
    %1439 = vmatprep.subr.bf16.mxu0 0
    %1440 = vmatpush1.bf16.msra.mxu0 %v1420
    %1441 = vmatprep.subr.bf16.mxu0 0
    %1442 = vmatpush1.bf16.msra.mxu0 %v1421
    %1443 = vmatprep.subr.bf16.mxu0 0
    %1444 = vmatpush1.bf16.msra.mxu0 %v1422
    %1445 = vmatprep.subr.bf16.mxu0 0
    %1446 = vmatpush1.bf16.msra.mxu0 %v1423
    %1447 = vmatprep.subr.bf16.mxu0 0
    %1448 = vmatpush1.bf16.msra.mxu0 %v1424
    %1449 = vmatprep.subr.bf16.mxu0 0
    %1450 = vmatpush1.bf16.msra.mxu0 0
    %1451 = vmatprep.subr.bf16.mxu0 0
    %1452 = vmatpush1.bf16.msra.mxu0 0
    %1453 = vmatprep.subr.bf16.mxu0 0
    %1454 = vmatpush1.bf16.msra.mxu0 0
    %1455 = vmatprep.subr.bf16.mxu0 0
    %1456 = vmatpush1.bf16.msra.mxu0 0
    %1457 = vmatprep.subr.bf16.mxu0 0
    %1458 = vmatpush1.bf16.msra.mxu0 0
    %1459 = vmatprep.subr.bf16.mxu0 0
    %1460 = vmatpush1.bf16.msra.mxu0 0
    %1461 = vmatprep.subr.bf16.mxu0 0
    %1462 = vmatpush1.bf16.msra.mxu0 0
    %1463 = vmatprep.subr.bf16.mxu0 0
    %1464 = vmatpush1.bf16.msra.mxu0 0
    %1465 = vmatprep.mubr.bf16.mxu0 0
    %1466 = vmatmul.mubr.bf16.gmra.mrb[0].mxu0 %v798
    %v1467 = vpop.f32.mrb[0].mxu0
    %v1468 = vadd.f32 %v1380, %v1467
    %v1469 = vpop.f32.mrb[0].mxu0
    %v1470 = vpop.f32.mrb[0].mxu0
    %v1471 = vpop.f32.mrb[0].mxu0
    %1472 = vdwg.mxu0
    %v1473 = vld [vmem:[%s2] sm:$0x1]
    %v1475 = vlaneseq
    %v1476 = vshrl.u32 %v1475, 7
    %v1477 = vsub.s32 0, %v1476
    %v1478 = vrot.slane %v1473, %v1477
    %v1480 = vadd.f32 %v1468, %v1478
    %v1481 = vmax.f32 %v1480, 0.0
    %v1482 = vpack.c.bf16 %v1481, %v1481
    %v1484 = vunpack.c.l.b16 %v1482
    %v1485 = vpack.c.b16 %v1484, %v1484
    %v1487 = vshrl.u32 %v1485, 16
    %v1489 = vrot.slane %v1487, 7
    %v1490 = vshll.u32 %v1485, 16
    %v1492 = vor.u32 %v1489, %v1490
    %v1494 = vld [vmem:[#allocation2 + $0x4] sm:$0x7]
    %v1495 = vsel %vm794, %v1492, %v1494
    %1496 = vst [vmem:[#allocation2 + $0x4] sm:$0x7] %v1495
    %v1497 = vld [vmem:[%s0 + $0x4] sm:$0x77]
    %v1498 = vld [vmem:[%s0 + $0xc] sm:$0x77]
    %v1499 = vld [vmem:[%s0 + $0x14] sm:$0x77]
    %v1500 = vld [vmem:[%s0 + $0x1c] sm:$0x7]
    %v1501 = vld [vmem:[#allocation4] sm:$0xf]
    %v1502 = vld [vmem:[#allocation4 + $0x4] sm:$0xf]
    %v1503 = vld [vmem:[#allocation4 + $0x8] sm:$0xf]
    %v1504 = vld [vmem:[#allocation4 + $0xc] sm:$0xf]
    %v1505 = vld [vmem:[#allocation4 + $0x10] sm:$0xf]
    %v1506 = vld [vmem:[#allocation4 + $0x14] sm:$0xf]
    %v1507 = vld [vmem:[#allocation4 + $0x18] sm:$0xf]
    %v1508 = vld [vmem:[#allocation4 + $0x1c] sm:$0xf]
    %v1509 = vld [vmem:[#allocation4 + $0x20] sm:$0xf]
    %v1510 = vld [vmem:[#allocation4 + $0x24] sm:$0xf]
    %v1511 = vld [vmem:[#allocation4 + $0x28] sm:$0xf]
    %v1512 = vld [vmem:[#allocation4 + $0x2c] sm:$0xf]
    %v1513 = vld [vmem:[#allocation4 + $0x30] sm:$0xf]
    %v1514 = vld [vmem:[#allocation4 + $0x34] sm:$0xf]
    %v1515 = vld [vmem:[#allocation4 + $0x38] sm:$0xf]
    %v1516 = vld [vmem:[#allocation4 + $0x3c] sm:$0xf]
    %v1517 = vld [vmem:[#allocation4 + $0x40] sm:$0xf]
    %v1518 = vld [vmem:[#allocation4 + $0x44] sm:$0xf]
    %v1519 = vld [vmem:[#allocation4 + $0x48] sm:$0xf]
    %v1520 = vld [vmem:[#allocation4 + $0x4c] sm:$0xf]
    %v1521 = vld [vmem:[#allocation4 + $0x50] sm:$0xf]
    %v1522 = vld [vmem:[#allocation4 + $0x54] sm:$0xf]
    %v1523 = vld [vmem:[#allocation4 + $0x58] sm:$0xf]
    %v1524 = vld [vmem:[#allocation4 + $0x5c] sm:$0xf]
    %v1525 = vld [vmem:[#allocation4 + $0x60] sm:$0xf]
    %v1526 = vld [vmem:[#allocation4 + $0x64] sm:$0xf]
    %v1527 = vld [vmem:[#allocation4 + $0x68] sm:$0xf]
    %v1528 = vld [vmem:[#allocation4 + $0x6c] sm:$0xf]
    %v1529 = vld [vmem:[#allocation4 + $0x70] sm:$0xf]
    %v1530 = vld [vmem:[#allocation4 + $0x74] sm:$0xf]
    %v1531 = vld [vmem:[#allocation4 + $0x78] sm:$0xf]
    %v1532 = vld [vmem:[#allocation4 + $0x7c] sm:$0xf]
    %v1533 = vld [vmem:[#allocation4 + $0x80] sm:$0xf]
    %v1534 = vld [vmem:[#allocation4 + $0x84] sm:$0xf]
    %v1535 = vld [vmem:[#allocation4 + $0x88] sm:$0xf]
    %v1536 = vld [vmem:[#allocation4 + $0x8c] sm:$0xf]
    %v1537 = vld [vmem:[#allocation4 + $0x90] sm:$0xf]
    %v1538 = vld [vmem:[#allocation4 + $0x94] sm:$0xf]
    %v1539 = vld [vmem:[#allocation4 + $0x98] sm:$0xf]
    %v1540 = vld [vmem:[#allocation4 + $0x9c] sm:$0xf]
    %v1541 = vld [vmem:[#allocation4 + $0xa0] sm:$0xf]
    %v1542 = vld [vmem:[#allocation4 + $0xa4] sm:$0xf]
    %v1543 = vld [vmem:[#allocation4 + $0xa8] sm:$0xf]
    %v1544 = vld [vmem:[#allocation4 + $0xac] sm:$0xf]
    %v1545 = vld [vmem:[#allocation4 + $0xb0] sm:$0xf]
    %v1546 = vld [vmem:[#allocation4 + $0xb4] sm:$0xf]
    %v1547 = vld [vmem:[#allocation4 + $0xb8] sm:$0xf]
    %v1548 = vld [vmem:[#allocation4 + $0xbc] sm:$0xf]
    %v1549 = vld [vmem:[#allocation4 + $0xc0] sm:$0xf]
    %v1550 = vld [vmem:[#allocation4 + $0xc4] sm:$0xf]
    %v1551 = vld [vmem:[#allocation4 + $0xc8] sm:$0xf]
    %v1552 = vld [vmem:[#allocation4 + $0xcc] sm:$0xf]
    %v1553 = vld [vmem:[#allocation4 + $0xd0] sm:$0xf]
    %v1554 = vld [vmem:[#allocation4 + $0xd4] sm:$0xf]
    %v1555 = vld [vmem:[#allocation4 + $0xd8] sm:$0xf]
    %v1556 = vld [vmem:[#allocation4 + $0xdc] sm:$0xf]
    %v1557 = vld [vmem:[#allocation4 + $0xe0] sm:$0xf]
    %v1558 = vld [vmem:[#allocation4 + $0xe4] sm:$0xf]
    %v1559 = vld [vmem:[#allocation4 + $0xe8] sm:$0xf]
    %v1560 = vld [vmem:[#allocation4 + $0xec] sm:$0xf]
    %v1561 = vld [vmem:[#allocation4 + $0xf0] sm:$0xf]
    %v1562 = vld [vmem:[#allocation4 + $0xf4] sm:$0xf]
    %v1563 = vld [vmem:[#allocation4 + $0xf8] sm:$0xf]
    %v1564 = vld [vmem:[#allocation4 + $0xfc] sm:$0xf]
    %v1565 = vld [vmem:[#allocation4 + $0x100] sm:$0xf]
    %v1566 = vld [vmem:[#allocation4 + $0x104] sm:$0xf]
    %v1567 = vld [vmem:[#allocation4 + $0x108] sm:$0xf]
    %v1568 = vld [vmem:[#allocation4 + $0x10c] sm:$0xf]
    %v1569 = vld [vmem:[#allocation4 + $0x110] sm:$0xf]
    %v1570 = vld [vmem:[#allocation4 + $0x114] sm:$0xf]
    %v1571 = vld [vmem:[#allocation4 + $0x118] sm:$0xf]
    %v1572 = vld [vmem:[#allocation4 + $0x11c] sm:$0xf]
    %v1573 = vld [vmem:[#allocation4 + $0x120] sm:$0xf]
    %v1574 = vld [vmem:[#allocation4 + $0x124] sm:$0xf]
    %v1575 = vld [vmem:[#allocation4 + $0x128] sm:$0xf]
    %v1576 = vld [vmem:[#allocation4 + $0x12c] sm:$0xf]
    %v1577 = vld [vmem:[#allocation4 + $0x130] sm:$0xf]
    %v1578 = vld [vmem:[#allocation4 + $0x134] sm:$0xf]
    %v1579 = vld [vmem:[#allocation4 + $0x138] sm:$0xf]
    %v1580 = vld [vmem:[#allocation4 + $0x13c] sm:$0xf]
    %v1581 = vld [vmem:[#allocation4 + $0x140] sm:$0xf]
    %v1582 = vld [vmem:[#allocation4 + $0x144] sm:$0xf]
    %v1583 = vld [vmem:[#allocation4 + $0x148] sm:$0xf]
    %v1584 = vld [vmem:[#allocation4 + $0x14c] sm:$0xf]
    %v1585 = vld [vmem:[#allocation4 + $0x150] sm:$0xf]
    %v1586 = vld [vmem:[#allocation4 + $0x154] sm:$0xf]
    %v1587 = vld [vmem:[#allocation4 + $0x158] sm:$0xf]
    %v1588 = vld [vmem:[#allocation4 + $0x15c] sm:$0xf]
    %v1589 = vld [vmem:[#allocation4 + $0x160] sm:$0xf]
    %v1590 = vld [vmem:[#allocation4 + $0x164] sm:$0xf]
    %v1591 = vld [vmem:[#allocation4 + $0x168] sm:$0xf]
    %v1592 = vld [vmem:[#allocation4 + $0x16c] sm:$0xf]
    %v1593 = vld [vmem:[#allocation4 + $0x170] sm:$0xf]
    %v1594 = vld [vmem:[#allocation4 + $0x174] sm:$0xf]
    %v1595 = vld [vmem:[#allocation4 + $0x178] sm:$0xf]
    %v1596 = vld [vmem:[#allocation4 + $0x17c] sm:$0xf]
    %v1597 = vld [vmem:[#allocation4 + $0x180] sm:$0xf]
    %v1598 = vld [vmem:[#allocation4 + $0x184] sm:$0xf]
    %v1599 = vld [vmem:[#allocation4 + $0x188] sm:$0xf]
    %v1600 = vld [vmem:[#allocation4 + $0x18c] sm:$0xf]
    %v1601 = vld [vmem:[#allocation4 + $0x190] sm:$0xf]
    %v1602 = vld [vmem:[#allocation4 + $0x194] sm:$0xf]
    %v1603 = vld [vmem:[#allocation4 + $0x198] sm:$0xf]
    %v1604 = vld [vmem:[#allocation4 + $0x19c] sm:$0xf]
    %v1605 = vld [vmem:[#allocation4 + $0x1a0] sm:$0xf]
    %v1606 = vld [vmem:[#allocation4 + $0x1a4] sm:$0xf]
    %v1607 = vld [vmem:[#allocation4 + $0x1a8] sm:$0xf]
    %v1608 = vld [vmem:[#allocation4 + $0x1ac] sm:$0xf]
    %v1609 = vld [vmem:[#allocation4 + $0x1b0] sm:$0xf]
    %v1610 = vld [vmem:[#allocation4 + $0x1b4] sm:$0xf]
    %v1611 = vld [vmem:[#allocation4 + $0x1b8] sm:$0xf]
    %v1612 = vld [vmem:[#allocation4 + $0x1bc] sm:$0xf]
    %v1613 = vld [vmem:[%s2] sm:$0x1]
    %v1615 = vlaneseq
    %v1616 = vshrl.u32 %v1615, 7
    %v1617 = vsub.s32 0, %v1616
    %v1618 = vrot.slane %v1613, %v1617
    %v1624 = vunpack.c.l.b16 %v1497
    %v1625 = vunpack.c.h.b16 %v1497
    %v1626 = vunpack.c.l.b16 %v1498
    %v1627 = vunpack.c.h.b16 %v1498
    %v1628 = vunpack.c.l.b16 %v1499
    %v1629 = vunpack.c.h.b16 %v1499
    %v1630 = vunpack.c.l.b16 %v1500
    %v1631 = vpack.c.b16 %v1624, %v1624
    %v1632 = vpack.c.b16 %v1625, %v1625
    %v1633 = vpack.c.b16 %v1626, %v1626
    %v1634 = vpack.c.b16 %v1627, %v1627
    %v1635 = vpack.c.b16 %v1628, %v1628
    %v1636 = vpack.c.b16 %v1629, %v1629
    %v1637 = vpack.c.b16 %v1630, %v1630
    %v1639 = vshrl.u32 %v1631, 16
    %v1641 = vshll.u32 %v1631, 16
    %v1643 = vrot.slane %v1641, 1
    %v1644 = vor.u32 %v1639, %v1643
    %v1646 = vshrl.u32 %v1632, 16
    %v1648 = vshll.u32 %v1632, 16
    %v1650 = vrot.slane %v1648, 1
    %v1651 = vor.u32 %v1646, %v1650
    %v1653 = vshrl.u32 %v1633, 16
    %v1655 = vshll.u32 %v1633, 16
    %v1657 = vrot.slane %v1655, 1
    %v1658 = vor.u32 %v1653, %v1657
    %v1660 = vshrl.u32 %v1634, 16
    %v1662 = vshll.u32 %v1634, 16
    %v1664 = vrot.slane %v1662, 1
    %v1665 = vor.u32 %v1660, %v1664
    %v1667 = vshrl.u32 %v1635, 16
    %v1669 = vshll.u32 %v1635, 16
    %v1671 = vrot.slane %v1669, 1
    %v1672 = vor.u32 %v1667, %v1671
    %v1674 = vshrl.u32 %v1636, 16
    %v1676 = vshll.u32 %v1636, 16
    %v1678 = vrot.slane %v1676, 1
    %v1679 = vor.u32 %v1674, %v1678
    %v1681 = vshrl.u32 %v1637, 16
    %v1683 = vshll.u32 %v1637, 16
    %v1685 = vrot.slane %v1683, 1
    %v1686 = vor.u32 %v1681, %v1685
    %v1806 = vunpack.c.l.b16 %v1501
    %v1807 = vunpack.c.l.b16 %v1502
    %v1808 = vunpack.c.l.b16 %v1503
    %v1809 = vunpack.c.l.b16 %v1504
    %v1810 = vunpack.c.l.b16 %v1505
    %v1811 = vunpack.c.l.b16 %v1506
    %v1812 = vunpack.c.l.b16 %v1507
    %v1813 = vunpack.c.l.b16 %v1508
    %v1814 = vunpack.c.l.b16 %v1509
    %v1815 = vunpack.c.l.b16 %v1510
    %v1816 = vunpack.c.l.b16 %v1511
    %v1817 = vunpack.c.l.b16 %v1512
    %v1818 = vunpack.c.l.b16 %v1513
    %v1819 = vunpack.c.l.b16 %v1514
    %v1820 = vunpack.c.l.b16 %v1515
    %v1821 = vunpack.c.l.b16 %v1516
    %v1822 = vunpack.c.l.b16 %v1517
    %v1823 = vunpack.c.l.b16 %v1518
    %v1824 = vunpack.c.l.b16 %v1519
    %v1825 = vunpack.c.l.b16 %v1520
    %v1826 = vunpack.c.l.b16 %v1521
    %v1827 = vunpack.c.l.b16 %v1522
    %v1828 = vunpack.c.l.b16 %v1523
    %v1829 = vunpack.c.l.b16 %v1524
    %v1830 = vunpack.c.l.b16 %v1525
    %v1831 = vunpack.c.l.b16 %v1526
    %v1832 = vunpack.c.l.b16 %v1527
    %v1833 = vunpack.c.l.b16 %v1528
    %v1834 = vunpack.c.l.b16 %v1529
    %v1835 = vunpack.c.l.b16 %v1530
    %v1836 = vunpack.c.l.b16 %v1531
    %v1837 = vunpack.c.l.b16 %v1532
    %v1838 = vunpack.c.l.b16 %v1533
    %v1839 = vunpack.c.l.b16 %v1534
    %v1840 = vunpack.c.l.b16 %v1535
    %v1841 = vunpack.c.l.b16 %v1536
    %v1842 = vunpack.c.l.b16 %v1537
    %v1843 = vunpack.c.l.b16 %v1538
    %v1844 = vunpack.c.l.b16 %v1539
    %v1845 = vunpack.c.l.b16 %v1540
    %v1846 = vunpack.c.l.b16 %v1541
    %v1847 = vunpack.c.l.b16 %v1542
    %v1848 = vunpack.c.l.b16 %v1543
    %v1849 = vunpack.c.l.b16 %v1544
    %v1850 = vunpack.c.l.b16 %v1545
    %v1851 = vunpack.c.l.b16 %v1546
    %v1852 = vunpack.c.l.b16 %v1547
    %v1853 = vunpack.c.l.b16 %v1548
    %v1854 = vunpack.c.l.b16 %v1549
    %v1855 = vunpack.c.l.b16 %v1550
    %v1856 = vunpack.c.l.b16 %v1551
    %v1857 = vunpack.c.l.b16 %v1552
    %v1858 = vunpack.c.l.b16 %v1553
    %v1859 = vunpack.c.l.b16 %v1554
    %v1860 = vunpack.c.l.b16 %v1555
    %v1861 = vunpack.c.l.b16 %v1556
    %v1862 = vunpack.c.l.b16 %v1557
    %v1863 = vunpack.c.l.b16 %v1558
    %v1864 = vunpack.c.l.b16 %v1559
    %v1865 = vunpack.c.l.b16 %v1560
    %v1866 = vunpack.c.l.b16 %v1561
    %v1867 = vunpack.c.l.b16 %v1562
    %v1868 = vunpack.c.l.b16 %v1563
    %v1869 = vunpack.c.l.b16 %v1564
    %v1870 = vunpack.c.l.b16 %v1565
    %v1871 = vunpack.c.l.b16 %v1566
    %v1872 = vunpack.c.l.b16 %v1567
    %v1873 = vunpack.c.l.b16 %v1568
    %v1874 = vunpack.c.l.b16 %v1569
    %v1875 = vunpack.c.l.b16 %v1570
    %v1876 = vunpack.c.l.b16 %v1571
    %v1877 = vunpack.c.l.b16 %v1572
    %v1878 = vunpack.c.l.b16 %v1573
    %v1879 = vunpack.c.l.b16 %v1574
    %v1880 = vunpack.c.l.b16 %v1575
    %v1881 = vunpack.c.l.b16 %v1576
    %v1882 = vunpack.c.l.b16 %v1577
    %v1883 = vunpack.c.l.b16 %v1578
    %v1884 = vunpack.c.l.b16 %v1579
    %v1885 = vunpack.c.l.b16 %v1580
    %v1886 = vunpack.c.l.b16 %v1581
    %v1887 = vunpack.c.l.b16 %v1582
    %v1888 = vunpack.c.l.b16 %v1583
    %v1889 = vunpack.c.l.b16 %v1584
    %v1890 = vunpack.c.l.b16 %v1585
    %v1891 = vunpack.c.l.b16 %v1586
    %v1892 = vunpack.c.l.b16 %v1587
    %v1893 = vunpack.c.l.b16 %v1588
    %v1894 = vunpack.c.l.b16 %v1589
    %v1895 = vunpack.c.l.b16 %v1590
    %v1896 = vunpack.c.l.b16 %v1591
    %v1897 = vunpack.c.l.b16 %v1592
    %v1898 = vunpack.c.l.b16 %v1593
    %v1899 = vunpack.c.l.b16 %v1594
    %v1900 = vunpack.c.l.b16 %v1595
    %v1901 = vunpack.c.l.b16 %v1596
    %v1902 = vunpack.c.l.b16 %v1597
    %v1903 = vunpack.c.l.b16 %v1598
    %v1904 = vunpack.c.l.b16 %v1599
    %v1905 = vunpack.c.l.b16 %v1600
    %v1906 = vunpack.c.l.b16 %v1601
    %v1907 = vunpack.c.l.b16 %v1602
    %v1908 = vunpack.c.l.b16 %v1603
    %v1909 = vunpack.c.l.b16 %v1604
    %v1910 = vunpack.c.l.b16 %v1605
    %v1911 = vunpack.c.l.b16 %v1606
    %v1912 = vunpack.c.l.b16 %v1607
    %v1913 = vunpack.c.l.b16 %v1608
    %v1914 = vunpack.c.l.b16 %v1609
    %v1915 = vunpack.c.l.b16 %v1610
    %v1916 = vunpack.c.l.b16 %v1611
    %v1917 = vunpack.c.l.b16 %v1612
    %v1918 = vpack.c.b16 %v1807, %v1806
    %v1919 = vpack.c.b16 %v1809, %v1808
    %v1920 = vpack.c.b16 %v1811, %v1810
    %v1921 = vpack.c.b16 %v1813, %v1812
    %v1922 = vpack.c.b16 %v1815, %v1814
    %v1923 = vpack.c.b16 %v1817, %v1816
    %v1924 = vpack.c.b16 %v1819, %v1818
    %v1925 = vpack.c.b16 %v1821, %v1820
    %v1926 = vpack.c.b16 %v1823, %v1822
    %v1927 = vpack.c.b16 %v1825, %v1824
    %v1928 = vpack.c.b16 %v1827, %v1826
    %v1929 = vpack.c.b16 %v1829, %v1828
    %v1930 = vpack.c.b16 %v1831, %v1830
    %v1931 = vpack.c.b16 %v1833, %v1832
    %v1932 = vpack.c.b16 %v1835, %v1834
    %v1933 = vpack.c.b16 %v1837, %v1836
    %v1934 = vpack.c.b16 %v1839, %v1838
    %v1935 = vpack.c.b16 %v1841, %v1840
    %v1936 = vpack.c.b16 %v1843, %v1842
    %v1937 = vpack.c.b16 %v1845, %v1844
    %v1938 = vpack.c.b16 %v1847, %v1846
    %v1939 = vpack.c.b16 %v1849, %v1848
    %v1940 = vpack.c.b16 %v1851, %v1850
    %v1941 = vpack.c.b16 %v1853, %v1852
    %v1942 = vpack.c.b16 %v1855, %v1854
    %v1943 = vpack.c.b16 %v1857, %v1856
    %v1944 = vpack.c.b16 %v1859, %v1858
    %v1945 = vpack.c.b16 %v1861, %v1860
    %v1946 = vpack.c.b16 %v1863, %v1862
    %v1947 = vpack.c.b16 %v1865, %v1864
    %v1948 = vpack.c.b16 %v1867, %v1866
    %v1949 = vpack.c.b16 %v1869, %v1868
    %v1950 = vpack.c.b16 %v1871, %v1870
    %v1951 = vpack.c.b16 %v1873, %v1872
    %v1952 = vpack.c.b16 %v1875, %v1874
    %v1953 = vpack.c.b16 %v1877, %v1876
    %v1954 = vpack.c.b16 %v1879, %v1878
    %v1955 = vpack.c.b16 %v1881, %v1880
    %v1956 = vpack.c.b16 %v1883, %v1882
    %v1957 = vpack.c.b16 %v1885, %v1884
    %v1958 = vpack.c.b16 %v1887, %v1886
    %v1959 = vpack.c.b16 %v1889, %v1888
    %v1960 = vpack.c.b16 %v1891, %v1890
    %v1961 = vpack.c.b16 %v1893, %v1892
    %v1962 = vpack.c.b16 %v1895, %v1894
    %v1963 = vpack.c.b16 %v1897, %v1896
    %v1964 = vpack.c.b16 %v1899, %v1898
    %v1965 = vpack.c.b16 %v1901, %v1900
    %v1966 = vpack.c.b16 %v1903, %v1902
    %v1967 = vpack.c.b16 %v1905, %v1904
    %v1968 = vpack.c.b16 %v1907, %v1906
    %v1969 = vpack.c.b16 %v1909, %v1908
    %v1970 = vpack.c.b16 %v1911, %v1910
    %v1971 = vpack.c.b16 %v1913, %v1912
    %v1972 = vpack.c.b16 %v1915, %v1914
    %v1973 = vpack.c.b16 %v1917, %v1916
    %2030 = vmatprep.subr.bf16.mxu0 0
    %2031 = vmatpush1.bf16.msra.mxu0 %v1918
    %2032 = vmatprep.subr.bf16.mxu0 0
    %2033 = vmatpush1.bf16.msra.mxu0 %v1919
    %2034 = vmatprep.subr.bf16.mxu0 0
    %2035 = vmatpush1.bf16.msra.mxu0 %v1920
    %2036 = vmatprep.subr.bf16.mxu0 0
    %2037 = vmatpush1.bf16.msra.mxu0 %v1921
    %2038 = vmatprep.subr.bf16.mxu0 0
    %2039 = vmatpush1.bf16.msra.mxu0 %v1922
    %2040 = vmatprep.subr.bf16.mxu0 0
    %2041 = vmatpush1.bf16.msra.mxu0 %v1923
    %2042 = vmatprep.subr.bf16.mxu0 0
    %2043 = vmatpush1.bf16.msra.mxu0 %v1924
    %2044 = vmatprep.subr.bf16.mxu0 0
    %2045 = vmatpush1.bf16.msra.mxu0 %v1925
    %2046 = vmatprep.subr.bf16.mxu0 0
    %2047 = vmatpush1.bf16.msra.mxu0 %v1926
    %2048 = vmatprep.subr.bf16.mxu0 0
    %2049 = vmatpush1.bf16.msra.mxu0 %v1927
    %2050 = vmatprep.subr.bf16.mxu0 0
    %2051 = vmatpush1.bf16.msra.mxu0 %v1928
    %2052 = vmatprep.subr.bf16.mxu0 0
    %2053 = vmatpush1.bf16.msra.mxu0 %v1929
    %2054 = vmatprep.subr.bf16.mxu0 0
    %2055 = vmatpush1.bf16.msra.mxu0 %v1930
    %2056 = vmatprep.subr.bf16.mxu0 0
    %2057 = vmatpush1.bf16.msra.mxu0 %v1931
    %2058 = vmatprep.subr.bf16.mxu0 0
    %2059 = vmatpush1.bf16.msra.mxu0 %v1932
    %2060 = vmatprep.subr.bf16.mxu0 0
    %2061 = vmatpush1.bf16.msra.mxu0 %v1933
    %2062 = vmatprep.mubr.bf16.mxu0 %v1651
    %2063 = vmatmul.mubr.bf16.gmra.mrb[0].mxu0 %v1644
    %v2064 = vpop.f32.mrb[0].mxu0
    %v2065 = vadd.f32 %v1618, %v2064
    %v2066 = vpop.f32.mrb[0].mxu0
    %v2067 = vpop.f32.mrb[0].mxu0
    %v2068 = vpop.f32.mrb[0].mxu0
    %2069 = vdwg.mxu0
    %2070 = vmatprep.subr.bf16.mxu0 0
    %2071 = vmatpush1.bf16.msra.mxu0 %v1934
    %2072 = vmatprep.subr.bf16.mxu0 0
    %2073 = vmatpush1.bf16.msra.mxu0 %v1935
    %2074 = vmatprep.subr.bf16.mxu0 0
    %2075 = vmatpush1.bf16.msra.mxu0 %v1936
    %2076 = vmatprep.subr.bf16.mxu0 0
    %2077 = vmatpush1.bf16.msra.mxu0 %v1937
    %2078 = vmatprep.subr.bf16.mxu0 0
    %2079 = vmatpush1.bf16.msra.mxu0 %v1938
    %2080 = vmatprep.subr.bf16.mxu0 0
    %2081 = vmatpush1.bf16.msra.mxu0 %v1939
    %2082 = vmatprep.subr.bf16.mxu0 0
    %2083 = vmatpush1.bf16.msra.mxu0 %v1940
    %2084 = vmatprep.subr.bf16.mxu0 0
    %2085 = vmatpush1.bf16.msra.mxu0 %v1941
    %2086 = vmatprep.subr.bf16.mxu0 0
    %2087 = vmatpush1.bf16.msra.mxu0 %v1942
    %2088 = vmatprep.subr.bf16.mxu0 0
    %2089 = vmatpush1.bf16.msra.mxu0 %v1943
    %2090 = vmatprep.subr.bf16.mxu0 0
    %2091 = vmatpush1.bf16.msra.mxu0 %v1944
    %2092 = vmatprep.subr.bf16.mxu0 0
    %2093 = vmatpush1.bf16.msra.mxu0 %v1945
    %2094 = vmatprep.subr.bf16.mxu0 0
    %2095 = vmatpush1.bf16.msra.mxu0 %v1946
    %2096 = vmatprep.subr.bf16.mxu0 0
    %2097 = vmatpush1.bf16.msra.mxu0 %v1947
    %2098 = vmatprep.subr.bf16.mxu0 0
    %2099 = vmatpush1.bf16.msra.mxu0 %v1948
    %2100 = vmatprep.subr.bf16.mxu0 0
    %2101 = vmatpush1.bf16.msra.mxu0 %v1949
    %2102 = vmatprep.mubr.bf16.mxu0 %v1665
    %2103 = vmatmul.mubr.bf16.gmra.mrb[0].mxu0 %v1658
    %v2104 = vpop.f32.mrb[0].mxu0
    %v2105 = vadd.f32 %v2065, %v2104
    %v2106 = vpop.f32.mrb[0].mxu0
    %v2107 = vpop.f32.mrb[0].mxu0
    %v2108 = vpop.f32.mrb[0].mxu0
    %2109 = vdwg.mxu0
    %2110 = vmatprep.subr.bf16.mxu0 0
    %2111 = vmatpush1.bf16.msra.mxu0 %v1950
    %2112 = vmatprep.subr.bf16.mxu0 0
    %2113 = vmatpush1.bf16.msra.mxu0 %v1951
    %2114 = vmatprep.subr.bf16.mxu0 0
    %2115 = vmatpush1.bf16.msra.mxu0 %v1952
    %2116 = vmatprep.subr.bf16.mxu0 0
    %2117 = vmatpush1.bf16.msra.mxu0 %v1953
    %2118 = vmatprep.subr.bf16.mxu0 0
    %2119 = vmatpush1.bf16.msra.mxu0 %v1954
    %2120 = vmatprep.subr.bf16.mxu0 0
    %2121 = vmatpush1.bf16.msra.mxu0 %v1955
    %2122 = vmatprep.subr.bf16.mxu0 0
    %2123 = vmatpush1.bf16.msra.mxu0 %v1956
    %2124 = vmatprep.subr.bf16.mxu0 0
    %2125 = vmatpush1.bf16.msra.mxu0 %v1957
    %2126 = vmatprep.subr.bf16.mxu0 0
    %2127 = vmatpush1.bf16.msra.mxu0 %v1958
    %2128 = vmatprep.subr.bf16.mxu0 0
    %2129 = vmatpush1.bf16.msra.mxu0 %v1959
    %2130 = vmatprep.subr.bf16.mxu0 0
    %2131 = vmatpush1.bf16.msra.mxu0 %v1960
    %2132 = vmatprep.subr.bf16.mxu0 0
    %2133 = vmatpush1.bf16.msra.mxu0 %v1961
    %2134 = vmatprep.subr.bf16.mxu0 0
    %2135 = vmatpush1.bf16.msra.mxu0 %v1962
    %2136 = vmatprep.subr.bf16.mxu0 0
    %2137 = vmatpush1.bf16.msra.mxu0 %v1963
    %2138 = vmatprep.subr.bf16.mxu0 0
    %2139 = vmatpush1.bf16.msra.mxu0 %v1964
    %2140 = vmatprep.subr.bf16.mxu0 0
    %2141 = vmatpush1.bf16.msra.mxu0 %v1965
    %2142 = vmatprep.mubr.bf16.mxu0 %v1679
    %2143 = vmatmul.mubr.bf16.gmra.mrb[0].mxu0 %v1672
    %v2144 = vpop.f32.mrb[0].mxu0
    %v2145 = vadd.f32 %v2105, %v2144
    %v2146 = vpop.f32.mrb[0].mxu0
    %v2147 = vpop.f32.mrb[0].mxu0
    %v2148 = vpop.f32.mrb[0].mxu0
    %2149 = vdwg.mxu0
    %2150 = vmatprep.subr.bf16.mxu0 0
    %2151 = vmatpush1.bf16.msra.mxu0 %v1966
    %2152 = vmatprep.subr.bf16.mxu0 0
    %2153 = vmatpush1.bf16.msra.mxu0 %v1967
    %2154 = vmatprep.subr.bf16.mxu0 0
    %2155 = vmatpush1.bf16.msra.mxu0 %v1968
    %2156 = vmatprep.subr.bf16.mxu0 0
    %2157 = vmatpush1.bf16.msra.mxu0 %v1969
    %2158 = vmatprep.subr.bf16.mxu0 0
    %2159 = vmatpush1.bf16.msra.mxu0 %v1970
    %2160 = vmatprep.subr.bf16.mxu0 0
    %2161 = vmatpush1.bf16.msra.mxu0 %v1971
    %2162 = vmatprep.subr.bf16.mxu0 0
    %2163 = vmatpush1.bf16.msra.mxu0 %v1972
    %2164 = vmatprep.subr.bf16.mxu0 0
    %2165 = vmatpush1.bf16.msra.mxu0 %v1973
    %2166 = vmatprep.subr.bf16.mxu0 0
    %2167 = vmatpush1.bf16.msra.mxu0 0
    %2168 = vmatprep.subr.bf16.mxu0 0
    %2169 = vmatpush1.bf16.msra.mxu0 0
    %2170 = vmatprep.subr.bf16.mxu0 0
    %2171 = vmatpush1.bf16.msra.mxu0 0
    %2172 = vmatprep.subr.bf16.mxu0 0
    %2173 = vmatpush1.bf16.msra.mxu0 0
    %2174 = vmatprep.subr.bf16.mxu0 0
    %2175 = vmatpush1.bf16.msra.mxu0 0
    %2176 = vmatprep.subr.bf16.mxu0 0
    %2177 = vmatpush1.bf16.msra.mxu0 0
    %2178 = vmatprep.subr.bf16.mxu0 0
    %2179 = vmatpush1.bf16.msra.mxu0 0
    %2180 = vmatprep.subr.bf16.mxu0 0
    %2181 = vmatpush1.bf16.msra.mxu0 0
    %2182 = vmatprep.mubr.bf16.mxu0 0
    %2183 = vmatmul.mubr.bf16.gmra.mrb[0].mxu0 %v1686
    %v2184 = vpop.f32.mrb[0].mxu0
    %v2185 = vadd.f32 %v2145, %v2184
    %v2186 = vpop.f32.mrb[0].mxu0
    %v2187 = vpop.f32.mrb[0].mxu0
    %v2188 = vpop.f32.mrb[0].mxu0
    %2189 = vdwg.mxu0
    %v2190 = vmax.f32 %v2185, 0.0
    %v2191 = vpack.c.bf16 %v2190, %v2190
    %v2193 = vunpack.c.l.b16 %v2191
    %v2194 = vpack.c.b16 %v2193, %v2193
    %v2196 = vshrl.u32 %v2194, 16
    %v2198 = vrot.slane %v2196, 7
    %v2199 = vshll.u32 %v2194, 16
    %v2201 = vor.u32 %v2198, %v2199
    %v2203 = vld [vmem:[#allocation2 + $0x8] sm:$0x7]
    %v2204 = vsel %vm794, %v2201, %v2203
    %2205 = vst [vmem:[#allocation2 + $0x8] sm:$0x7] %v2204
    %v2206 = vld [vmem:[%s0 + $0xc] sm:$0x77]
    %v2207 = vld [vmem:[%s0 + $0x14] sm:$0x77]
    %v2208 = vld [vmem:[%s0 + $0x1c] sm:$0x7]
    %v2209 = vld [vmem:[#allocation4] sm:$0xf]
    %v2210 = vld [vmem:[#allocation4 + $0x4] sm:$0xf]
    %v2211 = vld [vmem:[#allocation4 + $0x8] sm:$0xf]
    %v2212 = vld [vmem:[#allocation4 + $0xc] sm:$0xf]
    %v2213 = vld [vmem:[#allocation4 + $0x10] sm:$0xf]
    %v2214 = vld [vmem:[#allocation4 + $0x14] sm:$0xf]
    %v2215 = vld [vmem:[#allocation4 + $0x18] sm:$0xf]
    %v2216 = vld [vmem:[#allocation4 + $0x1c] sm:$0xf]
    %v2217 = vld [vmem:[#allocation4 + $0x20] sm:$0xf]
    %v2218 = vld [vmem:[#allocation4 + $0x24] sm:$0xf]
    %v2219 = vld [vmem:[#allocation4 + $0x28] sm:$0xf]
    %v2220 = vld [vmem:[#allocation4 + $0x2c] sm:$0xf]
    %v2221 = vld [vmem:[#allocation4 + $0x30] sm:$0xf]
    %v2222 = vld [vmem:[#allocation4 + $0x34] sm:$0xf]
    %v2223 = vld [vmem:[#allocation4 + $0x38] sm:$0xf]
    %v2224 = vld [vmem:[#allocation4 + $0x3c] sm:$0xf]
    %v2225 = vld [vmem:[#allocation4 + $0x40] sm:$0xf]
    %v2226 = vld [vmem:[#allocation4 + $0x44] sm:$0xf]
    %v2227 = vld [vmem:[#allocation4 + $0x48] sm:$0xf]
    %v2228 = vld [vmem:[#allocation4 + $0x4c] sm:$0xf]
    %v2229 = vld [vmem:[#allocation4 + $0x50] sm:$0xf]
    %v2230 = vld [vmem:[#allocation4 + $0x54] sm:$0xf]
    %v2231 = vld [vmem:[#allocation4 + $0x58] sm:$0xf]
    %v2232 = vld [vmem:[#allocation4 + $0x5c] sm:$0xf]
    %v2233 = vld [vmem:[#allocation4 + $0x60] sm:$0xf]
    %v2234 = vld [vmem:[#allocation4 + $0x64] sm:$0xf]
    %v2235 = vld [vmem:[#allocation4 + $0x68] sm:$0xf]
    %v2236 = vld [vmem:[#allocation4 + $0x6c] sm:$0xf]
    %v2237 = vld [vmem:[#allocation4 + $0x70] sm:$0xf]
    %v2238 = vld [vmem:[#allocation4 + $0x74] sm:$0xf]
    %v2239 = vld [vmem:[#allocation4 + $0x78] sm:$0xf]
    %v2240 = vld [vmem:[#allocation4 + $0x7c] sm:$0xf]
    %v2241 = vld [vmem:[#allocation4 + $0x80] sm:$0xf]
    %v2242 = vld [vmem:[#allocation4 + $0x84] sm:$0xf]
    %v2243 = vld [vmem:[#allocation4 + $0x88] sm:$0xf]
    %v2244 = vld [vmem:[#allocation4 + $0x8c] sm:$0xf]
    %v2245 = vld [vmem:[#allocation4 + $0x90] sm:$0xf]
    %v2246 = vld [vmem:[#allocation4 + $0x94] sm:$0xf]
    %v2247 = vld [vmem:[#allocation4 + $0x98] sm:$0xf]
    %v2248 = vld [vmem:[#allocation4 + $0x9c] sm:$0xf]
    %v2249 = vld [vmem:[#allocation4 + $0xa0] sm:$0xf]
    %v2250 = vld [vmem:[#allocation4 + $0xa4] sm:$0xf]
    %v2251 = vld [vmem:[#allocation4 + $0xa8] sm:$0xf]
    %v2252 = vld [vmem:[#allocation4 + $0xac] sm:$0xf]
    %v2253 = vld [vmem:[#allocation4 + $0xb0] sm:$0xf]
    %v2254 = vld [vmem:[#allocation4 + $0xb4] sm:$0xf]
    %v2255 = vld [vmem:[#allocation4 + $0xb8] sm:$0xf]
    %v2256 = vld [vmem:[#allocation4 + $0xbc] sm:$0xf]
    %v2257 = vld [vmem:[#allocation4 + $0xc0] sm:$0xf]
    %v2258 = vld [vmem:[#allocation4 + $0xc4] sm:$0xf]
    %v2259 = vld [vmem:[#allocation4 + $0xc8] sm:$0xf]
    %v2260 = vld [vmem:[#allocation4 + $0xcc] sm:$0xf]
    %v2261 = vld [vmem:[#allocation4 + $0xd0] sm:$0xf]
    %v2262 = vld [vmem:[#allocation4 + $0xd4] sm:$0xf]
    %v2263 = vld [vmem:[#allocation4 + $0xd8] sm:$0xf]
    %v2264 = vld [vmem:[#allocation4 + $0xdc] sm:$0xf]
    %v2265 = vld [vmem:[#allocation4 + $0xe0] sm:$0xf]
    %v2266 = vld [vmem:[#allocation4 + $0xe4] sm:$0xf]
    %v2267 = vld [vmem:[#allocation4 + $0xe8] sm:$0xf]
    %v2268 = vld [vmem:[#allocation4 + $0xec] sm:$0xf]
    %v2269 = vld [vmem:[#allocation4 + $0xf0] sm:$0xf]
    %v2270 = vld [vmem:[#allocation4 + $0xf4] sm:$0xf]
    %v2271 = vld [vmem:[#allocation4 + $0xf8] sm:$0xf]
    %v2272 = vld [vmem:[#allocation4 + $0xfc] sm:$0xf]
    %v2273 = vld [vmem:[#allocation4 + $0x100] sm:$0xf]
    %v2274 = vld [vmem:[#allocation4 + $0x104] sm:$0xf]
    %v2275 = vld [vmem:[#allocation4 + $0x108] sm:$0xf]
    %v2276 = vld [vmem:[#allocation4 + $0x10c] sm:$0xf]
    %v2277 = vld [vmem:[#allocation4 + $0x110] sm:$0xf]
    %v2278 = vld [vmem:[#allocation4 + $0x114] sm:$0xf]
    %v2279 = vld [vmem:[#allocation4 + $0x118] sm:$0xf]
    %v2280 = vld [vmem:[#allocation4 + $0x11c] sm:$0xf]
    %v2281 = vld [vmem:[#allocation4 + $0x120] sm:$0xf]
    %v2282 = vld [vmem:[#allocation4 + $0x124] sm:$0xf]
    %v2283 = vld [vmem:[#allocation4 + $0x128] sm:$0xf]
    %v2284 = vld [vmem:[#allocation4 + $0x12c] sm:$0xf]
    %v2285 = vld [vmem:[#allocation4 + $0x130] sm:$0xf]
    %v2286 = vld [vmem:[#allocation4 + $0x134] sm:$0xf]
    %v2287 = vld [vmem:[#allocation4 + $0x138] sm:$0xf]
    %v2288 = vld [vmem:[#allocation4 + $0x13c] sm:$0xf]
    %v2289 = vld [vmem:[%s0] sm:$0x66]
    %v2290 = vld [vmem:[#allocation4 + $0x140] sm:$0xf]
    %v2291 = vld [vmem:[#allocation4 + $0x144] sm:$0xf]
    %v2292 = vld [vmem:[#allocation4 + $0x148] sm:$0xf]
    %v2293 = vld [vmem:[#allocation4 + $0x14c] sm:$0xf]
    %v2294 = vld [vmem:[#allocation4 + $0x150] sm:$0xf]
    %v2295 = vld [vmem:[#allocation4 + $0x154] sm:$0xf]
    %v2296 = vld [vmem:[#allocation4 + $0x158] sm:$0xf]
    %v2297 = vld [vmem:[#allocation4 + $0x15c] sm:$0xf]
    %v2298 = vld [vmem:[#allocation4 + $0x160] sm:$0xf]
    %v2299 = vld [vmem:[#allocation4 + $0x164] sm:$0xf]
    %v2300 = vld [vmem:[#allocation4 + $0x168] sm:$0xf]
    %v2301 = vld [vmem:[#allocation4 + $0x16c] sm:$0xf]
    %v2302 = vld [vmem:[#allocation4 + $0x170] sm:$0xf]
    %v2303 = vld [vmem:[#allocation4 + $0x174] sm:$0xf]
    %v2304 = vld [vmem:[#allocation4 + $0x178] sm:$0xf]
    %v2305 = vld [vmem:[#allocation4 + $0x17c] sm:$0xf]
    %v2306 = vld [vmem:[#allocation4 + $0x180] sm:$0xf]
    %v2307 = vld [vmem:[#allocation4 + $0x184] sm:$0xf]
    %v2308 = vld [vmem:[#allocation4 + $0x188] sm:$0xf]
    %v2309 = vld [vmem:[#allocation4 + $0x18c] sm:$0xf]
    %v2310 = vld [vmem:[#allocation4 + $0x190] sm:$0xf]
    %v2311 = vld [vmem:[#allocation4 + $0x194] sm:$0xf]
    %v2312 = vld [vmem:[#allocation4 + $0x198] sm:$0xf]
    %v2313 = vld [vmem:[#allocation4 + $0x19c] sm:$0xf]
    %v2314 = vld [vmem:[#allocation4 + $0x1a0] sm:$0xf]
    %v2315 = vld [vmem:[#allocation4 + $0x1a4] sm:$0xf]
    %v2316 = vld [vmem:[#allocation4 + $0x1a8] sm:$0xf]
    %v2317 = vld [vmem:[#allocation4 + $0x1ac] sm:$0xf]
    %v2318 = vld [vmem:[#allocation4 + $0x1b0] sm:$0xf]
    %v2319 = vld [vmem:[#allocation4 + $0x1b4] sm:$0xf]
    %v2320 = vld [vmem:[#allocation4 + $0x1b8] sm:$0xf]
    %v2321 = vld [vmem:[#allocation4 + $0x1bc] sm:$0xf]
    %v2323 = vunpack.c.l.b16 %v2289
    %v2324 = vunpack.c.h.b16 %v2289
    %v2325 = vpack.c.b16 %v2323, %v2323
    %v2326 = vpack.c.b16 %v2324, %v2324
    %v2327 = vrot.slane %v2325, 1
    %v2328 = vrot.slane %v2326, 1
    %v2363 = vunpack.c.l.b16 %v2290
    %v2364 = vunpack.c.l.b16 %v2291
    %v2365 = vunpack.c.l.b16 %v2292
    %v2366 = vunpack.c.l.b16 %v2293
    %v2367 = vunpack.c.l.b16 %v2294
    %v2368 = vunpack.c.l.b16 %v2295
    %v2369 = vunpack.c.l.b16 %v2296
    %v2370 = vunpack.c.l.b16 %v2297
    %v2371 = vunpack.c.l.b16 %v2298
    %v2372 = vunpack.c.l.b16 %v2299
    %v2373 = vunpack.c.l.b16 %v2300
    %v2374 = vunpack.c.l.b16 %v2301
    %v2375 = vunpack.c.l.b16 %v2302
    %v2376 = vunpack.c.l.b16 %v2303
    %v2377 = vunpack.c.l.b16 %v2304
    %v2378 = vunpack.c.l.b16 %v2305
    %v2379 = vunpack.c.l.b16 %v2306
    %v2380 = vunpack.c.l.b16 %v2307
    %v2381 = vunpack.c.l.b16 %v2308
    %v2382 = vunpack.c.l.b16 %v2309
    %v2383 = vunpack.c.l.b16 %v2310
    %v2384 = vunpack.c.l.b16 %v2311
    %v2385 = vunpack.c.l.b16 %v2312
    %v2386 = vunpack.c.l.b16 %v2313
    %v2387 = vunpack.c.l.b16 %v2314
    %v2388 = vunpack.c.l.b16 %v2315
    %v2389 = vunpack.c.l.b16 %v2316
    %v2390 = vunpack.c.l.b16 %v2317
    %v2391 = vunpack.c.l.b16 %v2318
    %v2392 = vunpack.c.l.b16 %v2319
    %v2393 = vunpack.c.l.b16 %v2320
    %v2394 = vunpack.c.l.b16 %v2321
    %v2395 = vpack.c.b16 %v2364, %v2363
    %v2396 = vpack.c.b16 %v2366, %v2365
    %v2397 = vpack.c.b16 %v2368, %v2367
    %v2398 = vpack.c.b16 %v2370, %v2369
    %v2399 = vpack.c.b16 %v2372, %v2371
    %v2400 = vpack.c.b16 %v2374, %v2373
    %v2401 = vpack.c.b16 %v2376, %v2375
    %v2402 = vpack.c.b16 %v2378, %v2377
    %v2403 = vpack.c.b16 %v2380, %v2379
    %v2404 = vpack.c.b16 %v2382, %v2381
    %v2405 = vpack.c.b16 %v2384, %v2383
    %v2406 = vpack.c.b16 %v2386, %v2385
    %v2407 = vpack.c.b16 %v2388, %v2387
    %v2408 = vpack.c.b16 %v2390, %v2389
    %v2409 = vpack.c.b16 %v2392, %v2391
    %v2410 = vpack.c.b16 %v2394, %v2393
    %2427 = vmatprep.subr.bf16.mxu0 0
    %2428 = vmatpush1.bf16.msra.mxu0 %v2395
    %2429 = vmatprep.subr.bf16.mxu0 0
    %2430 = vmatpush1.bf16.msra.mxu0 %v2396
    %2431 = vmatprep.subr.bf16.mxu0 0
    %2432 = vmatpush1.bf16.msra.mxu0 %v2397
    %2433 = vmatprep.subr.bf16.mxu0 0
    %2434 = vmatpush1.bf16.msra.mxu0 %v2398
    %2435 = vmatprep.subr.bf16.mxu0 0
    %2436 = vmatpush1.bf16.msra.mxu0 %v2399
    %2437 = vmatprep.subr.bf16.mxu0 0
    %2438 = vmatpush1.bf16.msra.mxu0 %v2400
    %2439 = vmatprep.subr.bf16.mxu0 0
    %2440 = vmatpush1.bf16.msra.mxu0 %v2401
    %2441 = vmatprep.subr.bf16.mxu0 0
    %2442 = vmatpush1.bf16.msra.mxu0 %v2402
    %2443 = vmatprep.subr.bf16.mxu0 0
    %2444 = vmatpush1.bf16.msra.mxu0 %v2403
    %2445 = vmatprep.subr.bf16.mxu0 0
    %2446 = vmatpush1.bf16.msra.mxu0 %v2404
    %2447 = vmatprep.subr.bf16.mxu0 0
    %2448 = vmatpush1.bf16.msra.mxu0 %v2405
    %2449 = vmatprep.subr.bf16.mxu0 0
    %2450 = vmatpush1.bf16.msra.mxu0 %v2406
    %2451 = vmatprep.subr.bf16.mxu0 0
    %2452 = vmatpush1.bf16.msra.mxu0 %v2407
    %2453 = vmatprep.subr.bf16.mxu0 0
    %2454 = vmatpush1.bf16.msra.mxu0 %v2408
    %2455 = vmatprep.subr.bf16.mxu0 0
    %2456 = vmatpush1.bf16.msra.mxu0 %v2409
    %2457 = vmatprep.subr.bf16.mxu0 0
    %2458 = vmatpush1.bf16.msra.mxu0 %v2410
    %2459 = vmatprep.mubr.bf16.mxu0 %v2328
    %2460 = vmatmul.mubr.bf16.gmra.mrb[0].mxu0 %v2327
    %v2461 = vpop.f32.mrb[0].mxu0
    %v2462 = vadd.f32 0.0, %v2461
    %v2463 = vpop.f32.mrb[0].mxu0
    %v2464 = vpop.f32.mrb[0].mxu0
    %v2465 = vpop.f32.mrb[0].mxu0
    %2466 = vdwg.mxu0
    %v2470 = vunpack.c.l.b16 %v2206
    %v2471 = vunpack.c.h.b16 %v2206
    %v2472 = vunpack.c.l.b16 %v2207
    %v2473 = vunpack.c.h.b16 %v2207
    %v2474 = vunpack.c.l.b16 %v2208
    %v2475 = vpack.c.b16 %v2470, %v2470
    %v2476 = vpack.c.b16 %v2471, %v2471
    %v2477 = vpack.c.b16 %v2472, %v2472
    %v2478 = vpack.c.b16 %v2473, %v2473
    %v2479 = vpack.c.b16 %v2474, %v2474
    %v2481 = vshrl.u32 %v2475, 16
    %v2483 = vshll.u32 %v2475, 16
    %v2485 = vrot.slane %v2483, 1
    %v2486 = vor.u32 %v2481, %v2485
    %v2488 = vshrl.u32 %v2476, 16
    %v2490 = vshll.u32 %v2476, 16
    %v2492 = vrot.slane %v2490, 1
    %v2493 = vor.u32 %v2488, %v2492
    %v2495 = vshrl.u32 %v2477, 16
    %v2497 = vshll.u32 %v2477, 16
    %v2499 = vrot.slane %v2497, 1
    %v2500 = vor.u32 %v2495, %v2499
    %v2502 = vshrl.u32 %v2478, 16
    %v2504 = vshll.u32 %v2478, 16
    %v2506 = vrot.slane %v2504, 1
    %v2507 = vor.u32 %v2502, %v2506
    %v2509 = vshrl.u32 %v2479, 16
    %v2511 = vshll.u32 %v2479, 16
    %v2513 = vrot.slane %v2511, 1
    %v2514 = vor.u32 %v2509, %v2513
    %v2600 = vunpack.c.l.b16 %v2209
    %v2601 = vunpack.c.l.b16 %v2210
    %v2602 = vunpack.c.l.b16 %v2211
    %v2603 = vunpack.c.l.b16 %v2212
    %v2604 = vunpack.c.l.b16 %v2213
    %v2605 = vunpack.c.l.b16 %v2214
    %v2606 = vunpack.c.l.b16 %v2215
    %v2607 = vunpack.c.l.b16 %v2216
    %v2608 = vunpack.c.l.b16 %v2217
    %v2609 = vunpack.c.l.b16 %v2218
    %v2610 = vunpack.c.l.b16 %v2219
    %v2611 = vunpack.c.l.b16 %v2220
    %v2612 = vunpack.c.l.b16 %v2221
    %v2613 = vunpack.c.l.b16 %v2222
    %v2614 = vunpack.c.l.b16 %v2223
    %v2615 = vunpack.c.l.b16 %v2224
    %v2616 = vunpack.c.l.b16 %v2225
    %v2617 = vunpack.c.l.b16 %v2226
    %v2618 = vunpack.c.l.b16 %v2227
    %v2619 = vunpack.c.l.b16 %v2228
    %v2620 = vunpack.c.l.b16 %v2229
    %v2621 = vunpack.c.l.b16 %v2230
    %v2622 = vunpack.c.l.b16 %v2231
    %v2623 = vunpack.c.l.b16 %v2232
    %v2624 = vunpack.c.l.b16 %v2233
    %v2625 = vunpack.c.l.b16 %v2234
    %v2626 = vunpack.c.l.b16 %v2235
    %v2627 = vunpack.c.l.b16 %v2236
    %v2628 = vunpack.c.l.b16 %v2237
    %v2629 = vunpack.c.l.b16 %v2238
    %v2630 = vunpack.c.l.b16 %v2239
    %v2631 = vunpack.c.l.b16 %v2240
    %v2632 = vunpack.c.l.b16 %v2241
    %v2633 = vunpack.c.l.b16 %v2242
    %v2634 = vunpack.c.l.b16 %v2243
    %v2635 = vunpack.c.l.b16 %v2244
    %v2636 = vunpack.c.l.b16 %v2245
    %v2637 = vunpack.c.l.b16 %v2246
    %v2638 = vunpack.c.l.b16 %v2247
    %v2639 = vunpack.c.l.b16 %v2248
    %v2640 = vunpack.c.l.b16 %v2249
    %v2641 = vunpack.c.l.b16 %v2250
    %v2642 = vunpack.c.l.b16 %v2251
    %v2643 = vunpack.c.l.b16 %v2252
    %v2644 = vunpack.c.l.b16 %v2253
    %v2645 = vunpack.c.l.b16 %v2254
    %v2646 = vunpack.c.l.b16 %v2255
    %v2647 = vunpack.c.l.b16 %v2256
    %v2648 = vunpack.c.l.b16 %v2257
    %v2649 = vunpack.c.l.b16 %v2258
    %v2650 = vunpack.c.l.b16 %v2259
    %v2651 = vunpack.c.l.b16 %v2260
    %v2652 = vunpack.c.l.b16 %v2261
    %v2653 = vunpack.c.l.b16 %v2262
    %v2654 = vunpack.c.l.b16 %v2263
    %v2655 = vunpack.c.l.b16 %v2264
    %v2656 = vunpack.c.l.b16 %v2265
    %v2657 = vunpack.c.l.b16 %v2266
    %v2658 = vunpack.c.l.b16 %v2267
    %v2659 = vunpack.c.l.b16 %v2268
    %v2660 = vunpack.c.l.b16 %v2269
    %v2661 = vunpack.c.l.b16 %v2270
    %v2662 = vunpack.c.l.b16 %v2271
    %v2663 = vunpack.c.l.b16 %v2272
    %v2664 = vunpack.c.l.b16 %v2273
    %v2665 = vunpack.c.l.b16 %v2274
    %v2666 = vunpack.c.l.b16 %v2275
    %v2667 = vunpack.c.l.b16 %v2276
    %v2668 = vunpack.c.l.b16 %v2277
    %v2669 = vunpack.c.l.b16 %v2278
    %v2670 = vunpack.c.l.b16 %v2279
    %v2671 = vunpack.c.l.b16 %v2280
    %v2672 = vunpack.c.l.b16 %v2281
    %v2673 = vunpack.c.l.b16 %v2282
    %v2674 = vunpack.c.l.b16 %v2283
    %v2675 = vunpack.c.l.b16 %v2284
    %v2676 = vunpack.c.l.b16 %v2285
    %v2677 = vunpack.c.l.b16 %v2286
    %v2678 = vunpack.c.l.b16 %v2287
    %v2679 = vunpack.c.l.b16 %v2288
    %v2680 = vpack.c.b16 %v2601, %v2600
    %v2681 = vpack.c.b16 %v2603, %v2602
    %v2682 = vpack.c.b16 %v2605, %v2604
    %v2683 = vpack.c.b16 %v2607, %v2606
    %v2684 = vpack.c.b16 %v2609, %v2608
    %v2685 = vpack.c.b16 %v2611, %v2610
    %v2686 = vpack.c.b16 %v2613, %v2612
    %v2687 = vpack.c.b16 %v2615, %v2614
    %v2688 = vpack.c.b16 %v2617, %v2616
    %v2689 = vpack.c.b16 %v2619, %v2618
    %v2690 = vpack.c.b16 %v2621, %v2620
    %v2691 = vpack.c.b16 %v2623, %v2622
    %v2692 = vpack.c.b16 %v2625, %v2624
    %v2693 = vpack.c.b16 %v2627, %v2626
    %v2694 = vpack.c.b16 %v2629, %v2628
    %v2695 = vpack.c.b16 %v2631, %v2630
    %v2696 = vpack.c.b16 %v2633, %v2632
    %v2697 = vpack.c.b16 %v2635, %v2634
    %v2698 = vpack.c.b16 %v2637, %v2636
    %v2699 = vpack.c.b16 %v2639, %v2638
    %v2700 = vpack.c.b16 %v2641, %v2640
    %v2701 = vpack.c.b16 %v2643, %v2642
    %v2702 = vpack.c.b16 %v2645, %v2644
    %v2703 = vpack.c.b16 %v2647, %v2646
    %v2704 = vpack.c.b16 %v2649, %v2648
    %v2705 = vpack.c.b16 %v2651, %v2650
    %v2706 = vpack.c.b16 %v2653, %v2652
    %v2707 = vpack.c.b16 %v2655, %v2654
    %v2708 = vpack.c.b16 %v2657, %v2656
    %v2709 = vpack.c.b16 %v2659, %v2658
    %v2710 = vpack.c.b16 %v2661, %v2660
    %v2711 = vpack.c.b16 %v2663, %v2662
    %v2712 = vpack.c.b16 %v2665, %v2664
    %v2713 = vpack.c.b16 %v2667, %v2666
    %v2714 = vpack.c.b16 %v2669, %v2668
    %v2715 = vpack.c.b16 %v2671, %v2670
    %v2716 = vpack.c.b16 %v2673, %v2672
    %v2717 = vpack.c.b16 %v2675, %v2674
    %v2718 = vpack.c.b16 %v2677, %v2676
    %v2719 = vpack.c.b16 %v2679, %v2678
    %2760 = vmatprep.subr.bf16.mxu0 0
    %2761 = vmatpush1.bf16.msra.mxu0 %v2680
    %2762 = vmatprep.subr.bf16.mxu0 0
    %2763 = vmatpush1.bf16.msra.mxu0 %v2681
    %2764 = vmatprep.subr.bf16.mxu0 0
    %2765 = vmatpush1.bf16.msra.mxu0 %v2682
    %2766 = vmatprep.subr.bf16.mxu0 0
    %2767 = vmatpush1.bf16.msra.mxu0 %v2683
    %2768 = vmatprep.subr.bf16.mxu0 0
    %2769 = vmatpush1.bf16.msra.mxu0 %v2684
    %2770 = vmatprep.subr.bf16.mxu0 0
    %2771 = vmatpush1.bf16.msra.mxu0 %v2685
    %2772 = vmatprep.subr.bf16.mxu0 0
    %2773 = vmatpush1.bf16.msra.mxu0 %v2686
    %2774 = vmatprep.subr.bf16.mxu0 0
    %2775 = vmatpush1.bf16.msra.mxu0 %v2687
    %2776 = vmatprep.subr.bf16.mxu0 0
    %2777 = vmatpush1.bf16.msra.mxu0 %v2688
    %2778 = vmatprep.subr.bf16.mxu0 0
    %2779 = vmatpush1.bf16.msra.mxu0 %v2689
    %2780 = vmatprep.subr.bf16.mxu0 0
    %2781 = vmatpush1.bf16.msra.mxu0 %v2690
    %2782 = vmatprep.subr.bf16.mxu0 0
    %2783 = vmatpush1.bf16.msra.mxu0 %v2691
    %2784 = vmatprep.subr.bf16.mxu0 0
    %2785 = vmatpush1.bf16.msra.mxu0 %v2692
    %2786 = vmatprep.subr.bf16.mxu0 0
    %2787 = vmatpush1.bf16.msra.mxu0 %v2693
    %2788 = vmatprep.subr.bf16.mxu0 0
    %2789 = vmatpush1.bf16.msra.mxu0 %v2694
    %2790 = vmatprep.subr.bf16.mxu0 0
    %2791 = vmatpush1.bf16.msra.mxu0 %v2695
    %2792 = vmatprep.mubr.bf16.mxu0 %v2493
    %2793 = vmatmul.mubr.bf16.gmra.mrb[0].mxu0 %v2486
    %v2794 = vpop.f32.mrb[0].mxu0
    %v2795 = vadd.f32 %v2462, %v2794
    %v2796 = vpop.f32.mrb[0].mxu0
    %v2797 = vpop.f32.mrb[0].mxu0
    %v2798 = vpop.f32.mrb[0].mxu0
    %2799 = vdwg.mxu0
    %2800 = vmatprep.subr.bf16.mxu0 0
    %2801 = vmatpush1.bf16.msra.mxu0 %v2696
    %2802 = vmatprep.subr.bf16.mxu0 0
    %2803 = vmatpush1.bf16.msra.mxu0 %v2697
    %2804 = vmatprep.subr.bf16.mxu0 0
    %2805 = vmatpush1.bf16.msra.mxu0 %v2698
    %2806 = vmatprep.subr.bf16.mxu0 0
    %2807 = vmatpush1.bf16.msra.mxu0 %v2699
    %2808 = vmatprep.subr.bf16.mxu0 0
    %2809 = vmatpush1.bf16.msra.mxu0 %v2700
    %2810 = vmatprep.subr.bf16.mxu0 0
    %2811 = vmatpush1.bf16.msra.mxu0 %v2701
    %2812 = vmatprep.subr.bf16.mxu0 0
    %2813 = vmatpush1.bf16.msra.mxu0 %v2702
    %2814 = vmatprep.subr.bf16.mxu0 0
    %2815 = vmatpush1.bf16.msra.mxu0 %v2703
    %2816 = vmatprep.subr.bf16.mxu0 0
    %2817 = vmatpush1.bf16.msra.mxu0 %v2704
    %2818 = vmatprep.subr.bf16.mxu0 0
    %2819 = vmatpush1.bf16.msra.mxu0 %v2705
    %2820 = vmatprep.subr.bf16.mxu0 0
    %2821 = vmatpush1.bf16.msra.mxu0 %v2706
    %2822 = vmatprep.subr.bf16.mxu0 0
    %2823 = vmatpush1.bf16.msra.mxu0 %v2707
    %2824 = vmatprep.subr.bf16.mxu0 0
    %2825 = vmatpush1.bf16.msra.mxu0 %v2708
    %2826 = vmatprep.subr.bf16.mxu0 0
    %2827 = vmatpush1.bf16.msra.mxu0 %v2709
    %2828 = vmatprep.subr.bf16.mxu0 0
    %2829 = vmatpush1.bf16.msra.mxu0 %v2710
    %2830 = vmatprep.subr.bf16.mxu0 0
    %2831 = vmatpush1.bf16.msra.mxu0 %v2711
    %2832 = vmatprep.mubr.bf16.mxu0 %v2507
    %2833 = vmatmul.mubr.bf16.gmra.mrb[0].mxu0 %v2500
    %v2834 = vpop.f32.mrb[0].mxu0
    %v2835 = vadd.f32 %v2795, %v2834
    %v2836 = vpop.f32.mrb[0].mxu0
    %v2837 = vpop.f32.mrb[0].mxu0
    %v2838 = vpop.f32.mrb[0].mxu0
    %2839 = vdwg.mxu0
    %2840 = vmatprep.subr.bf16.mxu0 0
    %2841 = vmatpush1.bf16.msra.mxu0 %v2712
    %2842 = vmatprep.subr.bf16.mxu0 0
    %2843 = vmatpush1.bf16.msra.mxu0 %v2713
    %2844 = vmatprep.subr.bf16.mxu0 0
    %2845 = vmatpush1.bf16.msra.mxu0 %v2714
    %2846 = vmatprep.subr.bf16.mxu0 0
    %2847 = vmatpush1.bf16.msra.mxu0 %v2715
    %2848 = vmatprep.subr.bf16.mxu0 0
    %2849 = vmatpush1.bf16.msra.mxu0 %v2716
    %2850 = vmatprep.subr.bf16.mxu0 0
    %2851 = vmatpush1.bf16.msra.mxu0 %v2717
    %2852 = vmatprep.subr.bf16.mxu0 0
    %2853 = vmatpush1.bf16.msra.mxu0 %v2718
    %2854 = vmatprep.subr.bf16.mxu0 0
    %2855 = vmatpush1.bf16.msra.mxu0 %v2719
    %2856 = vmatprep.subr.bf16.mxu0 0
    %2857 = vmatpush1.bf16.msra.mxu0 0
    %2858 = vmatprep.subr.bf16.mxu0 0
    %2859 = vmatpush1.bf16.msra.mxu0 0
    %2860 = vmatprep.subr.bf16.mxu0 0
    %2861 = vmatpush1.bf16.msra.mxu0 0
    %2862 = vmatprep.subr.bf16.mxu0 0
    %2863 = vmatpush1.bf16.msra.mxu0 0
    %2864 = vmatprep.subr.bf16.mxu0 0
    %2865 = vmatpush1.bf16.msra.mxu0 0
    %2866 = vmatprep.subr.bf16.mxu0 0
    %2867 = vmatpush1.bf16.msra.mxu0 0
    %2868 = vmatprep.subr.bf16.mxu0 0
    %2869 = vmatpush1.bf16.msra.mxu0 0
    %2870 = vmatprep.subr.bf16.mxu0 0
    %2871 = vmatpush1.bf16.msra.mxu0 0
    %2872 = vmatprep.mubr.bf16.mxu0 0
    %2873 = vmatmul.mubr.bf16.gmra.mrb[0].mxu0 %v2514
    %v2874 = vpop.f32.mrb[0].mxu0
    %v2875 = vadd.f32 %v2835, %v2874
    %v2876 = vpop.f32.mrb[0].mxu0
    %v2877 = vpop.f32.mrb[0].mxu0
    %v2878 = vpop.f32.mrb[0].mxu0
    %2879 = vdwg.mxu0
    %v2880 = vld [vmem:[%s2] sm:$0x1]
    %v2882 = vlaneseq
    %v2883 = vshrl.u32 %v2882, 7
    %v2884 = vsub.s32 0, %v2883
    %v2885 = vrot.slane %v2880, %v2884
    %v2887 = vadd.f32 %v2875, %v2885
    %v2888 = vmax.f32 %v2887, 0.0
    %v2889 = vpack.c.bf16 %v2888, %v2888
    %v2891 = vunpack.c.l.b16 %v2889
    %v2892 = vpack.c.b16 %v2891, %v2891
    %v2894 = vshrl.u32 %v2892, 16
    %v2896 = vrot.slane %v2894, 7
    %v2897 = vshll.u32 %v2892, 16
    %v2899 = vor.u32 %v2896, %v2897
    %v2901 = vld [vmem:[#allocation2 + $0xc] sm:$0x7]
    %v2902 = vsel %vm794, %v2899, %v2901
    %2903 = vst [vmem:[#allocation2 + $0xc] sm:$0x7] %v2902
    %v2904 = vld [vmem:[#allocation2 + $0x4] sm:$0x33]
    %v2905 = vld [vmem:[#allocation2 + $0xc] sm:$0x3]
    %v2906 = vld [vmem:[#allocation6] sm:$0xf]
    %v2907 = vld [vmem:[#allocation6 + $0x4] sm:$0xf]
    %v2908 = vld [vmem:[#allocation6 + $0x8] sm:$0xf]
    %v2909 = vld [vmem:[#allocation6 + $0xc] sm:$0xf]
    %v2910 = vld [vmem:[#allocation6 + $0x10] sm:$0xf]
    %v2911 = vld [vmem:[#allocation6 + $0x14] sm:$0xf]
    %v2912 = vld [vmem:[#allocation6 + $0x18] sm:$0xf]
    %v2913 = vld [vmem:[#allocation6 + $0x1c] sm:$0xf]
    %v2914 = vld [vmem:[#allocation6 + $0x20] sm:$0xf]
    %v2915 = vld [vmem:[#allocation6 + $0x24] sm:$0xf]
    %v2916 = vld [vmem:[#allocation6 + $0x28] sm:$0xf]
    %v2917 = vld [vmem:[#allocation6 + $0x2c] sm:$0xf]
    %v2918 = vld [vmem:[#allocation6 + $0x30] sm:$0xf]
    %v2919 = vld [vmem:[#allocation6 + $0x34] sm:$0xf]
    %v2920 = vld [vmem:[#allocation6 + $0x38] sm:$0xf]
    %v2921 = vld [vmem:[#allocation6 + $0x3c] sm:$0xf]
    %v2922 = vld [vmem:[#allocation6 + $0x40] sm:$0xf]
    %v2923 = vld [vmem:[#allocation6 + $0x44] sm:$0xf]
    %v2924 = vld [vmem:[#allocation6 + $0x48] sm:$0xf]
    %v2925 = vld [vmem:[#allocation6 + $0x4c] sm:$0xf]
    %v2926 = vld [vmem:[#allocation6 + $0x50] sm:$0xf]
    %v2927 = vld [vmem:[#allocation6 + $0x54] sm:$0xf]
    %v2928 = vld [vmem:[#allocation6 + $0x58] sm:$0xf]
    %v2929 = vld [vmem:[#allocation6 + $0x5c] sm:$0xf]
    %v2930 = vld [vmem:[#allocation6 + $0x60] sm:$0xf]
    %v2931 = vld [vmem:[#allocation6 + $0x64] sm:$0xf]
    %v2932 = vld [vmem:[#allocation6 + $0x68] sm:$0xf]
    %v2933 = vld [vmem:[#allocation6 + $0x6c] sm:$0xf]
    %v2934 = vld [vmem:[#allocation6 + $0x70] sm:$0xf]
    %v2935 = vld [vmem:[#allocation6 + $0x74] sm:$0xf]
    %v2936 = vld [vmem:[#allocation6 + $0x78] sm:$0xf]
    %v2937 = vld [vmem:[#allocation6 + $0x7c] sm:$0xf]
    %v2938 = vld [vmem:[#allocation6 + $0x80] sm:$0xf]
    %v2939 = vld [vmem:[#allocation6 + $0x84] sm:$0xf]
    %v2940 = vld [vmem:[#allocation6 + $0x88] sm:$0xf]
    %v2941 = vld [vmem:[#allocation6 + $0x8c] sm:$0xf]
    %v2942 = vld [vmem:[#allocation6 + $0x90] sm:$0xf]
    %v2943 = vld [vmem:[#allocation6 + $0x94] sm:$0xf]
    %v2944 = vld [vmem:[#allocation6 + $0x98] sm:$0xf]
    %v2945 = vld [vmem:[#allocation6 + $0x9c] sm:$0xf]
    %v2946 = vld [vmem:[#allocation6 + $0xa0] sm:$0xf]
    %v2947 = vld [vmem:[#allocation6 + $0xa4] sm:$0xf]
    %v2948 = vld [vmem:[#allocation6 + $0xa8] sm:$0xf]
    %v2949 = vld [vmem:[#allocation6 + $0xac] sm:$0xf]
    %v2950 = vld [vmem:[#allocation6 + $0xb0] sm:$0xf]
    %v2951 = vld [vmem:[#allocation6 + $0xb4] sm:$0xf]
    %v2952 = vld [vmem:[#allocation6 + $0xb8] sm:$0xf]
    %v2953 = vld [vmem:[#allocation6 + $0xbc] sm:$0xf]
    %v2954 = vld [vmem:[#allocation2] sm:$0x77]
    %v2955 = vld [vmem:[#allocation2 + $0x8] sm:$0x77]
    %v2956 = vld [vmem:[#allocation6 + $0xc0] sm:$0xf]
    %v2957 = vld [vmem:[#allocation6 + $0xc4] sm:$0xf]
    %v2958 = vld [vmem:[#allocation6 + $0xc8] sm:$0xf]
    %v2959 = vld [vmem:[#allocation6 + $0xcc] sm:$0xf]
    %v2960 = vld [vmem:[#allocation6 + $0xd0] sm:$0xf]
    %v2961 = vld [vmem:[#allocation6 + $0xd4] sm:$0xf]
    %v2962 = vld [vmem:[#allocation6 + $0xd8] sm:$0xf]
    %v2963 = vld [vmem:[#allocation6 + $0xdc] sm:$0xf]
    %v2964 = vld [vmem:[#allocation6 + $0xe0] sm:$0xf]
    %v2965 = vld [vmem:[#allocation6 + $0xe4] sm:$0xf]
    %v2966 = vld [vmem:[#allocation6 + $0xe8] sm:$0xf]
    %v2967 = vld [vmem:[#allocation6 + $0xec] sm:$0xf]
    %v2968 = vld [vmem:[#allocation6 + $0xf0] sm:$0xf]
    %v2969 = vld [vmem:[#allocation6 + $0xf4] sm:$0xf]
    %v2970 = vld [vmem:[#allocation6 + $0xf8] sm:$0xf]
    %v2971 = vld [vmem:[#allocation6 + $0xfc] sm:$0xf]
    %v2972 = vld [vmem:[#allocation6 + $0x100] sm:$0xf]
    %v2973 = vld [vmem:[#allocation6 + $0x104] sm:$0xf]
    %v2974 = vld [vmem:[#allocation6 + $0x108] sm:$0xf]
    %v2975 = vld [vmem:[#allocation6 + $0x10c] sm:$0xf]
    %v2976 = vld [vmem:[#allocation6 + $0x110] sm:$0xf]
    %v2977 = vld [vmem:[#allocation6 + $0x114] sm:$0xf]
    %v2978 = vld [vmem:[#allocation6 + $0x118] sm:$0xf]
    %v2979 = vld [vmem:[#allocation6 + $0x11c] sm:$0xf]
    %v2980 = vld [vmem:[#allocation6 + $0x120] sm:$0xf]
    %v2981 = vld [vmem:[#allocation6 + $0x124] sm:$0xf]
    %v2982 = vld [vmem:[#allocation6 + $0x128] sm:$0xf]
    %v2983 = vld [vmem:[#allocation6 + $0x12c] sm:$0xf]
    %v2984 = vld [vmem:[#allocation6 + $0x130] sm:$0xf]
    %v2985 = vld [vmem:[#allocation6 + $0x134] sm:$0xf]
    %v2986 = vld [vmem:[#allocation6 + $0x138] sm:$0xf]
    %v2987 = vld [vmem:[#allocation6 + $0x13c] sm:$0xf]
    %v2988 = vld [vmem:[#allocation6 + $0x140] sm:$0xf]
    %v2989 = vld [vmem:[#allocation6 + $0x144] sm:$0xf]
    %v2990 = vld [vmem:[#allocation6 + $0x148] sm:$0xf]
    %v2991 = vld [vmem:[#allocation6 + $0x14c] sm:$0xf]
    %v2992 = vld [vmem:[#allocation6 + $0x150] sm:$0xf]
    %v2993 = vld [vmem:[#allocation6 + $0x154] sm:$0xf]
    %v2994 = vld [vmem:[#allocation6 + $0x158] sm:$0xf]
    %v2995 = vld [vmem:[#allocation6 + $0x15c] sm:$0xf]
    %v2996 = vld [vmem:[#allocation6 + $0x160] sm:$0xf]
    %v2997 = vld [vmem:[#allocation6 + $0x164] sm:$0xf]
    %v2998 = vld [vmem:[#allocation6 + $0x168] sm:$0xf]
    %v2999 = vld [vmem:[#allocation6 + $0x16c] sm:$0xf]
    %v3000 = vld [vmem:[#allocation6 + $0x170] sm:$0xf]
    %v3001 = vld [vmem:[#allocation6 + $0x174] sm:$0xf]
    %v3002 = vld [vmem:[#allocation6 + $0x178] sm:$0xf]
    %v3003 = vld [vmem:[#allocation6 + $0x17c] sm:$0xf]
    %v3004 = vld [vmem:[#allocation6 + $0x180] sm:$0xf]
    %v3005 = vld [vmem:[#allocation6 + $0x184] sm:$0xf]
    %v3006 = vld [vmem:[#allocation6 + $0x188] sm:$0xf]
    %v3007 = vld [vmem:[#allocation6 + $0x18c] sm:$0xf]
    %v3008 = vld [vmem:[#allocation6 + $0x190] sm:$0xf]
    %v3009 = vld [vmem:[#allocation6 + $0x194] sm:$0xf]
    %v3010 = vld [vmem:[#allocation6 + $0x198] sm:$0xf]
    %v3011 = vld [vmem:[#allocation6 + $0x19c] sm:$0xf]
    %v3012 = vld [vmem:[#allocation6 + $0x1a0] sm:$0xf]
    %v3013 = vld [vmem:[#allocation6 + $0x1a4] sm:$0xf]
    %v3014 = vld [vmem:[#allocation6 + $0x1a8] sm:$0xf]
    %v3015 = vld [vmem:[#allocation6 + $0x1ac] sm:$0xf]
    %v3016 = vld [vmem:[#allocation6 + $0x1b0] sm:$0xf]
    %v3017 = vld [vmem:[#allocation6 + $0x1b4] sm:$0xf]
    %v3018 = vld [vmem:[#allocation6 + $0x1b8] sm:$0xf]
    %v3019 = vld [vmem:[#allocation6 + $0x1bc] sm:$0xf]
    %v3022 = vunpack.c.l.b16 %v2954
    %v3023 = vunpack.c.h.b16 %v2954
    %v3024 = vunpack.c.l.b16 %v2955
    %v3025 = vunpack.c.h.b16 %v2955
    %v3026 = vpack.c.b16 %v3022, %v3022
    %v3027 = vpack.c.b16 %v3023, %v3023
    %v3028 = vpack.c.b16 %v3024, %v3024
    %v3029 = vpack.c.b16 %v3025, %v3025
    %v3031 = vshrl.u32 %v3026, 16
    %v3033 = vshll.u32 %v3026, 16
    %v3035 = vrot.slane %v3033, 1
    %v3036 = vor.u32 %v3031, %v3035
    %v3038 = vshrl.u32 %v3027, 16
    %v3040 = vshll.u32 %v3027, 16
    %v3042 = vrot.slane %v3040, 1
    %v3043 = vor.u32 %v3038, %v3042
    %v3045 = vshrl.u32 %v3028, 16
    %v3047 = vshll.u32 %v3028, 16
    %v3049 = vrot.slane %v3047, 1
    %v3050 = vor.u32 %v3045, %v3049
    %v3052 = vshrl.u32 %v3029, 16
    %v3054 = vshll.u32 %v3029, 16
    %v3056 = vrot.slane %v3054, 1
    %v3057 = vor.u32 %v3052, %v3056
    %v3126 = vunpack.c.l.b16 %v2956
    %v3127 = vunpack.c.l.b16 %v2957
    %v3128 = vunpack.c.l.b16 %v2958
    %v3129 = vunpack.c.l.b16 %v2959
    %v3130 = vunpack.c.l.b16 %v2960
    %v3131 = vunpack.c.l.b16 %v2961
    %v3132 = vunpack.c.l.b16 %v2962
    %v3133 = vunpack.c.l.b16 %v2963
    %v3134 = vunpack.c.l.b16 %v2964
    %v3135 = vunpack.c.l.b16 %v2965
    %v3136 = vunpack.c.l.b16 %v2966
    %v3137 = vunpack.c.l.b16 %v2967
    %v3138 = vunpack.c.l.b16 %v2968
    %v3139 = vunpack.c.l.b16 %v2969
    %v3140 = vunpack.c.l.b16 %v2970
    %v3141 = vunpack.c.l.b16 %v2971
    %v3142 = vunpack.c.l.b16 %v2972
    %v3143 = vunpack.c.l.b16 %v2973
    %v3144 = vunpack.c.l.b16 %v2974
    %v3145 = vunpack.c.l.b16 %v2975
    %v3146 = vunpack.c.l.b16 %v2976
    %v3147 = vunpack.c.l.b16 %v2977
    %v3148 = vunpack.c.l.b16 %v2978
    %v3149 = vunpack.c.l.b16 %v2979
    %v3150 = vunpack.c.l.b16 %v2980
    %v3151 = vunpack.c.l.b16 %v2981
    %v3152 = vunpack.c.l.b16 %v2982
    %v3153 = vunpack.c.l.b16 %v2983
    %v3154 = vunpack.c.l.b16 %v2984
    %v3155 = vunpack.c.l.b16 %v2985
    %v3156 = vunpack.c.l.b16 %v2986
    %v3157 = vunpack.c.l.b16 %v2987
    %v3158 = vunpack.c.l.b16 %v2988
    %v3159 = vunpack.c.l.b16 %v2989
    %v3160 = vunpack.c.l.b16 %v2990
    %v3161 = vunpack.c.l.b16 %v2991
    %v3162 = vunpack.c.l.b16 %v2992
    %v3163 = vunpack.c.l.b16 %v2993
    %v3164 = vunpack.c.l.b16 %v2994
    %v3165 = vunpack.c.l.b16 %v2995
    %v3166 = vunpack.c.l.b16 %v2996
    %v3167 = vunpack.c.l.b16 %v2997
    %v3168 = vunpack.c.l.b16 %v2998
    %v3169 = vunpack.c.l.b16 %v2999
    %v3170 = vunpack.c.l.b16 %v3000
    %v3171 = vunpack.c.l.b16 %v3001
    %v3172 = vunpack.c.l.b16 %v3002
    %v3173 = vunpack.c.l.b16 %v3003
    %v3174 = vunpack.c.l.b16 %v3004
    %v3175 = vunpack.c.l.b16 %v3005
    %v3176 = vunpack.c.l.b16 %v3006
    %v3177 = vunpack.c.l.b16 %v3007
    %v3178 = vunpack.c.l.b16 %v3008
    %v3179 = vunpack.c.l.b16 %v3009
    %v3180 = vunpack.c.l.b16 %v3010
    %v3181 = vunpack.c.l.b16 %v3011
    %v3182 = vunpack.c.l.b16 %v3012
    %v3183 = vunpack.c.l.b16 %v3013
    %v3184 = vunpack.c.l.b16 %v3014
    %v3185 = vunpack.c.l.b16 %v3015
    %v3186 = vunpack.c.l.b16 %v3016
    %v3187 = vunpack.c.l.b16 %v3017
    %v3188 = vunpack.c.l.b16 %v3018
    %v3189 = vunpack.c.l.b16 %v3019
    %v3190 = vpack.c.b16 %v3127, %v3126
    %v3191 = vpack.c.b16 %v3129, %v3128
    %v3192 = vpack.c.b16 %v3131, %v3130
    %v3193 = vpack.c.b16 %v3133, %v3132
    %v3194 = vpack.c.b16 %v3135, %v3134
    %v3195 = vpack.c.b16 %v3137, %v3136
    %v3196 = vpack.c.b16 %v3139, %v3138
    %v3197 = vpack.c.b16 %v3141, %v3140
    %v3198 = vpack.c.b16 %v3143, %v3142
    %v3199 = vpack.c.b16 %v3145, %v3144
    %v3200 = vpack.c.b16 %v3147, %v3146
    %v3201 = vpack.c.b16 %v3149, %v3148
    %v3202 = vpack.c.b16 %v3151, %v3150
    %v3203 = vpack.c.b16 %v3153, %v3152
    %v3204 = vpack.c.b16 %v3155, %v3154
    %v3205 = vpack.c.b16 %v3157, %v3156
    %v3206 = vpack.c.b16 %v3159, %v3158
    %v3207 = vpack.c.b16 %v3161, %v3160
    %v3208 = vpack.c.b16 %v3163, %v3162
    %v3209 = vpack.c.b16 %v3165, %v3164
    %v3210 = vpack.c.b16 %v3167, %v3166
    %v3211 = vpack.c.b16 %v3169, %v3168
    %v3212 = vpack.c.b16 %v3171, %v3170
    %v3213 = vpack.c.b16 %v3173, %v3172
    %v3214 = vpack.c.b16 %v3175, %v3174
    %v3215 = vpack.c.b16 %v3177, %v3176
    %v3216 = vpack.c.b16 %v3179, %v3178
    %v3217 = vpack.c.b16 %v3181, %v3180
    %v3218 = vpack.c.b16 %v3183, %v3182
    %v3219 = vpack.c.b16 %v3185, %v3184
    %v3220 = vpack.c.b16 %v3187, %v3186
    %v3221 = vpack.c.b16 %v3189, %v3188
    %3254 = vmatprep.subr.bf16.mxu0 0
    %3255 = vmatpush1.bf16.msra.mxu0 %v3190
    %3256 = vmatprep.subr.bf16.mxu0 0
    %3257 = vmatpush1.bf16.msra.mxu0 %v3191
    %3258 = vmatprep.subr.bf16.mxu0 0
    %3259 = vmatpush1.bf16.msra.mxu0 %v3192
    %3260 = vmatprep.subr.bf16.mxu0 0
    %3261 = vmatpush1.bf16.msra.mxu0 %v3193
    %3262 = vmatprep.subr.bf16.mxu0 0
    %3263 = vmatpush1.bf16.msra.mxu0 %v3194
    %3264 = vmatprep.subr.bf16.mxu0 0
    %3265 = vmatpush1.bf16.msra.mxu0 %v3195
    %3266 = vmatprep.subr.bf16.mxu0 0
    %3267 = vmatpush1.bf16.msra.mxu0 %v3196
    %3268 = vmatprep.subr.bf16.mxu0 0
    %3269 = vmatpush1.bf16.msra.mxu0 %v3197
    %3270 = vmatprep.subr.bf16.mxu0 0
    %3271 = vmatpush1.bf16.msra.mxu0 %v3198
    %3272 = vmatprep.subr.bf16.mxu0 0
    %3273 = vmatpush1.bf16.msra.mxu0 %v3199
    %3274 = vmatprep.subr.bf16.mxu0 0
    %3275 = vmatpush1.bf16.msra.mxu0 %v3200
    %3276 = vmatprep.subr.bf16.mxu0 0
    %3277 = vmatpush1.bf16.msra.mxu0 %v3201
    %3278 = vmatprep.subr.bf16.mxu0 0
    %3279 = vmatpush1.bf16.msra.mxu0 %v3202
    %3280 = vmatprep.subr.bf16.mxu0 0
    %3281 = vmatpush1.bf16.msra.mxu0 %v3203
    %3282 = vmatprep.subr.bf16.mxu0 0
    %3283 = vmatpush1.bf16.msra.mxu0 %v3204
    %3284 = vmatprep.subr.bf16.mxu0 0
    %3285 = vmatpush1.bf16.msra.mxu0 %v3205
    %3286 = vmatprep.mubr.bf16.mxu0 %v3043
    %3287 = vmatmul.mubr.bf16.gmra.mrb[0].mxu0 %v3036
    %v3288 = vpop.f32.mrb[0].mxu0
    %v3289 = vadd.f32 0.0, %v3288
    %v3290 = vpop.f32.mrb[0].mxu0
    %v3291 = vpop.f32.mrb[0].mxu0
    %v3292 = vpop.f32.mrb[0].mxu0
    %3293 = vdwg.mxu0
    %3294 = vmatprep.subr.bf16.mxu0 0
    %3295 = vmatpush1.bf16.msra.mxu0 %v3206
    %3296 = vmatprep.subr.bf16.mxu0 0
    %3297 = vmatpush1.bf16.msra.mxu0 %v3207
    %3298 = vmatprep.subr.bf16.mxu0 0
    %3299 = vmatpush1.bf16.msra.mxu0 %v3208
    %3300 = vmatprep.subr.bf16.mxu0 0
    %3301 = vmatpush1.bf16.msra.mxu0 %v3209
    %3302 = vmatprep.subr.bf16.mxu0 0
    %3303 = vmatpush1.bf16.msra.mxu0 %v3210
    %3304 = vmatprep.subr.bf16.mxu0 0
    %3305 = vmatpush1.bf16.msra.mxu0 %v3211
    %3306 = vmatprep.subr.bf16.mxu0 0
    %3307 = vmatpush1.bf16.msra.mxu0 %v3212
    %3308 = vmatprep.subr.bf16.mxu0 0
    %3309 = vmatpush1.bf16.msra.mxu0 %v3213
    %3310 = vmatprep.subr.bf16.mxu0 0
    %3311 = vmatpush1.bf16.msra.mxu0 %v3214
    %3312 = vmatprep.subr.bf16.mxu0 0
    %3313 = vmatpush1.bf16.msra.mxu0 %v3215
    %3314 = vmatprep.subr.bf16.mxu0 0
    %3315 = vmatpush1.bf16.msra.mxu0 %v3216
    %3316 = vmatprep.subr.bf16.mxu0 0
    %3317 = vmatpush1.bf16.msra.mxu0 %v3217
    %3318 = vmatprep.subr.bf16.mxu0 0
    %3319 = vmatpush1.bf16.msra.mxu0 %v3218
    %3320 = vmatprep.subr.bf16.mxu0 0
    %3321 = vmatpush1.bf16.msra.mxu0 %v3219
    %3322 = vmatprep.subr.bf16.mxu0 0
    %3323 = vmatpush1.bf16.msra.mxu0 %v3220
    %3324 = vmatprep.subr.bf16.mxu0 0
    %3325 = vmatpush1.bf16.msra.mxu0 %v3221
    %3326 = vmatprep.mubr.bf16.mxu0 %v3057
    %3327 = vmatmul.mubr.bf16.gmra.mrb[0].mxu0 %v3050
    %v3328 = vpop.f32.mrb[0].mxu0
    %v3329 = vadd.f32 %v3289, %v3328
    %v3330 = vpop.f32.mrb[0].mxu0
    %v3331 = vpop.f32.mrb[0].mxu0
    %v3332 = vpop.f32.mrb[0].mxu0
    %3333 = vdwg.mxu0
    %v3336 = vunpack.c.l.b16 %v2904
    %v3337 = vunpack.c.h.b16 %v2904
    %v3338 = vunpack.c.l.b16 %v2905
    %v3339 = vpack.c.b16 %v3336, %v3336
    %v3340 = vpack.c.b16 %v3337, %v3337
    %v3341 = vpack.c.b16 %v3338, %v3338
    %v3393 = vunpack.c.l.b16 %v2906
    %v3394 = vunpack.c.l.b16 %v2907
    %v3395 = vunpack.c.l.b16 %v2908
    %v3396 = vunpack.c.l.b16 %v2909
    %v3397 = vunpack.c.l.b16 %v2910
    %v3398 = vunpack.c.l.b16 %v2911
    %v3399 = vunpack.c.l.b16 %v2912
    %v3400 = vunpack.c.l.b16 %v2913
    %v3401 = vunpack.c.l.b16 %v2914
    %v3402 = vunpack.c.l.b16 %v2915
    %v3403 = vunpack.c.l.b16 %v2916
    %v3404 = vunpack.c.l.b16 %v2917
    %v3405 = vunpack.c.l.b16 %v2918
    %v3406 = vunpack.c.l.b16 %v2919
    %v3407 = vunpack.c.l.b16 %v2920
    %v3408 = vunpack.c.l.b16 %v2921
    %v3409 = vunpack.c.l.b16 %v2922
    %v3410 = vunpack.c.l.b16 %v2923
    %v3411 = vunpack.c.l.b16 %v2924
    %v3412 = vunpack.c.l.b16 %v2925
    %v3413 = vunpack.c.l.b16 %v2926
    %v3414 = vunpack.c.l.b16 %v2927
    %v3415 = vunpack.c.l.b16 %v2928
    %v3416 = vunpack.c.l.b16 %v2929
    %v3417 = vunpack.c.l.b16 %v2930
    %v3418 = vunpack.c.l.b16 %v2931
    %v3419 = vunpack.c.l.b16 %v2932
    %v3420 = vunpack.c.l.b16 %v2933
    %v3421 = vunpack.c.l.b16 %v2934
    %v3422 = vunpack.c.l.b16 %v2935
    %v3423 = vunpack.c.l.b16 %v2936
    %v3424 = vunpack.c.l.b16 %v2937
    %v3425 = vunpack.c.l.b16 %v2938
    %v3426 = vunpack.c.l.b16 %v2939
    %v3427 = vunpack.c.l.b16 %v2940
    %v3428 = vunpack.c.l.b16 %v2941
    %v3429 = vunpack.c.l.b16 %v2942
    %v3430 = vunpack.c.l.b16 %v2943
    %v3431 = vunpack.c.l.b16 %v2944
    %v3432 = vunpack.c.l.b16 %v2945
    %v3433 = vunpack.c.l.b16 %v2946
    %v3434 = vunpack.c.l.b16 %v2947
    %v3435 = vunpack.c.l.b16 %v2948
    %v3436 = vunpack.c.l.b16 %v2949
    %v3437 = vunpack.c.l.b16 %v2950
    %v3438 = vunpack.c.l.b16 %v2951
    %v3439 = vunpack.c.l.b16 %v2952
    %v3440 = vunpack.c.l.b16 %v2953
    %v3441 = vpack.c.b16 %v3394, %v3393
    %v3442 = vpack.c.b16 %v3396, %v3395
    %v3443 = vpack.c.b16 %v3398, %v3397
    %v3444 = vpack.c.b16 %v3400, %v3399
    %v3445 = vpack.c.b16 %v3402, %v3401
    %v3446 = vpack.c.b16 %v3404, %v3403
    %v3447 = vpack.c.b16 %v3406, %v3405
    %v3448 = vpack.c.b16 %v3408, %v3407
    %v3449 = vpack.c.b16 %v3410, %v3409
    %v3450 = vpack.c.b16 %v3412, %v3411
    %v3451 = vpack.c.b16 %v3414, %v3413
    %v3452 = vpack.c.b16 %v3416, %v3415
    %v3453 = vpack.c.b16 %v3418, %v3417
    %v3454 = vpack.c.b16 %v3420, %v3419
    %v3455 = vpack.c.b16 %v3422, %v3421
    %v3456 = vpack.c.b16 %v3424, %v3423
    %v3457 = vpack.c.b16 %v3426, %v3425
    %v3458 = vpack.c.b16 %v3428, %v3427
    %v3459 = vpack.c.b16 %v3430, %v3429
    %v3460 = vpack.c.b16 %v3432, %v3431
    %v3461 = vpack.c.b16 %v3434, %v3433
    %v3462 = vpack.c.b16 %v3436, %v3435
    %v3463 = vpack.c.b16 %v3438, %v3437
    %v3464 = vpack.c.b16 %v3440, %v3439
    %3489 = vmatprep.subr.bf16.mxu0 0
    %3490 = vmatpush1.bf16.msra.mxu0 %v3441
    %3491 = vmatprep.subr.bf16.mxu0 0
    %3492 = vmatpush1.bf16.msra.mxu0 %v3442
    %3493 = vmatprep.subr.bf16.mxu0 0
    %3494 = vmatpush1.bf16.msra.mxu0 %v3443
    %3495 = vmatprep.subr.bf16.mxu0 0
    %3496 = vmatpush1.bf16.msra.mxu0 %v3444
    %3497 = vmatprep.subr.bf16.mxu0 0
    %3498 = vmatpush1.bf16.msra.mxu0 %v3445
    %3499 = vmatprep.subr.bf16.mxu0 0
    %3500 = vmatpush1.bf16.msra.mxu0 %v3446
    %3501 = vmatprep.subr.bf16.mxu0 0
    %3502 = vmatpush1.bf16.msra.mxu0 %v3447
    %3503 = vmatprep.subr.bf16.mxu0 0
    %3504 = vmatpush1.bf16.msra.mxu0 %v3448
    %3505 = vmatprep.subr.bf16.mxu0 0
    %3506 = vmatpush1.bf16.msra.mxu0 %v3449
    %3507 = vmatprep.subr.bf16.mxu0 0
    %3508 = vmatpush1.bf16.msra.mxu0 %v3450
    %3509 = vmatprep.subr.bf16.mxu0 0
    %3510 = vmatpush1.bf16.msra.mxu0 %v3451
    %3511 = vmatprep.subr.bf16.mxu0 0
    %3512 = vmatpush1.bf16.msra.mxu0 %v3452
    %3513 = vmatprep.subr.bf16.mxu0 0
    %3514 = vmatpush1.bf16.msra.mxu0 %v3453
    %3515 = vmatprep.subr.bf16.mxu0 0
    %3516 = vmatpush1.bf16.msra.mxu0 %v3454
    %3517 = vmatprep.subr.bf16.mxu0 0
    %3518 = vmatpush1.bf16.msra.mxu0 %v3455
    %3519 = vmatprep.subr.bf16.mxu0 0
    %3520 = vmatpush1.bf16.msra.mxu0 %v3456
    %3521 = vmatprep.mubr.bf16.mxu0 %v3340
    %3522 = vmatmul.mubr.bf16.gmra.mrb[0].mxu0 %v3339
    %v3523 = vpop.f32.mrb[0].mxu0
    %v3524 = vadd.f32 %v3329, %v3523
    %v3525 = vpop.f32.mrb[0].mxu0
    %v3526 = vpop.f32.mrb[0].mxu0
    %v3527 = vpop.f32.mrb[0].mxu0
    %3528 = vdwg.mxu0
    %3529 = vmatprep.subr.bf16.mxu0 0
    %3530 = vmatpush1.bf16.msra.mxu0 %v3457
    %3531 = vmatprep.subr.bf16.mxu0 0
    %3532 = vmatpush1.bf16.msra.mxu0 %v3458
    %3533 = vmatprep.subr.bf16.mxu0 0
    %3534 = vmatpush1.bf16.msra.mxu0 %v3459
    %3535 = vmatprep.subr.bf16.mxu0 0
    %3536 = vmatpush1.bf16.msra.mxu0 %v3460
    %3537 = vmatprep.subr.bf16.mxu0 0
    %3538 = vmatpush1.bf16.msra.mxu0 %v3461
    %3539 = vmatprep.subr.bf16.mxu0 0
    %3540 = vmatpush1.bf16.msra.mxu0 %v3462
    %3541 = vmatprep.subr.bf16.mxu0 0
    %3542 = vmatpush1.bf16.msra.mxu0 %v3463
    %3543 = vmatprep.subr.bf16.mxu0 0
    %3544 = vmatpush1.bf16.msra.mxu0 %v3464
    %3545 = vmatprep.subr.bf16.mxu0 0
    %3546 = vmatpush1.bf16.msra.mxu0 0
    %3547 = vmatprep.subr.bf16.mxu0 0
    %3548 = vmatpush1.bf16.msra.mxu0 0
    %3549 = vmatprep.subr.bf16.mxu0 0
    %3550 = vmatpush1.bf16.msra.mxu0 0
    %3551 = vmatprep.subr.bf16.mxu0 0
    %3552 = vmatpush1.bf16.msra.mxu0 0
    %3553 = vmatprep.subr.bf16.mxu0 0
    %3554 = vmatpush1.bf16.msra.mxu0 0
    %3555 = vmatprep.subr.bf16.mxu0 0
    %3556 = vmatpush1.bf16.msra.mxu0 0
    %3557 = vmatprep.subr.bf16.mxu0 0
    %3558 = vmatpush1.bf16.msra.mxu0 0
    %3559 = vmatprep.subr.bf16.mxu0 0
    %3560 = vmatpush1.bf16.msra.mxu0 0
    %3561 = vmatprep.mubr.bf16.mxu0 0
    %3562 = vmatmul.mubr.bf16.gmra.mrb[0].mxu0 %v3341
    %v3563 = vpop.f32.mrb[0].mxu0
    %v3564 = vadd.f32 %v3524, %v3563
    %v3565 = vpop.f32.mrb[0].mxu0
    %v3566 = vpop.f32.mrb[0].mxu0
    %v3567 = vpop.f32.mrb[0].mxu0
    %3568 = vdwg.mxu0
    %v3569 = vld [vmem:[%s4] sm:$0x1]
    %v3571 = vlaneseq
    %v3572 = vshrl.u32 %v3571, 7
    %v3573 = vsub.s32 0, %v3572
    %v3574 = vrot.slane %v3569, %v3573
    %v3576 = vadd.f32 %v3564, %v3574
    %v3577 = vmax.f32 %v3576, 0.0
    %v3578 = vpack.c.bf16 %v3577, %v3577
    %v3580 = vunpack.c.l.b16 %v3578
    %v3581 = vpack.c.b16 %v3580, %v3580
    %v3582 = vrot.slane %v3581, 7
    %3584 = vst [vmem:[#allocation3] sm:$0x6] %v3582
    %v3585 = vld [vmem:[#allocation2 + $0xc] sm:$0x3]
    %v3586 = vld [vmem:[#allocation6] sm:$0xf]
    %v3587 = vld [vmem:[#allocation6 + $0x4] sm:$0xf]
    %v3588 = vld [vmem:[#allocation6 + $0x8] sm:$0xf]
    %v3589 = vld [vmem:[#allocation6 + $0xc] sm:$0xf]
    %v3590 = vld [vmem:[#allocation6 + $0x10] sm:$0xf]
    %v3591 = vld [vmem:[#allocation6 + $0x14] sm:$0xf]
    %v3592 = vld [vmem:[#allocation6 + $0x18] sm:$0xf]
    %v3593 = vld [vmem:[#allocation6 + $0x1c] sm:$0xf]
    %v3594 = vld [vmem:[#allocation6 + $0x20] sm:$0xf]
    %v3595 = vld [vmem:[#allocation6 + $0x24] sm:$0xf]
    %v3596 = vld [vmem:[#allocation6 + $0x28] sm:$0xf]
    %v3597 = vld [vmem:[#allocation6 + $0x2c] sm:$0xf]
    %v3598 = vld [vmem:[#allocation6 + $0x30] sm:$0xf]
    %v3599 = vld [vmem:[#allocation6 + $0x34] sm:$0xf]
    %v3600 = vld [vmem:[#allocation6 + $0x38] sm:$0xf]
    %v3601 = vld [vmem:[#allocation6 + $0x3c] sm:$0xf]
    %v3602 = vld [vmem:[#allocation2] sm:$0x77]
    %v3603 = vld [vmem:[#allocation2 + $0x8] sm:$0x77]
    %v3604 = vld [vmem:[#allocation6 + $0x40] sm:$0xf]
    %v3605 = vld [vmem:[#allocation6 + $0x44] sm:$0xf]
    %v3606 = vld [vmem:[#allocation6 + $0x48] sm:$0xf]
    %v3607 = vld [vmem:[#allocation6 + $0x4c] sm:$0xf]
    %v3608 = vld [vmem:[#allocation6 + $0x50] sm:$0xf]
    %v3609 = vld [vmem:[#allocation6 + $0x54] sm:$0xf]
    %v3610 = vld [vmem:[#allocation6 + $0x58] sm:$0xf]
    %v3611 = vld [vmem:[#allocation6 + $0x5c] sm:$0xf]
    %v3612 = vld [vmem:[#allocation6 + $0x60] sm:$0xf]
    %v3613 = vld [vmem:[#allocation6 + $0x64] sm:$0xf]
    %v3614 = vld [vmem:[#allocation6 + $0x68] sm:$0xf]
    %v3615 = vld [vmem:[#allocation6 + $0x6c] sm:$0xf]
    %v3616 = vld [vmem:[#allocation6 + $0x70] sm:$0xf]
    %v3617 = vld [vmem:[#allocation6 + $0x74] sm:$0xf]
    %v3618 = vld [vmem:[#allocation6 + $0x78] sm:$0xf]
    %v3619 = vld [vmem:[#allocation6 + $0x7c] sm:$0xf]
    %v3620 = vld [vmem:[#allocation6 + $0x80] sm:$0xf]
    %v3621 = vld [vmem:[#allocation6 + $0x84] sm:$0xf]
    %v3622 = vld [vmem:[#allocation6 + $0x88] sm:$0xf]
    %v3623 = vld [vmem:[#allocation6 + $0x8c] sm:$0xf]
    %v3624 = vld [vmem:[#allocation6 + $0x90] sm:$0xf]
    %v3625 = vld [vmem:[#allocation6 + $0x94] sm:$0xf]
    %v3626 = vld [vmem:[#allocation6 + $0x98] sm:$0xf]
    %v3627 = vld [vmem:[#allocation6 + $0x9c] sm:$0xf]
    %v3628 = vld [vmem:[#allocation6 + $0xa0] sm:$0xf]
    %v3629 = vld [vmem:[#allocation6 + $0xa4] sm:$0xf]
    %v3630 = vld [vmem:[#allocation6 + $0xa8] sm:$0xf]
    %v3631 = vld [vmem:[#allocation6 + $0xac] sm:$0xf]
    %v3632 = vld [vmem:[#allocation6 + $0xb0] sm:$0xf]
    %v3633 = vld [vmem:[#allocation6 + $0xb4] sm:$0xf]
    %v3634 = vld [vmem:[#allocation6 + $0xb8] sm:$0xf]
    %v3635 = vld [vmem:[#allocation6 + $0xbc] sm:$0xf]
    %v3636 = vld [vmem:[#allocation6 + $0xc0] sm:$0xf]
    %v3637 = vld [vmem:[#allocation6 + $0xc4] sm:$0xf]
    %v3638 = vld [vmem:[#allocation6 + $0xc8] sm:$0xf]
    %v3639 = vld [vmem:[#allocation6 + $0xcc] sm:$0xf]
    %v3640 = vld [vmem:[#allocation6 + $0xd0] sm:$0xf]
    %v3641 = vld [vmem:[#allocation6 + $0xd4] sm:$0xf]
    %v3642 = vld [vmem:[#allocation6 + $0xd8] sm:$0xf]
    %v3643 = vld [vmem:[#allocation6 + $0xdc] sm:$0xf]
    %v3644 = vld [vmem:[#allocation6 + $0xe0] sm:$0xf]
    %v3645 = vld [vmem:[#allocation6 + $0xe4] sm:$0xf]
    %v3646 = vld [vmem:[#allocation6 + $0xe8] sm:$0xf]
    %v3647 = vld [vmem:[#allocation6 + $0xec] sm:$0xf]
    %v3648 = vld [vmem:[#allocation6 + $0xf0] sm:$0xf]
    %v3649 = vld [vmem:[#allocation6 + $0xf4] sm:$0xf]
    %v3650 = vld [vmem:[#allocation6 + $0xf8] sm:$0xf]
    %v3651 = vld [vmem:[#allocation6 + $0xfc] sm:$0xf]
    %v3652 = vld [vmem:[#allocation6 + $0x100] sm:$0xf]
    %v3653 = vld [vmem:[#allocation6 + $0x104] sm:$0xf]
    %v3654 = vld [vmem:[#allocation6 + $0x108] sm:$0xf]
    %v3655 = vld [vmem:[#allocation6 + $0x10c] sm:$0xf]
    %v3656 = vld [vmem:[#allocation6 + $0x110] sm:$0xf]
    %v3657 = vld [vmem:[#allocation6 + $0x114] sm:$0xf]
    %v3658 = vld [vmem:[#allocation6 + $0x118] sm:$0xf]
    %v3659 = vld [vmem:[#allocation6 + $0x11c] sm:$0xf]
    %v3660 = vld [vmem:[#allocation6 + $0x120] sm:$0xf]
    %v3661 = vld [vmem:[#allocation6 + $0x124] sm:$0xf]
    %v3662 = vld [vmem:[#allocation6 + $0x128] sm:$0xf]
    %v3663 = vld [vmem:[#allocation6 + $0x12c] sm:$0xf]
    %v3664 = vld [vmem:[#allocation6 + $0x130] sm:$0xf]
    %v3665 = vld [vmem:[#allocation6 + $0x134] sm:$0xf]
    %v3666 = vld [vmem:[#allocation6 + $0x138] sm:$0xf]
    %v3667 = vld [vmem:[#allocation6 + $0x13c] sm:$0xf]
    %v3670 = vunpack.c.l.b16 %v3602
    %v3671 = vunpack.c.h.b16 %v3602
    %v3672 = vunpack.c.l.b16 %v3603
    %v3673 = vunpack.c.h.b16 %v3603
    %v3674 = vpack.c.b16 %v3670, %v3670
    %v3675 = vpack.c.b16 %v3671, %v3671
    %v3676 = vpack.c.b16 %v3672, %v3672
    %v3677 = vpack.c.b16 %v3673, %v3673
    %v3679 = vshrl.u32 %v3674, 16
    %v3681 = vshll.u32 %v3674, 16
    %v3683 = vrot.slane %v3681, 1
    %v3684 = vor.u32 %v3679, %v3683
    %v3686 = vshrl.u32 %v3675, 16
    %v3688 = vshll.u32 %v3675, 16
    %v3690 = vrot.slane %v3688, 1
    %v3691 = vor.u32 %v3686, %v3690
    %v3693 = vshrl.u32 %v3676, 16
    %v3695 = vshll.u32 %v3676, 16
    %v3697 = vrot.slane %v3695, 1
    %v3698 = vor.u32 %v3693, %v3697
    %v3700 = vshrl.u32 %v3677, 16
    %v3702 = vshll.u32 %v3677, 16
    %v3704 = vrot.slane %v3702, 1
    %v3705 = vor.u32 %v3700, %v3704
    %v3774 = vunpack.c.l.b16 %v3604
    %v3775 = vunpack.c.l.b16 %v3605
    %v3776 = vunpack.c.l.b16 %v3606
    %v3777 = vunpack.c.l.b16 %v3607
    %v3778 = vunpack.c.l.b16 %v3608
    %v3779 = vunpack.c.l.b16 %v3609
    %v3780 = vunpack.c.l.b16 %v3610
    %v3781 = vunpack.c.l.b16 %v3611
    %v3782 = vunpack.c.l.b16 %v3612
    %v3783 = vunpack.c.l.b16 %v3613
    %v3784 = vunpack.c.l.b16 %v3614
    %v3785 = vunpack.c.l.b16 %v3615
    %v3786 = vunpack.c.l.b16 %v3616
    %v3787 = vunpack.c.l.b16 %v3617
    %v3788 = vunpack.c.l.b16 %v3618
    %v3789 = vunpack.c.l.b16 %v3619
    %v3790 = vunpack.c.l.b16 %v3620
    %v3791 = vunpack.c.l.b16 %v3621
    %v3792 = vunpack.c.l.b16 %v3622
    %v3793 = vunpack.c.l.b16 %v3623
    %v3794 = vunpack.c.l.b16 %v3624
    %v3795 = vunpack.c.l.b16 %v3625
    %v3796 = vunpack.c.l.b16 %v3626
    %v3797 = vunpack.c.l.b16 %v3627
    %v3798 = vunpack.c.l.b16 %v3628
    %v3799 = vunpack.c.l.b16 %v3629
    %v3800 = vunpack.c.l.b16 %v3630
    %v3801 = vunpack.c.l.b16 %v3631
    %v3802 = vunpack.c.l.b16 %v3632
    %v3803 = vunpack.c.l.b16 %v3633
    %v3804 = vunpack.c.l.b16 %v3634
    %v3805 = vunpack.c.l.b16 %v3635
    %v3806 = vunpack.c.l.b16 %v3636
    %v3807 = vunpack.c.l.b16 %v3637
    %v3808 = vunpack.c.l.b16 %v3638
    %v3809 = vunpack.c.l.b16 %v3639
    %v3810 = vunpack.c.l.b16 %v3640
    %v3811 = vunpack.c.l.b16 %v3641
    %v3812 = vunpack.c.l.b16 %v3642
    %v3813 = vunpack.c.l.b16 %v3643
    %v3814 = vunpack.c.l.b16 %v3644
    %v3815 = vunpack.c.l.b16 %v3645
    %v3816 = vunpack.c.l.b16 %v3646
    %v3817 = vunpack.c.l.b16 %v3647
    %v3818 = vunpack.c.l.b16 %v3648
    %v3819 = vunpack.c.l.b16 %v3649
    %v3820 = vunpack.c.l.b16 %v3650
    %v3821 = vunpack.c.l.b16 %v3651
    %v3822 = vunpack.c.l.b16 %v3652
    %v3823 = vunpack.c.l.b16 %v3653
    %v3824 = vunpack.c.l.b16 %v3654
    %v3825 = vunpack.c.l.b16 %v3655
    %v3826 = vunpack.c.l.b16 %v3656
    %v3827 = vunpack.c.l.b16 %v3657
    %v3828 = vunpack.c.l.b16 %v3658
    %v3829 = vunpack.c.l.b16 %v3659
    %v3830 = vunpack.c.l.b16 %v3660
    %v3831 = vunpack.c.l.b16 %v3661
    %v3832 = vunpack.c.l.b16 %v3662
    %v3833 = vunpack.c.l.b16 %v3663
    %v3834 = vunpack.c.l.b16 %v3664
    %v3835 = vunpack.c.l.b16 %v3665
    %v3836 = vunpack.c.l.b16 %v3666
    %v3837 = vunpack.c.l.b16 %v3667
    %v3838 = vpack.c.b16 %v3775, %v3774
    %v3839 = vpack.c.b16 %v3777, %v3776
    %v3840 = vpack.c.b16 %v3779, %v3778
    %v3841 = vpack.c.b16 %v3781, %v3780
    %v3842 = vpack.c.b16 %v3783, %v3782
    %v3843 = vpack.c.b16 %v3785, %v3784
    %v3844 = vpack.c.b16 %v3787, %v3786
    %v3845 = vpack.c.b16 %v3789, %v3788
    %v3846 = vpack.c.b16 %v3791, %v3790
    %v3847 = vpack.c.b16 %v3793, %v3792
    %v3848 = vpack.c.b16 %v3795, %v3794
    %v3849 = vpack.c.b16 %v3797, %v3796
    %v3850 = vpack.c.b16 %v3799, %v3798
    %v3851 = vpack.c.b16 %v3801, %v3800
    %v3852 = vpack.c.b16 %v3803, %v3802
    %v3853 = vpack.c.b16 %v3805, %v3804
    %v3854 = vpack.c.b16 %v3807, %v3806
    %v3855 = vpack.c.b16 %v3809, %v3808
    %v3856 = vpack.c.b16 %v3811, %v3810
    %v3857 = vpack.c.b16 %v3813, %v3812
    %v3858 = vpack.c.b16 %v3815, %v3814
    %v3859 = vpack.c.b16 %v3817, %v3816
    %v3860 = vpack.c.b16 %v3819, %v3818
    %v3861 = vpack.c.b16 %v3821, %v3820
    %v3862 = vpack.c.b16 %v3823, %v3822
    %v3863 = vpack.c.b16 %v3825, %v3824
    %v3864 = vpack.c.b16 %v3827, %v3826
    %v3865 = vpack.c.b16 %v3829, %v3828
    %v3866 = vpack.c.b16 %v3831, %v3830
    %v3867 = vpack.c.b16 %v3833, %v3832
    %v3868 = vpack.c.b16 %v3835, %v3834
    %v3869 = vpack.c.b16 %v3837, %v3836
    %3902 = vmatprep.subr.bf16.mxu0 0
    %3903 = vmatpush1.bf16.msra.mxu0 %v3838
    %3904 = vmatprep.subr.bf16.mxu0 0
    %3905 = vmatpush1.bf16.msra.mxu0 %v3839
    %3906 = vmatprep.subr.bf16.mxu0 0
    %3907 = vmatpush1.bf16.msra.mxu0 %v3840
    %3908 = vmatprep.subr.bf16.mxu0 0
    %3909 = vmatpush1.bf16.msra.mxu0 %v3841
    %3910 = vmatprep.subr.bf16.mxu0 0
    %3911 = vmatpush1.bf16.msra.mxu0 %v3842
    %3912 = vmatprep.subr.bf16.mxu0 0
    %3913 = vmatpush1.bf16.msra.mxu0 %v3843
    %3914 = vmatprep.subr.bf16.mxu0 0
    %3915 = vmatpush1.bf16.msra.mxu0 %v3844
    %3916 = vmatprep.subr.bf16.mxu0 0
    %3917 = vmatpush1.bf16.msra.mxu0 %v3845
    %3918 = vmatprep.subr.bf16.mxu0 0
    %3919 = vmatpush1.bf16.msra.mxu0 %v3846
    %3920 = vmatprep.subr.bf16.mxu0 0
    %3921 = vmatpush1.bf16.msra.mxu0 %v3847
    %3922 = vmatprep.subr.bf16.mxu0 0
    %3923 = vmatpush1.bf16.msra.mxu0 %v3848
    %3924 = vmatprep.subr.bf16.mxu0 0
    %3925 = vmatpush1.bf16.msra.mxu0 %v3849
    %3926 = vmatprep.subr.bf16.mxu0 0
    %3927 = vmatpush1.bf16.msra.mxu0 %v3850
    %3928 = vmatprep.subr.bf16.mxu0 0
    %3929 = vmatpush1.bf16.msra.mxu0 %v3851
    %3930 = vmatprep.subr.bf16.mxu0 0
    %3931 = vmatpush1.bf16.msra.mxu0 %v3852
    %3932 = vmatprep.subr.bf16.mxu0 0
    %3933 = vmatpush1.bf16.msra.mxu0 %v3853
    %3934 = vmatprep.mubr.bf16.mxu0 %v3691
    %3935 = vmatmul.mubr.bf16.gmra.mrb[0].mxu0 %v3684
    %v3936 = vpop.f32.mrb[0].mxu0
    %v3937 = vadd.f32 0.0, %v3936
    %v3938 = vpop.f32.mrb[0].mxu0
    %v3939 = vpop.f32.mrb[0].mxu0
    %v3940 = vpop.f32.mrb[0].mxu0
    %3941 = vdwg.mxu0
    %3942 = vmatprep.subr.bf16.mxu0 0
    %3943 = vmatpush1.bf16.msra.mxu0 %v3854
    %3944 = vmatprep.subr.bf16.mxu0 0
    %3945 = vmatpush1.bf16.msra.mxu0 %v3855
    %3946 = vmatprep.subr.bf16.mxu0 0
    %3947 = vmatpush1.bf16.msra.mxu0 %v3856
    %3948 = vmatprep.subr.bf16.mxu0 0
    %3949 = vmatpush1.bf16.msra.mxu0 %v3857
    %3950 = vmatprep.subr.bf16.mxu0 0
    %3951 = vmatpush1.bf16.msra.mxu0 %v3858
    %3952 = vmatprep.subr.bf16.mxu0 0
    %3953 = vmatpush1.bf16.msra.mxu0 %v3859
    %3954 = vmatprep.subr.bf16.mxu0 0
    %3955 = vmatpush1.bf16.msra.mxu0 %v3860
    %3956 = vmatprep.subr.bf16.mxu0 0
    %3957 = vmatpush1.bf16.msra.mxu0 %v3861
    %3958 = vmatprep.subr.bf16.mxu0 0
    %3959 = vmatpush1.bf16.msra.mxu0 %v3862
    %3960 = vmatprep.subr.bf16.mxu0 0
    %3961 = vmatpush1.bf16.msra.mxu0 %v3863
    %3962 = vmatprep.subr.bf16.mxu0 0
    %3963 = vmatpush1.bf16.msra.mxu0 %v3864
    %3964 = vmatprep.subr.bf16.mxu0 0
    %3965 = vmatpush1.bf16.msra.mxu0 %v3865
    %3966 = vmatprep.subr.bf16.mxu0 0
    %3967 = vmatpush1.bf16.msra.mxu0 %v3866
    %3968 = vmatprep.subr.bf16.mxu0 0
    %3969 = vmatpush1.bf16.msra.mxu0 %v3867
    %3970 = vmatprep.subr.bf16.mxu0 0
    %3971 = vmatpush1.bf16.msra.mxu0 %v3868
    %3972 = vmatprep.subr.bf16.mxu0 0
    %3973 = vmatpush1.bf16.msra.mxu0 %v3869
    %3974 = vmatprep.mubr.bf16.mxu0 %v3705
    %3975 = vmatmul.mubr.bf16.gmra.mrb[0].mxu0 %v3698
    %v3976 = vpop.f32.mrb[0].mxu0
    %v3977 = vadd.f32 %v3937, %v3976
    %v3978 = vpop.f32.mrb[0].mxu0
    %v3979 = vpop.f32.mrb[0].mxu0
    %v3980 = vpop.f32.mrb[0].mxu0
    %3981 = vdwg.mxu0
    %v3998 = vunpack.c.l.b16 %v3586
    %v3999 = vunpack.c.l.b16 %v3587
    %v4000 = vunpack.c.l.b16 %v3588
    %v4001 = vunpack.c.l.b16 %v3589
    %v4002 = vunpack.c.l.b16 %v3590
    %v4003 = vunpack.c.l.b16 %v3591
    %v4004 = vunpack.c.l.b16 %v3592
    %v4005 = vunpack.c.l.b16 %v3593
    %v4006 = vunpack.c.l.b16 %v3594
    %v4007 = vunpack.c.l.b16 %v3595
    %v4008 = vunpack.c.l.b16 %v3596
    %v4009 = vunpack.c.l.b16 %v3597
    %v4010 = vunpack.c.l.b16 %v3598
    %v4011 = vunpack.c.l.b16 %v3599
    %v4012 = vunpack.c.l.b16 %v3600
    %v4013 = vunpack.c.l.b16 %v3601
    %v4014 = vpack.c.b16 %v3999, %v3998
    %v4015 = vpack.c.b16 %v4001, %v4000
    %v4016 = vpack.c.b16 %v4003, %v4002
    %v4017 = vpack.c.b16 %v4005, %v4004
    %v4018 = vpack.c.b16 %v4007, %v4006
    %v4019 = vpack.c.b16 %v4009, %v4008
    %v4020 = vpack.c.b16 %v4011, %v4010
    %v4021 = vpack.c.b16 %v4013, %v4012
    %4030 = vmatprep.subr.bf16.mxu0 0
    %4031 = vmatpush1.bf16.msra.mxu0 %v4014
    %4032 = vmatprep.subr.bf16.mxu0 0
    %4033 = vmatpush1.bf16.msra.mxu0 %v4015
    %4034 = vmatprep.subr.bf16.mxu0 0
    %4035 = vmatpush1.bf16.msra.mxu0 %v4016
    %4036 = vmatprep.subr.bf16.mxu0 0
    %4037 = vmatpush1.bf16.msra.mxu0 %v4017
    %4038 = vmatprep.subr.bf16.mxu0 0
    %4039 = vmatpush1.bf16.msra.mxu0 %v4018
    %4040 = vmatprep.subr.bf16.mxu0 0
    %4041 = vmatpush1.bf16.msra.mxu0 %v4019
    %4042 = vmatprep.subr.bf16.mxu0 0
    %4043 = vmatpush1.bf16.msra.mxu0 %v4020
    %4044 = vmatprep.subr.bf16.mxu0 0
    %4045 = vmatpush1.bf16.msra.mxu0 %v4021
    %4046 = vmatprep.subr.bf16.mxu0 0
    %4047 = vmatpush1.bf16.msra.mxu0 0
    %4048 = vmatprep.subr.bf16.mxu0 0
    %4049 = vmatpush1.bf16.msra.mxu0 0
    %4050 = vmatprep.subr.bf16.mxu0 0
    %4051 = vmatpush1.bf16.msra.mxu0 0
    %4052 = vmatprep.subr.bf16.mxu0 0
    %4053 = vmatpush1.bf16.msra.mxu0 0
    %4054 = vmatprep.subr.bf16.mxu0 0
    %4055 = vmatpush1.bf16.msra.mxu0 0
    %4056 = vmatprep.subr.bf16.mxu0 0
    %4057 = vmatpush1.bf16.msra.mxu0 0
    %4058 = vmatprep.subr.bf16.mxu0 0
    %4059 = vmatpush1.bf16.msra.mxu0 0
    %4060 = vmatprep.subr.bf16.mxu0 0
    %4061 = vmatpush1.bf16.msra.mxu0 0
    %4062 = vmatprep.mubr.bf16.mxu0 0
    %4063 = vmatmul.mubr.bf16.gmra.mrb[0].mxu0 %v3585
    %v4064 = vpop.f32.mrb[0].mxu0
    %v4065 = vadd.f32 %v3977, %v4064
    %v4066 = vpop.f32.mrb[0].mxu0
    %v4067 = vpop.f32.mrb[0].mxu0
    %v4068 = vpop.f32.mrb[0].mxu0
    %4069 = vdwg.mxu0
    %v4070 = vld [vmem:[#allocation2] sm:$0x66]
    %v4071 = vld [vmem:[#allocation6 + $0x140] sm:$0xf]
    %v4072 = vld [vmem:[#allocation6 + $0x144] sm:$0xf]
    %v4073 = vld [vmem:[#allocation6 + $0x148] sm:$0xf]
    %v4074 = vld [vmem:[#allocation6 + $0x14c] sm:$0xf]
    %v4075 = vld [vmem:[#allocation6 + $0x150] sm:$0xf]
    %v4076 = vld [vmem:[#allocation6 + $0x154] sm:$0xf]
    %v4077 = vld [vmem:[#allocation6 + $0x158] sm:$0xf]
    %v4078 = vld [vmem:[#allocation6 + $0x15c] sm:$0xf]
    %v4079 = vld [vmem:[#allocation6 + $0x160] sm:$0xf]
    %v4080 = vld [vmem:[#allocation6 + $0x164] sm:$0xf]
    %v4081 = vld [vmem:[#allocation6 + $0x168] sm:$0xf]
    %v4082 = vld [vmem:[#allocation6 + $0x16c] sm:$0xf]
    %v4083 = vld [vmem:[#allocation6 + $0x170] sm:$0xf]
    %v4084 = vld [vmem:[#allocation6 + $0x174] sm:$0xf]
    %v4085 = vld [vmem:[#allocation6 + $0x178] sm:$0xf]
    %v4086 = vld [vmem:[#allocation6 + $0x17c] sm:$0xf]
    %v4087 = vld [vmem:[#allocation6 + $0x180] sm:$0xf]
    %v4088 = vld [vmem:[#allocation6 + $0x184] sm:$0xf]
    %v4089 = vld [vmem:[#allocation6 + $0x188] sm:$0xf]
    %v4090 = vld [vmem:[#allocation6 + $0x18c] sm:$0xf]
    %v4091 = vld [vmem:[#allocation6 + $0x190] sm:$0xf]
    %v4092 = vld [vmem:[#allocation6 + $0x194] sm:$0xf]
    %v4093 = vld [vmem:[#allocation6 + $0x198] sm:$0xf]
    %v4094 = vld [vmem:[#allocation6 + $0x19c] sm:$0xf]
    %v4095 = vld [vmem:[#allocation6 + $0x1a0] sm:$0xf]
    %v4096 = vld [vmem:[#allocation6 + $0x1a4] sm:$0xf]
    %v4097 = vld [vmem:[#allocation6 + $0x1a8] sm:$0xf]
    %v4098 = vld [vmem:[#allocation6 + $0x1ac] sm:$0xf]
    %v4099 = vld [vmem:[#allocation6 + $0x1b0] sm:$0xf]
    %v4100 = vld [vmem:[#allocation6 + $0x1b4] sm:$0xf]
    %v4101 = vld [vmem:[#allocation6 + $0x1b8] sm:$0xf]
    %v4102 = vld [vmem:[#allocation6 + $0x1bc] sm:$0xf]
    %v4104 = vunpack.c.l.b16 %v4070
    %v4105 = vunpack.c.h.b16 %v4070
    %v4106 = vpack.c.b16 %v4104, %v4104
    %v4107 = vpack.c.b16 %v4105, %v4105
    %v4108 = vrot.slane %v4106, 1
    %v4109 = vrot.slane %v4107, 1
    %v4144 = vunpack.c.l.b16 %v4071
    %v4145 = vunpack.c.l.b16 %v4072
    %v4146 = vunpack.c.l.b16 %v4073
    %v4147 = vunpack.c.l.b16 %v4074
    %v4148 = vunpack.c.l.b16 %v4075
    %v4149 = vunpack.c.l.b16 %v4076
    %v4150 = vunpack.c.l.b16 %v4077
    %v4151 = vunpack.c.l.b16 %v4078
    %v4152 = vunpack.c.l.b16 %v4079
    %v4153 = vunpack.c.l.b16 %v4080
    %v4154 = vunpack.c.l.b16 %v4081
    %v4155 = vunpack.c.l.b16 %v4082
    %v4156 = vunpack.c.l.b16 %v4083
    %v4157 = vunpack.c.l.b16 %v4084
    %v4158 = vunpack.c.l.b16 %v4085
    %v4159 = vunpack.c.l.b16 %v4086
    %v4160 = vunpack.c.l.b16 %v4087
    %v4161 = vunpack.c.l.b16 %v4088
    %v4162 = vunpack.c.l.b16 %v4089
    %v4163 = vunpack.c.l.b16 %v4090
    %v4164 = vunpack.c.l.b16 %v4091
    %v4165 = vunpack.c.l.b16 %v4092
    %v4166 = vunpack.c.l.b16 %v4093
    %v4167 = vunpack.c.l.b16 %v4094
    %v4168 = vunpack.c.l.b16 %v4095
    %v4169 = vunpack.c.l.b16 %v4096
    %v4170 = vunpack.c.l.b16 %v4097
    %v4171 = vunpack.c.l.b16 %v4098
    %v4172 = vunpack.c.l.b16 %v4099
    %v4173 = vunpack.c.l.b16 %v4100
    %v4174 = vunpack.c.l.b16 %v4101
    %v4175 = vunpack.c.l.b16 %v4102
    %v4176 = vpack.c.b16 %v4145, %v4144
    %v4177 = vpack.c.b16 %v4147, %v4146
    %v4178 = vpack.c.b16 %v4149, %v4148
    %v4179 = vpack.c.b16 %v4151, %v4150
    %v4180 = vpack.c.b16 %v4153, %v4152
    %v4181 = vpack.c.b16 %v4155, %v4154
    %v4182 = vpack.c.b16 %v4157, %v4156
    %v4183 = vpack.c.b16 %v4159, %v4158
    %v4184 = vpack.c.b16 %v4161, %v4160
    %v4185 = vpack.c.b16 %v4163, %v4162
    %v4186 = vpack.c.b16 %v4165, %v4164
    %v4187 = vpack.c.b16 %v4167, %v4166
    %v4188 = vpack.c.b16 %v4169, %v4168
    %v4189 = vpack.c.b16 %v4171, %v4170
    %v4190 = vpack.c.b16 %v4173, %v4172
    %v4191 = vpack.c.b16 %v4175, %v4174
    %4208 = vmatprep.subr.bf16.mxu0 0
    %4209 = vmatpush1.bf16.msra.mxu0 %v4176
    %4210 = vmatprep.subr.bf16.mxu0 0
    %4211 = vmatpush1.bf16.msra.mxu0 %v4177
    %4212 = vmatprep.subr.bf16.mxu0 0
    %4213 = vmatpush1.bf16.msra.mxu0 %v4178
    %4214 = vmatprep.subr.bf16.mxu0 0
    %4215 = vmatpush1.bf16.msra.mxu0 %v4179
    %4216 = vmatprep.subr.bf16.mxu0 0
    %4217 = vmatpush1.bf16.msra.mxu0 %v4180
    %4218 = vmatprep.subr.bf16.mxu0 0
    %4219 = vmatpush1.bf16.msra.mxu0 %v4181
    %4220 = vmatprep.subr.bf16.mxu0 0
    %4221 = vmatpush1.bf16.msra.mxu0 %v4182
    %4222 = vmatprep.subr.bf16.mxu0 0
    %4223 = vmatpush1.bf16.msra.mxu0 %v4183
    %4224 = vmatprep.subr.bf16.mxu0 0
    %4225 = vmatpush1.bf16.msra.mxu0 %v4184
    %4226 = vmatprep.subr.bf16.mxu0 0
    %4227 = vmatpush1.bf16.msra.mxu0 %v4185
    %4228 = vmatprep.subr.bf16.mxu0 0
    %4229 = vmatpush1.bf16.msra.mxu0 %v4186
    %4230 = vmatprep.subr.bf16.mxu0 0
    %4231 = vmatpush1.bf16.msra.mxu0 %v4187
    %4232 = vmatprep.subr.bf16.mxu0 0
    %4233 = vmatpush1.bf16.msra.mxu0 %v4188
    %4234 = vmatprep.subr.bf16.mxu0 0
    %4235 = vmatpush1.bf16.msra.mxu0 %v4189
    %4236 = vmatprep.subr.bf16.mxu0 0
    %4237 = vmatpush1.bf16.msra.mxu0 %v4190
    %4238 = vmatprep.subr.bf16.mxu0 0
    %4239 = vmatpush1.bf16.msra.mxu0 %v4191
    %4240 = vmatprep.mubr.bf16.mxu0 %v4109
    %4241 = vmatmul.mubr.bf16.gmra.mrb[0].mxu0 %v4108
    %v4242 = vpop.f32.mrb[0].mxu0
    %v4243 = vadd.f32 0.0, %v4242
    %v4244 = vpop.f32.mrb[0].mxu0
    %v4245 = vpop.f32.mrb[0].mxu0
    %v4246 = vpop.f32.mrb[0].mxu0
    %4247 = vdwg.mxu0
    %v4248 = vadd.f32 %v4065, %v4243
    %v4249 = vld [vmem:[%s4] sm:$0x1]
    %v4251 = vlaneseq
    %v4252 = vshrl.u32 %v4251, 7
    %v4253 = vsub.s32 0, %v4252
    %v4254 = vrot.slane %v4249, %v4253
    %v4256 = vadd.f32 %v4248, %v4254
    %v4257 = vmax.f32 %v4256, 0.0
    %v4258 = vpack.c.bf16 %v4257, %v4257
    %v4260 = vunpack.c.l.b16 %v4258
    %v4261 = vpack.c.b16 %v4260, %v4260
    %v4262 = vrot.slane %v4261, 7
    %4264 = vst [vmem:[#allocation3 + $0x4] sm:$0x6] %v4262
    %v4265 = vld [vmem:[#allocation3 + $0x4] sm:$0x3]
    %v4266 = vld [vmem:[#allocation8] sm:$0xf]
    %v4267 = vld [vmem:[#allocation8 + $0x4] sm:$0xf]
    %v4268 = vld [vmem:[#allocation8 + $0x8] sm:$0xf]
    %v4269 = vld [vmem:[#allocation8 + $0xc] sm:$0xf]
    %v4270 = vld [vmem:[#allocation8 + $0x10] sm:$0xf]
    %v4271 = vld [vmem:[#allocation8 + $0x14] sm:$0xf]
    %v4272 = vld [vmem:[#allocation8 + $0x18] sm:$0xf]
    %v4273 = vld [vmem:[#allocation8 + $0x1c] sm:$0xf]
    %v4274 = vld [vmem:[#allocation8 + $0x20] sm:$0xf]
    %v4275 = vld [vmem:[#allocation8 + $0x24] sm:$0xf]
    %v4276 = vld [vmem:[#allocation8 + $0x28] sm:$0xf]
    %v4277 = vld [vmem:[#allocation8 + $0x2c] sm:$0xf]
    %v4278 = vld [vmem:[#allocation8 + $0x30] sm:$0xf]
    %v4279 = vld [vmem:[#allocation8 + $0x34] sm:$0xf]
    %v4280 = vld [vmem:[#allocation8 + $0x38] sm:$0xf]
    %v4281 = vld [vmem:[#allocation8 + $0x3c] sm:$0xf]
    %v4282 = vld [vmem:[#allocation3] sm:$0x77]
    %v4283 = vld [vmem:[#allocation8 + $0x40] sm:$0xf]
    %v4284 = vld [vmem:[#allocation8 + $0x44] sm:$0xf]
    %v4285 = vld [vmem:[#allocation8 + $0x48] sm:$0xf]
    %v4286 = vld [vmem:[#allocation8 + $0x4c] sm:$0xf]
    %v4287 = vld [vmem:[#allocation8 + $0x50] sm:$0xf]
    %v4288 = vld [vmem:[#allocation8 + $0x54] sm:$0xf]
    %v4289 = vld [vmem:[#allocation8 + $0x58] sm:$0xf]
    %v4290 = vld [vmem:[#allocation8 + $0x5c] sm:$0xf]
    %v4291 = vld [vmem:[#allocation8 + $0x60] sm:$0xf]
    %v4292 = vld [vmem:[#allocation8 + $0x64] sm:$0xf]
    %v4293 = vld [vmem:[#allocation8 + $0x68] sm:$0xf]
    %v4294 = vld [vmem:[#allocation8 + $0x6c] sm:$0xf]
    %v4295 = vld [vmem:[#allocation8 + $0x70] sm:$0xf]
    %v4296 = vld [vmem:[#allocation8 + $0x74] sm:$0xf]
    %v4297 = vld [vmem:[#allocation8 + $0x78] sm:$0xf]
    %v4298 = vld [vmem:[#allocation8 + $0x7c] sm:$0xf]
    %v4299 = vld [vmem:[#allocation8 + $0x80] sm:$0xf]
    %v4300 = vld [vmem:[#allocation8 + $0x84] sm:$0xf]
    %v4301 = vld [vmem:[#allocation8 + $0x88] sm:$0xf]
    %v4302 = vld [vmem:[#allocation8 + $0x8c] sm:$0xf]
    %v4303 = vld [vmem:[#allocation8 + $0x90] sm:$0xf]
    %v4304 = vld [vmem:[#allocation8 + $0x94] sm:$0xf]
    %v4305 = vld [vmem:[#allocation8 + $0x98] sm:$0xf]
    %v4306 = vld [vmem:[#allocation8 + $0x9c] sm:$0xf]
    %v4307 = vld [vmem:[#allocation8 + $0xa0] sm:$0xf]
    %v4308 = vld [vmem:[#allocation8 + $0xa4] sm:$0xf]
    %v4309 = vld [vmem:[#allocation8 + $0xa8] sm:$0xf]
    %v4310 = vld [vmem:[#allocation8 + $0xac] sm:$0xf]
    %v4311 = vld [vmem:[#allocation8 + $0xb0] sm:$0xf]
    %v4312 = vld [vmem:[#allocation8 + $0xb4] sm:$0xf]
    %v4313 = vld [vmem:[#allocation8 + $0xb8] sm:$0xf]
    %v4314 = vld [vmem:[#allocation8 + $0xbc] sm:$0xf]
    %v4316 = vunpack.c.l.b16 %v4282
    %v4317 = vunpack.c.h.b16 %v4282
    %v4318 = vpack.c.b16 %v4316, %v4316
    %v4319 = vpack.c.b16 %v4317, %v4317
    %v4321 = vshrl.u32 %v4318, 16
    %v4323 = vshll.u32 %v4318, 16
    %v4325 = vrot.slane %v4323, 1
    %v4326 = vor.u32 %v4321, %v4325
    %v4328 = vshrl.u32 %v4319, 16
    %v4330 = vshll.u32 %v4319, 16
    %v4332 = vrot.slane %v4330, 1
    %v4333 = vor.u32 %v4328, %v4332
    %v4368 = vunpack.c.l.b16 %v4283
    %v4369 = vunpack.c.l.b16 %v4284
    %v4370 = vunpack.c.l.b16 %v4285
    %v4371 = vunpack.c.l.b16 %v4286
    %v4372 = vunpack.c.l.b16 %v4287
    %v4373 = vunpack.c.l.b16 %v4288
    %v4374 = vunpack.c.l.b16 %v4289
    %v4375 = vunpack.c.l.b16 %v4290
    %v4376 = vunpack.c.l.b16 %v4291
    %v4377 = vunpack.c.l.b16 %v4292
    %v4378 = vunpack.c.l.b16 %v4293
    %v4379 = vunpack.c.l.b16 %v4294
    %v4380 = vunpack.c.l.b16 %v4295
    %v4381 = vunpack.c.l.b16 %v4296
    %v4382 = vunpack.c.l.b16 %v4297
    %v4383 = vunpack.c.l.b16 %v4298
    %v4384 = vunpack.c.l.b16 %v4299
    %v4385 = vunpack.c.l.b16 %v4300
    %v4386 = vunpack.c.l.b16 %v4301
    %v4387 = vunpack.c.l.b16 %v4302
    %v4388 = vunpack.c.l.b16 %v4303
    %v4389 = vunpack.c.l.b16 %v4304
    %v4390 = vunpack.c.l.b16 %v4305
    %v4391 = vunpack.c.l.b16 %v4306
    %v4392 = vunpack.c.l.b16 %v4307
    %v4393 = vunpack.c.l.b16 %v4308
    %v4394 = vunpack.c.l.b16 %v4309
    %v4395 = vunpack.c.l.b16 %v4310
    %v4396 = vunpack.c.l.b16 %v4311
    %v4397 = vunpack.c.l.b16 %v4312
    %v4398 = vunpack.c.l.b16 %v4313
    %v4399 = vunpack.c.l.b16 %v4314
    %v4400 = vpack.c.b16 %v4369, %v4368
    %v4401 = vpack.c.b16 %v4371, %v4370
    %v4402 = vpack.c.b16 %v4373, %v4372
    %v4403 = vpack.c.b16 %v4375, %v4374
    %v4404 = vpack.c.b16 %v4377, %v4376
    %v4405 = vpack.c.b16 %v4379, %v4378
    %v4406 = vpack.c.b16 %v4381, %v4380
    %v4407 = vpack.c.b16 %v4383, %v4382
    %v4408 = vpack.c.b16 %v4385, %v4384
    %v4409 = vpack.c.b16 %v4387, %v4386
    %v4410 = vpack.c.b16 %v4389, %v4388
    %v4411 = vpack.c.b16 %v4391, %v4390
    %v4412 = vpack.c.b16 %v4393, %v4392
    %v4413 = vpack.c.b16 %v4395, %v4394
    %v4414 = vpack.c.b16 %v4397, %v4396
    %v4415 = vpack.c.b16 %v4399, %v4398
    %4432 = vmatprep.subr.bf16.mxu0 0
    %4433 = vmatpush1.bf16.msra.mxu0 %v4400
    %4434 = vmatprep.subr.bf16.mxu0 0
    %4435 = vmatpush1.bf16.msra.mxu0 %v4401
    %4436 = vmatprep.subr.bf16.mxu0 0
    %4437 = vmatpush1.bf16.msra.mxu0 %v4402
    %4438 = vmatprep.subr.bf16.mxu0 0
    %4439 = vmatpush1.bf16.msra.mxu0 %v4403
    %4440 = vmatprep.subr.bf16.mxu0 0
    %4441 = vmatpush1.bf16.msra.mxu0 %v4404
    %4442 = vmatprep.subr.bf16.mxu0 0
    %4443 = vmatpush1.bf16.msra.mxu0 %v4405
    %4444 = vmatprep.subr.bf16.mxu0 0
    %4445 = vmatpush1.bf16.msra.mxu0 %v4406
    %4446 = vmatprep.subr.bf16.mxu0 0
    %4447 = vmatpush1.bf16.msra.mxu0 %v4407
    %4448 = vmatprep.subr.bf16.mxu0 0
    %4449 = vmatpush1.bf16.msra.mxu0 %v4408
    %4450 = vmatprep.subr.bf16.mxu0 0
    %4451 = vmatpush1.bf16.msra.mxu0 %v4409
    %4452 = vmatprep.subr.bf16.mxu0 0
    %4453 = vmatpush1.bf16.msra.mxu0 %v4410
    %4454 = vmatprep.subr.bf16.mxu0 0
    %4455 = vmatpush1.bf16.msra.mxu0 %v4411
    %4456 = vmatprep.subr.bf16.mxu0 0
    %4457 = vmatpush1.bf16.msra.mxu0 %v4412
    %4458 = vmatprep.subr.bf16.mxu0 0
    %4459 = vmatpush1.bf16.msra.mxu0 %v4413
    %4460 = vmatprep.subr.bf16.mxu0 0
    %4461 = vmatpush1.bf16.msra.mxu0 %v4414
    %4462 = vmatprep.subr.bf16.mxu0 0
    %4463 = vmatpush1.bf16.msra.mxu0 %v4415
    %4464 = vmatprep.mubr.bf16.mxu0 %v4333
    %4465 = vmatmul.mubr.bf16.gmra.mrb[0].mxu0 %v4326
    %v4466 = vpop.f32.mrb[0].mxu0
    %v4467 = vadd.f32 0.0, %v4466
    %v4468 = vpop.f32.mrb[0].mxu0
    %v4469 = vpop.f32.mrb[0].mxu0
    %v4470 = vpop.f32.mrb[0].mxu0
    %4471 = vdwg.mxu0
    %v4488 = vunpack.c.l.b16 %v4266
    %v4489 = vunpack.c.l.b16 %v4267
    %v4490 = vunpack.c.l.b16 %v4268
    %v4491 = vunpack.c.l.b16 %v4269
    %v4492 = vunpack.c.l.b16 %v4270
    %v4493 = vunpack.c.l.b16 %v4271
    %v4494 = vunpack.c.l.b16 %v4272
    %v4495 = vunpack.c.l.b16 %v4273
    %v4496 = vunpack.c.l.b16 %v4274
    %v4497 = vunpack.c.l.b16 %v4275
    %v4498 = vunpack.c.l.b16 %v4276
    %v4499 = vunpack.c.l.b16 %v4277
    %v4500 = vunpack.c.l.b16 %v4278
    %v4501 = vunpack.c.l.b16 %v4279
    %v4502 = vunpack.c.l.b16 %v4280
    %v4503 = vunpack.c.l.b16 %v4281
    %v4504 = vpack.c.b16 %v4489, %v4488
    %v4505 = vpack.c.b16 %v4491, %v4490
    %v4506 = vpack.c.b16 %v4493, %v4492
    %v4507 = vpack.c.b16 %v4495, %v4494
    %v4508 = vpack.c.b16 %v4497, %v4496
    %v4509 = vpack.c.b16 %v4499, %v4498
    %v4510 = vpack.c.b16 %v4501, %v4500
    %v4511 = vpack.c.b16 %v4503, %v4502
    %4520 = vmatprep.subr.bf16.mxu0 0
    %4521 = vmatpush1.bf16.msra.mxu0 %v4504
    %4522 = vmatprep.subr.bf16.mxu0 0
    %4523 = vmatpush1.bf16.msra.mxu0 %v4505
    %4524 = vmatprep.subr.bf16.mxu0 0
    %4525 = vmatpush1.bf16.msra.mxu0 %v4506
    %4526 = vmatprep.subr.bf16.mxu0 0
    %4527 = vmatpush1.bf16.msra.mxu0 %v4507
    %4528 = vmatprep.subr.bf16.mxu0 0
    %4529 = vmatpush1.bf16.msra.mxu0 %v4508
    %4530 = vmatprep.subr.bf16.mxu0 0
    %4531 = vmatpush1.bf16.msra.mxu0 %v4509
    %4532 = vmatprep.subr.bf16.mxu0 0
    %4533 = vmatpush1.bf16.msra.mxu0 %v4510
    %4534 = vmatprep.subr.bf16.mxu0 0
    %4535 = vmatpush1.bf16.msra.mxu0 %v4511
    %4536 = vmatprep.subr.bf16.mxu0 0
    %4537 = vmatpush1.bf16.msra.mxu0 0
    %4538 = vmatprep.subr.bf16.mxu0 0
    %4539 = vmatpush1.bf16.msra.mxu0 0
    %4540 = vmatprep.subr.bf16.mxu0 0
    %4541 = vmatpush1.bf16.msra.mxu0 0
    %4542 = vmatprep.subr.bf16.mxu0 0
    %4543 = vmatpush1.bf16.msra.mxu0 0
    %4544 = vmatprep.subr.bf16.mxu0 0
    %4545 = vmatpush1.bf16.msra.mxu0 0
    %4546 = vmatprep.subr.bf16.mxu0 0
    %4547 = vmatpush1.bf16.msra.mxu0 0
    %4548 = vmatprep.subr.bf16.mxu0 0
    %4549 = vmatpush1.bf16.msra.mxu0 0
    %4550 = vmatprep.subr.bf16.mxu0 0
    %4551 = vmatpush1.bf16.msra.mxu0 0
    %4552 = vmatprep.mubr.bf16.mxu0 0
    %4553 = vmatmul.mubr.bf16.gmra.mrb[0].mxu0 %v4265
    %v4554 = vpop.f32.mrb[0].mxu0
    %v4555 = vadd.f32 %v4467, %v4554
    %v4556 = vpop.f32.mrb[0].mxu0
    %v4557 = vpop.f32.mrb[0].mxu0
    %v4558 = vpop.f32.mrb[0].mxu0
    %4559 = vdwg.mxu0
    %v4560 = vld [vmem:[#allocation3] sm:$0x66]
    %v4561 = vld [vmem:[#allocation8 + $0xc0] sm:$0xf]
    %v4562 = vld [vmem:[#allocation8 + $0xc4] sm:$0xf]
    %v4563 = vld [vmem:[#allocation8 + $0xc8] sm:$0xf]
    %v4564 = vld [vmem:[#allocation8 + $0xcc] sm:$0xf]
    %v4565 = vld [vmem:[#allocation8 + $0xd0] sm:$0xf]
    %v4566 = vld [vmem:[#allocation8 + $0xd4] sm:$0xf]
    %v4567 = vld [vmem:[#allocation8 + $0xd8] sm:$0xf]
    %v4568 = vld [vmem:[#allocation8 + $0xdc] sm:$0xf]
    %v4569 = vld [vmem:[#allocation8 + $0xe0] sm:$0xf]
    %v4570 = vld [vmem:[#allocation8 + $0xe4] sm:$0xf]
    %v4571 = vld [vmem:[#allocation8 + $0xe8] sm:$0xf]
    %v4572 = vld [vmem:[#allocation8 + $0xec] sm:$0xf]
    %v4573 = vld [vmem:[#allocation8 + $0xf0] sm:$0xf]
    %v4574 = vld [vmem:[#allocation8 + $0xf4] sm:$0xf]
    %v4575 = vld [vmem:[#allocation8 + $0xf8] sm:$0xf]
    %v4576 = vld [vmem:[#allocation8 + $0xfc] sm:$0xf]
    %v4577 = vld [vmem:[#allocation8 + $0x100] sm:$0xf]
    %v4578 = vld [vmem:[#allocation8 + $0x104] sm:$0xf]
    %v4579 = vld [vmem:[#allocation8 + $0x108] sm:$0xf]
    %v4580 = vld [vmem:[#allocation8 + $0x10c] sm:$0xf]
    %v4581 = vld [vmem:[#allocation8 + $0x110] sm:$0xf]
    %v4582 = vld [vmem:[#allocation8 + $0x114] sm:$0xf]
    %v4583 = vld [vmem:[#allocation8 + $0x118] sm:$0xf]
    %v4584 = vld [vmem:[#allocation8 + $0x11c] sm:$0xf]
    %v4585 = vld [vmem:[#allocation8 + $0x120] sm:$0xf]
    %v4586 = vld [vmem:[#allocation8 + $0x124] sm:$0xf]
    %v4587 = vld [vmem:[#allocation8 + $0x128] sm:$0xf]
    %v4588 = vld [vmem:[#allocation8 + $0x12c] sm:$0xf]
    %v4589 = vld [vmem:[#allocation8 + $0x130] sm:$0xf]
    %v4590 = vld [vmem:[#allocation8 + $0x134] sm:$0xf]
    %v4591 = vld [vmem:[#allocation8 + $0x138] sm:$0xf]
    %v4592 = vld [vmem:[#allocation8 + $0x13c] sm:$0xf]
    %v4594 = vunpack.c.l.b16 %v4560
    %v4595 = vunpack.c.h.b16 %v4560
    %v4596 = vpack.c.b16 %v4594, %v4594
    %v4597 = vpack.c.b16 %v4595, %v4595
    %v4598 = vrot.slane %v4596, 1
    %v4599 = vrot.slane %v4597, 1
    %v4634 = vunpack.c.l.b16 %v4561
    %v4635 = vunpack.c.l.b16 %v4562
    %v4636 = vunpack.c.l.b16 %v4563
    %v4637 = vunpack.c.l.b16 %v4564
    %v4638 = vunpack.c.l.b16 %v4565
    %v4639 = vunpack.c.l.b16 %v4566
    %v4640 = vunpack.c.l.b16 %v4567
    %v4641 = vunpack.c.l.b16 %v4568
    %v4642 = vunpack.c.l.b16 %v4569
    %v4643 = vunpack.c.l.b16 %v4570
    %v4644 = vunpack.c.l.b16 %v4571
    %v4645 = vunpack.c.l.b16 %v4572
    %v4646 = vunpack.c.l.b16 %v4573
    %v4647 = vunpack.c.l.b16 %v4574
    %v4648 = vunpack.c.l.b16 %v4575
    %v4649 = vunpack.c.l.b16 %v4576
    %v4650 = vunpack.c.l.b16 %v4577
    %v4651 = vunpack.c.l.b16 %v4578
    %v4652 = vunpack.c.l.b16 %v4579
    %v4653 = vunpack.c.l.b16 %v4580
    %v4654 = vunpack.c.l.b16 %v4581
    %v4655 = vunpack.c.l.b16 %v4582
    %v4656 = vunpack.c.l.b16 %v4583
    %v4657 = vunpack.c.l.b16 %v4584
    %v4658 = vunpack.c.l.b16 %v4585
    %v4659 = vunpack.c.l.b16 %v4586
    %v4660 = vunpack.c.l.b16 %v4587
    %v4661 = vunpack.c.l.b16 %v4588
    %v4662 = vunpack.c.l.b16 %v4589
    %v4663 = vunpack.c.l.b16 %v4590
    %v4664 = vunpack.c.l.b16 %v4591
    %v4665 = vunpack.c.l.b16 %v4592
    %v4666 = vpack.c.b16 %v4635, %v4634
    %v4667 = vpack.c.b16 %v4637, %v4636
    %v4668 = vpack.c.b16 %v4639, %v4638
    %v4669 = vpack.c.b16 %v4641, %v4640
    %v4670 = vpack.c.b16 %v4643, %v4642
    %v4671 = vpack.c.b16 %v4645, %v4644
    %v4672 = vpack.c.b16 %v4647, %v4646
    %v4673 = vpack.c.b16 %v4649, %v4648
    %v4674 = vpack.c.b16 %v4651, %v4650
    %v4675 = vpack.c.b16 %v4653, %v4652
    %v4676 = vpack.c.b16 %v4655, %v4654
    %v4677 = vpack.c.b16 %v4657, %v4656
    %v4678 = vpack.c.b16 %v4659, %v4658
    %v4679 = vpack.c.b16 %v4661, %v4660
    %v4680 = vpack.c.b16 %v4663, %v4662
    %v4681 = vpack.c.b16 %v4665, %v4664
    %4698 = vmatprep.subr.bf16.mxu0 0
    %4699 = vmatpush1.bf16.msra.mxu0 %v4666
    %4700 = vmatprep.subr.bf16.mxu0 0
    %4701 = vmatpush1.bf16.msra.mxu0 %v4667
    %4702 = vmatprep.subr.bf16.mxu0 0
    %4703 = vmatpush1.bf16.msra.mxu0 %v4668
    %4704 = vmatprep.subr.bf16.mxu0 0
    %4705 = vmatpush1.bf16.msra.mxu0 %v4669
    %4706 = vmatprep.subr.bf16.mxu0 0
    %4707 = vmatpush1.bf16.msra.mxu0 %v4670
    %4708 = vmatprep.subr.bf16.mxu0 0
    %4709 = vmatpush1.bf16.msra.mxu0 %v4671
    %4710 = vmatprep.subr.bf16.mxu0 0
    %4711 = vmatpush1.bf16.msra.mxu0 %v4672
    %4712 = vmatprep.subr.bf16.mxu0 0
    %4713 = vmatpush1.bf16.msra.mxu0 %v4673
    %4714 = vmatprep.subr.bf16.mxu0 0
    %4715 = vmatpush1.bf16.msra.mxu0 %v4674
    %4716 = vmatprep.subr.bf16.mxu0 0
    %4717 = vmatpush1.bf16.msra.mxu0 %v4675
    %4718 = vmatprep.subr.bf16.mxu0 0
    %4719 = vmatpush1.bf16.msra.mxu0 %v4676
    %4720 = vmatprep.subr.bf16.mxu0 0
    %4721 = vmatpush1.bf16.msra.mxu0 %v4677
    %4722 = vmatprep.subr.bf16.mxu0 0
    %4723 = vmatpush1.bf16.msra.mxu0 %v4678
    %4724 = vmatprep.subr.bf16.mxu0 0
    %4725 = vmatpush1.bf16.msra.mxu0 %v4679
    %4726 = vmatprep.subr.bf16.mxu0 0
    %4727 = vmatpush1.bf16.msra.mxu0 %v4680
    %4728 = vmatprep.subr.bf16.mxu0 0
    %4729 = vmatpush1.bf16.msra.mxu0 %v4681
    %4730 = vmatprep.mubr.bf16.mxu0 %v4599
    %4731 = vmatmul.mubr.bf16.gmra.mrb[0].mxu0 %v4598
    %v4732 = vpop.f32.mrb[0].mxu0
    %v4733 = vadd.f32 0.0, %v4732
    %v4734 = vpop.f32.mrb[0].mxu0
    %v4735 = vpop.f32.mrb[0].mxu0
    %v4736 = vpop.f32.mrb[0].mxu0
    %4737 = vdwg.mxu0
    %v4738 = vadd.f32 %v4555, %v4733
    %v4739 = vld [vmem:[#allocation3] sm:$0xee]
    %v4740 = vld [vmem:[#allocation8 + $0x140] sm:$0xf]
    %v4741 = vld [vmem:[#allocation8 + $0x144] sm:$0xf]
    %v4742 = vld [vmem:[#allocation8 + $0x148] sm:$0xf]
    %v4743 = vld [vmem:[#allocation8 + $0x14c] sm:$0xf]
    %v4744 = vld [vmem:[#allocation8 + $0x150] sm:$0xf]
    %v4745 = vld [vmem:[#allocation8 + $0x154] sm:$0xf]
    %v4746 = vld [vmem:[#allocation8 + $0x158] sm:$0xf]
    %v4747 = vld [vmem:[#allocation8 + $0x15c] sm:$0xf]
    %v4748 = vld [vmem:[#allocation8 + $0x160] sm:$0xf]
    %v4749 = vld [vmem:[#allocation8 + $0x164] sm:$0xf]
    %v4750 = vld [vmem:[#allocation8 + $0x168] sm:$0xf]
    %v4751 = vld [vmem:[#allocation8 + $0x16c] sm:$0xf]
    %v4752 = vld [vmem:[#allocation8 + $0x170] sm:$0xf]
    %v4753 = vld [vmem:[#allocation8 + $0x174] sm:$0xf]
    %v4754 = vld [vmem:[#allocation8 + $0x178] sm:$0xf]
    %v4755 = vld [vmem:[#allocation8 + $0x17c] sm:$0xf]
    %v4756 = vld [vmem:[#allocation8 + $0x180] sm:$0xf]
    %v4757 = vld [vmem:[#allocation8 + $0x184] sm:$0xf]
    %v4758 = vld [vmem:[#allocation8 + $0x188] sm:$0xf]
    %v4759 = vld [vmem:[#allocation8 + $0x18c] sm:$0xf]
    %v4760 = vld [vmem:[#allocation8 + $0x190] sm:$0xf]
    %v4761 = vld [vmem:[#allocation8 + $0x194] sm:$0xf]
    %v4762 = vld [vmem:[#allocation8 + $0x198] sm:$0xf]
    %v4763 = vld [vmem:[#allocation8 + $0x19c] sm:$0xf]
    %v4764 = vld [vmem:[#allocation8 + $0x1a0] sm:$0xf]
    %v4765 = vld [vmem:[#allocation8 + $0x1a4] sm:$0xf]
    %v4766 = vld [vmem:[#allocation8 + $0x1a8] sm:$0xf]
    %v4767 = vld [vmem:[#allocation8 + $0x1ac] sm:$0xf]
    %v4768 = vld [vmem:[#allocation8 + $0x1b0] sm:$0xf]
    %v4769 = vld [vmem:[#allocation8 + $0x1b4] sm:$0xf]
    %v4770 = vld [vmem:[#allocation8 + $0x1b8] sm:$0xf]
    %v4771 = vld [vmem:[#allocation8 + $0x1bc] sm:$0xf]
    %v4773 = vunpack.c.l.b16 %v4739
    %v4774 = vunpack.c.h.b16 %v4739
    %v4775 = vpack.c.b16 %v4773, %v4773
    %v4776 = vpack.c.b16 %v4774, %v4774
    %v4778 = vshrl.u32 %v4775, 16
    %v4780 = vrot.slane %v4778, 1
    %v4781 = vshll.u32 %v4775, 16
    %v4783 = vrot.slane %v4781, 2
    %v4784 = vor.u32 %v4780, %v4783
    %v4786 = vshrl.u32 %v4776, 16
    %v4788 = vrot.slane %v4786, 1
    %v4789 = vshll.u32 %v4776, 16
    %v4791 = vrot.slane %v4789, 2
    %v4792 = vor.u32 %v4788, %v4791
    %v4827 = vunpack.c.l.b16 %v4740
    %v4828 = vunpack.c.l.b16 %v4741
    %v4829 = vunpack.c.l.b16 %v4742
    %v4830 = vunpack.c.l.b16 %v4743
    %v4831 = vunpack.c.l.b16 %v4744
    %v4832 = vunpack.c.l.b16 %v4745
    %v4833 = vunpack.c.l.b16 %v4746
    %v4834 = vunpack.c.l.b16 %v4747
    %v4835 = vunpack.c.l.b16 %v4748
    %v4836 = vunpack.c.l.b16 %v4749
    %v4837 = vunpack.c.l.b16 %v4750
    %v4838 = vunpack.c.l.b16 %v4751
    %v4839 = vunpack.c.l.b16 %v4752
    %v4840 = vunpack.c.l.b16 %v4753
    %v4841 = vunpack.c.l.b16 %v4754
    %v4842 = vunpack.c.l.b16 %v4755
    %v4843 = vunpack.c.l.b16 %v4756
    %v4844 = vunpack.c.l.b16 %v4757
    %v4845 = vunpack.c.l.b16 %v4758
    %v4846 = vunpack.c.l.b16 %v4759
    %v4847 = vunpack.c.l.b16 %v4760
    %v4848 = vunpack.c.l.b16 %v4761
    %v4849 = vunpack.c.l.b16 %v4762
    %v4850 = vunpack.c.l.b16 %v4763
    %v4851 = vunpack.c.l.b16 %v4764
    %v4852 = vunpack.c.l.b16 %v4765
    %v4853 = vunpack.c.l.b16 %v4766
    %v4854 = vunpack.c.l.b16 %v4767
    %v4855 = vunpack.c.l.b16 %v4768
    %v4856 = vunpack.c.l.b16 %v4769
    %v4857 = vunpack.c.l.b16 %v4770
    %v4858 = vunpack.c.l.b16 %v4771
    %v4859 = vpack.c.b16 %v4828, %v4827
    %v4860 = vpack.c.b16 %v4830, %v4829
    %v4861 = vpack.c.b16 %v4832, %v4831
    %v4862 = vpack.c.b16 %v4834, %v4833
    %v4863 = vpack.c.b16 %v4836, %v4835
    %v4864 = vpack.c.b16 %v4838, %v4837
    %v4865 = vpack.c.b16 %v4840, %v4839
    %v4866 = vpack.c.b16 %v4842, %v4841
    %v4867 = vpack.c.b16 %v4844, %v4843
    %v4868 = vpack.c.b16 %v4846, %v4845
    %v4869 = vpack.c.b16 %v4848, %v4847
    %v4870 = vpack.c.b16 %v4850, %v4849
    %v4871 = vpack.c.b16 %v4852, %v4851
    %v4872 = vpack.c.b16 %v4854, %v4853
    %v4873 = vpack.c.b16 %v4856, %v4855
    %v4874 = vpack.c.b16 %v4858, %v4857
    %4891 = vmatprep.subr.bf16.mxu0 0
    %4892 = vmatpush1.bf16.msra.mxu0 %v4859
    %4893 = vmatprep.subr.bf16.mxu0 0
    %4894 = vmatpush1.bf16.msra.mxu0 %v4860
    %4895 = vmatprep.subr.bf16.mxu0 0
    %4896 = vmatpush1.bf16.msra.mxu0 %v4861
    %4897 = vmatprep.subr.bf16.mxu0 0
    %4898 = vmatpush1.bf16.msra.mxu0 %v4862
    %4899 = vmatprep.subr.bf16.mxu0 0
    %4900 = vmatpush1.bf16.msra.mxu0 %v4863
    %4901 = vmatprep.subr.bf16.mxu0 0
    %4902 = vmatpush1.bf16.msra.mxu0 %v4864
    %4903 = vmatprep.subr.bf16.mxu0 0
    %4904 = vmatpush1.bf16.msra.mxu0 %v4865
    %4905 = vmatprep.subr.bf16.mxu0 0
    %4906 = vmatpush1.bf16.msra.mxu0 %v4866
    %4907 = vmatprep.subr.bf16.mxu0 0
    %4908 = vmatpush1.bf16.msra.mxu0 %v4867
    %4909 = vmatprep.subr.bf16.mxu0 0
    %4910 = vmatpush1.bf16.msra.mxu0 %v4868
    %4911 = vmatprep.subr.bf16.mxu0 0
    %4912 = vmatpush1.bf16.msra.mxu0 %v4869
    %4913 = vmatprep.subr.bf16.mxu0 0
    %4914 = vmatpush1.bf16.msra.mxu0 %v4870
    %4915 = vmatprep.subr.bf16.mxu0 0
    %4916 = vmatpush1.bf16.msra.mxu0 %v4871
    %4917 = vmatprep.subr.bf16.mxu0 0
    %4918 = vmatpush1.bf16.msra.mxu0 %v4872
    %4919 = vmatprep.subr.bf16.mxu0 0
    %4920 = vmatpush1.bf16.msra.mxu0 %v4873
    %4921 = vmatprep.subr.bf16.mxu0 0
    %4922 = vmatpush1.bf16.msra.mxu0 %v4874
    %4923 = vmatprep.mubr.bf16.mxu0 %v4792
    %4924 = vmatmul.mubr.bf16.gmra.mrb[0].mxu0 %v4784
    %v4925 = vpop.f32.mrb[0].mxu0
    %v4926 = vadd.f32 0.0, %v4925
    %v4927 = vpop.f32.mrb[0].mxu0
    %v4928 = vpop.f32.mrb[0].mxu0
    %v4929 = vpop.f32.mrb[0].mxu0
    %4930 = vdwg.mxu0
    %v4931 = vadd.f32 %v4738, %v4926
    %v4932 = vld [vmem:[%s6] sm:$0x1]
    %v4934 = vlaneseq
    %v4935 = vshrl.u32 %v4934, 7
    %v4936 = vsub.s32 0, %v4935
    %v4937 = vrot.slane %v4932, %v4936
    %v4939 = vadd.f32 %v4931, %v4937
    %v4940 = vmax.f32 %v4939, 0.0
    %v4941 = vpack.c.bf16 %v4940, %v4940
    %4942 = vst [vmem:[%s7] sm:$0x3] %v4941
    %4943 = vst [vmem:[%s7] sm:$0xc] 0
    %4944 = vst [vmem:[%s7 + $0x4] sm:$0xf] 0
    %s4945 = scalar_lea.vmem %s0, 32
    %v4946 = vld [vmem:[%s4945 + $0x14] sm:$0x33]
    %v4947 = vld [vmem:[%s4945 + $0x1c] sm:$0x3]
    %v4948 = vld [vmem:[#allocation4] sm:$0xf]
    %v4949 = vld [vmem:[#allocation4 + $0x4] sm:$0xf]
    %v4950 = vld [vmem:[#allocation4 + $0x8] sm:$0xf]
    %v4951 = vld [vmem:[#allocation4 + $0xc] sm:$0xf]
    %v4952 = vld [vmem:[#allocation4 + $0x10] sm:$0xf]
    %v4953 = vld [vmem:[#allocation4 + $0x14] sm:$0xf]
    %v4954 = vld [vmem:[#allocation4 + $0x18] sm:$0xf]
    %v4955 = vld [vmem:[#allocation4 + $0x1c] sm:$0xf]
    %v4956 = vld [vmem:[#allocation4 + $0x20] sm:$0xf]
    %v4957 = vld [vmem:[#allocation4 + $0x24] sm:$0xf]
    %v4958 = vld [vmem:[#allocation4 + $0x28] sm:$0xf]
    %v4959 = vld [vmem:[#allocation4 + $0x2c] sm:$0xf]
    %v4960 = vld [vmem:[#allocation4 + $0x30] sm:$0xf]
    %v4961 = vld [vmem:[#allocation4 + $0x34] sm:$0xf]
    %v4962 = vld [vmem:[#allocation4 + $0x38] sm:$0xf]
    %v4963 = vld [vmem:[#allocation4 + $0x3c] sm:$0xf]
    %v4964 = vld [vmem:[#allocation4 + $0x40] sm:$0xf]
    %v4965 = vld [vmem:[#allocation4 + $0x44] sm:$0xf]
    %v4966 = vld [vmem:[#allocation4 + $0x48] sm:$0xf]
    %v4967 = vld [vmem:[#allocation4 + $0x4c] sm:$0xf]
    %v4968 = vld [vmem:[#allocation4 + $0x50] sm:$0xf]
    %v4969 = vld [vmem:[#allocation4 + $0x54] sm:$0xf]
    %v4970 = vld [vmem:[#allocation4 + $0x58] sm:$0xf]
    %v4971 = vld [vmem:[#allocation4 + $0x5c] sm:$0xf]
    %v4972 = vld [vmem:[#allocation4 + $0x60] sm:$0xf]
    %v4973 = vld [vmem:[#allocation4 + $0x64] sm:$0xf]
    %v4974 = vld [vmem:[#allocation4 + $0x68] sm:$0xf]
    %v4975 = vld [vmem:[#allocation4 + $0x6c] sm:$0xf]
    %v4976 = vld [vmem:[#allocation4 + $0x70] sm:$0xf]
    %v4977 = vld [vmem:[#allocation4 + $0x74] sm:$0xf]
    %v4978 = vld [vmem:[#allocation4 + $0x78] sm:$0xf]
    %v4979 = vld [vmem:[#allocation4 + $0x7c] sm:$0xf]
    %v4980 = vld [vmem:[#allocation4 + $0x80] sm:$0xf]
    %v4981 = vld [vmem:[#allocation4 + $0x84] sm:$0xf]
    %v4982 = vld [vmem:[#allocation4 + $0x88] sm:$0xf]
    %v4983 = vld [vmem:[#allocation4 + $0x8c] sm:$0xf]
    %v4984 = vld [vmem:[#allocation4 + $0x90] sm:$0xf]
    %v4985 = vld [vmem:[#allocation4 + $0x94] sm:$0xf]
    %v4986 = vld [vmem:[#allocation4 + $0x98] sm:$0xf]
    %v4987 = vld [vmem:[#allocation4 + $0x9c] sm:$0xf]
    %v4988 = vld [vmem:[#allocation4 + $0xa0] sm:$0xf]
    %v4989 = vld [vmem:[#allocation4 + $0xa4] sm:$0xf]
    %v4990 = vld [vmem:[#allocation4 + $0xa8] sm:$0xf]
    %v4991 = vld [vmem:[#allocation4 + $0xac] sm:$0xf]
    %v4992 = vld [vmem:[#allocation4 + $0xb0] sm:$0xf]
    %v4993 = vld [vmem:[#allocation4 + $0xb4] sm:$0xf]
    %v4994 = vld [vmem:[#allocation4 + $0xb8] sm:$0xf]
    %v4995 = vld [vmem:[#allocation4 + $0xbc] sm:$0xf]
    %v4996 = vld [vmem:[%s4945] sm:$0x77]
    %v4997 = vld [vmem:[%s4945 + $0x8] sm:$0x77]
    %v4998 = vld [vmem:[#allocation4 + $0xc0] sm:$0xf]
    %v4999 = vld [vmem:[#allocation4 + $0xc4] sm:$0xf]
    %v5000 = vld [vmem:[#allocation4 + $0xc8] sm:$0xf]
    %v5001 = vld [vmem:[#allocation4 + $0xcc] sm:$0xf]
    %v5002 = vld [vmem:[#allocation4 + $0xd0] sm:$0xf]
    %v5003 = vld [vmem:[#allocation4 + $0xd4] sm:$0xf]
    %v5004 = vld [vmem:[#allocation4 + $0xd8] sm:$0xf]
    %v5005 = vld [vmem:[#allocation4 + $0xdc] sm:$0xf]
    %v5006 = vld [vmem:[#allocation4 + $0xe0] sm:$0xf]
    %v5007 = vld [vmem:[#allocation4 + $0xe4] sm:$0xf]
    %v5008 = vld [vmem:[#allocation4 + $0xe8] sm:$0xf]
    %v5009 = vld [vmem:[#allocation4 + $0xec] sm:$0xf]
    %v5010 = vld [vmem:[#allocation4 + $0xf0] sm:$0xf]
    %v5011 = vld [vmem:[#allocation4 + $0xf4] sm:$0xf]
    %v5012 = vld [vmem:[#allocation4 + $0xf8] sm:$0xf]
    %v5013 = vld [vmem:[#allocation4 + $0xfc] sm:$0xf]
    %v5014 = vld [vmem:[#allocation4 + $0x100] sm:$0xf]
    %v5015 = vld [vmem:[#allocation4 + $0x104] sm:$0xf]
    %v5016 = vld [vmem:[#allocation4 + $0x108] sm:$0xf]
    %v5017 = vld [vmem:[#allocation4 + $0x10c] sm:$0xf]
    %v5018 = vld [vmem:[#allocation4 + $0x110] sm:$0xf]
    %v5019 = vld [vmem:[#allocation4 + $0x114] sm:$0xf]
    %v5020 = vld [vmem:[#allocation4 + $0x118] sm:$0xf]
    %v5021 = vld [vmem:[#allocation4 + $0x11c] sm:$0xf]
    %v5022 = vld [vmem:[#allocation4 + $0x120] sm:$0xf]
    %v5023 = vld [vmem:[#allocation4 + $0x124] sm:$0xf]
    %v5024 = vld [vmem:[#allocation4 + $0x128] sm:$0xf]
    %v5025 = vld [vmem:[#allocation4 + $0x12c] sm:$0xf]
    %v5026 = vld [vmem:[#allocation4 + $0x130] sm:$0xf]
    %v5027 = vld [vmem:[#allocation4 + $0x134] sm:$0xf]
    %v5028 = vld [vmem:[#allocation4 + $0x138] sm:$0xf]
    %v5029 = vld [vmem:[#allocation4 + $0x13c] sm:$0xf]
    %v5030 = vld [vmem:[#allocation4 + $0x140] sm:$0xf]
    %v5031 = vld [vmem:[#allocation4 + $0x144] sm:$0xf]
    %v5032 = vld [vmem:[#allocation4 + $0x148] sm:$0xf]
    %v5033 = vld [vmem:[#allocation4 + $0x14c] sm:$0xf]
    %v5034 = vld [vmem:[#allocation4 + $0x150] sm:$0xf]
    %v5035 = vld [vmem:[#allocation4 + $0x154] sm:$0xf]
    %v5036 = vld [vmem:[#allocation4 + $0x158] sm:$0xf]
    %v5037 = vld [vmem:[#allocation4 + $0x15c] sm:$0xf]
    %v5038 = vld [vmem:[#allocation4 + $0x160] sm:$0xf]
    %v5039 = vld [vmem:[#allocation4 + $0x164] sm:$0xf]
    %v5040 = vld [vmem:[#allocation4 + $0x168] sm:$0xf]
    %v5041 = vld [vmem:[#allocation4 + $0x16c] sm:$0xf]
    %v5042 = vld [vmem:[#allocation4 + $0x170] sm:$0xf]
    %v5043 = vld [vmem:[#allocation4 + $0x174] sm:$0xf]
    %v5044 = vld [vmem:[#allocation4 + $0x178] sm:$0xf]
    %v5045 = vld [vmem:[#allocation4 + $0x17c] sm:$0xf]
    %v5046 = vld [vmem:[#allocation4 + $0x180] sm:$0xf]
    %v5047 = vld [vmem:[#allocation4 + $0x184] sm:$0xf]
    %v5048 = vld [vmem:[#allocation4 + $0x188] sm:$0xf]
    %v5049 = vld [vmem:[#allocation4 + $0x18c] sm:$0xf]
    %v5050 = vld [vmem:[#allocation4 + $0x190] sm:$0xf]
    %v5051 = vld [vmem:[#allocation4 + $0x194] sm:$0xf]
    %v5052 = vld [vmem:[#allocation4 + $0x198] sm:$0xf]
    %v5053 = vld [vmem:[#allocation4 + $0x19c] sm:$0xf]
    %v5054 = vld [vmem:[#allocation4 + $0x1a0] sm:$0xf]
    %v5055 = vld [vmem:[#allocation4 + $0x1a4] sm:$0xf]
    %v5056 = vld [vmem:[#allocation4 + $0x1a8] sm:$0xf]
    %v5057 = vld [vmem:[#allocation4 + $0x1ac] sm:$0xf]
    %v5058 = vld [vmem:[#allocation4 + $0x1b0] sm:$0xf]
    %v5059 = vld [vmem:[#allocation4 + $0x1b4] sm:$0xf]
    %v5060 = vld [vmem:[#allocation4 + $0x1b8] sm:$0xf]
    %v5061 = vld [vmem:[#allocation4 + $0x1bc] sm:$0xf]
    %v5064 = vunpack.c.l.b16 %v4996
    %v5065 = vunpack.c.h.b16 %v4996
    %v5066 = vunpack.c.l.b16 %v4997
    %v5067 = vunpack.c.h.b16 %v4997
    %v5068 = vpack.c.b16 %v5064, %v5064
    %v5069 = vpack.c.b16 %v5065, %v5065
    %v5070 = vpack.c.b16 %v5066, %v5066
    %v5071 = vpack.c.b16 %v5067, %v5067
    %v5073 = vshrl.u32 %v5068, 16
    %v5075 = vshll.u32 %v5068, 16
    %v5077 = vrot.slane %v5075, 1
    %v5078 = vor.u32 %v5073, %v5077
    %v5080 = vshrl.u32 %v5069, 16
    %v5082 = vshll.u32 %v5069, 16
    %v5084 = vrot.slane %v5082, 1
    %v5085 = vor.u32 %v5080, %v5084
    %v5087 = vshrl.u32 %v5070, 16
    %v5089 = vshll.u32 %v5070, 16
    %v5091 = vrot.slane %v5089, 1
    %v5092 = vor.u32 %v5087, %v5091
    %v5094 = vshrl.u32 %v5071, 16
    %v5096 = vshll.u32 %v5071, 16
    %v5098 = vrot.slane %v5096, 1
    %v5099 = vor.u32 %v5094, %v5098
    %v5168 = vunpack.c.l.b16 %v4998
    %v5169 = vunpack.c.l.b16 %v4999
    %v5170 = vunpack.c.l.b16 %v5000
    %v5171 = vunpack.c.l.b16 %v5001
    %v5172 = vunpack.c.l.b16 %v5002
    %v5173 = vunpack.c.l.b16 %v5003
    %v5174 = vunpack.c.l.b16 %v5004
    %v5175 = vunpack.c.l.b16 %v5005
    %v5176 = vunpack.c.l.b16 %v5006
    %v5177 = vunpack.c.l.b16 %v5007
    %v5178 = vunpack.c.l.b16 %v5008
    %v5179 = vunpack.c.l.b16 %v5009
    %v5180 = vunpack.c.l.b16 %v5010
    %v5181 = vunpack.c.l.b16 %v5011
    %v5182 = vunpack.c.l.b16 %v5012
    %v5183 = vunpack.c.l.b16 %v5013
    %v5184 = vunpack.c.l.b16 %v5014
    %v5185 = vunpack.c.l.b16 %v5015
    %v5186 = vunpack.c.l.b16 %v5016
    %v5187 = vunpack.c.l.b16 %v5017
    %v5188 = vunpack.c.l.b16 %v5018
    %v5189 = vunpack.c.l.b16 %v5019
    %v5190 = vunpack.c.l.b16 %v5020
    %v5191 = vunpack.c.l.b16 %v5021
    %v5192 = vunpack.c.l.b16 %v5022
    %v5193 = vunpack.c.l.b16 %v5023
    %v5194 = vunpack.c.l.b16 %v5024
    %v5195 = vunpack.c.l.b16 %v5025
    %v5196 = vunpack.c.l.b16 %v5026
    %v5197 = vunpack.c.l.b16 %v5027
    %v5198 = vunpack.c.l.b16 %v5028
    %v5199 = vunpack.c.l.b16 %v5029
    %v5200 = vunpack.c.l.b16 %v5030
    %v5201 = vunpack.c.l.b16 %v5031
    %v5202 = vunpack.c.l.b16 %v5032
    %v5203 = vunpack.c.l.b16 %v5033
    %v5204 = vunpack.c.l.b16 %v5034
    %v5205 = vunpack.c.l.b16 %v5035
    %v5206 = vunpack.c.l.b16 %v5036
    %v5207 = vunpack.c.l.b16 %v5037
    %v5208 = vunpack.c.l.b16 %v5038
    %v5209 = vunpack.c.l.b16 %v5039
    %v5210 = vunpack.c.l.b16 %v5040
    %v5211 = vunpack.c.l.b16 %v5041
    %v5212 = vunpack.c.l.b16 %v5042
    %v5213 = vunpack.c.l.b16 %v5043
    %v5214 = vunpack.c.l.b16 %v5044
    %v5215 = vunpack.c.l.b16 %v5045
    %v5216 = vunpack.c.l.b16 %v5046
    %v5217 = vunpack.c.l.b16 %v5047
    %v5218 = vunpack.c.l.b16 %v5048
    %v5219 = vunpack.c.l.b16 %v5049
    %v5220 = vunpack.c.l.b16 %v5050
    %v5221 = vunpack.c.l.b16 %v5051
    %v5222 = vunpack.c.l.b16 %v5052
    %v5223 = vunpack.c.l.b16 %v5053
    %v5224 = vunpack.c.l.b16 %v5054
    %v5225 = vunpack.c.l.b16 %v5055
    %v5226 = vunpack.c.l.b16 %v5056
    %v5227 = vunpack.c.l.b16 %v5057
    %v5228 = vunpack.c.l.b16 %v5058
    %v5229 = vunpack.c.l.b16 %v5059
    %v5230 = vunpack.c.l.b16 %v5060
    %v5231 = vunpack.c.l.b16 %v5061
    %v5232 = vpack.c.b16 %v5169, %v5168
    %v5233 = vpack.c.b16 %v5171, %v5170
    %v5234 = vpack.c.b16 %v5173, %v5172
    %v5235 = vpack.c.b16 %v5175, %v5174
    %v5236 = vpack.c.b16 %v5177, %v5176
    %v5237 = vpack.c.b16 %v5179, %v5178
    %v5238 = vpack.c.b16 %v5181, %v5180
    %v5239 = vpack.c.b16 %v5183, %v5182
    %v5240 = vpack.c.b16 %v5185, %v5184
    %v5241 = vpack.c.b16 %v5187, %v5186
    %v5242 = vpack.c.b16 %v5189, %v5188
    %v5243 = vpack.c.b16 %v5191, %v5190
    %v5244 = vpack.c.b16 %v5193, %v5192
    %v5245 = vpack.c.b16 %v5195, %v5194
    %v5246 = vpack.c.b16 %v5197, %v5196
    %v5247 = vpack.c.b16 %v5199, %v5198
    %v5248 = vpack.c.b16 %v5201, %v5200
    %v5249 = vpack.c.b16 %v5203, %v5202
    %v5250 = vpack.c.b16 %v5205, %v5204
    %v5251 = vpack.c.b16 %v5207, %v5206
    %v5252 = vpack.c.b16 %v5209, %v5208
    %v5253 = vpack.c.b16 %v5211, %v5210
    %v5254 = vpack.c.b16 %v5213, %v5212
    %v5255 = vpack.c.b16 %v5215, %v5214
    %v5256 = vpack.c.b16 %v5217, %v5216
    %v5257 = vpack.c.b16 %v5219, %v5218
    %v5258 = vpack.c.b16 %v5221, %v5220
    %v5259 = vpack.c.b16 %v5223, %v5222
    %v5260 = vpack.c.b16 %v5225, %v5224
    %v5261 = vpack.c.b16 %v5227, %v5226
    %v5262 = vpack.c.b16 %v5229, %v5228
    %v5263 = vpack.c.b16 %v5231, %v5230
    %5296 = vmatprep.subr.bf16.mxu0 0
    %5297 = vmatpush1.bf16.msra.mxu0 %v5232
    %5298 = vmatprep.subr.bf16.mxu0 0
    %5299 = vmatpush1.bf16.msra.mxu0 %v5233
    %5300 = vmatprep.subr.bf16.mxu0 0
    %5301 = vmatpush1.bf16.msra.mxu0 %v5234
    %5302 = vmatprep.subr.bf16.mxu0 0
    %5303 = vmatpush1.bf16.msra.mxu0 %v5235
    %5304 = vmatprep.subr.bf16.mxu0 0
    %5305 = vmatpush1.bf16.msra.mxu0 %v5236
    %5306 = vmatprep.subr.bf16.mxu0 0
    %5307 = vmatpush1.bf16.msra.mxu0 %v5237
    %5308 = vmatprep.subr.bf16.mxu0 0
    %5309 = vmatpush1.bf16.msra.mxu0 %v5238
    %5310 = vmatprep.subr.bf16.mxu0 0
    %5311 = vmatpush1.bf16.msra.mxu0 %v5239
    %5312 = vmatprep.subr.bf16.mxu0 0
    %5313 = vmatpush1.bf16.msra.mxu0 %v5240
    %5314 = vmatprep.subr.bf16.mxu0 0
    %5315 = vmatpush1.bf16.msra.mxu0 %v5241
    %5316 = vmatprep.subr.bf16.mxu0 0
    %5317 = vmatpush1.bf16.msra.mxu0 %v5242
    %5318 = vmatprep.subr.bf16.mxu0 0
    %5319 = vmatpush1.bf16.msra.mxu0 %v5243
    %5320 = vmatprep.subr.bf16.mxu0 0
    %5321 = vmatpush1.bf16.msra.mxu0 %v5244
    %5322 = vmatprep.subr.bf16.mxu0 0
    %5323 = vmatpush1.bf16.msra.mxu0 %v5245
    %5324 = vmatprep.subr.bf16.mxu0 0
    %5325 = vmatpush1.bf16.msra.mxu0 %v5246
    %5326 = vmatprep.subr.bf16.mxu0 0
    %5327 = vmatpush1.bf16.msra.mxu0 %v5247
    %5328 = vmatprep.mubr.bf16.mxu0 %v5085
    %5329 = vmatmul.mubr.bf16.gmra.mrb[0].mxu0 %v5078
    %v5330 = vpop.f32.mrb[0].mxu0
    %v5331 = vadd.f32 0.0, %v5330
    %v5332 = vpop.f32.mrb[0].mxu0
    %v5333 = vpop.f32.mrb[0].mxu0
    %v5334 = vpop.f32.mrb[0].mxu0
    %5335 = vdwg.mxu0
    %5336 = vmatprep.subr.bf16.mxu0 0
    %5337 = vmatpush1.bf16.msra.mxu0 %v5248
    %5338 = vmatprep.subr.bf16.mxu0 0
    %5339 = vmatpush1.bf16.msra.mxu0 %v5249
    %5340 = vmatprep.subr.bf16.mxu0 0
    %5341 = vmatpush1.bf16.msra.mxu0 %v5250
    %5342 = vmatprep.subr.bf16.mxu0 0
    %5343 = vmatpush1.bf16.msra.mxu0 %v5251
    %5344 = vmatprep.subr.bf16.mxu0 0
    %5345 = vmatpush1.bf16.msra.mxu0 %v5252
    %5346 = vmatprep.subr.bf16.mxu0 0
    %5347 = vmatpush1.bf16.msra.mxu0 %v5253
    %5348 = vmatprep.subr.bf16.mxu0 0
    %5349 = vmatpush1.bf16.msra.mxu0 %v5254
    %5350 = vmatprep.subr.bf16.mxu0 0
    %5351 = vmatpush1.bf16.msra.mxu0 %v5255
    %5352 = vmatprep.subr.bf16.mxu0 0
    %5353 = vmatpush1.bf16.msra.mxu0 %v5256
    %5354 = vmatprep.subr.bf16.mxu0 0
    %5355 = vmatpush1.bf16.msra.mxu0 %v5257
    %5356 = vmatprep.subr.bf16.mxu0 0
    %5357 = vmatpush1.bf16.msra.mxu0 %v5258
    %5358 = vmatprep.subr.bf16.mxu0 0
    %5359 = vmatpush1.bf16.msra.mxu0 %v5259
    %5360 = vmatprep.subr.bf16.mxu0 0
    %5361 = vmatpush1.bf16.msra.mxu0 %v5260
    %5362 = vmatprep.subr.bf16.mxu0 0
    %5363 = vmatpush1.bf16.msra.mxu0 %v5261
    %5364 = vmatprep.subr.bf16.mxu0 0
    %5365 = vmatpush1.bf16.msra.mxu0 %v5262
    %5366 = vmatprep.subr.bf16.mxu0 0
    %5367 = vmatpush1.bf16.msra.mxu0 %v5263
    %5368 = vmatprep.mubr.bf16.mxu0 %v5099
    %5369 = vmatmul.mubr.bf16.gmra.mrb[0].mxu0 %v5092
    %v5370 = vpop.f32.mrb[0].mxu0
    %v5371 = vadd.f32 %v5331, %v5370
    %v5372 = vpop.f32.mrb[0].mxu0
    %v5373 = vpop.f32.mrb[0].mxu0
    %v5374 = vpop.f32.mrb[0].mxu0
    %5375 = vdwg.mxu0
    %v5378 = vunpack.c.l.b16 %v4946
    %v5379 = vunpack.c.h.b16 %v4946
    %v5380 = vunpack.c.l.b16 %v4947
    %v5381 = vpack.c.b16 %v5378, %v5378
    %v5382 = vpack.c.b16 %v5379, %v5379
    %v5383 = vpack.c.b16 %v5380, %v5380
    %v5435 = vunpack.c.l.b16 %v4948
    %v5436 = vunpack.c.l.b16 %v4949
    %v5437 = vunpack.c.l.b16 %v4950
    %v5438 = vunpack.c.l.b16 %v4951
    %v5439 = vunpack.c.l.b16 %v4952
    %v5440 = vunpack.c.l.b16 %v4953
    %v5441 = vunpack.c.l.b16 %v4954
    %v5442 = vunpack.c.l.b16 %v4955
    %v5443 = vunpack.c.l.b16 %v4956
    %v5444 = vunpack.c.l.b16 %v4957
    %v5445 = vunpack.c.l.b16 %v4958
    %v5446 = vunpack.c.l.b16 %v4959
    %v5447 = vunpack.c.l.b16 %v4960
    %v5448 = vunpack.c.l.b16 %v4961
    %v5449 = vunpack.c.l.b16 %v4962
    %v5450 = vunpack.c.l.b16 %v4963
    %v5451 = vunpack.c.l.b16 %v4964
    %v5452 = vunpack.c.l.b16 %v4965
    %v5453 = vunpack.c.l.b16 %v4966
    %v5454 = vunpack.c.l.b16 %v4967
    %v5455 = vunpack.c.l.b16 %v4968
    %v5456 = vunpack.c.l.b16 %v4969
    %v5457 = vunpack.c.l.b16 %v4970
    %v5458 = vunpack.c.l.b16 %v4971
    %v5459 = vunpack.c.l.b16 %v4972
    %v5460 = vunpack.c.l.b16 %v4973
    %v5461 = vunpack.c.l.b16 %v4974
    %v5462 = vunpack.c.l.b16 %v4975
    %v5463 = vunpack.c.l.b16 %v4976
    %v5464 = vunpack.c.l.b16 %v4977
    %v5465 = vunpack.c.l.b16 %v4978
    %v5466 = vunpack.c.l.b16 %v4979
    %v5467 = vunpack.c.l.b16 %v4980
    %v5468 = vunpack.c.l.b16 %v4981
    %v5469 = vunpack.c.l.b16 %v4982
    %v5470 = vunpack.c.l.b16 %v4983
    %v5471 = vunpack.c.l.b16 %v4984
    %v5472 = vunpack.c.l.b16 %v4985
    %v5473 = vunpack.c.l.b16 %v4986
    %v5474 = vunpack.c.l.b16 %v4987
    %v5475 = vunpack.c.l.b16 %v4988
    %v5476 = vunpack.c.l.b16 %v4989
    %v5477 = vunpack.c.l.b16 %v4990
    %v5478 = vunpack.c.l.b16 %v4991
    %v5479 = vunpack.c.l.b16 %v4992
    %v5480 = vunpack.c.l.b16 %v4993
    %v5481 = vunpack.c.l.b16 %v4994
    %v5482 = vunpack.c.l.b16 %v4995
    %v5483 = vpack.c.b16 %v5436, %v5435
    %v5484 = vpack.c.b16 %v5438, %v5437
    %v5485 = vpack.c.b16 %v5440, %v5439
    %v5486 = vpack.c.b16 %v5442, %v5441
    %v5487 = vpack.c.b16 %v5444, %v5443
    %v5488 = vpack.c.b16 %v5446, %v5445
    %v5489 = vpack.c.b16 %v5448, %v5447
    %v5490 = vpack.c.b16 %v5450, %v5449
    %v5491 = vpack.c.b16 %v5452, %v5451
    %v5492 = vpack.c.b16 %v5454, %v5453
    %v5493 = vpack.c.b16 %v5456, %v5455
    %v5494 = vpack.c.b16 %v5458, %v5457
    %v5495 = vpack.c.b16 %v5460, %v5459
    %v5496 = vpack.c.b16 %v5462, %v5461
    %v5497 = vpack.c.b16 %v5464, %v5463
    %v5498 = vpack.c.b16 %v5466, %v5465
    %v5499 = vpack.c.b16 %v5468, %v5467
    %v5500 = vpack.c.b16 %v5470, %v5469
    %v5501 = vpack.c.b16 %v5472, %v5471
    %v5502 = vpack.c.b16 %v5474, %v5473
    %v5503 = vpack.c.b16 %v5476, %v5475
    %v5504 = vpack.c.b16 %v5478, %v5477
    %v5505 = vpack.c.b16 %v5480, %v5479
    %v5506 = vpack.c.b16 %v5482, %v5481
    %5531 = vmatprep.subr.bf16.mxu0 0
    %5532 = vmatpush1.bf16.msra.mxu0 %v5483
    %5533 = vmatprep.subr.bf16.mxu0 0
    %5534 = vmatpush1.bf16.msra.mxu0 %v5484
    %5535 = vmatprep.subr.bf16.mxu0 0
    %5536 = vmatpush1.bf16.msra.mxu0 %v5485
    %5537 = vmatprep.subr.bf16.mxu0 0
    %5538 = vmatpush1.bf16.msra.mxu0 %v5486
    %5539 = vmatprep.subr.bf16.mxu0 0
    %5540 = vmatpush1.bf16.msra.mxu0 %v5487
    %5541 = vmatprep.subr.bf16.mxu0 0
    %5542 = vmatpush1.bf16.msra.mxu0 %v5488
    %5543 = vmatprep.subr.bf16.mxu0 0
    %5544 = vmatpush1.bf16.msra.mxu0 %v5489
    %5545 = vmatprep.subr.bf16.mxu0 0
    %5546 = vmatpush1.bf16.msra.mxu0 %v5490
    %5547 = vmatprep.subr.bf16.mxu0 0
    %5548 = vmatpush1.bf16.msra.mxu0 %v5491
    %5549 = vmatprep.subr.bf16.mxu0 0
    %5550 = vmatpush1.bf16.msra.mxu0 %v5492
    %5551 = vmatprep.subr.bf16.mxu0 0
    %5552 = vmatpush1.bf16.msra.mxu0 %v5493
    %5553 = vmatprep.subr.bf16.mxu0 0
    %5554 = vmatpush1.bf16.msra.mxu0 %v5494
    %5555 = vmatprep.subr.bf16.mxu0 0
    %5556 = vmatpush1.bf16.msra.mxu0 %v5495
    %5557 = vmatprep.subr.bf16.mxu0 0
    %5558 = vmatpush1.bf16.msra.mxu0 %v5496
    %5559 = vmatprep.subr.bf16.mxu0 0
    %5560 = vmatpush1.bf16.msra.mxu0 %v5497
    %5561 = vmatprep.subr.bf16.mxu0 0
    %5562 = vmatpush1.bf16.msra.mxu0 %v5498
    %5563 = vmatprep.mubr.bf16.mxu0 %v5382
    %5564 = vmatmul.mubr.bf16.gmra.mrb[0].mxu0 %v5381
    %v5565 = vpop.f32.mrb[0].mxu0
    %v5566 = vadd.f32 %v5371, %v5565
    %v5567 = vpop.f32.mrb[0].mxu0
    %v5568 = vpop.f32.mrb[0].mxu0
    %v5569 = vpop.f32.mrb[0].mxu0
    %5570 = vdwg.mxu0
    %5571 = vmatprep.subr.bf16.mxu0 0
    %5572 = vmatpush1.bf16.msra.mxu0 %v5499
    %5573 = vmatprep.subr.bf16.mxu0 0
    %5574 = vmatpush1.bf16.msra.mxu0 %v5500
    %5575 = vmatprep.subr.bf16.mxu0 0
    %5576 = vmatpush1.bf16.msra.mxu0 %v5501
    %5577 = vmatprep.subr.bf16.mxu0 0
    %5578 = vmatpush1.bf16.msra.mxu0 %v5502
    %5579 = vmatprep.subr.bf16.mxu0 0
    %5580 = vmatpush1.bf16.msra.mxu0 %v5503
    %5581 = vmatprep.subr.bf16.mxu0 0
    %5582 = vmatpush1.bf16.msra.mxu0 %v5504
    %5583 = vmatprep.subr.bf16.mxu0 0
    %5584 = vmatpush1.bf16.msra.mxu0 %v5505
    %5585 = vmatprep.subr.bf16.mxu0 0
    %5586 = vmatpush1.bf16.msra.mxu0 %v5506
    %5587 = vmatprep.subr.bf16.mxu0 0
    %5588 = vmatpush1.bf16.msra.mxu0 0
    %5589 = vmatprep.subr.bf16.mxu0 0
    %5590 = vmatpush1.bf16.msra.mxu0 0
    %5591 = vmatprep.subr.bf16.mxu0 0
    %5592 = vmatpush1.bf16.msra.mxu0 0
    %5593 = vmatprep.subr.bf16.mxu0 0
    %5594 = vmatpush1.bf16.msra.mxu0 0
    %5595 = vmatprep.subr.bf16.mxu0 0
    %5596 = vmatpush1.bf16.msra.mxu0 0
    %5597 = vmatprep.subr.bf16.mxu0 0
    %5598 = vmatpush1.bf16.msra.mxu0 0
    %5599 = vmatprep.subr.bf16.mxu0 0
    %5600 = vmatpush1.bf16.msra.mxu0 0
    %5601 = vmatprep.subr.bf16.mxu0 0
    %5602 = vmatpush1.bf16.msra.mxu0 0
    %5603 = vmatprep.mubr.bf16.mxu0 0
    %5604 = vmatmul.mubr.bf16.gmra.mrb[0].mxu0 %v5383
    %v5605 = vpop.f32.mrb[0].mxu0
    %v5606 = vadd.f32 %v5566, %v5605
    %v5607 = vpop.f32.mrb[0].mxu0
    %v5608 = vpop.f32.mrb[0].mxu0
    %v5609 = vpop.f32.mrb[0].mxu0
    %5610 = vdwg.mxu0
    %v5611 = vld [vmem:[%s2] sm:$0x1]
    %v5613 = vlaneseq
    %v5614 = vshrl.u32 %v5613, 7
    %v5615 = vsub.s32 0, %v5614
    %v5616 = vrot.slane %v5611, %v5615
    %v5618 = vadd.f32 %v5606, %v5616
    %v5619 = vmax.f32 %v5618, 0.0
    %v5620 = vpack.c.bf16 %v5619, %v5619
    %v5622 = vunpack.c.l.b16 %v5620
    %v5623 = vpack.c.b16 %v5622, %v5622
    %v5625 = vshrl.u32 %v5623, 16
    %v5627 = vrot.slane %v5625, 7
    %v5628 = vshll.u32 %v5623, 16
    %v5630 = vor.u32 %v5627, %v5628
    %v5632 = vld [vmem:[#allocation2] sm:$0x7]
    %v5633 = vsel %vm794, %v5630, %v5632
    %5634 = vst [vmem:[#allocation2] sm:$0x7] %v5633
    %v5635 = vld [vmem:[%s4945 + $0x1c] sm:$0x3]
    %v5636 = vld [vmem:[#allocation4] sm:$0xf]
    %v5637 = vld [vmem:[#allocation4 + $0x4] sm:$0xf]
    %v5638 = vld [vmem:[#allocation4 + $0x8] sm:$0xf]
    %v5639 = vld [vmem:[#allocation4 + $0xc] sm:$0xf]
    %v5640 = vld [vmem:[#allocation4 + $0x10] sm:$0xf]
    %v5641 = vld [vmem:[#allocation4 + $0x14] sm:$0xf]
    %v5642 = vld [vmem:[#allocation4 + $0x18] sm:$0xf]
    %v5643 = vld [vmem:[#allocation4 + $0x1c] sm:$0xf]
    %v5644 = vld [vmem:[#allocation4 + $0x20] sm:$0xf]
    %v5645 = vld [vmem:[#allocation4 + $0x24] sm:$0xf]
    %v5646 = vld [vmem:[#allocation4 + $0x28] sm:$0xf]
    %v5647 = vld [vmem:[#allocation4 + $0x2c] sm:$0xf]
    %v5648 = vld [vmem:[#allocation4 + $0x30] sm:$0xf]
    %v5649 = vld [vmem:[#allocation4 + $0x34] sm:$0xf]
    %v5650 = vld [vmem:[#allocation4 + $0x38] sm:$0xf]
    %v5651 = vld [vmem:[#allocation4 + $0x3c] sm:$0xf]
    %v5652 = vld [vmem:[%s4945] sm:$0x77]
    %v5653 = vld [vmem:[%s4945 + $0x8] sm:$0x77]
    %v5654 = vld [vmem:[%s4945 + $0x10] sm:$0x77]
    %v5655 = vld [vmem:[#allocation4 + $0x40] sm:$0xf]
    %v5656 = vld [vmem:[#allocation4 + $0x44] sm:$0xf]
    %v5657 = vld [vmem:[#allocation4 + $0x48] sm:$0xf]
    %v5658 = vld [vmem:[#allocation4 + $0x4c] sm:$0xf]
    %v5659 = vld [vmem:[#allocation4 + $0x50] sm:$0xf]
    %v5660 = vld [vmem:[#allocation4 + $0x54] sm:$0xf]
    %v5661 = vld [vmem:[#allocation4 + $0x58] sm:$0xf]
    %v5662 = vld [vmem:[#allocation4 + $0x5c] sm:$0xf]
    %v5663 = vld [vmem:[#allocation4 + $0x60] sm:$0xf]
    %v5664 = vld [vmem:[#allocation4 + $0x64] sm:$0xf]
    %v5665 = vld [vmem:[#allocation4 + $0x68] sm:$0xf]
    %v5666 = vld [vmem:[#allocation4 + $0x6c] sm:$0xf]
    %v5667 = vld [vmem:[#allocation4 + $0x70] sm:$0xf]
    %v5668 = vld [vmem:[#allocation4 + $0x74] sm:$0xf]
    %v5669 = vld [vmem:[#allocation4 + $0x78] sm:$0xf]
    %v5670 = vld [vmem:[#allocation4 + $0x7c] sm:$0xf]
    %v5671 = vld [vmem:[#allocation4 + $0x80] sm:$0xf]
    %v5672 = vld [vmem:[#allocation4 + $0x84] sm:$0xf]
    %v5673 = vld [vmem:[#allocation4 + $0x88] sm:$0xf]
    %v5674 = vld [vmem:[#allocation4 + $0x8c] sm:$0xf]
    %v5675 = vld [vmem:[#allocation4 + $0x90] sm:$0xf]
    %v5676 = vld [vmem:[#allocation4 + $0x94] sm:$0xf]
    %v5677 = vld [vmem:[#allocation4 + $0x98] sm:$0xf]
    %v5678 = vld [vmem:[#allocation4 + $0x9c] sm:$0xf]
    %v5679 = vld [vmem:[#allocation4 + $0xa0] sm:$0xf]
    %v5680 = vld [vmem:[#allocation4 + $0xa4] sm:$0xf]
    %v5681 = vld [vmem:[#allocation4 + $0xa8] sm:$0xf]
    %v5682 = vld [vmem:[#allocation4 + $0xac] sm:$0xf]
    %v5683 = vld [vmem:[#allocation4 + $0xb0] sm:$0xf]
    %v5684 = vld [vmem:[#allocation4 + $0xb4] sm:$0xf]
    %v5685 = vld [vmem:[#allocation4 + $0xb8] sm:$0xf]
    %v5686 = vld [vmem:[#allocation4 + $0xbc] sm:$0xf]
    %v5687 = vld [vmem:[#allocation4 + $0xc0] sm:$0xf]
    %v5688 = vld [vmem:[#allocation4 + $0xc4] sm:$0xf]
    %v5689 = vld [vmem:[#allocation4 + $0xc8] sm:$0xf]
    %v5690 = vld [vmem:[#allocation4 + $0xcc] sm:$0xf]
    %v5691 = vld [vmem:[#allocation4 + $0xd0] sm:$0xf]
    %v5692 = vld [vmem:[#allocation4 + $0xd4] sm:$0xf]
    %v5693 = vld [vmem:[#allocation4 + $0xd8] sm:$0xf]
    %v5694 = vld [vmem:[#allocation4 + $0xdc] sm:$0xf]
    %v5695 = vld [vmem:[#allocation4 + $0xe0] sm:$0xf]
    %v5696 = vld [vmem:[#allocation4 + $0xe4] sm:$0xf]
    %v5697 = vld [vmem:[#allocation4 + $0xe8] sm:$0xf]
    %v5698 = vld [vmem:[#allocation4 + $0xec] sm:$0xf]
    %v5699 = vld [vmem:[#allocation4 + $0xf0] sm:$0xf]
    %v5700 = vld [vmem:[#allocation4 + $0xf4] sm:$0xf]
    %v5701 = vld [vmem:[#allocation4 + $0xf8] sm:$0xf]
    %v5702 = vld [vmem:[#allocation4 + $0xfc] sm:$0xf]
    %v5703 = vld [vmem:[#allocation4 + $0x100] sm:$0xf]
    %v5704 = vld [vmem:[#allocation4 + $0x104] sm:$0xf]
    %v5705 = vld [vmem:[#allocation4 + $0x108] sm:$0xf]
    %v5706 = vld [vmem:[#allocation4 + $0x10c] sm:$0xf]
    %v5707 = vld [vmem:[#allocation4 + $0x110] sm:$0xf]
    %v5708 = vld [vmem:[#allocation4 + $0x114] sm:$0xf]
    %v5709 = vld [vmem:[#allocation4 + $0x118] sm:$0xf]
    %v5710 = vld [vmem:[#allocation4 + $0x11c] sm:$0xf]
    %v5711 = vld [vmem:[#allocation4 + $0x120] sm:$0xf]
    %v5712 = vld [vmem:[#allocation4 + $0x124] sm:$0xf]
    %v5713 = vld [vmem:[#allocation4 + $0x128] sm:$0xf]
    %v5714 = vld [vmem:[#allocation4 + $0x12c] sm:$0xf]
    %v5715 = vld [vmem:[#allocation4 + $0x130] sm:$0xf]
    %v5716 = vld [vmem:[#allocation4 + $0x134] sm:$0xf]
    %v5717 = vld [vmem:[#allocation4 + $0x138] sm:$0xf]
    %v5718 = vld [vmem:[#allocation4 + $0x13c] sm:$0xf]
    %v5719 = vld [vmem:[#allocation4 + $0x140] sm:$0xf]
    %v5720 = vld [vmem:[#allocation4 + $0x144] sm:$0xf]
    %v5721 = vld [vmem:[#allocation4 + $0x148] sm:$0xf]
    %v5722 = vld [vmem:[#allocation4 + $0x14c] sm:$0xf]
    %v5723 = vld [vmem:[#allocation4 + $0x150] sm:$0xf]
    %v5724 = vld [vmem:[#allocation4 + $0x154] sm:$0xf]
    %v5725 = vld [vmem:[#allocation4 + $0x158] sm:$0xf]
    %v5726 = vld [vmem:[#allocation4 + $0x15c] sm:$0xf]
    %v5727 = vld [vmem:[#allocation4 + $0x160] sm:$0xf]
    %v5728 = vld [vmem:[#allocation4 + $0x164] sm:$0xf]
    %v5729 = vld [vmem:[#allocation4 + $0x168] sm:$0xf]
    %v5730 = vld [vmem:[#allocation4 + $0x16c] sm:$0xf]
    %v5731 = vld [vmem:[#allocation4 + $0x170] sm:$0xf]
    %v5732 = vld [vmem:[#allocation4 + $0x174] sm:$0xf]
    %v5733 = vld [vmem:[#allocation4 + $0x178] sm:$0xf]
    %v5734 = vld [vmem:[#allocation4 + $0x17c] sm:$0xf]
    %v5735 = vld [vmem:[#allocation4 + $0x180] sm:$0xf]
    %v5736 = vld [vmem:[#allocation4 + $0x184] sm:$0xf]
    %v5737 = vld [vmem:[#allocation4 + $0x188] sm:$0xf]
    %v5738 = vld [vmem:[#allocation4 + $0x18c] sm:$0xf]
    %v5739 = vld [vmem:[#allocation4 + $0x190] sm:$0xf]
    %v5740 = vld [vmem:[#allocation4 + $0x194] sm:$0xf]
    %v5741 = vld [vmem:[#allocation4 + $0x198] sm:$0xf]
    %v5742 = vld [vmem:[#allocation4 + $0x19c] sm:$0xf]
    %v5743 = vld [vmem:[#allocation4 + $0x1a0] sm:$0xf]
    %v5744 = vld [vmem:[#allocation4 + $0x1a4] sm:$0xf]
    %v5745 = vld [vmem:[#allocation4 + $0x1a8] sm:$0xf]
    %v5746 = vld [vmem:[#allocation4 + $0x1ac] sm:$0xf]
    %v5747 = vld [vmem:[#allocation4 + $0x1b0] sm:$0xf]
    %v5748 = vld [vmem:[#allocation4 + $0x1b4] sm:$0xf]
    %v5749 = vld [vmem:[#allocation4 + $0x1b8] sm:$0xf]
    %v5750 = vld [vmem:[#allocation4 + $0x1bc] sm:$0xf]
    %v5754 = vunpack.c.l.b16 %v5652
    %v5755 = vunpack.c.h.b16 %v5652
    %v5756 = vunpack.c.l.b16 %v5653
    %v5757 = vunpack.c.h.b16 %v5653
    %v5758 = vunpack.c.l.b16 %v5654
    %v5759 = vunpack.c.h.b16 %v5654
    %v5760 = vpack.c.b16 %v5754, %v5754
    %v5761 = vpack.c.b16 %v5755, %v5755
    %v5762 = vpack.c.b16 %v5756, %v5756
    %v5763 = vpack.c.b16 %v5757, %v5757
    %v5764 = vpack.c.b16 %v5758, %v5758
    %v5765 = vpack.c.b16 %v5759, %v5759
    %v5767 = vshrl.u32 %v5760, 16
    %v5769 = vshll.u32 %v5760, 16
    %v5771 = vrot.slane %v5769, 1
    %v5772 = vor.u32 %v5767, %v5771
    %v5774 = vshrl.u32 %v5761, 16
    %v5776 = vshll.u32 %v5761, 16
    %v5778 = vrot.slane %v5776, 1
    %v5779 = vor.u32 %v5774, %v5778
    %v5781 = vshrl.u32 %v5762, 16
    %v5783 = vshll.u32 %v5762, 16
    %v5785 = vrot.slane %v5783, 1
    %v5786 = vor.u32 %v5781, %v5785
    %v5788 = vshrl.u32 %v5763, 16
    %v5790 = vshll.u32 %v5763, 16
    %v5792 = vrot.slane %v5790, 1
    %v5793 = vor.u32 %v5788, %v5792
    %v5795 = vshrl.u32 %v5764, 16
    %v5797 = vshll.u32 %v5764, 16
    %v5799 = vrot.slane %v5797, 1
    %v5800 = vor.u32 %v5795, %v5799
    %v5802 = vshrl.u32 %v5765, 16
    %v5804 = vshll.u32 %v5765, 16
    %v5806 = vrot.slane %v5804, 1
    %v5807 = vor.u32 %v5802, %v5806
    %v5910 = vunpack.c.l.b16 %v5655
    %v5911 = vunpack.c.l.b16 %v5656
    %v5912 = vunpack.c.l.b16 %v5657
    %v5913 = vunpack.c.l.b16 %v5658
    %v5914 = vunpack.c.l.b16 %v5659
    %v5915 = vunpack.c.l.b16 %v5660
    %v5916 = vunpack.c.l.b16 %v5661
    %v5917 = vunpack.c.l.b16 %v5662
    %v5918 = vunpack.c.l.b16 %v5663
    %v5919 = vunpack.c.l.b16 %v5664
    %v5920 = vunpack.c.l.b16 %v5665
    %v5921 = vunpack.c.l.b16 %v5666
    %v5922 = vunpack.c.l.b16 %v5667
    %v5923 = vunpack.c.l.b16 %v5668
    %v5924 = vunpack.c.l.b16 %v5669
    %v5925 = vunpack.c.l.b16 %v5670
    %v5926 = vunpack.c.l.b16 %v5671
    %v5927 = vunpack.c.l.b16 %v5672
    %v5928 = vunpack.c.l.b16 %v5673
    %v5929 = vunpack.c.l.b16 %v5674
    %v5930 = vunpack.c.l.b16 %v5675
    %v5931 = vunpack.c.l.b16 %v5676
    %v5932 = vunpack.c.l.b16 %v5677
    %v5933 = vunpack.c.l.b16 %v5678
    %v5934 = vunpack.c.l.b16 %v5679
    %v5935 = vunpack.c.l.b16 %v5680
    %v5936 = vunpack.c.l.b16 %v5681
    %v5937 = vunpack.c.l.b16 %v5682
    %v5938 = vunpack.c.l.b16 %v5683
    %v5939 = vunpack.c.l.b16 %v5684
    %v5940 = vunpack.c.l.b16 %v5685
    %v5941 = vunpack.c.l.b16 %v5686
    %v5942 = vunpack.c.l.b16 %v5687
    %v5943 = vunpack.c.l.b16 %v5688
    %v5944 = vunpack.c.l.b16 %v5689
    %v5945 = vunpack.c.l.b16 %v5690
    %v5946 = vunpack.c.l.b16 %v5691
    %v5947 = vunpack.c.l.b16 %v5692
    %v5948 = vunpack.c.l.b16 %v5693
    %v5949 = vunpack.c.l.b16 %v5694
    %v5950 = vunpack.c.l.b16 %v5695
    %v5951 = vunpack.c.l.b16 %v5696
    %v5952 = vunpack.c.l.b16 %v5697
    %v5953 = vunpack.c.l.b16 %v5698
    %v5954 = vunpack.c.l.b16 %v5699
    %v5955 = vunpack.c.l.b16 %v5700
    %v5956 = vunpack.c.l.b16 %v5701
    %v5957 = vunpack.c.l.b16 %v5702
    %v5958 = vunpack.c.l.b16 %v5703
    %v5959 = vunpack.c.l.b16 %v5704
    %v5960 = vunpack.c.l.b16 %v5705
    %v5961 = vunpack.c.l.b16 %v5706
    %v5962 = vunpack.c.l.b16 %v5707
    %v5963 = vunpack.c.l.b16 %v5708
    %v5964 = vunpack.c.l.b16 %v5709
    %v5965 = vunpack.c.l.b16 %v5710
    %v5966 = vunpack.c.l.b16 %v5711
    %v5967 = vunpack.c.l.b16 %v5712
    %v5968 = vunpack.c.l.b16 %v5713
    %v5969 = vunpack.c.l.b16 %v5714
    %v5970 = vunpack.c.l.b16 %v5715
    %v5971 = vunpack.c.l.b16 %v5716
    %v5972 = vunpack.c.l.b16 %v5717
    %v5973 = vunpack.c.l.b16 %v5718
    %v5974 = vunpack.c.l.b16 %v5719
    %v5975 = vunpack.c.l.b16 %v5720
    %v5976 = vunpack.c.l.b16 %v5721
    %v5977 = vunpack.c.l.b16 %v5722
    %v5978 = vunpack.c.l.b16 %v5723
    %v5979 = vunpack.c.l.b16 %v5724
    %v5980 = vunpack.c.l.b16 %v5725
    %v5981 = vunpack.c.l.b16 %v5726
    %v5982 = vunpack.c.l.b16 %v5727
    %v5983 = vunpack.c.l.b16 %v5728
    %v5984 = vunpack.c.l.b16 %v5729
    %v5985 = vunpack.c.l.b16 %v5730
    %v5986 = vunpack.c.l.b16 %v5731
    %v5987 = vunpack.c.l.b16 %v5732
    %v5988 = vunpack.c.l.b16 %v5733
    %v5989 = vunpack.c.l.b16 %v5734
    %v5990 = vunpack.c.l.b16 %v5735
    %v5991 = vunpack.c.l.b16 %v5736
    %v5992 = vunpack.c.l.b16 %v5737
    %v5993 = vunpack.c.l.b16 %v5738
    %v5994 = vunpack.c.l.b16 %v5739
    %v5995 = vunpack.c.l.b16 %v5740
    %v5996 = vunpack.c.l.b16 %v5741
    %v5997 = vunpack.c.l.b16 %v5742
    %v5998 = vunpack.c.l.b16 %v5743
    %v5999 = vunpack.c.l.b16 %v5744
    %v6000 = vunpack.c.l.b16 %v5745
    %v6001 = vunpack.c.l.b16 %v5746
    %v6002 = vunpack.c.l.b16 %v5747
    %v6003 = vunpack.c.l.b16 %v5748
    %v6004 = vunpack.c.l.b16 %v5749
    %v6005 = vunpack.c.l.b16 %v5750
    %v6006 = vpack.c.b16 %v5911, %v5910
    %v6007 = vpack.c.b16 %v5913, %v5912
    %v6008 = vpack.c.b16 %v5915, %v5914
    %v6009 = vpack.c.b16 %v5917, %v5916
    %v6010 = vpack.c.b16 %v5919, %v5918
    %v6011 = vpack.c.b16 %v5921, %v5920
    %v6012 = vpack.c.b16 %v5923, %v5922
    %v6013 = vpack.c.b16 %v5925, %v5924
    %v6014 = vpack.c.b16 %v5927, %v5926
    %v6015 = vpack.c.b16 %v5929, %v5928
    %v6016 = vpack.c.b16 %v5931, %v5930
    %v6017 = vpack.c.b16 %v5933, %v5932
    %v6018 = vpack.c.b16 %v5935, %v5934
    %v6019 = vpack.c.b16 %v5937, %v5936
    %v6020 = vpack.c.b16 %v5939, %v5938
    %v6021 = vpack.c.b16 %v5941, %v5940
    %v6022 = vpack.c.b16 %v5943, %v5942
    %v6023 = vpack.c.b16 %v5945, %v5944
    %v6024 = vpack.c.b16 %v5947, %v5946
    %v6025 = vpack.c.b16 %v5949, %v5948
    %v6026 = vpack.c.b16 %v5951, %v5950
    %v6027 = vpack.c.b16 %v5953, %v5952
    %v6028 = vpack.c.b16 %v5955, %v5954
    %v6029 = vpack.c.b16 %v5957, %v5956
    %v6030 = vpack.c.b16 %v5959, %v5958
    %v6031 = vpack.c.b16 %v5961, %v5960
    %v6032 = vpack.c.b16 %v5963, %v5962
    %v6033 = vpack.c.b16 %v5965, %v5964
    %v6034 = vpack.c.b16 %v5967, %v5966
    %v6035 = vpack.c.b16 %v5969, %v5968
    %v6036 = vpack.c.b16 %v5971, %v5970
    %v6037 = vpack.c.b16 %v5973, %v5972
    %v6038 = vpack.c.b16 %v5975, %v5974
    %v6039 = vpack.c.b16 %v5977, %v5976
    %v6040 = vpack.c.b16 %v5979, %v5978
    %v6041 = vpack.c.b16 %v5981, %v5980
    %v6042 = vpack.c.b16 %v5983, %v5982
    %v6043 = vpack.c.b16 %v5985, %v5984
    %v6044 = vpack.c.b16 %v5987, %v5986
    %v6045 = vpack.c.b16 %v5989, %v5988
    %v6046 = vpack.c.b16 %v5991, %v5990
    %v6047 = vpack.c.b16 %v5993, %v5992
    %v6048 = vpack.c.b16 %v5995, %v5994
    %v6049 = vpack.c.b16 %v5997, %v5996
    %v6050 = vpack.c.b16 %v5999, %v5998
    %v6051 = vpack.c.b16 %v6001, %v6000
    %v6052 = vpack.c.b16 %v6003, %v6002
    %v6053 = vpack.c.b16 %v6005, %v6004
    %6102 = vmatprep.subr.bf16.mxu0 0
    %6103 = vmatpush1.bf16.msra.mxu0 %v6006
    %6104 = vmatprep.subr.bf16.mxu0 0
    %6105 = vmatpush1.bf16.msra.mxu0 %v6007
    %6106 = vmatprep.subr.bf16.mxu0 0
    %6107 = vmatpush1.bf16.msra.mxu0 %v6008
    %6108 = vmatprep.subr.bf16.mxu0 0
    %6109 = vmatpush1.bf16.msra.mxu0 %v6009
    %6110 = vmatprep.subr.bf16.mxu0 0
    %6111 = vmatpush1.bf16.msra.mxu0 %v6010
    %6112 = vmatprep.subr.bf16.mxu0 0
    %6113 = vmatpush1.bf16.msra.mxu0 %v6011
    %6114 = vmatprep.subr.bf16.mxu0 0
    %6115 = vmatpush1.bf16.msra.mxu0 %v6012
    %6116 = vmatprep.subr.bf16.mxu0 0
    %6117 = vmatpush1.bf16.msra.mxu0 %v6013
    %6118 = vmatprep.subr.bf16.mxu0 0
    %6119 = vmatpush1.bf16.msra.mxu0 %v6014
    %6120 = vmatprep.subr.bf16.mxu0 0
    %6121 = vmatpush1.bf16.msra.mxu0 %v6015
    %6122 = vmatprep.subr.bf16.mxu0 0
    %6123 = vmatpush1.bf16.msra.mxu0 %v6016
    %6124 = vmatprep.subr.bf16.mxu0 0
    %6125 = vmatpush1.bf16.msra.mxu0 %v6017
    %6126 = vmatprep.subr.bf16.mxu0 0
    %6127 = vmatpush1.bf16.msra.mxu0 %v6018
    %6128 = vmatprep.subr.bf16.mxu0 0
    %6129 = vmatpush1.bf16.msra.mxu0 %v6019
    %6130 = vmatprep.subr.bf16.mxu0 0
    %6131 = vmatpush1.bf16.msra.mxu0 %v6020
    %6132 = vmatprep.subr.bf16.mxu0 0
    %6133 = vmatpush1.bf16.msra.mxu0 %v6021
    %6134 = vmatprep.mubr.bf16.mxu0 %v5779
    %6135 = vmatmul.mubr.bf16.gmra.mrb[0].mxu0 %v5772
    %v6136 = vpop.f32.mrb[0].mxu0
    %v6137 = vadd.f32 0.0, %v6136
    %v6138 = vpop.f32.mrb[0].mxu0
    %v6139 = vpop.f32.mrb[0].mxu0
    %v6140 = vpop.f32.mrb[0].mxu0
    %6141 = vdwg.mxu0
    %6142 = vmatprep.subr.bf16.mxu0 0
    %6143 = vmatpush1.bf16.msra.mxu0 %v6022
    %6144 = vmatprep.subr.bf16.mxu0 0
    %6145 = vmatpush1.bf16.msra.mxu0 %v6023
    %6146 = vmatprep.subr.bf16.mxu0 0
    %6147 = vmatpush1.bf16.msra.mxu0 %v6024
    %6148 = vmatprep.subr.bf16.mxu0 0
    %6149 = vmatpush1.bf16.msra.mxu0 %v6025
    %6150 = vmatprep.subr.bf16.mxu0 0
    %6151 = vmatpush1.bf16.msra.mxu0 %v6026
    %6152 = vmatprep.subr.bf16.mxu0 0
    %6153 = vmatpush1.bf16.msra.mxu0 %v6027
    %6154 = vmatprep.subr.bf16.mxu0 0
    %6155 = vmatpush1.bf16.msra.mxu0 %v6028
    %6156 = vmatprep.subr.bf16.mxu0 0
    %6157 = vmatpush1.bf16.msra.mxu0 %v6029
    %6158 = vmatprep.subr.bf16.mxu0 0
    %6159 = vmatpush1.bf16.msra.mxu0 %v6030
    %6160 = vmatprep.subr.bf16.mxu0 0
    %6161 = vmatpush1.bf16.msra.mxu0 %v6031
    %6162 = vmatprep.subr.bf16.mxu0 0
    %6163 = vmatpush1.bf16.msra.mxu0 %v6032
    %6164 = vmatprep.subr.bf16.mxu0 0
    %6165 = vmatpush1.bf16.msra.mxu0 %v6033
    %6166 = vmatprep.subr.bf16.mxu0 0
    %6167 = vmatpush1.bf16.msra.mxu0 %v6034
    %6168 = vmatprep.subr.bf16.mxu0 0
    %6169 = vmatpush1.bf16.msra.mxu0 %v6035
    %6170 = vmatprep.subr.bf16.mxu0 0
    %6171 = vmatpush1.bf16.msra.mxu0 %v6036
    %6172 = vmatprep.subr.bf16.mxu0 0
    %6173 = vmatpush1.bf16.msra.mxu0 %v6037
    %6174 = vmatprep.mubr.bf16.mxu0 %v5793
    %6175 = vmatmul.mubr.bf16.gmra.mrb[0].mxu0 %v5786
    %v6176 = vpop.f32.mrb[0].mxu0
    %v6177 = vadd.f32 %v6137, %v6176
    %v6178 = vpop.f32.mrb[0].mxu0
    %v6179 = vpop.f32.mrb[0].mxu0
    %v6180 = vpop.f32.mrb[0].mxu0
    %6181 = vdwg.mxu0
    %6182 = vmatprep.subr.bf16.mxu0 0
    %6183 = vmatpush1.bf16.msra.mxu0 %v6038
    %6184 = vmatprep.subr.bf16.mxu0 0
    %6185 = vmatpush1.bf16.msra.mxu0 %v6039
    %6186 = vmatprep.subr.bf16.mxu0 0
    %6187 = vmatpush1.bf16.msra.mxu0 %v6040
    %6188 = vmatprep.subr.bf16.mxu0 0
    %6189 = vmatpush1.bf16.msra.mxu0 %v6041
    %6190 = vmatprep.subr.bf16.mxu0 0
    %6191 = vmatpush1.bf16.msra.mxu0 %v6042
    %6192 = vmatprep.subr.bf16.mxu0 0
    %6193 = vmatpush1.bf16.msra.mxu0 %v6043
    %6194 = vmatprep.subr.bf16.mxu0 0
    %6195 = vmatpush1.bf16.msra.mxu0 %v6044
    %6196 = vmatprep.subr.bf16.mxu0 0
    %6197 = vmatpush1.bf16.msra.mxu0 %v6045
    %6198 = vmatprep.subr.bf16.mxu0 0
    %6199 = vmatpush1.bf16.msra.mxu0 %v6046
    %6200 = vmatprep.subr.bf16.mxu0 0
    %6201 = vmatpush1.bf16.msra.mxu0 %v6047
    %6202 = vmatprep.subr.bf16.mxu0 0
    %6203 = vmatpush1.bf16.msra.mxu0 %v6048
    %6204 = vmatprep.subr.bf16.mxu0 0
    %6205 = vmatpush1.bf16.msra.mxu0 %v6049
    %6206 = vmatprep.subr.bf16.mxu0 0
    %6207 = vmatpush1.bf16.msra.mxu0 %v6050
    %6208 = vmatprep.subr.bf16.mxu0 0
    %6209 = vmatpush1.bf16.msra.mxu0 %v6051
    %6210 = vmatprep.subr.bf16.mxu0 0
    %6211 = vmatpush1.bf16.msra.mxu0 %v6052
    %6212 = vmatprep.subr.bf16.mxu0 0
    %6213 = vmatpush1.bf16.msra.mxu0 %v6053
    %6214 = vmatprep.mubr.bf16.mxu0 %v5807
    %6215 = vmatmul.mubr.bf16.gmra.mrb[0].mxu0 %v5800
    %v6216 = vpop.f32.mrb[0].mxu0
    %v6217 = vadd.f32 %v6177, %v6216
    %v6218 = vpop.f32.mrb[0].mxu0
    %v6219 = vpop.f32.mrb[0].mxu0
    %v6220 = vpop.f32.mrb[0].mxu0
    %6221 = vdwg.mxu0
    %v6238 = vunpack.c.l.b16 %v5636
    %v6239 = vunpack.c.l.b16 %v5637
    %v6240 = vunpack.c.l.b16 %v5638
    %v6241 = vunpack.c.l.b16 %v5639
    %v6242 = vunpack.c.l.b16 %v5640
    %v6243 = vunpack.c.l.b16 %v5641
    %v6244 = vunpack.c.l.b16 %v5642
    %v6245 = vunpack.c.l.b16 %v5643
    %v6246 = vunpack.c.l.b16 %v5644
    %v6247 = vunpack.c.l.b16 %v5645
    %v6248 = vunpack.c.l.b16 %v5646
    %v6249 = vunpack.c.l.b16 %v5647
    %v6250 = vunpack.c.l.b16 %v5648
    %v6251 = vunpack.c.l.b16 %v5649
    %v6252 = vunpack.c.l.b16 %v5650
    %v6253 = vunpack.c.l.b16 %v5651
    %v6254 = vpack.c.b16 %v6239, %v6238
    %v6255 = vpack.c.b16 %v6241, %v6240
    %v6256 = vpack.c.b16 %v6243, %v6242
    %v6257 = vpack.c.b16 %v6245, %v6244
    %v6258 = vpack.c.b16 %v6247, %v6246
    %v6259 = vpack.c.b16 %v6249, %v6248
    %v6260 = vpack.c.b16 %v6251, %v6250
    %v6261 = vpack.c.b16 %v6253, %v6252
    %6270 = vmatprep.subr.bf16.mxu0 0
    %6271 = vmatpush1.bf16.msra.mxu0 %v6254
    %6272 = vmatprep.subr.bf16.mxu0 0
    %6273 = vmatpush1.bf16.msra.mxu0 %v6255
    %6274 = vmatprep.subr.bf16.mxu0 0
    %6275 = vmatpush1.bf16.msra.mxu0 %v6256
    %6276 = vmatprep.subr.bf16.mxu0 0
    %6277 = vmatpush1.bf16.msra.mxu0 %v6257
    %6278 = vmatprep.subr.bf16.mxu0 0
    %6279 = vmatpush1.bf16.msra.mxu0 %v6258
    %6280 = vmatprep.subr.bf16.mxu0 0
    %6281 = vmatpush1.bf16.msra.mxu0 %v6259
    %6282 = vmatprep.subr.bf16.mxu0 0
    %6283 = vmatpush1.bf16.msra.mxu0 %v6260
    %6284 = vmatprep.subr.bf16.mxu0 0
    %6285 = vmatpush1.bf16.msra.mxu0 %v6261
    %6286 = vmatprep.subr.bf16.mxu0 0
    %6287 = vmatpush1.bf16.msra.mxu0 0
    %6288 = vmatprep.subr.bf16.mxu0 0
    %6289 = vmatpush1.bf16.msra.mxu0 0
    %6290 = vmatprep.subr.bf16.mxu0 0
    %6291 = vmatpush1.bf16.msra.mxu0 0
    %6292 = vmatprep.subr.bf16.mxu0 0
    %6293 = vmatpush1.bf16.msra.mxu0 0
    %6294 = vmatprep.subr.bf16.mxu0 0
    %6295 = vmatpush1.bf16.msra.mxu0 0
    %6296 = vmatprep.subr.bf16.mxu0 0
    %6297 = vmatpush1.bf16.msra.mxu0 0
    %6298 = vmatprep.subr.bf16.mxu0 0
    %6299 = vmatpush1.bf16.msra.mxu0 0
    %6300 = vmatprep.subr.bf16.mxu0 0
    %6301 = vmatpush1.bf16.msra.mxu0 0
    %6302 = vmatprep.mubr.bf16.mxu0 0
    %6303 = vmatmul.mubr.bf16.gmra.mrb[0].mxu0 %v5635
    %v6304 = vpop.f32.mrb[0].mxu0
    %v6305 = vadd.f32 %v6217, %v6304
    %v6306 = vpop.f32.mrb[0].mxu0
    %v6307 = vpop.f32.mrb[0].mxu0
    %v6308 = vpop.f32.mrb[0].mxu0
    %6309 = vdwg.mxu0
    %v6310 = vld [vmem:[%s2] sm:$0x1]
    %v6312 = vlaneseq
    %v6313 = vshrl.u32 %v6312, 7
    %v6314 = vsub.s32 0, %v6313
    %v6315 = vrot.slane %v6310, %v6314
    %v6317 = vadd.f32 %v6305, %v6315
    %v6318 = vmax.f32 %v6317, 0.0
    %v6319 = vpack.c.bf16 %v6318, %v6318
    %v6321 = vunpack.c.l.b16 %v6319
    %v6322 = vpack.c.b16 %v6321, %v6321
    %v6324 = vshrl.u32 %v6322, 16
    %v6326 = vrot.slane %v6324, 7
    %v6327 = vshll.u32 %v6322, 16
    %v6329 = vor.u32 %v6326, %v6327
    %v6331 = vld [vmem:[#allocation2 + $0x4] sm:$0x7]
    %v6332 = vsel %vm794, %v6329, %v6331
    %6333 = vst [vmem:[#allocation2 + $0x4] sm:$0x7] %v6332
    %v6334 = vld [vmem:[%s4945 + $0x4] sm:$0x77]
    %v6335 = vld [vmem:[%s4945 + $0xc] sm:$0x77]
    %v6336 = vld [vmem:[%s4945 + $0x14] sm:$0x77]
    %v6337 = vld [vmem:[%s4945 + $0x1c] sm:$0x7]
    %v6338 = vld [vmem:[#allocation4] sm:$0xf]
    %v6339 = vld [vmem:[#allocation4 + $0x4] sm:$0xf]
    %v6340 = vld [vmem:[#allocation4 + $0x8] sm:$0xf]
    %v6341 = vld [vmem:[#allocation4 + $0xc] sm:$0xf]
    %v6342 = vld [vmem:[#allocation4 + $0x10] sm:$0xf]
    %v6343 = vld [vmem:[#allocation4 + $0x14] sm:$0xf]
    %v6344 = vld [vmem:[#allocation4 + $0x18] sm:$0xf]
    %v6345 = vld [vmem:[#allocation4 + $0x1c] sm:$0xf]
    %v6346 = vld [vmem:[#allocation4 + $0x20] sm:$0xf]
    %v6347 = vld [vmem:[#allocation4 + $0x24] sm:$0xf]
    %v6348 = vld [vmem:[#allocation4 + $0x28] sm:$0xf]
    %v6349 = vld [vmem:[#allocation4 + $0x2c] sm:$0xf]
    %v6350 = vld [vmem:[#allocation4 + $0x30] sm:$0xf]
    %v6351 = vld [vmem:[#allocation4 + $0x34] sm:$0xf]
    %v6352 = vld [vmem:[#allocation4 + $0x38] sm:$0xf]
    %v6353 = vld [vmem:[#allocation4 + $0x3c] sm:$0xf]
    %v6354 = vld [vmem:[#allocation4 + $0x40] sm:$0xf]
    %v6355 = vld [vmem:[#allocation4 + $0x44] sm:$0xf]
    %v6356 = vld [vmem:[#allocation4 + $0x48] sm:$0xf]
    %v6357 = vld [vmem:[#allocation4 + $0x4c] sm:$0xf]
    %v6358 = vld [vmem:[#allocation4 + $0x50] sm:$0xf]
    %v6359 = vld [vmem:[#allocation4 + $0x54] sm:$0xf]
    %v6360 = vld [vmem:[#allocation4 + $0x58] sm:$0xf]
    %v6361 = vld [vmem:[#allocation4 + $0x5c] sm:$0xf]
    %v6362 = vld [vmem:[#allocation4 + $0x60] sm:$0xf]
    %v6363 = vld [vmem:[#allocation4 + $0x64] sm:$0xf]
    %v6364 = vld [vmem:[#allocation4 + $0x68] sm:$0xf]
    %v6365 = vld [vmem:[#allocation4 + $0x6c] sm:$0xf]
    %v6366 = vld [vmem:[#allocation4 + $0x70] sm:$0xf]
    %v6367 = vld [vmem:[#allocation4 + $0x74] sm:$0xf]
    %v6368 = vld [vmem:[#allocation4 + $0x78] sm:$0xf]
    %v6369 = vld [vmem:[#allocation4 + $0x7c] sm:$0xf]
    %v6370 = vld [vmem:[#allocation4 + $0x80] sm:$0xf]
    %v6371 = vld [vmem:[#allocation4 + $0x84] sm:$0xf]
    %v6372 = vld [vmem:[#allocation4 + $0x88] sm:$0xf]
    %v6373 = vld [vmem:[#allocation4 + $0x8c] sm:$0xf]
    %v6374 = vld [vmem:[#allocation4 + $0x90] sm:$0xf]
    %v6375 = vld [vmem:[#allocation4 + $0x94] sm:$0xf]
    %v6376 = vld [vmem:[#allocation4 + $0x98] sm:$0xf]
    %v6377 = vld [vmem:[#allocation4 + $0x9c] sm:$0xf]
    %v6378 = vld [vmem:[#allocation4 + $0xa0] sm:$0xf]
    %v6379 = vld [vmem:[#allocation4 + $0xa4] sm:$0xf]
    %v6380 = vld [vmem:[#allocation4 + $0xa8] sm:$0xf]
    %v6381 = vld [vmem:[#allocation4 + $0xac] sm:$0xf]
    %v6382 = vld [vmem:[#allocation4 + $0xb0] sm:$0xf]
    %v6383 = vld [vmem:[#allocation4 + $0xb4] sm:$0xf]
    %v6384 = vld [vmem:[#allocation4 + $0xb8] sm:$0xf]
    %v6385 = vld [vmem:[#allocation4 + $0xbc] sm:$0xf]
    %v6386 = vld [vmem:[#allocation4 + $0xc0] sm:$0xf]
    %v6387 = vld [vmem:[#allocation4 + $0xc4] sm:$0xf]
    %v6388 = vld [vmem:[#allocation4 + $0xc8] sm:$0xf]
    %v6389 = vld [vmem:[#allocation4 + $0xcc] sm:$0xf]
    %v6390 = vld [vmem:[#allocation4 + $0xd0] sm:$0xf]
    %v6391 = vld [vmem:[#allocation4 + $0xd4] sm:$0xf]
    %v6392 = vld [vmem:[#allocation4 + $0xd8] sm:$0xf]
    %v6393 = vld [vmem:[#allocation4 + $0xdc] sm:$0xf]
    %v6394 = vld [vmem:[#allocation4 + $0xe0] sm:$0xf]
    %v6395 = vld [vmem:[#allocation4 + $0xe4] sm:$0xf]
    %v6396 = vld [vmem:[#allocation4 + $0xe8] sm:$0xf]
    %v6397 = vld [vmem:[#allocation4 + $0xec] sm:$0xf]
    %v6398 = vld [vmem:[#allocation4 + $0xf0] sm:$0xf]
    %v6399 = vld [vmem:[#allocation4 + $0xf4] sm:$0xf]
    %v6400 = vld [vmem:[#allocation4 + $0xf8] sm:$0xf]
    %v6401 = vld [vmem:[#allocation4 + $0xfc] sm:$0xf]
    %v6402 = vld [vmem:[#allocation4 + $0x100] sm:$0xf]
    %v6403 = vld [vmem:[#allocation4 + $0x104] sm:$0xf]
    %v6404 = vld [vmem:[#allocation4 + $0x108] sm:$0xf]
    %v6405 = vld [vmem:[#allocation4 + $0x10c] sm:$0xf]
    %v6406 = vld [vmem:[#allocation4 + $0x110] sm:$0xf]
    %v6407 = vld [vmem:[#allocation4 + $0x114] sm:$0xf]
    %v6408 = vld [vmem:[#allocation4 + $0x118] sm:$0xf]
    %v6409 = vld [vmem:[#allocation4 + $0x11c] sm:$0xf]
    %v6410 = vld [vmem:[#allocation4 + $0x120] sm:$0xf]
    %v6411 = vld [vmem:[#allocation4 + $0x124] sm:$0xf]
    %v6412 = vld [vmem:[#allocation4 + $0x128] sm:$0xf]
    %v6413 = vld [vmem:[#allocation4 + $0x12c] sm:$0xf]
    %v6414 = vld [vmem:[#allocation4 + $0x130] sm:$0xf]
    %v6415 = vld [vmem:[#allocation4 + $0x134] sm:$0xf]
    %v6416 = vld [vmem:[#allocation4 + $0x138] sm:$0xf]
    %v6417 = vld [vmem:[#allocation4 + $0x13c] sm:$0xf]
    %v6418 = vld [vmem:[#allocation4 + $0x140] sm:$0xf]
    %v6419 = vld [vmem:[#allocation4 + $0x144] sm:$0xf]
    %v6420 = vld [vmem:[#allocation4 + $0x148] sm:$0xf]
    %v6421 = vld [vmem:[#allocation4 + $0x14c] sm:$0xf]
    %v6422 = vld [vmem:[#allocation4 + $0x150] sm:$0xf]
    %v6423 = vld [vmem:[#allocation4 + $0x154] sm:$0xf]
    %v6424 = vld [vmem:[#allocation4 + $0x158] sm:$0xf]
    %v6425 = vld [vmem:[#allocation4 + $0x15c] sm:$0xf]
    %v6426 = vld [vmem:[#allocation4 + $0x160] sm:$0xf]
    %v6427 = vld [vmem:[#allocation4 + $0x164] sm:$0xf]
    %v6428 = vld [vmem:[#allocation4 + $0x168] sm:$0xf]
    %v6429 = vld [vmem:[#allocation4 + $0x16c] sm:$0xf]
    %v6430 = vld [vmem:[#allocation4 + $0x170] sm:$0xf]
    %v6431 = vld [vmem:[#allocation4 + $0x174] sm:$0xf]
    %v6432 = vld [vmem:[#allocation4 + $0x178] sm:$0xf]
    %v6433 = vld [vmem:[#allocation4 + $0x17c] sm:$0xf]
    %v6434 = vld [vmem:[#allocation4 + $0x180] sm:$0xf]
    %v6435 = vld [vmem:[#allocation4 + $0x184] sm:$0xf]
    %v6436 = vld [vmem:[#allocation4 + $0x188] sm:$0xf]
    %v6437 = vld [vmem:[#allocation4 + $0x18c] sm:$0xf]
    %v6438 = vld [vmem:[#allocation4 + $0x190] sm:$0xf]
    %v6439 = vld [vmem:[#allocation4 + $0x194] sm:$0xf]
    %v6440 = vld [vmem:[#allocation4 + $0x198] sm:$0xf]
    %v6441 = vld [vmem:[#allocation4 + $0x19c] sm:$0xf]
    %v6442 = vld [vmem:[#allocation4 + $0x1a0] sm:$0xf]
    %v6443 = vld [vmem:[#allocation4 + $0x1a4] sm:$0xf]
    %v6444 = vld [vmem:[#allocation4 + $0x1a8] sm:$0xf]
    %v6445 = vld [vmem:[#allocation4 + $0x1ac] sm:$0xf]
    %v6446 = vld [vmem:[#allocation4 + $0x1b0] sm:$0xf]
    %v6447 = vld [vmem:[#allocation4 + $0x1b4] sm:$0xf]
    %v6448 = vld [vmem:[#allocation4 + $0x1b8] sm:$0xf]
    %v6449 = vld [vmem:[#allocation4 + $0x1bc] sm:$0xf]
    %v6450 = vld [vmem:[%s2] sm:$0x1]
    %v6452 = vlaneseq
    %v6453 = vshrl.u32 %v6452, 7
    %v6454 = vsub.s32 0, %v6453
    %v6455 = vrot.slane %v6450, %v6454
    %v6461 = vunpack.c.l.b16 %v6334
    %v6462 = vunpack.c.h.b16 %v6334
    %v6463 = vunpack.c.l.b16 %v6335
    %v6464 = vunpack.c.h.b16 %v6335
    %v6465 = vunpack.c.l.b16 %v6336
    %v6466 = vunpack.c.h.b16 %v6336
    %v6467 = vunpack.c.l.b16 %v6337
    %v6468 = vpack.c.b16 %v6461, %v6461
    %v6469 = vpack.c.b16 %v6462, %v6462
    %v6470 = vpack.c.b16 %v6463, %v6463
    %v6471 = vpack.c.b16 %v6464, %v6464
    %v6472 = vpack.c.b16 %v6465, %v6465
    %v6473 = vpack.c.b16 %v6466, %v6466
    %v6474 = vpack.c.b16 %v6467, %v6467
    %v6476 = vshrl.u32 %v6468, 16
    %v6478 = vshll.u32 %v6468, 16
    %v6480 = vrot.slane %v6478, 1
    %v6481 = vor.u32 %v6476, %v6480
    %v6483 = vshrl.u32 %v6469, 16
    %v6485 = vshll.u32 %v6469, 16
    %v6487 = vrot.slane %v6485, 1
    %v6488 = vor.u32 %v6483, %v6487
    %v6490 = vshrl.u32 %v6470, 16
    %v6492 = vshll.u32 %v6470, 16
    %v6494 = vrot.slane %v6492, 1
    %v6495 = vor.u32 %v6490, %v6494
    %v6497 = vshrl.u32 %v6471, 16
    %v6499 = vshll.u32 %v6471, 16
    %v6501 = vrot.slane %v6499, 1
    %v6502 = vor.u32 %v6497, %v6501
    %v6504 = vshrl.u32 %v6472, 16
    %v6506 = vshll.u32 %v6472, 16
    %v6508 = vrot.slane %v6506, 1
    %v6509 = vor.u32 %v6504, %v6508
    %v6511 = vshrl.u32 %v6473, 16
    %v6513 = vshll.u32 %v6473, 16
    %v6515 = vrot.slane %v6513, 1
    %v6516 = vor.u32 %v6511, %v6515
    %v6518 = vshrl.u32 %v6474, 16
    %v6520 = vshll.u32 %v6474, 16
    %v6522 = vrot.slane %v6520, 1
    %v6523 = vor.u32 %v6518, %v6522
    %v6643 = vunpack.c.l.b16 %v6338
    %v6644 = vunpack.c.l.b16 %v6339
    %v6645 = vunpack.c.l.b16 %v6340
    %v6646 = vunpack.c.l.b16 %v6341
    %v6647 = vunpack.c.l.b16 %v6342
    %v6648 = vunpack.c.l.b16 %v6343
    %v6649 = vunpack.c.l.b16 %v6344
    %v6650 = vunpack.c.l.b16 %v6345
    %v6651 = vunpack.c.l.b16 %v6346
    %v6652 = vunpack.c.l.b16 %v6347
    %v6653 = vunpack.c.l.b16 %v6348
    %v6654 = vunpack.c.l.b16 %v6349
    %v6655 = vunpack.c.l.b16 %v6350
    %v6656 = vunpack.c.l.b16 %v6351
    %v6657 = vunpack.c.l.b16 %v6352
    %v6658 = vunpack.c.l.b16 %v6353
    %v6659 = vunpack.c.l.b16 %v6354
    %v6660 = vunpack.c.l.b16 %v6355
    %v6661 = vunpack.c.l.b16 %v6356
    %v6662 = vunpack.c.l.b16 %v6357
    %v6663 = vunpack.c.l.b16 %v6358
    %v6664 = vunpack.c.l.b16 %v6359
    %v6665 = vunpack.c.l.b16 %v6360
    %v6666 = vunpack.c.l.b16 %v6361
    %v6667 = vunpack.c.l.b16 %v6362
    %v6668 = vunpack.c.l.b16 %v6363
    %v6669 = vunpack.c.l.b16 %v6364
    %v6670 = vunpack.c.l.b16 %v6365
    %v6671 = vunpack.c.l.b16 %v6366
    %v6672 = vunpack.c.l.b16 %v6367
    %v6673 = vunpack.c.l.b16 %v6368
    %v6674 = vunpack.c.l.b16 %v6369
    %v6675 = vunpack.c.l.b16 %v6370
    %v6676 = vunpack.c.l.b16 %v6371
    %v6677 = vunpack.c.l.b16 %v6372
    %v6678 = vunpack.c.l.b16 %v6373
    %v6679 = vunpack.c.l.b16 %v6374
    %v6680 = vunpack.c.l.b16 %v6375
    %v6681 = vunpack.c.l.b16 %v6376
    %v6682 = vunpack.c.l.b16 %v6377
    %v6683 = vunpack.c.l.b16 %v6378
    %v6684 = vunpack.c.l.b16 %v6379
    %v6685 = vunpack.c.l.b16 %v6380
    %v6686 = vunpack.c.l.b16 %v6381
    %v6687 = vunpack.c.l.b16 %v6382
    %v6688 = vunpack.c.l.b16 %v6383
    %v6689 = vunpack.c.l.b16 %v6384
    %v6690 = vunpack.c.l.b16 %v6385
    %v6691 = vunpack.c.l.b16 %v6386
    %v6692 = vunpack.c.l.b16 %v6387
    %v6693 = vunpack.c.l.b16 %v6388
    %v6694 = vunpack.c.l.b16 %v6389
    %v6695 = vunpack.c.l.b16 %v6390
    %v6696 = vunpack.c.l.b16 %v6391
    %v6697 = vunpack.c.l.b16 %v6392
    %v6698 = vunpack.c.l.b16 %v6393
    %v6699 = vunpack.c.l.b16 %v6394
    %v6700 = vunpack.c.l.b16 %v6395
    %v6701 = vunpack.c.l.b16 %v6396
    %v6702 = vunpack.c.l.b16 %v6397
    %v6703 = vunpack.c.l.b16 %v6398
    %v6704 = vunpack.c.l.b16 %v6399
    %v6705 = vunpack.c.l.b16 %v6400
    %v6706 = vunpack.c.l.b16 %v6401
    %v6707 = vunpack.c.l.b16 %v6402
    %v6708 = vunpack.c.l.b16 %v6403
    %v6709 = vunpack.c.l.b16 %v6404
    %v6710 = vunpack.c.l.b16 %v6405
    %v6711 = vunpack.c.l.b16 %v6406
    %v6712 = vunpack.c.l.b16 %v6407
    %v6713 = vunpack.c.l.b16 %v6408
    %v6714 = vunpack.c.l.b16 %v6409
    %v6715 = vunpack.c.l.b16 %v6410
    %v6716 = vunpack.c.l.b16 %v6411
    %v6717 = vunpack.c.l.b16 %v6412
    %v6718 = vunpack.c.l.b16 %v6413
    %v6719 = vunpack.c.l.b16 %v6414
    %v6720 = vunpack.c.l.b16 %v6415
    %v6721 = vunpack.c.l.b16 %v6416
    %v6722 = vunpack.c.l.b16 %v6417
    %v6723 = vunpack.c.l.b16 %v6418
    %v6724 = vunpack.c.l.b16 %v6419
    %v6725 = vunpack.c.l.b16 %v6420
    %v6726 = vunpack.c.l.b16 %v6421
    %v6727 = vunpack.c.l.b16 %v6422
    %v6728 = vunpack.c.l.b16 %v6423
    %v6729 = vunpack.c.l.b16 %v6424
    %v6730 = vunpack.c.l.b16 %v6425
    %v6731 = vunpack.c.l.b16 %v6426
    %v6732 = vunpack.c.l.b16 %v6427
    %v6733 = vunpack.c.l.b16 %v6428
    %v6734 = vunpack.c.l.b16 %v6429
    %v6735 = vunpack.c.l.b16 %v6430
    %v6736 = vunpack.c.l.b16 %v6431
    %v6737 = vunpack.c.l.b16 %v6432
    %v6738 = vunpack.c.l.b16 %v6433
    %v6739 = vunpack.c.l.b16 %v6434
    %v6740 = vunpack.c.l.b16 %v6435
    %v6741 = vunpack.c.l.b16 %v6436
    %v6742 = vunpack.c.l.b16 %v6437
    %v6743 = vunpack.c.l.b16 %v6438
    %v6744 = vunpack.c.l.b16 %v6439
    %v6745 = vunpack.c.l.b16 %v6440
    %v6746 = vunpack.c.l.b16 %v6441
    %v6747 = vunpack.c.l.b16 %v6442
    %v6748 = vunpack.c.l.b16 %v6443
    %v6749 = vunpack.c.l.b16 %v6444
    %v6750 = vunpack.c.l.b16 %v6445
    %v6751 = vunpack.c.l.b16 %v6446
    %v6752 = vunpack.c.l.b16 %v6447
    %v6753 = vunpack.c.l.b16 %v6448
    %v6754 = vunpack.c.l.b16 %v6449
    %v6755 = vpack.c.b16 %v6644, %v6643
    %v6756 = vpack.c.b16 %v6646, %v6645
    %v6757 = vpack.c.b16 %v6648, %v6647
    %v6758 = vpack.c.b16 %v6650, %v6649
    %v6759 = vpack.c.b16 %v6652, %v6651
    %v6760 = vpack.c.b16 %v6654, %v6653
    %v6761 = vpack.c.b16 %v6656, %v6655
    %v6762 = vpack.c.b16 %v6658, %v6657
    %v6763 = vpack.c.b16 %v6660, %v6659
    %v6764 = vpack.c.b16 %v6662, %v6661
    %v6765 = vpack.c.b16 %v6664, %v6663
    %v6766 = vpack.c.b16 %v6666, %v6665
    %v6767 = vpack.c.b16 %v6668, %v6667
    %v6768 = vpack.c.b16 %v6670, %v6669
    %v6769 = vpack.c.b16 %v6672, %v6671
    %v6770 = vpack.c.b16 %v6674, %v6673
    %v6771 = vpack.c.b16 %v6676, %v6675
    %v6772 = vpack.c.b16 %v6678, %v6677
    %v6773 = vpack.c.b16 %v6680, %v6679
    %v6774 = vpack.c.b16 %v6682, %v6681
    %v6775 = vpack.c.b16 %v6684, %v6683
    %v6776 = vpack.c.b16 %v6686, %v6685
    %v6777 = vpack.c.b16 %v6688, %v6687
    %v6778 = vpack.c.b16 %v6690, %v6689
    %v6779 = vpack.c.b16 %v6692, %v6691
    %v6780 = vpack.c.b16 %v6694, %v6693
    %v6781 = vpack.c.b16 %v6696, %v6695
    %v6782 = vpack.c.b16 %v6698, %v6697
    %v6783 = vpack.c.b16 %v6700, %v6699
    %v6784 = vpack.c.b16 %v6702, %v6701
    %v6785 = vpack.c.b16 %v6704, %v6703
    %v6786 = vpack.c.b16 %v6706, %v6705
    %v6787 = vpack.c.b16 %v6708, %v6707
    %v6788 = vpack.c.b16 %v6710, %v6709
    %v6789 = vpack.c.b16 %v6712, %v6711
    %v6790 = vpack.c.b16 %v6714, %v6713
    %v6791 = vpack.c.b16 %v6716, %v6715
    %v6792 = vpack.c.b16 %v6718, %v6717
    %v6793 = vpack.c.b16 %v6720, %v6719
    %v6794 = vpack.c.b16 %v6722, %v6721
    %v6795 = vpack.c.b16 %v6724, %v6723
    %v6796 = vpack.c.b16 %v6726, %v6725
    %v6797 = vpack.c.b16 %v6728, %v6727
    %v6798 = vpack.c.b16 %v6730, %v6729
    %v6799 = vpack.c.b16 %v6732, %v6731
    %v6800 = vpack.c.b16 %v6734, %v6733
    %v6801 = vpack.c.b16 %v6736, %v6735
    %v6802 = vpack.c.b16 %v6738, %v6737
    %v6803 = vpack.c.b16 %v6740, %v6739
    %v6804 = vpack.c.b16 %v6742, %v6741
    %v6805 = vpack.c.b16 %v6744, %v6743
    %v6806 = vpack.c.b16 %v6746, %v6745
    %v6807 = vpack.c.b16 %v6748, %v6747
    %v6808 = vpack.c.b16 %v6750, %v6749
    %v6809 = vpack.c.b16 %v6752, %v6751
    %v6810 = vpack.c.b16 %v6754, %v6753
    %6867 = vmatprep.subr.bf16.mxu0 0
    %6868 = vmatpush1.bf16.msra.mxu0 %v6755
    %6869 = vmatprep.subr.bf16.mxu0 0
    %6870 = vmatpush1.bf16.msra.mxu0 %v6756
    %6871 = vmatprep.subr.bf16.mxu0 0
    %6872 = vmatpush1.bf16.msra.mxu0 %v6757
    %6873 = vmatprep.subr.bf16.mxu0 0
    %6874 = vmatpush1.bf16.msra.mxu0 %v6758
    %6875 = vmatprep.subr.bf16.mxu0 0
    %6876 = vmatpush1.bf16.msra.mxu0 %v6759
    %6877 = vmatprep.subr.bf16.mxu0 0
    %6878 = vmatpush1.bf16.msra.mxu0 %v6760
    %6879 = vmatprep.subr.bf16.mxu0 0
    %6880 = vmatpush1.bf16.msra.mxu0 %v6761
    %6881 = vmatprep.subr.bf16.mxu0 0
    %6882 = vmatpush1.bf16.msra.mxu0 %v6762
    %6883 = vmatprep.subr.bf16.mxu0 0
    %6884 = vmatpush1.bf16.msra.mxu0 %v6763
    %6885 = vmatprep.subr.bf16.mxu0 0
    %6886 = vmatpush1.bf16.msra.mxu0 %v6764
    %6887 = vmatprep.subr.bf16.mxu0 0
    %6888 = vmatpush1.bf16.msra.mxu0 %v6765
    %6889 = vmatprep.subr.bf16.mxu0 0
    %6890 = vmatpush1.bf16.msra.mxu0 %v6766
    %6891 = vmatprep.subr.bf16.mxu0 0
    %6892 = vmatpush1.bf16.msra.mxu0 %v6767
    %6893 = vmatprep.subr.bf16.mxu0 0
    %6894 = vmatpush1.bf16.msra.mxu0 %v6768
    %6895 = vmatprep.subr.bf16.mxu0 0
    %6896 = vmatpush1.bf16.msra.mxu0 %v6769
    %6897 = vmatprep.subr.bf16.mxu0 0
    %6898 = vmatpush1.bf16.msra.mxu0 %v6770
    %6899 = vmatprep.mubr.bf16.mxu0 %v6488
    %6900 = vmatmul.mubr.bf16.gmra.mrb[0].mxu0 %v6481
    %v6901 = vpop.f32.mrb[0].mxu0
    %v6902 = vadd.f32 %v6455, %v6901
    %v6903 = vpop.f32.mrb[0].mxu0
    %v6904 = vpop.f32.mrb[0].mxu0
    %v6905 = vpop.f32.mrb[0].mxu0
    %6906 = vdwg.mxu0
    %6907 = vmatprep.subr.bf16.mxu0 0
    %6908 = vmatpush1.bf16.msra.mxu0 %v6771
    %6909 = vmatprep.subr.bf16.mxu0 0
    %6910 = vmatpush1.bf16.msra.mxu0 %v6772
    %6911 = vmatprep.subr.bf16.mxu0 0
    %6912 = vmatpush1.bf16.msra.mxu0 %v6773
    %6913 = vmatprep.subr.bf16.mxu0 0
    %6914 = vmatpush1.bf16.msra.mxu0 %v6774
    %6915 = vmatprep.subr.bf16.mxu0 0
    %6916 = vmatpush1.bf16.msra.mxu0 %v6775
    %6917 = vmatprep.subr.bf16.mxu0 0
    %6918 = vmatpush1.bf16.msra.mxu0 %v6776
    %6919 = vmatprep.subr.bf16.mxu0 0
    %6920 = vmatpush1.bf16.msra.mxu0 %v6777
    %6921 = vmatprep.subr.bf16.mxu0 0
    %6922 = vmatpush1.bf16.msra.mxu0 %v6778
    %6923 = vmatprep.subr.bf16.mxu0 0
    %6924 = vmatpush1.bf16.msra.mxu0 %v6779
    %6925 = vmatprep.subr.bf16.mxu0 0
    %6926 = vmatpush1.bf16.msra.mxu0 %v6780
    %6927 = vmatprep.subr.bf16.mxu0 0
    %6928 = vmatpush1.bf16.msra.mxu0 %v6781
    %6929 = vmatprep.subr.bf16.mxu0 0
    %6930 = vmatpush1.bf16.msra.mxu0 %v6782
    %6931 = vmatprep.subr.bf16.mxu0 0
    %6932 = vmatpush1.bf16.msra.mxu0 %v6783
    %6933 = vmatprep.subr.bf16.mxu0 0
    %6934 = vmatpush1.bf16.msra.mxu0 %v6784
    %6935 = vmatprep.subr.bf16.mxu0 0
    %6936 = vmatpush1.bf16.msra.mxu0 %v6785
    %6937 = vmatprep.subr.bf16.mxu0 0
    %6938 = vmatpush1.bf16.msra.mxu0 %v6786
    %6939 = vmatprep.mubr.bf16.mxu0 %v6502
    %6940 = vmatmul.mubr.bf16.gmra.mrb[0].mxu0 %v6495
    %v6941 = vpop.f32.mrb[0].mxu0
    %v6942 = vadd.f32 %v6902, %v6941
    %v6943 = vpop.f32.mrb[0].mxu0
    %v6944 = vpop.f32.mrb[0].mxu0
    %v6945 = vpop.f32.mrb[0].mxu0
    %6946 = vdwg.mxu0
    %6947 = vmatprep.subr.bf16.mxu0 0
    %6948 = vmatpush1.bf16.msra.mxu0 %v6787
    %6949 = vmatprep.subr.bf16.mxu0 0
    %6950 = vmatpush1.bf16.msra.mxu0 %v6788
    %6951 = vmatprep.subr.bf16.mxu0 0
    %6952 = vmatpush1.bf16.msra.mxu0 %v6789
    %6953 = vmatprep.subr.bf16.mxu0 0
    %6954 = vmatpush1.bf16.msra.mxu0 %v6790
    %6955 = vmatprep.subr.bf16.mxu0 0
    %6956 = vmatpush1.bf16.msra.mxu0 %v6791
    %6957 = vmatprep.subr.bf16.mxu0 0
    %6958 = vmatpush1.bf16.msra.mxu0 %v6792
    %6959 = vmatprep.subr.bf16.mxu0 0
    %6960 = vmatpush1.bf16.msra.mxu0 %v6793
    %6961 = vmatprep.subr.bf16.mxu0 0
    %6962 = vmatpush1.bf16.msra.mxu0 %v6794
    %6963 = vmatprep.subr.bf16.mxu0 0
    %6964 = vmatpush1.bf16.msra.mxu0 %v6795
    %6965 = vmatprep.subr.bf16.mxu0 0
    %6966 = vmatpush1.bf16.msra.mxu0 %v6796
    %6967 = vmatprep.subr.bf16.mxu0 0
    %6968 = vmatpush1.bf16.msra.mxu0 %v6797
    %6969 = vmatprep.subr.bf16.mxu0 0
    %6970 = vmatpush1.bf16.msra.mxu0 %v6798
    %6971 = vmatprep.subr.bf16.mxu0 0
    %6972 = vmatpush1.bf16.msra.mxu0 %v6799
    %6973 = vmatprep.subr.bf16.mxu0 0
    %6974 = vmatpush1.bf16.msra.mxu0 %v6800
    %6975 = vmatprep.subr.bf16.mxu0 0
    %6976 = vmatpush1.bf16.msra.mxu0 %v6801
    %6977 = vmatprep.subr.bf16.mxu0 0
    %6978 = vmatpush1.bf16.msra.mxu0 %v6802
    %6979 = vmatprep.mubr.bf16.mxu0 %v6516
    %6980 = vmatmul.mubr.bf16.gmra.mrb[0].mxu0 %v6509
    %v6981 = vpop.f32.mrb[0].mxu0
    %v6982 = vadd.f32 %v6942, %v6981
    %v6983 = vpop.f32.mrb[0].mxu0
    %v6984 = vpop.f32.mrb[0].mxu0
    %v6985 = vpop.f32.mrb[0].mxu0
    %6986 = vdwg.mxu0
    %6987 = vmatprep.subr.bf16.mxu0 0
    %6988 = vmatpush1.bf16.msra.mxu0 %v6803
    %6989 = vmatprep.subr.bf16.mxu0 0
    %6990 = vmatpush1.bf16.msra.mxu0 %v6804
    %6991 = vmatprep.subr.bf16.mxu0 0
    %6992 = vmatpush1.bf16.msra.mxu0 %v6805
    %6993 = vmatprep.subr.bf16.mxu0 0
    %6994 = vmatpush1.bf16.msra.mxu0 %v6806
    %6995 = vmatprep.subr.bf16.mxu0 0
    %6996 = vmatpush1.bf16.msra.mxu0 %v6807
    %6997 = vmatprep.subr.bf16.mxu0 0
    %6998 = vmatpush1.bf16.msra.mxu0 %v6808
    %6999 = vmatprep.subr.bf16.mxu0 0
    %7000 = vmatpush1.bf16.msra.mxu0 %v6809
    %7001 = vmatprep.subr.bf16.mxu0 0
    %7002 = vmatpush1.bf16.msra.mxu0 %v6810
    %7003 = vmatprep.subr.bf16.mxu0 0
    %7004 = vmatpush1.bf16.msra.mxu0 0
    %7005 = vmatprep.subr.bf16.mxu0 0
    %7006 = vmatpush1.bf16.msra.mxu0 0
    %7007 = vmatprep.subr.bf16.mxu0 0
    %7008 = vmatpush1.bf16.msra.mxu0 0
    %7009 = vmatprep.subr.bf16.mxu0 0
    %7010 = vmatpush1.bf16.msra.mxu0 0
    %7011 = vmatprep.subr.bf16.mxu0 0
    %7012 = vmatpush1.bf16.msra.mxu0 0
    %7013 = vmatprep.subr.bf16.mxu0 0
    %7014 = vmatpush1.bf16.msra.mxu0 0
    %7015 = vmatprep.subr.bf16.mxu0 0
    %7016 = vmatpush1.bf16.msra.mxu0 0
    %7017 = vmatprep.subr.bf16.mxu0 0
    %7018 = vmatpush1.bf16.msra.mxu0 0
    %7019 = vmatprep.mubr.bf16.mxu0 0
    %7020 = vmatmul.mubr.bf16.gmra.mrb[0].mxu0 %v6523
    %v7021 = vpop.f32.mrb[0].mxu0
    %v7022 = vadd.f32 %v6982, %v7021
    %v7023 = vpop.f32.mrb[0].mxu0
    %v7024 = vpop.f32.mrb[0].mxu0
    %v7025 = vpop.f32.mrb[0].mxu0
    %7026 = vdwg.mxu0
    %v7027 = vmax.f32 %v7022, 0.0
    %v7028 = vpack.c.bf16 %v7027, %v7027
    %v7030 = vunpack.c.l.b16 %v7028
    %v7031 = vpack.c.b16 %v7030, %v7030
    %v7033 = vshrl.u32 %v7031, 16
    %v7035 = vrot.slane %v7033, 7
    %v7036 = vshll.u32 %v7031, 16
    %v7038 = vor.u32 %v7035, %v7036
    %v7040 = vld [vmem:[#allocation2 + $0x8] sm:$0x7]
    %v7041 = vsel %vm794, %v7038, %v7040
    %7042 = vst [vmem:[#allocation2 + $0x8] sm:$0x7] %v7041
    %v7043 = vld [vmem:[%s4945 + $0xc] sm:$0x77]
    %v7044 = vld [vmem:[%s4945 + $0x14] sm:$0x77]
    %v7045 = vld [vmem:[%s4945 + $0x1c] sm:$0x7]
    %v7046 = vld [vmem:[#allocation4] sm:$0xf]
    %v7047 = vld [vmem:[#allocation4 + $0x4] sm:$0xf]
    %v7048 = vld [vmem:[#allocation4 + $0x8] sm:$0xf]
    %v7049 = vld [vmem:[#allocation4 + $0xc] sm:$0xf]
    %v7050 = vld [vmem:[#allocation4 + $0x10] sm:$0xf]
    %v7051 = vld [vmem:[#allocation4 + $0x14] sm:$0xf]
    %v7052 = vld [vmem:[#allocation4 + $0x18] sm:$0xf]
    %v7053 = vld [vmem:[#allocation4 + $0x1c] sm:$0xf]
    %v7054 = vld [vmem:[#allocation4 + $0x20] sm:$0xf]
    %v7055 = vld [vmem:[#allocation4 + $0x24] sm:$0xf]
    %v7056 = vld [vmem:[#allocation4 + $0x28] sm:$0xf]
    %v7057 = vld [vmem:[#allocation4 + $0x2c] sm:$0xf]
    %v7058 = vld [vmem:[#allocation4 + $0x30] sm:$0xf]
    %v7059 = vld [vmem:[#allocation4 + $0x34] sm:$0xf]
    %v7060 = vld [vmem:[#allocation4 + $0x38] sm:$0xf]
    %v7061 = vld [vmem:[#allocation4 + $0x3c] sm:$0xf]
    %v7062 = vld [vmem:[#allocation4 + $0x40] sm:$0xf]
    %v7063 = vld [vmem:[#allocation4 + $0x44] sm:$0xf]
    %v7064 = vld [vmem:[#allocation4 + $0x48] sm:$0xf]
    %v7065 = vld [vmem:[#allocation4 + $0x4c] sm:$0xf]
    %v7066 = vld [vmem:[#allocation4 + $0x50] sm:$0xf]
    %v7067 = vld [vmem:[#allocation4 + $0x54] sm:$0xf]
    %v7068 = vld [vmem:[#allocation4 + $0x58] sm:$0xf]
    %v7069 = vld [vmem:[#allocation4 + $0x5c] sm:$0xf]
    %v7070 = vld [vmem:[#allocation4 + $0x60] sm:$0xf]
    %v7071 = vld [vmem:[#allocation4 + $0x64] sm:$0xf]
    %v7072 = vld [vmem:[#allocation4 + $0x68] sm:$0xf]
    %v7073 = vld [vmem:[#allocation4 + $0x6c] sm:$0xf]
    %v7074 = vld [vmem:[#allocation4 + $0x70] sm:$0xf]
    %v7075 = vld [vmem:[#allocation4 + $0x74] sm:$0xf]
    %v7076 = vld [vmem:[#allocation4 + $0x78] sm:$0xf]
    %v7077 = vld [vmem:[#allocation4 + $0x7c] sm:$0xf]
    %v7078 = vld [vmem:[#allocation4 + $0x80] sm:$0xf]
    %v7079 = vld [vmem:[#allocation4 + $0x84] sm:$0xf]
    %v7080 = vld [vmem:[#allocation4 + $0x88] sm:$0xf]
    %v7081 = vld [vmem:[#allocation4 + $0x8c] sm:$0xf]
    %v7082 = vld [vmem:[#allocation4 + $0x90] sm:$0xf]
    %v7083 = vld [vmem:[#allocation4 + $0x94] sm:$0xf]
    %v7084 = vld [vmem:[#allocation4 + $0x98] sm:$0xf]
    %v7085 = vld [vmem:[#allocation4 + $0x9c] sm:$0xf]
    %v7086 = vld [vmem:[#allocation4 + $0xa0] sm:$0xf]
    %v7087 = vld [vmem:[#allocation4 + $0xa4] sm:$0xf]
    %v7088 = vld [vmem:[#allocation4 + $0xa8] sm:$0xf]
    %v7089 = vld [vmem:[#allocation4 + $0xac] sm:$0xf]
    %v7090 = vld [vmem:[#allocation4 + $0xb0] sm:$0xf]
    %v7091 = vld [vmem:[#allocation4 + $0xb4] sm:$0xf]
    %v7092 = vld [vmem:[#allocation4 + $0xb8] sm:$0xf]
    %v7093 = vld [vmem:[#allocation4 + $0xbc] sm:$0xf]
    %v7094 = vld [vmem:[#allocation4 + $0xc0] sm:$0xf]
    %v7095 = vld [vmem:[#allocation4 + $0xc4] sm:$0xf]
    %v7096 = vld [vmem:[#allocation4 + $0xc8] sm:$0xf]
    %v7097 = vld [vmem:[#allocation4 + $0xcc] sm:$0xf]
    %v7098 = vld [vmem:[#allocation4 + $0xd0] sm:$0xf]
    %v7099 = vld [vmem:[#allocation4 + $0xd4] sm:$0xf]
    %v7100 = vld [vmem:[#allocation4 + $0xd8] sm:$0xf]
    %v7101 = vld [vmem:[#allocation4 + $0xdc] sm:$0xf]
    %v7102 = vld [vmem:[#allocation4 + $0xe0] sm:$0xf]
    %v7103 = vld [vmem:[#allocation4 + $0xe4] sm:$0xf]
    %v7104 = vld [vmem:[#allocation4 + $0xe8] sm:$0xf]
    %v7105 = vld [vmem:[#allocation4 + $0xec] sm:$0xf]
    %v7106 = vld [vmem:[#allocation4 + $0xf0] sm:$0xf]
    %v7107 = vld [vmem:[#allocation4 + $0xf4] sm:$0xf]
    %v7108 = vld [vmem:[#allocation4 + $0xf8] sm:$0xf]
    %v7109 = vld [vmem:[#allocation4 + $0xfc] sm:$0xf]
    %v7110 = vld [vmem:[#allocation4 + $0x100] sm:$0xf]
    %v7111 = vld [vmem:[#allocation4 + $0x104] sm:$0xf]
    %v7112 = vld [vmem:[#allocation4 + $0x108] sm:$0xf]
    %v7113 = vld [vmem:[#allocation4 + $0x10c] sm:$0xf]
    %v7114 = vld [vmem:[#allocation4 + $0x110] sm:$0xf]
    %v7115 = vld [vmem:[#allocation4 + $0x114] sm:$0xf]
    %v7116 = vld [vmem:[#allocation4 + $0x118] sm:$0xf]
    %v7117 = vld [vmem:[#allocation4 + $0x11c] sm:$0xf]
    %v7118 = vld [vmem:[#allocation4 + $0x120] sm:$0xf]
    %v7119 = vld [vmem:[#allocation4 + $0x124] sm:$0xf]
    %v7120 = vld [vmem:[#allocation4 + $0x128] sm:$0xf]
    %v7121 = vld [vmem:[#allocation4 + $0x12c] sm:$0xf]
    %v7122 = vld [vmem:[#allocation4 + $0x130] sm:$0xf]
    %v7123 = vld [vmem:[#allocation4 + $0x134] sm:$0xf]
    %v7124 = vld [vmem:[#allocation4 + $0x138] sm:$0xf]
    %v7125 = vld [vmem:[#allocation4 + $0x13c] sm:$0xf]
    %v7126 = vld [vmem:[%s4945] sm:$0x66]
    %v7127 = vld [vmem:[#allocation4 + $0x140] sm:$0xf]
    %v7128 = vld [vmem:[#allocation4 + $0x144] sm:$0xf]
    %v7129 = vld [vmem:[#allocation4 + $0x148] sm:$0xf]
    %v7130 = vld [vmem:[#allocation4 + $0x14c] sm:$0xf]
    %v7131 = vld [vmem:[#allocation4 + $0x150] sm:$0xf]
    %v7132 = vld [vmem:[#allocation4 + $0x154] sm:$0xf]
    %v7133 = vld [vmem:[#allocation4 + $0x158] sm:$0xf]
    %v7134 = vld [vmem:[#allocation4 + $0x15c] sm:$0xf]
    %v7135 = vld [vmem:[#allocation4 + $0x160] sm:$0xf]
    %v7136 = vld [vmem:[#allocation4 + $0x164] sm:$0xf]
    %v7137 = vld [vmem:[#allocation4 + $0x168] sm:$0xf]
    %v7138 = vld [vmem:[#allocation4 + $0x16c] sm:$0xf]
    %v7139 = vld [vmem:[#allocation4 + $0x170] sm:$0xf]
    %v7140 = vld [vmem:[#allocation4 + $0x174] sm:$0xf]
    %v7141 = vld [vmem:[#allocation4 + $0x178] sm:$0xf]
    %v7142 = vld [vmem:[#allocation4 + $0x17c] sm:$0xf]
    %v7143 = vld [vmem:[#allocation4 + $0x180] sm:$0xf]
    %v7144 = vld [vmem:[#allocation4 + $0x184] sm:$0xf]
    %v7145 = vld [vmem:[#allocation4 + $0x188] sm:$0xf]
    %v7146 = vld [vmem:[#allocation4 + $0x18c] sm:$0xf]
    %v7147 = vld [vmem:[#allocation4 + $0x190] sm:$0xf]
    %v7148 = vld [vmem:[#allocation4 + $0x194] sm:$0xf]
    %v7149 = vld [vmem:[#allocation4 + $0x198] sm:$0xf]
    %v7150 = vld [vmem:[#allocation4 + $0x19c] sm:$0xf]
    %v7151 = vld [vmem:[#allocation4 + $0x1a0] sm:$0xf]
    %v7152 = vld [vmem:[#allocation4 + $0x1a4] sm:$0xf]
    %v7153 = vld [vmem:[#allocation4 + $0x1a8] sm:$0xf]
    %v7154 = vld [vmem:[#allocation4 + $0x1ac] sm:$0xf]
    %v7155 = vld [vmem:[#allocation4 + $0x1b0] sm:$0xf]
    %v7156 = vld [vmem:[#allocation4 + $0x1b4] sm:$0xf]
    %v7157 = vld [vmem:[#allocation4 + $0x1b8] sm:$0xf]
    %v7158 = vld [vmem:[#allocation4 + $0x1bc] sm:$0xf]
    %v7160 = vunpack.c.l.b16 %v7126
    %v7161 = vunpack.c.h.b16 %v7126
    %v7162 = vpack.c.b16 %v7160, %v7160
    %v7163 = vpack.c.b16 %v7161, %v7161
    %v7164 = vrot.slane %v7162, 1
    %v7165 = vrot.slane %v7163, 1
    %v7200 = vunpack.c.l.b16 %v7127
    %v7201 = vunpack.c.l.b16 %v7128
    %v7202 = vunpack.c.l.b16 %v7129
    %v7203 = vunpack.c.l.b16 %v7130
    %v7204 = vunpack.c.l.b16 %v7131
    %v7205 = vunpack.c.l.b16 %v7132
    %v7206 = vunpack.c.l.b16 %v7133
    %v7207 = vunpack.c.l.b16 %v7134
    %v7208 = vunpack.c.l.b16 %v7135
    %v7209 = vunpack.c.l.b16 %v7136
    %v7210 = vunpack.c.l.b16 %v7137
    %v7211 = vunpack.c.l.b16 %v7138
    %v7212 = vunpack.c.l.b16 %v7139
    %v7213 = vunpack.c.l.b16 %v7140
    %v7214 = vunpack.c.l.b16 %v7141
    %v7215 = vunpack.c.l.b16 %v7142
    %v7216 = vunpack.c.l.b16 %v7143
    %v7217 = vunpack.c.l.b16 %v7144
    %v7218 = vunpack.c.l.b16 %v7145
    %v7219 = vunpack.c.l.b16 %v7146
    %v7220 = vunpack.c.l.b16 %v7147
    %v7221 = vunpack.c.l.b16 %v7148
    %v7222 = vunpack.c.l.b16 %v7149
    %v7223 = vunpack.c.l.b16 %v7150
    %v7224 = vunpack.c.l.b16 %v7151
    %v7225 = vunpack.c.l.b16 %v7152
    %v7226 = vunpack.c.l.b16 %v7153
    %v7227 = vunpack.c.l.b16 %v7154
    %v7228 = vunpack.c.l.b16 %v7155
    %v7229 = vunpack.c.l.b16 %v7156
    %v7230 = vunpack.c.l.b16 %v7157
    %v7231 = vunpack.c.l.b16 %v7158
    %v7232 = vpack.c.b16 %v7201, %v7200
    %v7233 = vpack.c.b16 %v7203, %v7202
    %v7234 = vpack.c.b16 %v7205, %v7204
    %v7235 = vpack.c.b16 %v7207, %v7206
    %v7236 = vpack.c.b16 %v7209, %v7208
    %v7237 = vpack.c.b16 %v7211, %v7210
    %v7238 = vpack.c.b16 %v7213, %v7212
    %v7239 = vpack.c.b16 %v7215, %v7214
    %v7240 = vpack.c.b16 %v7217, %v7216
    %v7241 = vpack.c.b16 %v7219, %v7218
    %v7242 = vpack.c.b16 %v7221, %v7220
    %v7243 = vpack.c.b16 %v7223, %v7222
    %v7244 = vpack.c.b16 %v7225, %v7224
    %v7245 = vpack.c.b16 %v7227, %v7226
    %v7246 = vpack.c.b16 %v7229, %v7228
    %v7247 = vpack.c.b16 %v7231, %v7230
    %7264 = vmatprep.subr.bf16.mxu0 0
    %7265 = vmatpush1.bf16.msra.mxu0 %v7232
    %7266 = vmatprep.subr.bf16.mxu0 0
    %7267 = vmatpush1.bf16.msra.mxu0 %v7233
    %7268 = vmatprep.subr.bf16.mxu0 0
    %7269 = vmatpush1.bf16.msra.mxu0 %v7234
    %7270 = vmatprep.subr.bf16.mxu0 0
    %7271 = vmatpush1.bf16.msra.mxu0 %v7235
    %7272 = vmatprep.subr.bf16.mxu0 0
    %7273 = vmatpush1.bf16.msra.mxu0 %v7236
    %7274 = vmatprep.subr.bf16.mxu0 0
    %7275 = vmatpush1.bf16.msra.mxu0 %v7237
    %7276 = vmatprep.subr.bf16.mxu0 0
    %7277 = vmatpush1.bf16.msra.mxu0 %v7238
    %7278 = vmatprep.subr.bf16.mxu0 0
    %7279 = vmatpush1.bf16.msra.mxu0 %v7239
    %7280 = vmatprep.subr.bf16.mxu0 0
    %7281 = vmatpush1.bf16.msra.mxu0 %v7240
    %7282 = vmatprep.subr.bf16.mxu0 0
    %7283 = vmatpush1.bf16.msra.mxu0 %v7241
    %7284 = vmatprep.subr.bf16.mxu0 0
    %7285 = vmatpush1.bf16.msra.mxu0 %v7242
    %7286 = vmatprep.subr.bf16.mxu0 0
    %7287 = vmatpush1.bf16.msra.mxu0 %v7243
    %7288 = vmatprep.subr.bf16.mxu0 0
    %7289 = vmatpush1.bf16.msra.mxu0 %v7244
    %7290 = vmatprep.subr.bf16.mxu0 0
    %7291 = vmatpush1.bf16.msra.mxu0 %v7245
    %7292 = vmatprep.subr.bf16.mxu0 0
    %7293 = vmatpush1.bf16.msra.mxu0 %v7246
    %7294 = vmatprep.subr.bf16.mxu0 0
    %7295 = vmatpush1.bf16.msra.mxu0 %v7247
    %7296 = vmatprep.mubr.bf16.mxu0 %v7165
    %7297 = vmatmul.mubr.bf16.gmra.mrb[0].mxu0 %v7164
    %v7298 = vpop.f32.mrb[0].mxu0
    %v7299 = vadd.f32 0.0, %v7298
    %v7300 = vpop.f32.mrb[0].mxu0
    %v7301 = vpop.f32.mrb[0].mxu0
    %v7302 = vpop.f32.mrb[0].mxu0
    %7303 = vdwg.mxu0
    %v7307 = vunpack.c.l.b16 %v7043
    %v7308 = vunpack.c.h.b16 %v7043
    %v7309 = vunpack.c.l.b16 %v7044
    %v7310 = vunpack.c.h.b16 %v7044
    %v7311 = vunpack.c.l.b16 %v7045
    %v7312 = vpack.c.b16 %v7307, %v7307
    %v7313 = vpack.c.b16 %v7308, %v7308
    %v7314 = vpack.c.b16 %v7309, %v7309
    %v7315 = vpack.c.b16 %v7310, %v7310
    %v7316 = vpack.c.b16 %v7311, %v7311
    %v7318 = vshrl.u32 %v7312, 16
    %v7320 = vshll.u32 %v7312, 16
    %v7322 = vrot.slane %v7320, 1
    %v7323 = vor.u32 %v7318, %v7322
    %v7325 = vshrl.u32 %v7313, 16
    %v7327 = vshll.u32 %v7313, 16
    %v7329 = vrot.slane %v7327, 1
    %v7330 = vor.u32 %v7325, %v7329
    %v7332 = vshrl.u32 %v7314, 16
    %v7334 = vshll.u32 %v7314, 16
    %v7336 = vrot.slane %v7334, 1
    %v7337 = vor.u32 %v7332, %v7336
    %v7339 = vshrl.u32 %v7315, 16
    %v7341 = vshll.u32 %v7315, 16
    %v7343 = vrot.slane %v7341, 1
    %v7344 = vor.u32 %v7339, %v7343
    %v7346 = vshrl.u32 %v7316, 16
    %v7348 = vshll.u32 %v7316, 16
    %v7350 = vrot.slane %v7348, 1
    %v7351 = vor.u32 %v7346, %v7350
    %v7437 = vunpack.c.l.b16 %v7046
    %v7438 = vunpack.c.l.b16 %v7047
    %v7439 = vunpack.c.l.b16 %v7048
    %v7440 = vunpack.c.l.b16 %v7049
    %v7441 = vunpack.c.l.b16 %v7050
    %v7442 = vunpack.c.l.b16 %v7051
    %v7443 = vunpack.c.l.b16 %v7052
    %v7444 = vunpack.c.l.b16 %v7053
    %v7445 = vunpack.c.l.b16 %v7054
    %v7446 = vunpack.c.l.b16 %v7055
    %v7447 = vunpack.c.l.b16 %v7056
    %v7448 = vunpack.c.l.b16 %v7057
    %v7449 = vunpack.c.l.b16 %v7058
    %v7450 = vunpack.c.l.b16 %v7059
    %v7451 = vunpack.c.l.b16 %v7060
    %v7452 = vunpack.c.l.b16 %v7061
    %v7453 = vunpack.c.l.b16 %v7062
    %v7454 = vunpack.c.l.b16 %v7063
    %v7455 = vunpack.c.l.b16 %v7064
    %v7456 = vunpack.c.l.b16 %v7065
    %v7457 = vunpack.c.l.b16 %v7066
    %v7458 = vunpack.c.l.b16 %v7067
    %v7459 = vunpack.c.l.b16 %v7068
    %v7460 = vunpack.c.l.b16 %v7069
    %v7461 = vunpack.c.l.b16 %v7070
    %v7462 = vunpack.c.l.b16 %v7071
    %v7463 = vunpack.c.l.b16 %v7072
    %v7464 = vunpack.c.l.b16 %v7073
    %v7465 = vunpack.c.l.b16 %v7074
    %v7466 = vunpack.c.l.b16 %v7075
    %v7467 = vunpack.c.l.b16 %v7076
    %v7468 = vunpack.c.l.b16 %v7077
    %v7469 = vunpack.c.l.b16 %v7078
    %v7470 = vunpack.c.l.b16 %v7079
    %v7471 = vunpack.c.l.b16 %v7080
    %v7472 = vunpack.c.l.b16 %v7081
    %v7473 = vunpack.c.l.b16 %v7082
    %v7474 = vunpack.c.l.b16 %v7083
    %v7475 = vunpack.c.l.b16 %v7084
    %v7476 = vunpack.c.l.b16 %v7085
    %v7477 = vunpack.c.l.b16 %v7086
    %v7478 = vunpack.c.l.b16 %v7087
    %v7479 = vunpack.c.l.b16 %v7088
    %v7480 = vunpack.c.l.b16 %v7089
    %v7481 = vunpack.c.l.b16 %v7090
    %v7482 = vunpack.c.l.b16 %v7091
    %v7483 = vunpack.c.l.b16 %v7092
    %v7484 = vunpack.c.l.b16 %v7093
    %v7485 = vunpack.c.l.b16 %v7094
    %v7486 = vunpack.c.l.b16 %v7095
    %v7487 = vunpack.c.l.b16 %v7096
    %v7488 = vunpack.c.l.b16 %v7097
    %v7489 = vunpack.c.l.b16 %v7098
    %v7490 = vunpack.c.l.b16 %v7099
    %v7491 = vunpack.c.l.b16 %v7100
    %v7492 = vunpack.c.l.b16 %v7101
    %v7493 = vunpack.c.l.b16 %v7102
    %v7494 = vunpack.c.l.b16 %v7103
    %v7495 = vunpack.c.l.b16 %v7104
    %v7496 = vunpack.c.l.b16 %v7105
    %v7497 = vunpack.c.l.b16 %v7106
    %v7498 = vunpack.c.l.b16 %v7107
    %v7499 = vunpack.c.l.b16 %v7108
    %v7500 = vunpack.c.l.b16 %v7109
    %v7501 = vunpack.c.l.b16 %v7110
    %v7502 = vunpack.c.l.b16 %v7111
    %v7503 = vunpack.c.l.b16 %v7112
    %v7504 = vunpack.c.l.b16 %v7113
    %v7505 = vunpack.c.l.b16 %v7114
    %v7506 = vunpack.c.l.b16 %v7115
    %v7507 = vunpack.c.l.b16 %v7116
    %v7508 = vunpack.c.l.b16 %v7117
    %v7509 = vunpack.c.l.b16 %v7118
    %v7510 = vunpack.c.l.b16 %v7119
    %v7511 = vunpack.c.l.b16 %v7120
    %v7512 = vunpack.c.l.b16 %v7121
    %v7513 = vunpack.c.l.b16 %v7122
    %v7514 = vunpack.c.l.b16 %v7123
    %v7515 = vunpack.c.l.b16 %v7124
    %v7516 = vunpack.c.l.b16 %v7125
    %v7517 = vpack.c.b16 %v7438, %v7437
    %v7518 = vpack.c.b16 %v7440, %v7439
    %v7519 = vpack.c.b16 %v7442, %v7441
    %v7520 = vpack.c.b16 %v7444, %v7443
    %v7521 = vpack.c.b16 %v7446, %v7445
    %v7522 = vpack.c.b16 %v7448, %v7447
    %v7523 = vpack.c.b16 %v7450, %v7449
    %v7524 = vpack.c.b16 %v7452, %v7451
    %v7525 = vpack.c.b16 %v7454, %v7453
    %v7526 = vpack.c.b16 %v7456, %v7455
    %v7527 = vpack.c.b16 %v7458, %v7457
    %v7528 = vpack.c.b16 %v7460, %v7459
    %v7529 = vpack.c.b16 %v7462, %v7461
    %v7530 = vpack.c.b16 %v7464, %v7463
    %v7531 = vpack.c.b16 %v7466, %v7465
    %v7532 = vpack.c.b16 %v7468, %v7467
    %v7533 = vpack.c.b16 %v7470, %v7469
    %v7534 = vpack.c.b16 %v7472, %v7471
    %v7535 = vpack.c.b16 %v7474, %v7473
    %v7536 = vpack.c.b16 %v7476, %v7475
    %v7537 = vpack.c.b16 %v7478, %v7477
    %v7538 = vpack.c.b16 %v7480, %v7479
    %v7539 = vpack.c.b16 %v7482, %v7481
    %v7540 = vpack.c.b16 %v7484, %v7483
    %v7541 = vpack.c.b16 %v7486, %v7485
    %v7542 = vpack.c.b16 %v7488, %v7487
    %v7543 = vpack.c.b16 %v7490, %v7489
    %v7544 = vpack.c.b16 %v7492, %v7491
    %v7545 = vpack.c.b16 %v7494, %v7493
    %v7546 = vpack.c.b16 %v7496, %v7495
    %v7547 = vpack.c.b16 %v7498, %v7497
    %v7548 = vpack.c.b16 %v7500, %v7499
    %v7549 = vpack.c.b16 %v7502, %v7501
    %v7550 = vpack.c.b16 %v7504, %v7503
    %v7551 = vpack.c.b16 %v7506, %v7505
    %v7552 = vpack.c.b16 %v7508, %v7507
    %v7553 = vpack.c.b16 %v7510, %v7509
    %v7554 = vpack.c.b16 %v7512, %v7511
    %v7555 = vpack.c.b16 %v7514, %v7513
    %v7556 = vpack.c.b16 %v7516, %v7515
    %7597 = vmatprep.subr.bf16.mxu0 0
    %7598 = vmatpush1.bf16.msra.mxu0 %v7517
    %7599 = vmatprep.subr.bf16.mxu0 0
    %7600 = vmatpush1.bf16.msra.mxu0 %v7518
    %7601 = vmatprep.subr.bf16.mxu0 0
    %7602 = vmatpush1.bf16.msra.mxu0 %v7519
    %7603 = vmatprep.subr.bf16.mxu0 0
    %7604 = vmatpush1.bf16.msra.mxu0 %v7520
    %7605 = vmatprep.subr.bf16.mxu0 0
    %7606 = vmatpush1.bf16.msra.mxu0 %v7521
    %7607 = vmatprep.subr.bf16.mxu0 0
    %7608 = vmatpush1.bf16.msra.mxu0 %v7522
    %7609 = vmatprep.subr.bf16.mxu0 0
    %7610 = vmatpush1.bf16.msra.mxu0 %v7523
    %7611 = vmatprep.subr.bf16.mxu0 0
    %7612 = vmatpush1.bf16.msra.mxu0 %v7524
    %7613 = vmatprep.subr.bf16.mxu0 0
    %7614 = vmatpush1.bf16.msra.mxu0 %v7525
    %7615 = vmatprep.subr.bf16.mxu0 0
    %7616 = vmatpush1.bf16.msra.mxu0 %v7526
    %7617 = vmatprep.subr.bf16.mxu0 0
    %7618 = vmatpush1.bf16.msra.mxu0 %v7527
    %7619 = vmatprep.subr.bf16.mxu0 0
    %7620 = vmatpush1.bf16.msra.mxu0 %v7528
    %7621 = vmatprep.subr.bf16.mxu0 0
    %7622 = vmatpush1.bf16.msra.mxu0 %v7529
    %7623 = vmatprep.subr.bf16.mxu0 0
    %7624 = vmatpush1.bf16.msra.mxu0 %v7530
    %7625 = vmatprep.subr.bf16.mxu0 0
    %7626 = vmatpush1.bf16.msra.mxu0 %v7531
    %7627 = vmatprep.subr.bf16.mxu0 0
    %7628 = vmatpush1.bf16.msra.mxu0 %v7532
    %7629 = vmatprep.mubr.bf16.mxu0 %v7330
    %7630 = vmatmul.mubr.bf16.gmra.mrb[0].mxu0 %v7323
    %v7631 = vpop.f32.mrb[0].mxu0
    %v7632 = vadd.f32 %v7299, %v7631
    %v7633 = vpop.f32.mrb[0].mxu0
    %v7634 = vpop.f32.mrb[0].mxu0
    %v7635 = vpop.f32.mrb[0].mxu0
    %7636 = vdwg.mxu0
    %7637 = vmatprep.subr.bf16.mxu0 0
    %7638 = vmatpush1.bf16.msra.mxu0 %v7533
    %7639 = vmatprep.subr.bf16.mxu0 0
    %7640 = vmatpush1.bf16.msra.mxu0 %v7534
    %7641 = vmatprep.subr.bf16.mxu0 0
    %7642 = vmatpush1.bf16.msra.mxu0 %v7535
    %7643 = vmatprep.subr.bf16.mxu0 0
    %7644 = vmatpush1.bf16.msra.mxu0 %v7536
    %7645 = vmatprep.subr.bf16.mxu0 0
    %7646 = vmatpush1.bf16.msra.mxu0 %v7537
    %7647 = vmatprep.subr.bf16.mxu0 0
    %7648 = vmatpush1.bf16.msra.mxu0 %v7538
    %7649 = vmatprep.subr.bf16.mxu0 0
    %7650 = vmatpush1.bf16.msra.mxu0 %v7539
    %7651 = vmatprep.subr.bf16.mxu0 0
    %7652 = vmatpush1.bf16.msra.mxu0 %v7540
    %7653 = vmatprep.subr.bf16.mxu0 0
    %7654 = vmatpush1.bf16.msra.mxu0 %v7541
    %7655 = vmatprep.subr.bf16.mxu0 0
    %7656 = vmatpush1.bf16.msra.mxu0 %v7542
    %7657 = vmatprep.subr.bf16.mxu0 0
    %7658 = vmatpush1.bf16.msra.mxu0 %v7543
    %7659 = vmatprep.subr.bf16.mxu0 0
    %7660 = vmatpush1.bf16.msra.mxu0 %v7544
    %7661 = vmatprep.subr.bf16.mxu0 0
    %7662 = vmatpush1.bf16.msra.mxu0 %v7545
    %7663 = vmatprep.subr.bf16.mxu0 0
    %7664 = vmatpush1.bf16.msra.mxu0 %v7546
    %7665 = vmatprep.subr.bf16.mxu0 0
    %7666 = vmatpush1.bf16.msra.mxu0 %v7547
    %7667 = vmatprep.subr.bf16.mxu0 0
    %7668 = vmatpush1.bf16.msra.mxu0 %v7548
    %7669 = vmatprep.mubr.bf16.mxu0 %v7344
    %7670 = vmatmul.mubr.bf16.gmra.mrb[0].mxu0 %v7337
    %v7671 = vpop.f32.mrb[0].mxu0
    %v7672 = vadd.f32 %v7632, %v7671
    %v7673 = vpop.f32.mrb[0].mxu0
    %v7674 = vpop.f32.mrb[0].mxu0
    %v7675 = vpop.f32.mrb[0].mxu0
    %7676 = vdwg.mxu0
    %7677 = vmatprep.subr.bf16.mxu0 0
    %7678 = vmatpush1.bf16.msra.mxu0 %v7549
    %7679 = vmatprep.subr.bf16.mxu0 0
    %7680 = vmatpush1.bf16.msra.mxu0 %v7550
    %7681 = vmatprep.subr.bf16.mxu0 0
    %7682 = vmatpush1.bf16.msra.mxu0 %v7551
    %7683 = vmatprep.subr.bf16.mxu0 0
    %7684 = vmatpush1.bf16.msra.mxu0 %v7552
    %7685 = vmatprep.subr.bf16.mxu0 0
    %7686 = vmatpush1.bf16.msra.mxu0 %v7553
    %7687 = vmatprep.subr.bf16.mxu0 0
    %7688 = vmatpush1.bf16.msra.mxu0 %v7554
    %7689 = vmatprep.subr.bf16.mxu0 0
    %7690 = vmatpush1.bf16.msra.mxu0 %v7555
    %7691 = vmatprep.subr.bf16.mxu0 0
    %7692 = vmatpush1.bf16.msra.mxu0 %v7556
    %7693 = vmatprep.subr.bf16.mxu0 0
    %7694 = vmatpush1.bf16.msra.mxu0 0
    %7695 = vmatprep.subr.bf16.mxu0 0
    %7696 = vmatpush1.bf16.msra.mxu0 0
    %7697 = vmatprep.subr.bf16.mxu0 0
    %7698 = vmatpush1.bf16.msra.mxu0 0
    %7699 = vmatprep.subr.bf16.mxu0 0
    %7700 = vmatpush1.bf16.msra.mxu0 0
    %7701 = vmatprep.subr.bf16.mxu0 0
    %7702 = vmatpush1.bf16.msra.mxu0 0
    %7703 = vmatprep.subr.bf16.mxu0 0
    %7704 = vmatpush1.bf16.msra.mxu0 0
    %7705 = vmatprep.subr.bf16.mxu0 0
    %7706 = vmatpush1.bf16.msra.mxu0 0
    %7707 = vmatprep.subr.bf16.mxu0 0
    %7708 = vmatpush1.bf16.msra.mxu0 0
    %7709 = vmatprep.mubr.bf16.mxu0 0
    %7710 = vmatmul.mubr.bf16.gmra.mrb[0].mxu0 %v7351
    %v7711 = vpop.f32.mrb[0].mxu0
    %v7712 = vadd.f32 %v7672, %v7711
    %v7713 = vpop.f32.mrb[0].mxu0
    %v7714 = vpop.f32.mrb[0].mxu0
    %v7715 = vpop.f32.mrb[0].mxu0
    %7716 = vdwg.mxu0
    %v7717 = vld [vmem:[%s2] sm:$0x1]
    %v7719 = vlaneseq
    %v7720 = vshrl.u32 %v7719, 7
    %v7721 = vsub.s32 0, %v7720
    %v7722 = vrot.slane %v7717, %v7721
    %v7724 = vadd.f32 %v7712, %v7722
    %v7725 = vmax.f32 %v7724, 0.0
    %v7726 = vpack.c.bf16 %v7725, %v7725
    %v7728 = vunpack.c.l.b16 %v7726
    %v7729 = vpack.c.b16 %v7728, %v7728
    %v7731 = vshrl.u32 %v7729, 16
    %v7733 = vrot.slane %v7731, 7
    %v7734 = vshll.u32 %v7729, 16
    %v7736 = vor.u32 %v7733, %v7734
    %v7738 = vld [vmem:[#allocation2 + $0xc] sm:$0x7]
    %v7739 = vsel %vm794, %v7736, %v7738
    %7740 = vst [vmem:[#allocation2 + $0xc] sm:$0x7] %v7739
    %v7741 = vld [vmem:[#allocation2 + $0x4] sm:$0x33]
    %v7742 = vld [vmem:[#allocation2 + $0xc] sm:$0x3]
    %v7743 = vld [vmem:[#allocation6] sm:$0xf]
    %v7744 = vld [vmem:[#allocation6 + $0x4] sm:$0xf]
    %v7745 = vld [vmem:[#allocation6 + $0x8] sm:$0xf]
    %v7746 = vld [vmem:[#allocation6 + $0xc] sm:$0xf]
    %v7747 = vld [vmem:[#allocation6 + $0x10] sm:$0xf]
    %v7748 = vld [vmem:[#allocation6 + $0x14] sm:$0xf]
    %v7749 = vld [vmem:[#allocation6 + $0x18] sm:$0xf]
    %v7750 = vld [vmem:[#allocation6 + $0x1c] sm:$0xf]
    %v7751 = vld [vmem:[#allocation6 + $0x20] sm:$0xf]
    %v7752 = vld [vmem:[#allocation6 + $0x24] sm:$0xf]
    %v7753 = vld [vmem:[#allocation6 + $0x28] sm:$0xf]
    %v7754 = vld [vmem:[#allocation6 + $0x2c] sm:$0xf]
    %v7755 = vld [vmem:[#allocation6 + $0x30] sm:$0xf]
    %v7756 = vld [vmem:[#allocation6 + $0x34] sm:$0xf]
    %v7757 = vld [vmem:[#allocation6 + $0x38] sm:$0xf]
    %v7758 = vld [vmem:[#allocation6 + $0x3c] sm:$0xf]
    %v7759 = vld [vmem:[#allocation6 + $0x40] sm:$0xf]
    %v7760 = vld [vmem:[#allocation6 + $0x44] sm:$0xf]
    %v7761 = vld [vmem:[#allocation6 + $0x48] sm:$0xf]
    %v7762 = vld [vmem:[#allocation6 + $0x4c] sm:$0xf]
    %v7763 = vld [vmem:[#allocation6 + $0x50] sm:$0xf]
    %v7764 = vld [vmem:[#allocation6 + $0x54] sm:$0xf]
    %v7765 = vld [vmem:[#allocation6 + $0x58] sm:$0xf]
    %v7766 = vld [vmem:[#allocation6 + $0x5c] sm:$0xf]
    %v7767 = vld [vmem:[#allocation6 + $0x60] sm:$0xf]
    %v7768 = vld [vmem:[#allocation6 + $0x64] sm:$0xf]
    %v7769 = vld [vmem:[#allocation6 + $0x68] sm:$0xf]
    %v7770 = vld [vmem:[#allocation6 + $0x6c] sm:$0xf]
    %v7771 = vld [vmem:[#allocation6 + $0x70] sm:$0xf]
    %v7772 = vld [vmem:[#allocation6 + $0x74] sm:$0xf]
    %v7773 = vld [vmem:[#allocation6 + $0x78] sm:$0xf]
    %v7774 = vld [vmem:[#allocation6 + $0x7c] sm:$0xf]
    %v7775 = vld [vmem:[#allocation6 + $0x80] sm:$0xf]
    %v7776 = vld [vmem:[#allocation6 + $0x84] sm:$0xf]
    %v7777 = vld [vmem:[#allocation6 + $0x88] sm:$0xf]
    %v7778 = vld [vmem:[#allocation6 + $0x8c] sm:$0xf]
    %v7779 = vld [vmem:[#allocation6 + $0x90] sm:$0xf]
    %v7780 = vld [vmem:[#allocation6 + $0x94] sm:$0xf]
    %v7781 = vld [vmem:[#allocation6 + $0x98] sm:$0xf]
    %v7782 = vld [vmem:[#allocation6 + $0x9c] sm:$0xf]
    %v7783 = vld [vmem:[#allocation6 + $0xa0] sm:$0xf]
    %v7784 = vld [vmem:[#allocation6 + $0xa4] sm:$0xf]
    %v7785 = vld [vmem:[#allocation6 + $0xa8] sm:$0xf]
    %v7786 = vld [vmem:[#allocation6 + $0xac] sm:$0xf]
    %v7787 = vld [vmem:[#allocation6 + $0xb0] sm:$0xf]
    %v7788 = vld [vmem:[#allocation6 + $0xb4] sm:$0xf]
    %v7789 = vld [vmem:[#allocation6 + $0xb8] sm:$0xf]
    %v7790 = vld [vmem:[#allocation6 + $0xbc] sm:$0xf]
    %v7791 = vld [vmem:[#allocation2] sm:$0x77]
    %v7792 = vld [vmem:[#allocation2 + $0x8] sm:$0x77]
    %v7793 = vld [vmem:[#allocation6 + $0xc0] sm:$0xf]
    %v7794 = vld [vmem:[#allocation6 + $0xc4] sm:$0xf]
    %v7795 = vld [vmem:[#allocation6 + $0xc8] sm:$0xf]
    %v7796 = vld [vmem:[#allocation6 + $0xcc] sm:$0xf]
    %v7797 = vld [vmem:[#allocation6 + $0xd0] sm:$0xf]
    %v7798 = vld [vmem:[#allocation6 + $0xd4] sm:$0xf]
    %v7799 = vld [vmem:[#allocation6 + $0xd8] sm:$0xf]
    %v7800 = vld [vmem:[#allocation6 + $0xdc] sm:$0xf]
    %v7801 = vld [vmem:[#allocation6 + $0xe0] sm:$0xf]
    %v7802 = vld [vmem:[#allocation6 + $0xe4] sm:$0xf]
    %v7803 = vld [vmem:[#allocation6 + $0xe8] sm:$0xf]
    %v7804 = vld [vmem:[#allocation6 + $0xec] sm:$0xf]
    %v7805 = vld [vmem:[#allocation6 + $0xf0] sm:$0xf]
    %v7806 = vld [vmem:[#allocation6 + $0xf4] sm:$0xf]
    %v7807 = vld [vmem:[#allocation6 + $0xf8] sm:$0xf]
    %v7808 = vld [vmem:[#allocation6 + $0xfc] sm:$0xf]
    %v7809 = vld [vmem:[#allocation6 + $0x100] sm:$0xf]
    %v7810 = vld [vmem:[#allocation6 + $0x104] sm:$0xf]
    %v7811 = vld [vmem:[#allocation6 + $0x108] sm:$0xf]
    %v7812 = vld [vmem:[#allocation6 + $0x10c] sm:$0xf]
    %v7813 = vld [vmem:[#allocation6 + $0x110] sm:$0xf]
    %v7814 = vld [vmem:[#allocation6 + $0x114] sm:$0xf]
    %v7815 = vld [vmem:[#allocation6 + $0x118] sm:$0xf]
    %v7816 = vld [vmem:[#allocation6 + $0x11c] sm:$0xf]
    %v7817 = vld [vmem:[#allocation6 + $0x120] sm:$0xf]
    %v7818 = vld [vmem:[#allocation6 + $0x124] sm:$0xf]
    %v7819 = vld [vmem:[#allocation6 + $0x128] sm:$0xf]
    %v7820 = vld [vmem:[#allocation6 + $0x12c] sm:$0xf]
    %v7821 = vld [vmem:[#allocation6 + $0x130] sm:$0xf]
    %v7822 = vld [vmem:[#allocation6 + $0x134] sm:$0xf]
    %v7823 = vld [vmem:[#allocation6 + $0x138] sm:$0xf]
    %v7824 = vld [vmem:[#allocation6 + $0x13c] sm:$0xf]
    %v7825 = vld [vmem:[#allocation6 + $0x140] sm:$0xf]
    %v7826 = vld [vmem:[#allocation6 + $0x144] sm:$0xf]
    %v7827 = vld [vmem:[#allocation6 + $0x148] sm:$0xf]
    %v7828 = vld [vmem:[#allocation6 + $0x14c] sm:$0xf]
    %v7829 = vld [vmem:[#allocation6 + $0x150] sm:$0xf]
    %v7830 = vld [vmem:[#allocation6 + $0x154] sm:$0xf]
    %v7831 = vld [vmem:[#allocation6 + $0x158] sm:$0xf]
    %v7832 = vld [vmem:[#allocation6 + $0x15c] sm:$0xf]
    %v7833 = vld [vmem:[#allocation6 + $0x160] sm:$0xf]
    %v7834 = vld [vmem:[#allocation6 + $0x164] sm:$0xf]
    %v7835 = vld [vmem:[#allocation6 + $0x168] sm:$0xf]
    %v7836 = vld [vmem:[#allocation6 + $0x16c] sm:$0xf]
    %v7837 = vld [vmem:[#allocation6 + $0x170] sm:$0xf]
    %v7838 = vld [vmem:[#allocation6 + $0x174] sm:$0xf]
    %v7839 = vld [vmem:[#allocation6 + $0x178] sm:$0xf]
    %v7840 = vld [vmem:[#allocation6 + $0x17c] sm:$0xf]
    %v7841 = vld [vmem:[#allocation6 + $0x180] sm:$0xf]
    %v7842 = vld [vmem:[#allocation6 + $0x184] sm:$0xf]
    %v7843 = vld [vmem:[#allocation6 + $0x188] sm:$0xf]
    %v7844 = vld [vmem:[#allocation6 + $0x18c] sm:$0xf]
    %v7845 = vld [vmem:[#allocation6 + $0x190] sm:$0xf]
    %v7846 = vld [vmem:[#allocation6 + $0x194] sm:$0xf]
    %v7847 = vld [vmem:[#allocation6 + $0x198] sm:$0xf]
    %v7848 = vld [vmem:[#allocation6 + $0x19c] sm:$0xf]
    %v7849 = vld [vmem:[#allocation6 + $0x1a0] sm:$0xf]
    %v7850 = vld [vmem:[#allocation6 + $0x1a4] sm:$0xf]
    %v7851 = vld [vmem:[#allocation6 + $0x1a8] sm:$0xf]
    %v7852 = vld [vmem:[#allocation6 + $0x1ac] sm:$0xf]
    %v7853 = vld [vmem:[#allocation6 + $0x1b0] sm:$0xf]
    %v7854 = vld [vmem:[#allocation6 + $0x1b4] sm:$0xf]
    %v7855 = vld [vmem:[#allocation6 + $0x1b8] sm:$0xf]
    %v7856 = vld [vmem:[#allocation6 + $0x1bc] sm:$0xf]
    %v7859 = vunpack.c.l.b16 %v7791
    %v7860 = vunpack.c.h.b16 %v7791
    %v7861 = vunpack.c.l.b16 %v7792
    %v7862 = vunpack.c.h.b16 %v7792
    %v7863 = vpack.c.b16 %v7859, %v7859
    %v7864 = vpack.c.b16 %v7860, %v7860
    %v7865 = vpack.c.b16 %v7861, %v7861
    %v7866 = vpack.c.b16 %v7862, %v7862
    %v7868 = vshrl.u32 %v7863, 16
    %v7870 = vshll.u32 %v7863, 16
    %v7872 = vrot.slane %v7870, 1
    %v7873 = vor.u32 %v7868, %v7872
    %v7875 = vshrl.u32 %v7864, 16
    %v7877 = vshll.u32 %v7864, 16
    %v7879 = vrot.slane %v7877, 1
    %v7880 = vor.u32 %v7875, %v7879
    %v7882 = vshrl.u32 %v7865, 16
    %v7884 = vshll.u32 %v7865, 16
    %v7886 = vrot.slane %v7884, 1
    %v7887 = vor.u32 %v7882, %v7886
    %v7889 = vshrl.u32 %v7866, 16
    %v7891 = vshll.u32 %v7866, 16
    %v7893 = vrot.slane %v7891, 1
    %v7894 = vor.u32 %v7889, %v7893
    %v7963 = vunpack.c.l.b16 %v7793
    %v7964 = vunpack.c.l.b16 %v7794
    %v7965 = vunpack.c.l.b16 %v7795
    %v7966 = vunpack.c.l.b16 %v7796
    %v7967 = vunpack.c.l.b16 %v7797
    %v7968 = vunpack.c.l.b16 %v7798
    %v7969 = vunpack.c.l.b16 %v7799
    %v7970 = vunpack.c.l.b16 %v7800
    %v7971 = vunpack.c.l.b16 %v7801
    %v7972 = vunpack.c.l.b16 %v7802
    %v7973 = vunpack.c.l.b16 %v7803
    %v7974 = vunpack.c.l.b16 %v7804
    %v7975 = vunpack.c.l.b16 %v7805
    %v7976 = vunpack.c.l.b16 %v7806
    %v7977 = vunpack.c.l.b16 %v7807
    %v7978 = vunpack.c.l.b16 %v7808
    %v7979 = vunpack.c.l.b16 %v7809
    %v7980 = vunpack.c.l.b16 %v7810
    %v7981 = vunpack.c.l.b16 %v7811
    %v7982 = vunpack.c.l.b16 %v7812
    %v7983 = vunpack.c.l.b16 %v7813
    %v7984 = vunpack.c.l.b16 %v7814
    %v7985 = vunpack.c.l.b16 %v7815
    %v7986 = vunpack.c.l.b16 %v7816
    %v7987 = vunpack.c.l.b16 %v7817
    %v7988 = vunpack.c.l.b16 %v7818
    %v7989 = vunpack.c.l.b16 %v7819
    %v7990 = vunpack.c.l.b16 %v7820
    %v7991 = vunpack.c.l.b16 %v7821
    %v7992 = vunpack.c.l.b16 %v7822
    %v7993 = vunpack.c.l.b16 %v7823
    %v7994 = vunpack.c.l.b16 %v7824
    %v7995 = vunpack.c.l.b16 %v7825
    %v7996 = vunpack.c.l.b16 %v7826
    %v7997 = vunpack.c.l.b16 %v7827
    %v7998 = vunpack.c.l.b16 %v7828
    %v7999 = vunpack.c.l.b16 %v7829
    %v8000 = vunpack.c.l.b16 %v7830
    %v8001 = vunpack.c.l.b16 %v7831
    %v8002 = vunpack.c.l.b16 %v7832
    %v8003 = vunpack.c.l.b16 %v7833
    %v8004 = vunpack.c.l.b16 %v7834
    %v8005 = vunpack.c.l.b16 %v7835
    %v8006 = vunpack.c.l.b16 %v7836
    %v8007 = vunpack.c.l.b16 %v7837
    %v8008 = vunpack.c.l.b16 %v7838
    %v8009 = vunpack.c.l.b16 %v7839
    %v8010 = vunpack.c.l.b16 %v7840
    %v8011 = vunpack.c.l.b16 %v7841
    %v8012 = vunpack.c.l.b16 %v7842
    %v8013 = vunpack.c.l.b16 %v7843
    %v8014 = vunpack.c.l.b16 %v7844
    %v8015 = vunpack.c.l.b16 %v7845
    %v8016 = vunpack.c.l.b16 %v7846
    %v8017 = vunpack.c.l.b16 %v7847
    %v8018 = vunpack.c.l.b16 %v7848
    %v8019 = vunpack.c.l.b16 %v7849
    %v8020 = vunpack.c.l.b16 %v7850
    %v8021 = vunpack.c.l.b16 %v7851
    %v8022 = vunpack.c.l.b16 %v7852
    %v8023 = vunpack.c.l.b16 %v7853
    %v8024 = vunpack.c.l.b16 %v7854
    %v8025 = vunpack.c.l.b16 %v7855
    %v8026 = vunpack.c.l.b16 %v7856
    %v8027 = vpack.c.b16 %v7964, %v7963
    %v8028 = vpack.c.b16 %v7966, %v7965
    %v8029 = vpack.c.b16 %v7968, %v7967
    %v8030 = vpack.c.b16 %v7970, %v7969
    %v8031 = vpack.c.b16 %v7972, %v7971
    %v8032 = vpack.c.b16 %v7974, %v7973
    %v8033 = vpack.c.b16 %v7976, %v7975
    %v8034 = vpack.c.b16 %v7978, %v7977
    %v8035 = vpack.c.b16 %v7980, %v7979
    %v8036 = vpack.c.b16 %v7982, %v7981
    %v8037 = vpack.c.b16 %v7984, %v7983
    %v8038 = vpack.c.b16 %v7986, %v7985
    %v8039 = vpack.c.b16 %v7988, %v7987
    %v8040 = vpack.c.b16 %v7990, %v7989
    %v8041 = vpack.c.b16 %v7992, %v7991
    %v8042 = vpack.c.b16 %v7994, %v7993
    %v8043 = vpack.c.b16 %v7996, %v7995
    %v8044 = vpack.c.b16 %v7998, %v7997
    %v8045 = vpack.c.b16 %v8000, %v7999
    %v8046 = vpack.c.b16 %v8002, %v8001
    %v8047 = vpack.c.b16 %v8004, %v8003
    %v8048 = vpack.c.b16 %v8006, %v8005
    %v8049 = vpack.c.b16 %v8008, %v8007
    %v8050 = vpack.c.b16 %v8010, %v8009
    %v8051 = vpack.c.b16 %v8012, %v8011
    %v8052 = vpack.c.b16 %v8014, %v8013
    %v8053 = vpack.c.b16 %v8016, %v8015
    %v8054 = vpack.c.b16 %v8018, %v8017
    %v8055 = vpack.c.b16 %v8020, %v8019
    %v8056 = vpack.c.b16 %v8022, %v8021
    %v8057 = vpack.c.b16 %v8024, %v8023
    %v8058 = vpack.c.b16 %v8026, %v8025
    %8091 = vmatprep.subr.bf16.mxu0 0
    %8092 = vmatpush1.bf16.msra.mxu0 %v8027
    %8093 = vmatprep.subr.bf16.mxu0 0
    %8094 = vmatpush1.bf16.msra.mxu0 %v8028
    %8095 = vmatprep.subr.bf16.mxu0 0
    %8096 = vmatpush1.bf16.msra.mxu0 %v8029
    %8097 = vmatprep.subr.bf16.mxu0 0
    %8098 = vmatpush1.bf16.msra.mxu0 %v8030
    %8099 = vmatprep.subr.bf16.mxu0 0
    %8100 = vmatpush1.bf16.msra.mxu0 %v8031
    %8101 = vmatprep.subr.bf16.mxu0 0
    %8102 = vmatpush1.bf16.msra.mxu0 %v8032
    %8103 = vmatprep.subr.bf16.mxu0 0
    %8104 = vmatpush1.bf16.msra.mxu0 %v8033
    %8105 = vmatprep.subr.bf16.mxu0 0
    %8106 = vmatpush1.bf16.msra.mxu0 %v8034
    %8107 = vmatprep.subr.bf16.mxu0 0
    %8108 = vmatpush1.bf16.msra.mxu0 %v8035
    %8109 = vmatprep.subr.bf16.mxu0 0
    %8110 = vmatpush1.bf16.msra.mxu0 %v8036
    %8111 = vmatprep.subr.bf16.mxu0 0
    %8112 = vmatpush1.bf16.msra.mxu0 %v8037
    %8113 = vmatprep.subr.bf16.mxu0 0
    %8114 = vmatpush1.bf16.msra.mxu0 %v8038
    %8115 = vmatprep.subr.bf16.mxu0 0
    %8116 = vmatpush1.bf16.msra.mxu0 %v8039
    %8117 = vmatprep.subr.bf16.mxu0 0
    %8118 = vmatpush1.bf16.msra.mxu0 %v8040
    %8119 = vmatprep.subr.bf16.mxu0 0
    %8120 = vmatpush1.bf16.msra.mxu0 %v8041
    %8121 = vmatprep.subr.bf16.mxu0 0
    %8122 = vmatpush1.bf16.msra.mxu0 %v8042
    %8123 = vmatprep.mubr.bf16.mxu0 %v7880
    %8124 = vmatmul.mubr.bf16.gmra.mrb[0].mxu0 %v7873
    %v8125 = vpop.f32.mrb[0].mxu0
    %v8126 = vadd.f32 0.0, %v8125
    %v8127 = vpop.f32.mrb[0].mxu0
    %v8128 = vpop.f32.mrb[0].mxu0
    %v8129 = vpop.f32.mrb[0].mxu0
    %8130 = vdwg.mxu0
    %8131 = vmatprep.subr.bf16.mxu0 0
    %8132 = vmatpush1.bf16.msra.mxu0 %v8043
    %8133 = vmatprep.subr.bf16.mxu0 0
    %8134 = vmatpush1.bf16.msra.mxu0 %v8044
    %8135 = vmatprep.subr.bf16.mxu0 0
    %8136 = vmatpush1.bf16.msra.mxu0 %v8045
    %8137 = vmatprep.subr.bf16.mxu0 0
    %8138 = vmatpush1.bf16.msra.mxu0 %v8046
    %8139 = vmatprep.subr.bf16.mxu0 0
    %8140 = vmatpush1.bf16.msra.mxu0 %v8047
    %8141 = vmatprep.subr.bf16.mxu0 0
    %8142 = vmatpush1.bf16.msra.mxu0 %v8048
    %8143 = vmatprep.subr.bf16.mxu0 0
    %8144 = vmatpush1.bf16.msra.mxu0 %v8049
    %8145 = vmatprep.subr.bf16.mxu0 0
    %8146 = vmatpush1.bf16.msra.mxu0 %v8050
    %8147 = vmatprep.subr.bf16.mxu0 0
    %8148 = vmatpush1.bf16.msra.mxu0 %v8051
    %8149 = vmatprep.subr.bf16.mxu0 0
    %8150 = vmatpush1.bf16.msra.mxu0 %v8052
    %8151 = vmatprep.subr.bf16.mxu0 0
    %8152 = vmatpush1.bf16.msra.mxu0 %v8053
    %8153 = vmatprep.subr.bf16.mxu0 0
    %8154 = vmatpush1.bf16.msra.mxu0 %v8054
    %8155 = vmatprep.subr.bf16.mxu0 0
    %8156 = vmatpush1.bf16.msra.mxu0 %v8055
    %8157 = vmatprep.subr.bf16.mxu0 0
    %8158 = vmatpush1.bf16.msra.mxu0 %v8056
    %8159 = vmatprep.subr.bf16.mxu0 0
    %8160 = vmatpush1.bf16.msra.mxu0 %v8057
    %8161 = vmatprep.subr.bf16.mxu0 0
    %8162 = vmatpush1.bf16.msra.mxu0 %v8058
    %8163 = vmatprep.mubr.bf16.mxu0 %v7894
    %8164 = vmatmul.mubr.bf16.gmra.mrb[0].mxu0 %v7887
    %v8165 = vpop.f32.mrb[0].mxu0
    %v8166 = vadd.f32 %v8126, %v8165
    %v8167 = vpop.f32.mrb[0].mxu0
    %v8168 = vpop.f32.mrb[0].mxu0
    %v8169 = vpop.f32.mrb[0].mxu0
    %8170 = vdwg.mxu0
    %v8173 = vunpack.c.l.b16 %v7741
    %v8174 = vunpack.c.h.b16 %v7741
    %v8175 = vunpack.c.l.b16 %v7742
    %v8176 = vpack.c.b16 %v8173, %v8173
    %v8177 = vpack.c.b16 %v8174, %v8174
    %v8178 = vpack.c.b16 %v8175, %v8175
    %v8230 = vunpack.c.l.b16 %v7743
    %v8231 = vunpack.c.l.b16 %v7744
    %v8232 = vunpack.c.l.b16 %v7745
    %v8233 = vunpack.c.l.b16 %v7746
    %v8234 = vunpack.c.l.b16 %v7747
    %v8235 = vunpack.c.l.b16 %v7748
    %v8236 = vunpack.c.l.b16 %v7749
    %v8237 = vunpack.c.l.b16 %v7750
    %v8238 = vunpack.c.l.b16 %v7751
    %v8239 = vunpack.c.l.b16 %v7752
    %v8240 = vunpack.c.l.b16 %v7753
    %v8241 = vunpack.c.l.b16 %v7754
    %v8242 = vunpack.c.l.b16 %v7755
    %v8243 = vunpack.c.l.b16 %v7756
    %v8244 = vunpack.c.l.b16 %v7757
    %v8245 = vunpack.c.l.b16 %v7758
    %v8246 = vunpack.c.l.b16 %v7759
    %v8247 = vunpack.c.l.b16 %v7760
    %v8248 = vunpack.c.l.b16 %v7761
    %v8249 = vunpack.c.l.b16 %v7762
    %v8250 = vunpack.c.l.b16 %v7763
    %v8251 = vunpack.c.l.b16 %v7764
    %v8252 = vunpack.c.l.b16 %v7765
    %v8253 = vunpack.c.l.b16 %v7766
    %v8254 = vunpack.c.l.b16 %v7767
    %v8255 = vunpack.c.l.b16 %v7768
    %v8256 = vunpack.c.l.b16 %v7769
    %v8257 = vunpack.c.l.b16 %v7770
    %v8258 = vunpack.c.l.b16 %v7771
    %v8259 = vunpack.c.l.b16 %v7772
    %v8260 = vunpack.c.l.b16 %v7773
    %v8261 = vunpack.c.l.b16 %v7774
    %v8262 = vunpack.c.l.b16 %v7775
    %v8263 = vunpack.c.l.b16 %v7776
    %v8264 = vunpack.c.l.b16 %v7777
    %v8265 = vunpack.c.l.b16 %v7778
    %v8266 = vunpack.c.l.b16 %v7779
    %v8267 = vunpack.c.l.b16 %v7780
    %v8268 = vunpack.c.l.b16 %v7781
    %v8269 = vunpack.c.l.b16 %v7782
    %v8270 = vunpack.c.l.b16 %v7783
    %v8271 = vunpack.c.l.b16 %v7784
    %v8272 = vunpack.c.l.b16 %v7785
    %v8273 = vunpack.c.l.b16 %v7786
    %v8274 = vunpack.c.l.b16 %v7787
    %v8275 = vunpack.c.l.b16 %v7788
    %v8276 = vunpack.c.l.b16 %v7789
    %v8277 = vunpack.c.l.b16 %v7790
    %v8278 = vpack.c.b16 %v8231, %v8230
    %v8279 = vpack.c.b16 %v8233, %v8232
    %v8280 = vpack.c.b16 %v8235, %v8234
    %v8281 = vpack.c.b16 %v8237, %v8236
    %v8282 = vpack.c.b16 %v8239, %v8238
    %v8283 = vpack.c.b16 %v8241, %v8240
    %v8284 = vpack.c.b16 %v8243, %v8242
    %v8285 = vpack.c.b16 %v8245, %v8244
    %v8286 = vpack.c.b16 %v8247, %v8246
    %v8287 = vpack.c.b16 %v8249, %v8248
    %v8288 = vpack.c.b16 %v8251, %v8250
    %v8289 = vpack.c.b16 %v8253, %v8252
    %v8290 = vpack.c.b16 %v8255, %v8254
    %v8291 = vpack.c.b16 %v8257, %v8256
    %v8292 = vpack.c.b16 %v8259, %v8258
    %v8293 = vpack.c.b16 %v8261, %v8260
    %v8294 = vpack.c.b16 %v8263, %v8262
    %v8295 = vpack.c.b16 %v8265, %v8264
    %v8296 = vpack.c.b16 %v8267, %v8266
    %v8297 = vpack.c.b16 %v8269, %v8268
    %v8298 = vpack.c.b16 %v8271, %v8270
    %v8299 = vpack.c.b16 %v8273, %v8272
    %v8300 = vpack.c.b16 %v8275, %v8274
    %v8301 = vpack.c.b16 %v8277, %v8276
    %8326 = vmatprep.subr.bf16.mxu0 0
    %8327 = vmatpush1.bf16.msra.mxu0 %v8278
    %8328 = vmatprep.subr.bf16.mxu0 0
    %8329 = vmatpush1.bf16.msra.mxu0 %v8279
    %8330 = vmatprep.subr.bf16.mxu0 0
    %8331 = vmatpush1.bf16.msra.mxu0 %v8280
    %8332 = vmatprep.subr.bf16.mxu0 0
    %8333 = vmatpush1.bf16.msra.mxu0 %v8281
    %8334 = vmatprep.subr.bf16.mxu0 0
    %8335 = vmatpush1.bf16.msra.mxu0 %v8282
    %8336 = vmatprep.subr.bf16.mxu0 0
    %8337 = vmatpush1.bf16.msra.mxu0 %v8283
    %8338 = vmatprep.subr.bf16.mxu0 0
    %8339 = vmatpush1.bf16.msra.mxu0 %v8284
    %8340 = vmatprep.subr.bf16.mxu0 0
    %8341 = vmatpush1.bf16.msra.mxu0 %v8285
    %8342 = vmatprep.subr.bf16.mxu0 0
    %8343 = vmatpush1.bf16.msra.mxu0 %v8286
    %8344 = vmatprep.subr.bf16.mxu0 0
    %8345 = vmatpush1.bf16.msra.mxu0 %v8287
    %8346 = vmatprep.subr.bf16.mxu0 0
    %8347 = vmatpush1.bf16.msra.mxu0 %v8288
    %8348 = vmatprep.subr.bf16.mxu0 0
    %8349 = vmatpush1.bf16.msra.mxu0 %v8289
    %8350 = vmatprep.subr.bf16.mxu0 0
    %8351 = vmatpush1.bf16.msra.mxu0 %v8290
    %8352 = vmatprep.subr.bf16.mxu0 0
    %8353 = vmatpush1.bf16.msra.mxu0 %v8291
    %8354 = vmatprep.subr.bf16.mxu0 0
    %8355 = vmatpush1.bf16.msra.mxu0 %v8292
    %8356 = vmatprep.subr.bf16.mxu0 0
    %8357 = vmatpush1.bf16.msra.mxu0 %v8293
    %8358 = vmatprep.mubr.bf16.mxu0 %v8177
    %8359 = vmatmul.mubr.bf16.gmra.mrb[0].mxu0 %v8176
    %v8360 = vpop.f32.mrb[0].mxu0
    %v8361 = vadd.f32 %v8166, %v8360
    %v8362 = vpop.f32.mrb[0].mxu0
    %v8363 = vpop.f32.mrb[0].mxu0
    %v8364 = vpop.f32.mrb[0].mxu0
    %8365 = vdwg.mxu0
    %8366 = vmatprep.subr.bf16.mxu0 0
    %8367 = vmatpush1.bf16.msra.mxu0 %v8294
    %8368 = vmatprep.subr.bf16.mxu0 0
    %8369 = vmatpush1.bf16.msra.mxu0 %v8295
    %8370 = vmatprep.subr.bf16.mxu0 0
    %8371 = vmatpush1.bf16.msra.mxu0 %v8296
    %8372 = vmatprep.subr.bf16.mxu0 0
    %8373 = vmatpush1.bf16.msra.mxu0 %v8297
    %8374 = vmatprep.subr.bf16.mxu0 0
    %8375 = vmatpush1.bf16.msra.mxu0 %v8298
    %8376 = vmatprep.subr.bf16.mxu0 0
    %8377 = vmatpush1.bf16.msra.mxu0 %v8299
    %8378 = vmatprep.subr.bf16.mxu0 0
    %8379 = vmatpush1.bf16.msra.mxu0 %v8300
    %8380 = vmatprep.subr.bf16.mxu0 0
    %8381 = vmatpush1.bf16.msra.mxu0 %v8301
    %8382 = vmatprep.subr.bf16.mxu0 0
    %8383 = vmatpush1.bf16.msra.mxu0 0
    %8384 = vmatprep.subr.bf16.mxu0 0
    %8385 = vmatpush1.bf16.msra.mxu0 0
    %8386 = vmatprep.subr.bf16.mxu0 0
    %8387 = vmatpush1.bf16.msra.mxu0 0
    %8388 = vmatprep.subr.bf16.mxu0 0
    %8389 = vmatpush1.bf16.msra.mxu0 0
    %8390 = vmatprep.subr.bf16.mxu0 0
    %8391 = vmatpush1.bf16.msra.mxu0 0
    %8392 = vmatprep.subr.bf16.mxu0 0
    %8393 = vmatpush1.bf16.msra.mxu0 0
    %8394 = vmatprep.subr.bf16.mxu0 0
    %8395 = vmatpush1.bf16.msra.mxu0 0
    %8396 = vmatprep.subr.bf16.mxu0 0
    %8397 = vmatpush1.bf16.msra.mxu0 0
    %8398 = vmatprep.mubr.bf16.mxu0 0
    %8399 = vmatmul.mubr.bf16.gmra.mrb[0].mxu0 %v8178
    %v8400 = vpop.f32.mrb[0].mxu0
    %v8401 = vadd.f32 %v8361, %v8400
    %v8402 = vpop.f32.mrb[0].mxu0
    %v8403 = vpop.f32.mrb[0].mxu0
    %v8404 = vpop.f32.mrb[0].mxu0
    %8405 = vdwg.mxu0
    %v8406 = vld [vmem:[%s4] sm:$0x1]
    %v8408 = vlaneseq
    %v8409 = vshrl.u32 %v8408, 7
    %v8410 = vsub.s32 0, %v8409
    %v8411 = vrot.slane %v8406, %v8410
    %v8413 = vadd.f32 %v8401, %v8411
    %v8414 = vmax.f32 %v8413, 0.0
    %v8415 = vpack.c.bf16 %v8414, %v8414
    %v8417 = vunpack.c.l.b16 %v8415
    %v8418 = vpack.c.b16 %v8417, %v8417
    %v8419 = vrot.slane %v8418, 7
    %8421 = vst [vmem:[#allocation3] sm:$0x6] %v8419
    %v8422 = vld [vmem:[#allocation2 + $0xc] sm:$0x3]
    %v8423 = vld [vmem:[#allocation6] sm:$0xf]
    %v8424 = vld [vmem:[#allocation6 + $0x4] sm:$0xf]
    %v8425 = vld [vmem:[#allocation6 + $0x8] sm:$0xf]
    %v8426 = vld [vmem:[#allocation6 + $0xc] sm:$0xf]
    %v8427 = vld [vmem:[#allocation6 + $0x10] sm:$0xf]
    %v8428 = vld [vmem:[#allocation6 + $0x14] sm:$0xf]
    %v8429 = vld [vmem:[#allocation6 + $0x18] sm:$0xf]
    %v8430 = vld [vmem:[#allocation6 + $0x1c] sm:$0xf]
    %v8431 = vld [vmem:[#allocation6 + $0x20] sm:$0xf]
    %v8432 = vld [vmem:[#allocation6 + $0x24] sm:$0xf]
    %v8433 = vld [vmem:[#allocation6 + $0x28] sm:$0xf]
    %v8434 = vld [vmem:[#allocation6 + $0x2c] sm:$0xf]
    %v8435 = vld [vmem:[#allocation6 + $0x30] sm:$0xf]
    %v8436 = vld [vmem:[#allocation6 + $0x34] sm:$0xf]
    %v8437 = vld [vmem:[#allocation6 + $0x38] sm:$0xf]
    %v8438 = vld [vmem:[#allocation6 + $0x3c] sm:$0xf]
    %v8439 = vld [vmem:[#allocation2] sm:$0x77]
    %v8440 = vld [vmem:[#allocation2 + $0x8] sm:$0x77]
    %v8441 = vld [vmem:[#allocation6 + $0x40] sm:$0xf]
    %v8442 = vld [vmem:[#allocation6 + $0x44] sm:$0xf]
    %v8443 = vld [vmem:[#allocation6 + $0x48] sm:$0xf]
    %v8444 = vld [vmem:[#allocation6 + $0x4c] sm:$0xf]
    %v8445 = vld [vmem:[#allocation6 + $0x50] sm:$0xf]
    %v8446 = vld [vmem:[#allocation6 + $0x54] sm:$0xf]
    %v8447 = vld [vmem:[#allocation6 + $0x58] sm:$0xf]
    %v8448 = vld [vmem:[#allocation6 + $0x5c] sm:$0xf]
    %v8449 = vld [vmem:[#allocation6 + $0x60] sm:$0xf]
    %v8450 = vld [vmem:[#allocation6 + $0x64] sm:$0xf]
    %v8451 = vld [vmem:[#allocation6 + $0x68] sm:$0xf]
    %v8452 = vld [vmem:[#allocation6 + $0x6c] sm:$0xf]
    %v8453 = vld [vmem:[#allocation6 + $0x70] sm:$0xf]
    %v8454 = vld [vmem:[#allocation6 + $0x74] sm:$0xf]
    %v8455 = vld [vmem:[#allocation6 + $0x78] sm:$0xf]
    %v8456 = vld [vmem:[#allocation6 + $0x7c] sm:$0xf]
    %v8457 = vld [vmem:[#allocation6 + $0x80] sm:$0xf]
    %v8458 = vld [vmem:[#allocation6 + $0x84] sm:$0xf]
    %v8459 = vld [vmem:[#allocation6 + $0x88] sm:$0xf]
    %v8460 = vld [vmem:[#allocation6 + $0x8c] sm:$0xf]
    %v8461 = vld [vmem:[#allocation6 + $0x90] sm:$0xf]
    %v8462 = vld [vmem:[#allocation6 + $0x94] sm:$0xf]
    %v8463 = vld [vmem:[#allocation6 + $0x98] sm:$0xf]
    %v8464 = vld [vmem:[#allocation6 + $0x9c] sm:$0xf]
    %v8465 = vld [vmem:[#allocation6 + $0xa0] sm:$0xf]
    %v8466 = vld [vmem:[#allocation6 + $0xa4] sm:$0xf]
    %v8467 = vld [vmem:[#allocation6 + $0xa8] sm:$0xf]
    %v8468 = vld [vmem:[#allocation6 + $0xac] sm:$0xf]
    %v8469 = vld [vmem:[#allocation6 + $0xb0] sm:$0xf]
    %v8470 = vld [vmem:[#allocation6 + $0xb4] sm:$0xf]
    %v8471 = vld [vmem:[#allocation6 + $0xb8] sm:$0xf]
    %v8472 = vld [vmem:[#allocation6 + $0xbc] sm:$0xf]
    %v8473 = vld [vmem:[#allocation6 + $0xc0] sm:$0xf]
    %v8474 = vld [vmem:[#allocation6 + $0xc4] sm:$0xf]
    %v8475 = vld [vmem:[#allocation6 + $0xc8] sm:$0xf]
    %v8476 = vld [vmem:[#allocation6 + $0xcc] sm:$0xf]
    %v8477 = vld [vmem:[#allocation6 + $0xd0] sm:$0xf]
    %v8478 = vld [vmem:[#allocation6 + $0xd4] sm:$0xf]
    %v8479 = vld [vmem:[#allocation6 + $0xd8] sm:$0xf]
    %v8480 = vld [vmem:[#allocation6 + $0xdc] sm:$0xf]
    %v8481 = vld [vmem:[#allocation6 + $0xe0] sm:$0xf]
    %v8482 = vld [vmem:[#allocation6 + $0xe4] sm:$0xf]
    %v8483 = vld [vmem:[#allocation6 + $0xe8] sm:$0xf]
    %v8484 = vld [vmem:[#allocation6 + $0xec] sm:$0xf]
    %v8485 = vld [vmem:[#allocation6 + $0xf0] sm:$0xf]
    %v8486 = vld [vmem:[#allocation6 + $0xf4] sm:$0xf]
    %v8487 = vld [vmem:[#allocation6 + $0xf8] sm:$0xf]
    %v8488 = vld [vmem:[#allocation6 + $0xfc] sm:$0xf]
    %v8489 = vld [vmem:[#allocation6 + $0x100] sm:$0xf]
    %v8490 = vld [vmem:[#allocation6 + $0x104] sm:$0xf]
    %v8491 = vld [vmem:[#allocation6 + $0x108] sm:$0xf]
    %v8492 = vld [vmem:[#allocation6 + $0x10c] sm:$0xf]
    %v8493 = vld [vmem:[#allocation6 + $0x110] sm:$0xf]
    %v8494 = vld [vmem:[#allocation6 + $0x114] sm:$0xf]
    %v8495 = vld [vmem:[#allocation6 + $0x118] sm:$0xf]
    %v8496 = vld [vmem:[#allocation6 + $0x11c] sm:$0xf]
    %v8497 = vld [vmem:[#allocation6 + $0x120] sm:$0xf]
    %v8498 = vld [vmem:[#allocation6 + $0x124] sm:$0xf]
    %v8499 = vld [vmem:[#allocation6 + $0x128] sm:$0xf]
    %v8500 = vld [vmem:[#allocation6 + $0x12c] sm:$0xf]
    %v8501 = vld [vmem:[#allocation6 + $0x130] sm:$0xf]
    %v8502 = vld [vmem:[#allocation6 + $0x134] sm:$0xf]
    %v8503 = vld [vmem:[#allocation6 + $0x138] sm:$0xf]
    %v8504 = vld [vmem:[#allocation6 + $0x13c] sm:$0xf]
    %v8507 = vunpack.c.l.b16 %v8439
    %v8508 = vunpack.c.h.b16 %v8439
    %v8509 = vunpack.c.l.b16 %v8440
    %v8510 = vunpack.c.h.b16 %v8440
    %v8511 = vpack.c.b16 %v8507, %v8507
    %v8512 = vpack.c.b16 %v8508, %v8508
    %v8513 = vpack.c.b16 %v8509, %v8509
    %v8514 = vpack.c.b16 %v8510, %v8510
    %v8516 = vshrl.u32 %v8511, 16
    %v8518 = vshll.u32 %v8511, 16
    %v8520 = vrot.slane %v8518, 1
    %v8521 = vor.u32 %v8516, %v8520
    %v8523 = vshrl.u32 %v8512, 16
    %v8525 = vshll.u32 %v8512, 16
    %v8527 = vrot.slane %v8525, 1
    %v8528 = vor.u32 %v8523, %v8527
    %v8530 = vshrl.u32 %v8513, 16
    %v8532 = vshll.u32 %v8513, 16
    %v8534 = vrot.slane %v8532, 1
    %v8535 = vor.u32 %v8530, %v8534
    %v8537 = vshrl.u32 %v8514, 16
    %v8539 = vshll.u32 %v8514, 16
    %v8541 = vrot.slane %v8539, 1
    %v8542 = vor.u32 %v8537, %v8541
    %v8611 = vunpack.c.l.b16 %v8441
    %v8612 = vunpack.c.l.b16 %v8442
    %v8613 = vunpack.c.l.b16 %v8443
    %v8614 = vunpack.c.l.b16 %v8444
    %v8615 = vunpack.c.l.b16 %v8445
    %v8616 = vunpack.c.l.b16 %v8446
    %v8617 = vunpack.c.l.b16 %v8447
    %v8618 = vunpack.c.l.b16 %v8448
    %v8619 = vunpack.c.l.b16 %v8449
    %v8620 = vunpack.c.l.b16 %v8450
    %v8621 = vunpack.c.l.b16 %v8451
    %v8622 = vunpack.c.l.b16 %v8452
    %v8623 = vunpack.c.l.b16 %v8453
    %v8624 = vunpack.c.l.b16 %v8454
    %v8625 = vunpack.c.l.b16 %v8455
    %v8626 = vunpack.c.l.b16 %v8456
    %v8627 = vunpack.c.l.b16 %v8457
    %v8628 = vunpack.c.l.b16 %v8458
    %v8629 = vunpack.c.l.b16 %v8459
    %v8630 = vunpack.c.l.b16 %v8460
    %v8631 = vunpack.c.l.b16 %v8461
    %v8632 = vunpack.c.l.b16 %v8462
    %v8633 = vunpack.c.l.b16 %v8463
    %v8634 = vunpack.c.l.b16 %v8464
    %v8635 = vunpack.c.l.b16 %v8465
    %v8636 = vunpack.c.l.b16 %v8466
    %v8637 = vunpack.c.l.b16 %v8467
    %v8638 = vunpack.c.l.b16 %v8468
    %v8639 = vunpack.c.l.b16 %v8469
    %v8640 = vunpack.c.l.b16 %v8470
    %v8641 = vunpack.c.l.b16 %v8471
    %v8642 = vunpack.c.l.b16 %v8472
    %v8643 = vunpack.c.l.b16 %v8473
    %v8644 = vunpack.c.l.b16 %v8474
    %v8645 = vunpack.c.l.b16 %v8475
    %v8646 = vunpack.c.l.b16 %v8476
    %v8647 = vunpack.c.l.b16 %v8477
    %v8648 = vunpack.c.l.b16 %v8478
    %v8649 = vunpack.c.l.b16 %v8479
    %v8650 = vunpack.c.l.b16 %v8480
    %v8651 = vunpack.c.l.b16 %v8481
    %v8652 = vunpack.c.l.b16 %v8482
    %v8653 = vunpack.c.l.b16 %v8483
    %v8654 = vunpack.c.l.b16 %v8484
    %v8655 = vunpack.c.l.b16 %v8485
    %v8656 = vunpack.c.l.b16 %v8486
    %v8657 = vunpack.c.l.b16 %v8487
    %v8658 = vunpack.c.l.b16 %v8488
    %v8659 = vunpack.c.l.b16 %v8489
    %v8660 = vunpack.c.l.b16 %v8490
    %v8661 = vunpack.c.l.b16 %v8491
    %v8662 = vunpack.c.l.b16 %v8492
    %v8663 = vunpack.c.l.b16 %v8493
    %v8664 = vunpack.c.l.b16 %v8494
    %v8665 = vunpack.c.l.b16 %v8495
    %v8666 = vunpack.c.l.b16 %v8496
    %v8667 = vunpack.c.l.b16 %v8497
    %v8668 = vunpack.c.l.b16 %v8498
    %v8669 = vunpack.c.l.b16 %v8499
    %v8670 = vunpack.c.l.b16 %v8500
    %v8671 = vunpack.c.l.b16 %v8501
    %v8672 = vunpack.c.l.b16 %v8502
    %v8673 = vunpack.c.l.b16 %v8503
    %v8674 = vunpack.c.l.b16 %v8504
    %v8675 = vpack.c.b16 %v8612, %v8611
    %v8676 = vpack.c.b16 %v8614, %v8613
    %v8677 = vpack.c.b16 %v8616, %v8615
    %v8678 = vpack.c.b16 %v8618, %v8617
    %v8679 = vpack.c.b16 %v8620, %v8619
    %v8680 = vpack.c.b16 %v8622, %v8621
    %v8681 = vpack.c.b16 %v8624, %v8623
    %v8682 = vpack.c.b16 %v8626, %v8625
    %v8683 = vpack.c.b16 %v8628, %v8627
    %v8684 = vpack.c.b16 %v8630, %v8629
    %v8685 = vpack.c.b16 %v8632, %v8631
    %v8686 = vpack.c.b16 %v8634, %v8633
    %v8687 = vpack.c.b16 %v8636, %v8635
    %v8688 = vpack.c.b16 %v8638, %v8637
    %v8689 = vpack.c.b16 %v8640, %v8639
    %v8690 = vpack.c.b16 %v8642, %v8641
    %v8691 = vpack.c.b16 %v8644, %v8643
    %v8692 = vpack.c.b16 %v8646, %v8645
    %v8693 = vpack.c.b16 %v8648, %v8647
    %v8694 = vpack.c.b16 %v8650, %v8649
    %v8695 = vpack.c.b16 %v8652, %v8651
    %v8696 = vpack.c.b16 %v8654, %v8653
    %v8697 = vpack.c.b16 %v8656, %v8655
    %v8698 = vpack.c.b16 %v8658, %v8657
    %v8699 = vpack.c.b16 %v8660, %v8659
    %v8700 = vpack.c.b16 %v8662, %v8661
    %v8701 = vpack.c.b16 %v8664, %v8663
    %v8702 = vpack.c.b16 %v8666, %v8665
    %v8703 = vpack.c.b16 %v8668, %v8667
    %v8704 = vpack.c.b16 %v8670, %v8669
    %v8705 = vpack.c.b16 %v8672, %v8671
    %v8706 = vpack.c.b16 %v8674, %v8673
    %8739 = vmatprep.subr.bf16.mxu0 0
    %8740 = vmatpush1.bf16.msra.mxu0 %v8675
    %8741 = vmatprep.subr.bf16.mxu0 0
    %8742 = vmatpush1.bf16.msra.mxu0 %v8676
    %8743 = vmatprep.subr.bf16.mxu0 0
    %8744 = vmatpush1.bf16.msra.mxu0 %v8677
    %8745 = vmatprep.subr.bf16.mxu0 0
    %8746 = vmatpush1.bf16.msra.mxu0 %v8678
    %8747 = vmatprep.subr.bf16.mxu0 0
    %8748 = vmatpush1.bf16.msra.mxu0 %v8679
    %8749 = vmatprep.subr.bf16.mxu0 0
    %8750 = vmatpush1.bf16.msra.mxu0 %v8680
    %8751 = vmatprep.subr.bf16.mxu0 0
    %8752 = vmatpush1.bf16.msra.mxu0 %v8681
    %8753 = vmatprep.subr.bf16.mxu0 0
    %8754 = vmatpush1.bf16.msra.mxu0 %v8682
    %8755 = vmatprep.subr.bf16.mxu0 0
    %8756 = vmatpush1.bf16.msra.mxu0 %v8683
    %8757 = vmatprep.subr.bf16.mxu0 0
    %8758 = vmatpush1.bf16.msra.mxu0 %v8684
    %8759 = vmatprep.subr.bf16.mxu0 0
    %8760 = vmatpush1.bf16.msra.mxu0 %v8685
    %8761 = vmatprep.subr.bf16.mxu0 0
    %8762 = vmatpush1.bf16.msra.mxu0 %v8686
    %8763 = vmatprep.subr.bf16.mxu0 0
    %8764 = vmatpush1.bf16.msra.mxu0 %v8687
    %8765 = vmatprep.subr.bf16.mxu0 0
    %8766 = vmatpush1.bf16.msra.mxu0 %v8688
    %8767 = vmatprep.subr.bf16.mxu0 0
    %8768 = vmatpush1.bf16.msra.mxu0 %v8689
    %8769 = vmatprep.subr.bf16.mxu0 0
    %8770 = vmatpush1.bf16.msra.mxu0 %v8690
    %8771 = vmatprep.mubr.bf16.mxu0 %v8528
    %8772 = vmatmul.mubr.bf16.gmra.mrb[0].mxu0 %v8521
    %v8773 = vpop.f32.mrb[0].mxu0
    %v8774 = vadd.f32 0.0, %v8773
    %v8775 = vpop.f32.mrb[0].mxu0
    %v8776 = vpop.f32.mrb[0].mxu0
    %v8777 = vpop.f32.mrb[0].mxu0
    %8778 = vdwg.mxu0
    %8779 = vmatprep.subr.bf16.mxu0 0
    %8780 = vmatpush1.bf16.msra.mxu0 %v8691
    %8781 = vmatprep.subr.bf16.mxu0 0
    %8782 = vmatpush1.bf16.msra.mxu0 %v8692
    %8783 = vmatprep.subr.bf16.mxu0 0
    %8784 = vmatpush1.bf16.msra.mxu0 %v8693
    %8785 = vmatprep.subr.bf16.mxu0 0
    %8786 = vmatpush1.bf16.msra.mxu0 %v8694
    %8787 = vmatprep.subr.bf16.mxu0 0
    %8788 = vmatpush1.bf16.msra.mxu0 %v8695
    %8789 = vmatprep.subr.bf16.mxu0 0
    %8790 = vmatpush1.bf16.msra.mxu0 %v8696
    %8791 = vmatprep.subr.bf16.mxu0 0
    %8792 = vmatpush1.bf16.msra.mxu0 %v8697
    %8793 = vmatprep.subr.bf16.mxu0 0
    %8794 = vmatpush1.bf16.msra.mxu0 %v8698
    %8795 = vmatprep.subr.bf16.mxu0 0
    %8796 = vmatpush1.bf16.msra.mxu0 %v8699
    %8797 = vmatprep.subr.bf16.mxu0 0
    %8798 = vmatpush1.bf16.msra.mxu0 %v8700
    %8799 = vmatprep.subr.bf16.mxu0 0
    %8800 = vmatpush1.bf16.msra.mxu0 %v8701
    %8801 = vmatprep.subr.bf16.mxu0 0
    %8802 = vmatpush1.bf16.msra.mxu0 %v8702
    %8803 = vmatprep.subr.bf16.mxu0 0
    %8804 = vmatpush1.bf16.msra.mxu0 %v8703
    %8805 = vmatprep.subr.bf16.mxu0 0
    %8806 = vmatpush1.bf16.msra.mxu0 %v8704
    %8807 = vmatprep.subr.bf16.mxu0 0
    %8808 = vmatpush1.bf16.msra.mxu0 %v8705
    %8809 = vmatprep.subr.bf16.mxu0 0
    %8810 = vmatpush1.bf16.msra.mxu0 %v8706
    %8811 = vmatprep.mubr.bf16.mxu0 %v8542
    %8812 = vmatmul.mubr.bf16.gmra.mrb[0].mxu0 %v8535
    %v8813 = vpop.f32.mrb[0].mxu0
    %v8814 = vadd.f32 %v8774, %v8813
    %v8815 = vpop.f32.mrb[0].mxu0
    %v8816 = vpop.f32.mrb[0].mxu0
    %v8817 = vpop.f32.mrb[0].mxu0
    %8818 = vdwg.mxu0
    %v8835 = vunpack.c.l.b16 %v8423
    %v8836 = vunpack.c.l.b16 %v8424
    %v8837 = vunpack.c.l.b16 %v8425
    %v8838 = vunpack.c.l.b16 %v8426
    %v8839 = vunpack.c.l.b16 %v8427
    %v8840 = vunpack.c.l.b16 %v8428
    %v8841 = vunpack.c.l.b16 %v8429
    %v8842 = vunpack.c.l.b16 %v8430
    %v8843 = vunpack.c.l.b16 %v8431
    %v8844 = vunpack.c.l.b16 %v8432
    %v8845 = vunpack.c.l.b16 %v8433
    %v8846 = vunpack.c.l.b16 %v8434
    %v8847 = vunpack.c.l.b16 %v8435
    %v8848 = vunpack.c.l.b16 %v8436
    %v8849 = vunpack.c.l.b16 %v8437
    %v8850 = vunpack.c.l.b16 %v8438
    %v8851 = vpack.c.b16 %v8836, %v8835
    %v8852 = vpack.c.b16 %v8838, %v8837
    %v8853 = vpack.c.b16 %v8840, %v8839
    %v8854 = vpack.c.b16 %v8842, %v8841
    %v8855 = vpack.c.b16 %v8844, %v8843
    %v8856 = vpack.c.b16 %v8846, %v8845
    %v8857 = vpack.c.b16 %v8848, %v8847
    %v8858 = vpack.c.b16 %v8850, %v8849
    %8867 = vmatprep.subr.bf16.mxu0 0
    %8868 = vmatpush1.bf16.msra.mxu0 %v8851
    %8869 = vmatprep.subr.bf16.mxu0 0
    %8870 = vmatpush1.bf16.msra.mxu0 %v8852
    %8871 = vmatprep.subr.bf16.mxu0 0
    %8872 = vmatpush1.bf16.msra.mxu0 %v8853
    %8873 = vmatprep.subr.bf16.mxu0 0
    %8874 = vmatpush1.bf16.msra.mxu0 %v8854
    %8875 = vmatprep.subr.bf16.mxu0 0
    %8876 = vmatpush1.bf16.msra.mxu0 %v8855
    %8877 = vmatprep.subr.bf16.mxu0 0
    %8878 = vmatpush1.bf16.msra.mxu0 %v8856
    %8879 = vmatprep.subr.bf16.mxu0 0
    %8880 = vmatpush1.bf16.msra.mxu0 %v8857
    %8881 = vmatprep.subr.bf16.mxu0 0
    %8882 = vmatpush1.bf16.msra.mxu0 %v8858
    %8883 = vmatprep.subr.bf16.mxu0 0
    %8884 = vmatpush1.bf16.msra.mxu0 0
    %8885 = vmatprep.subr.bf16.mxu0 0
    %8886 = vmatpush1.bf16.msra.mxu0 0
    %8887 = vmatprep.subr.bf16.mxu0 0
    %8888 = vmatpush1.bf16.msra.mxu0 0
    %8889 = vmatprep.subr.bf16.mxu0 0
    %8890 = vmatpush1.bf16.msra.mxu0 0
    %8891 = vmatprep.subr.bf16.mxu0 0
    %8892 = vmatpush1.bf16.msra.mxu0 0
    %8893 = vmatprep.subr.bf16.mxu0 0
    %8894 = vmatpush1.bf16.msra.mxu0 0
    %8895 = vmatprep.subr.bf16.mxu0 0
    %8896 = vmatpush1.bf16.msra.mxu0 0
    %8897 = vmatprep.subr.bf16.mxu0 0
    %8898 = vmatpush1.bf16.msra.mxu0 0
    %8899 = vmatprep.mubr.bf16.mxu0 0
    %8900 = vmatmul.mubr.bf16.gmra.mrb[0].mxu0 %v8422
    %v8901 = vpop.f32.mrb[0].mxu0
    %v8902 = vadd.f32 %v8814, %v8901
    %v8903 = vpop.f32.mrb[0].mxu0
    %v8904 = vpop.f32.mrb[0].mxu0
    %v8905 = vpop.f32.mrb[0].mxu0
    %8906 = vdwg.mxu0
    %v8907 = vld [vmem:[#allocation2] sm:$0x66]
    %v8908 = vld [vmem:[#allocation6 + $0x140] sm:$0xf]
    %v8909 = vld [vmem:[#allocation6 + $0x144] sm:$0xf]
    %v8910 = vld [vmem:[#allocation6 + $0x148] sm:$0xf]
    %v8911 = vld [vmem:[#allocation6 + $0x14c] sm:$0xf]
    %v8912 = vld [vmem:[#allocation6 + $0x150] sm:$0xf]
    %v8913 = vld [vmem:[#allocation6 + $0x154] sm:$0xf]
    %v8914 = vld [vmem:[#allocation6 + $0x158] sm:$0xf]
    %v8915 = vld [vmem:[#allocation6 + $0x15c] sm:$0xf]
    %v8916 = vld [vmem:[#allocation6 + $0x160] sm:$0xf]
    %v8917 = vld [vmem:[#allocation6 + $0x164] sm:$0xf]
    %v8918 = vld [vmem:[#allocation6 + $0x168] sm:$0xf]
    %v8919 = vld [vmem:[#allocation6 + $0x16c] sm:$0xf]
    %v8920 = vld [vmem:[#allocation6 + $0x170] sm:$0xf]
    %v8921 = vld [vmem:[#allocation6 + $0x174] sm:$0xf]
    %v8922 = vld [vmem:[#allocation6 + $0x178] sm:$0xf]
    %v8923 = vld [vmem:[#allocation6 + $0x17c] sm:$0xf]
    %v8924 = vld [vmem:[#allocation6 + $0x180] sm:$0xf]
    %v8925 = vld [vmem:[#allocation6 + $0x184] sm:$0xf]
    %v8926 = vld [vmem:[#allocation6 + $0x188] sm:$0xf]
    %v8927 = vld [vmem:[#allocation6 + $0x18c] sm:$0xf]
    %v8928 = vld [vmem:[#allocation6 + $0x190] sm:$0xf]
    %v8929 = vld [vmem:[#allocation6 + $0x194] sm:$0xf]
    %v8930 = vld [vmem:[#allocation6 + $0x198] sm:$0xf]
    %v8931 = vld [vmem:[#allocation6 + $0x19c] sm:$0xf]
    %v8932 = vld [vmem:[#allocation6 + $0x1a0] sm:$0xf]
    %v8933 = vld [vmem:[#allocation6 + $0x1a4] sm:$0xf]
    %v8934 = vld [vmem:[#allocation6 + $0x1a8] sm:$0xf]
    %v8935 = vld [vmem:[#allocation6 + $0x1ac] sm:$0xf]
    %v8936 = vld [vmem:[#allocation6 + $0x1b0] sm:$0xf]
    %v8937 = vld [vmem:[#allocation6 + $0x1b4] sm:$0xf]
    %v8938 = vld [vmem:[#allocation6 + $0x1b8] sm:$0xf]
    %v8939 = vld [vmem:[#allocation6 + $0x1bc] sm:$0xf]
    %v8941 = vunpack.c.l.b16 %v8907
    %v8942 = vunpack.c.h.b16 %v8907
    %v8943 = vpack.c.b16 %v8941, %v8941
    %v8944 = vpack.c.b16 %v8942, %v8942
    %v8945 = vrot.slane %v8943, 1
    %v8946 = vrot.slane %v8944, 1
    %v8981 = vunpack.c.l.b16 %v8908
    %v8982 = vunpack.c.l.b16 %v8909
    %v8983 = vunpack.c.l.b16 %v8910
    %v8984 = vunpack.c.l.b16 %v8911
    %v8985 = vunpack.c.l.b16 %v8912
    %v8986 = vunpack.c.l.b16 %v8913
    %v8987 = vunpack.c.l.b16 %v8914
    %v8988 = vunpack.c.l.b16 %v8915
    %v8989 = vunpack.c.l.b16 %v8916
    %v8990 = vunpack.c.l.b16 %v8917
    %v8991 = vunpack.c.l.b16 %v8918
    %v8992 = vunpack.c.l.b16 %v8919
    %v8993 = vunpack.c.l.b16 %v8920
    %v8994 = vunpack.c.l.b16 %v8921
    %v8995 = vunpack.c.l.b16 %v8922
    %v8996 = vunpack.c.l.b16 %v8923
    %v8997 = vunpack.c.l.b16 %v8924
    %v8998 = vunpack.c.l.b16 %v8925
    %v8999 = vunpack.c.l.b16 %v8926
    %v9000 = vunpack.c.l.b16 %v8927
    %v9001 = vunpack.c.l.b16 %v8928
    %v9002 = vunpack.c.l.b16 %v8929
    %v9003 = vunpack.c.l.b16 %v8930
    %v9004 = vunpack.c.l.b16 %v8931
    %v9005 = vunpack.c.l.b16 %v8932
    %v9006 = vunpack.c.l.b16 %v8933
    %v9007 = vunpack.c.l.b16 %v8934
    %v9008 = vunpack.c.l.b16 %v8935
    %v9009 = vunpack.c.l.b16 %v8936
    %v9010 = vunpack.c.l.b16 %v8937
    %v9011 = vunpack.c.l.b16 %v8938
    %v9012 = vunpack.c.l.b16 %v8939
    %v9013 = vpack.c.b16 %v8982, %v8981
    %v9014 = vpack.c.b16 %v8984, %v8983
    %v9015 = vpack.c.b16 %v8986, %v8985
    %v9016 = vpack.c.b16 %v8988, %v8987
    %v9017 = vpack.c.b16 %v8990, %v8989
    %v9018 = vpack.c.b16 %v8992, %v8991
    %v9019 = vpack.c.b16 %v8994, %v8993
    %v9020 = vpack.c.b16 %v8996, %v8995
    %v9021 = vpack.c.b16 %v8998, %v8997
    %v9022 = vpack.c.b16 %v9000, %v8999
    %v9023 = vpack.c.b16 %v9002, %v9001
    %v9024 = vpack.c.b16 %v9004, %v9003
    %v9025 = vpack.c.b16 %v9006, %v9005
    %v9026 = vpack.c.b16 %v9008, %v9007
    %v9027 = vpack.c.b16 %v9010, %v9009
    %v9028 = vpack.c.b16 %v9012, %v9011
    %9045 = vmatprep.subr.bf16.mxu0 0
    %9046 = vmatpush1.bf16.msra.mxu0 %v9013
    %9047 = vmatprep.subr.bf16.mxu0 0
    %9048 = vmatpush1.bf16.msra.mxu0 %v9014
    %9049 = vmatprep.subr.bf16.mxu0 0
    %9050 = vmatpush1.bf16.msra.mxu0 %v9015
    %9051 = vmatprep.subr.bf16.mxu0 0
    %9052 = vmatpush1.bf16.msra.mxu0 %v9016
    %9053 = vmatprep.subr.bf16.mxu0 0
    %9054 = vmatpush1.bf16.msra.mxu0 %v9017
    %9055 = vmatprep.subr.bf16.mxu0 0
    %9056 = vmatpush1.bf16.msra.mxu0 %v9018
    %9057 = vmatprep.subr.bf16.mxu0 0
    %9058 = vmatpush1.bf16.msra.mxu0 %v9019
    %9059 = vmatprep.subr.bf16.mxu0 0
    %9060 = vmatpush1.bf16.msra.mxu0 %v9020
    %9061 = vmatprep.subr.bf16.mxu0 0
    %9062 = vmatpush1.bf16.msra.mxu0 %v9021
    %9063 = vmatprep.subr.bf16.mxu0 0
    %9064 = vmatpush1.bf16.msra.mxu0 %v9022
    %9065 = vmatprep.subr.bf16.mxu0 0
    %9066 = vmatpush1.bf16.msra.mxu0 %v9023
    %9067 = vmatprep.subr.bf16.mxu0 0
    %9068 = vmatpush1.bf16.msra.mxu0 %v9024
    %9069 = vmatprep.subr.bf16.mxu0 0
    %9070 = vmatpush1.bf16.msra.mxu0 %v9025
    %9071 = vmatprep.subr.bf16.mxu0 0
    %9072 = vmatpush1.bf16.msra.mxu0 %v9026
    %9073 = vmatprep.subr.bf16.mxu0 0
    %9074 = vmatpush1.bf16.msra.mxu0 %v9027
    %9075 = vmatprep.subr.bf16.mxu0 0
    %9076 = vmatpush1.bf16.msra.mxu0 %v9028
    %9077 = vmatprep.mubr.bf16.mxu0 %v8946
    %9078 = vmatmul.mubr.bf16.gmra.mrb[0].mxu0 %v8945
    %v9079 = vpop.f32.mrb[0].mxu0
    %v9080 = vadd.f32 0.0, %v9079
    %v9081 = vpop.f32.mrb[0].mxu0
    %v9082 = vpop.f32.mrb[0].mxu0
    %v9083 = vpop.f32.mrb[0].mxu0
    %9084 = vdwg.mxu0
    %v9085 = vadd.f32 %v8902, %v9080
    %v9086 = vld [vmem:[%s4] sm:$0x1]
    %v9088 = vlaneseq
    %v9089 = vshrl.u32 %v9088, 7
    %v9090 = vsub.s32 0, %v9089
    %v9091 = vrot.slane %v9086, %v9090
    %v9093 = vadd.f32 %v9085, %v9091
    %v9094 = vmax.f32 %v9093, 0.0
    %v9095 = vpack.c.bf16 %v9094, %v9094
    %v9097 = vunpack.c.l.b16 %v9095
    %v9098 = vpack.c.b16 %v9097, %v9097
    %v9099 = vrot.slane %v9098, 7
    %9101 = vst [vmem:[#allocation3 + $0x4] sm:$0x6] %v9099
    %v9102 = vld [vmem:[#allocation3 + $0x4] sm:$0x3]
    %v9103 = vld [vmem:[#allocation8] sm:$0xf]
    %v9104 = vld [vmem:[#allocation8 + $0x4] sm:$0xf]
    %v9105 = vld [vmem:[#allocation8 + $0x8] sm:$0xf]
    %v9106 = vld [vmem:[#allocation8 + $0xc] sm:$0xf]
    %v9107 = vld [vmem:[#allocation8 + $0x10] sm:$0xf]
    %v9108 = vld [vmem:[#allocation8 + $0x14] sm:$0xf]
    %v9109 = vld [vmem:[#allocation8 + $0x18] sm:$0xf]
    %v9110 = vld [vmem:[#allocation8 + $0x1c] sm:$0xf]
    %v9111 = vld [vmem:[#allocation8 + $0x20] sm:$0xf]
    %v9112 = vld [vmem:[#allocation8 + $0x24] sm:$0xf]
    %v9113 = vld [vmem:[#allocation8 + $0x28] sm:$0xf]
    %v9114 = vld [vmem:[#allocation8 + $0x2c] sm:$0xf]
    %v9115 = vld [vmem:[#allocation8 + $0x30] sm:$0xf]
    %v9116 = vld [vmem:[#allocation8 + $0x34] sm:$0xf]
    %v9117 = vld [vmem:[#allocation8 + $0x38] sm:$0xf]
    %v9118 = vld [vmem:[#allocation8 + $0x3c] sm:$0xf]
    %v9119 = vld [vmem:[#allocation3] sm:$0x77]
    %v9120 = vld [vmem:[#allocation8 + $0x40] sm:$0xf]
    %v9121 = vld [vmem:[#allocation8 + $0x44] sm:$0xf]
    %v9122 = vld [vmem:[#allocation8 + $0x48] sm:$0xf]
    %v9123 = vld [vmem:[#allocation8 + $0x4c] sm:$0xf]
    %v9124 = vld [vmem:[#allocation8 + $0x50] sm:$0xf]
    %v9125 = vld [vmem:[#allocation8 + $0x54] sm:$0xf]
    %v9126 = vld [vmem:[#allocation8 + $0x58] sm:$0xf]
    %v9127 = vld [vmem:[#allocation8 + $0x5c] sm:$0xf]
    %v9128 = vld [vmem:[#allocation8 + $0x60] sm:$0xf]
    %v9129 = vld [vmem:[#allocation8 + $0x64] sm:$0xf]
    %v9130 = vld [vmem:[#allocation8 + $0x68] sm:$0xf]
    %v9131 = vld [vmem:[#allocation8 + $0x6c] sm:$0xf]
    %v9132 = vld [vmem:[#allocation8 + $0x70] sm:$0xf]
    %v9133 = vld [vmem:[#allocation8 + $0x74] sm:$0xf]
    %v9134 = vld [vmem:[#allocation8 + $0x78] sm:$0xf]
    %v9135 = vld [vmem:[#allocation8 + $0x7c] sm:$0xf]
    %v9136 = vld [vmem:[#allocation8 + $0x80] sm:$0xf]
    %v9137 = vld [vmem:[#allocation8 + $0x84] sm:$0xf]
    %v9138 = vld [vmem:[#allocation8 + $0x88] sm:$0xf]
    %v9139 = vld [vmem:[#allocation8 + $0x8c] sm:$0xf]
    %v9140 = vld [vmem:[#allocation8 + $0x90] sm:$0xf]
    %v9141 = vld [vmem:[#allocation8 + $0x94] sm:$0xf]
    %v9142 = vld [vmem:[#allocation8 + $0x98] sm:$0xf]
    %v9143 = vld [vmem:[#allocation8 + $0x9c] sm:$0xf]
    %v9144 = vld [vmem:[#allocation8 + $0xa0] sm:$0xf]
    %v9145 = vld [vmem:[#allocation8 + $0xa4] sm:$0xf]
    %v9146 = vld [vmem:[#allocation8 + $0xa8] sm:$0xf]
    %v9147 = vld [vmem:[#allocation8 + $0xac] sm:$0xf]
    %v9148 = vld [vmem:[#allocation8 + $0xb0] sm:$0xf]
    %v9149 = vld [vmem:[#allocation8 + $0xb4] sm:$0xf]
    %v9150 = vld [vmem:[#allocation8 + $0xb8] sm:$0xf]
    %v9151 = vld [vmem:[#allocation8 + $0xbc] sm:$0xf]
    %v9153 = vunpack.c.l.b16 %v9119
    %v9154 = vunpack.c.h.b16 %v9119
    %v9155 = vpack.c.b16 %v9153, %v9153
    %v9156 = vpack.c.b16 %v9154, %v9154
    %v9158 = vshrl.u32 %v9155, 16
    %v9160 = vshll.u32 %v9155, 16
    %v9162 = vrot.slane %v9160, 1
    %v9163 = vor.u32 %v9158, %v9162
    %v9165 = vshrl.u32 %v9156, 16
    %v9167 = vshll.u32 %v9156, 16
    %v9169 = vrot.slane %v9167, 1
    %v9170 = vor.u32 %v9165, %v9169
    %v9205 = vunpack.c.l.b16 %v9120
    %v9206 = vunpack.c.l.b16 %v9121
    %v9207 = vunpack.c.l.b16 %v9122
    %v9208 = vunpack.c.l.b16 %v9123
    %v9209 = vunpack.c.l.b16 %v9124
    %v9210 = vunpack.c.l.b16 %v9125
    %v9211 = vunpack.c.l.b16 %v9126
    %v9212 = vunpack.c.l.b16 %v9127
    %v9213 = vunpack.c.l.b16 %v9128
    %v9214 = vunpack.c.l.b16 %v9129
    %v9215 = vunpack.c.l.b16 %v9130
    %v9216 = vunpack.c.l.b16 %v9131
    %v9217 = vunpack.c.l.b16 %v9132
    %v9218 = vunpack.c.l.b16 %v9133
    %v9219 = vunpack.c.l.b16 %v9134
    %v9220 = vunpack.c.l.b16 %v9135
    %v9221 = vunpack.c.l.b16 %v9136
    %v9222 = vunpack.c.l.b16 %v9137
    %v9223 = vunpack.c.l.b16 %v9138
    %v9224 = vunpack.c.l.b16 %v9139
    %v9225 = vunpack.c.l.b16 %v9140
    %v9226 = vunpack.c.l.b16 %v9141
    %v9227 = vunpack.c.l.b16 %v9142
    %v9228 = vunpack.c.l.b16 %v9143
    %v9229 = vunpack.c.l.b16 %v9144
    %v9230 = vunpack.c.l.b16 %v9145
    %v9231 = vunpack.c.l.b16 %v9146
    %v9232 = vunpack.c.l.b16 %v9147
    %v9233 = vunpack.c.l.b16 %v9148
    %v9234 = vunpack.c.l.b16 %v9149
    %v9235 = vunpack.c.l.b16 %v9150
    %v9236 = vunpack.c.l.b16 %v9151
    %v9237 = vpack.c.b16 %v9206, %v9205
    %v9238 = vpack.c.b16 %v9208, %v9207
    %v9239 = vpack.c.b16 %v9210, %v9209
    %v9240 = vpack.c.b16 %v9212, %v9211
    %v9241 = vpack.c.b16 %v9214, %v9213
    %v9242 = vpack.c.b16 %v9216, %v9215
    %v9243 = vpack.c.b16 %v9218, %v9217
    %v9244 = vpack.c.b16 %v9220, %v9219
    %v9245 = vpack.c.b16 %v9222, %v9221
    %v9246 = vpack.c.b16 %v9224, %v9223
    %v9247 = vpack.c.b16 %v9226, %v9225
    %v9248 = vpack.c.b16 %v9228, %v9227
    %v9249 = vpack.c.b16 %v9230, %v9229
    %v9250 = vpack.c.b16 %v9232, %v9231
    %v9251 = vpack.c.b16 %v9234, %v9233
    %v9252 = vpack.c.b16 %v9236, %v9235
    %9269 = vmatprep.subr.bf16.mxu0 0
    %9270 = vmatpush1.bf16.msra.mxu0 %v9237
    %9271 = vmatprep.subr.bf16.mxu0 0
    %9272 = vmatpush1.bf16.msra.mxu0 %v9238
    %9273 = vmatprep.subr.bf16.mxu0 0
    %9274 = vmatpush1.bf16.msra.mxu0 %v9239
    %9275 = vmatprep.subr.bf16.mxu0 0
    %9276 = vmatpush1.bf16.msra.mxu0 %v9240
    %9277 = vmatprep.subr.bf16.mxu0 0
    %9278 = vmatpush1.bf16.msra.mxu0 %v9241
    %9279 = vmatprep.subr.bf16.mxu0 0
    %9280 = vmatpush1.bf16.msra.mxu0 %v9242
    %9281 = vmatprep.subr.bf16.mxu0 0
    %9282 = vmatpush1.bf16.msra.mxu0 %v9243
    %9283 = vmatprep.subr.bf16.mxu0 0
    %9284 = vmatpush1.bf16.msra.mxu0 %v9244
    %9285 = vmatprep.subr.bf16.mxu0 0
    %9286 = vmatpush1.bf16.msra.mxu0 %v9245
    %9287 = vmatprep.subr.bf16.mxu0 0
    %9288 = vmatpush1.bf16.msra.mxu0 %v9246
    %9289 = vmatprep.subr.bf16.mxu0 0
    %9290 = vmatpush1.bf16.msra.mxu0 %v9247
    %9291 = vmatprep.subr.bf16.mxu0 0
    %9292 = vmatpush1.bf16.msra.mxu0 %v9248
    %9293 = vmatprep.subr.bf16.mxu0 0
    %9294 = vmatpush1.bf16.msra.mxu0 %v9249
    %9295 = vmatprep.subr.bf16.mxu0 0
    %9296 = vmatpush1.bf16.msra.mxu0 %v9250
    %9297 = vmatprep.subr.bf16.mxu0 0
    %9298 = vmatpush1.bf16.msra.mxu0 %v9251
    %9299 = vmatprep.subr.bf16.mxu0 0
    %9300 = vmatpush1.bf16.msra.mxu0 %v9252
    %9301 = vmatprep.mubr.bf16.mxu0 %v9170
    %9302 = vmatmul.mubr.bf16.gmra.mrb[0].mxu0 %v9163
    %v9303 = vpop.f32.mrb[0].mxu0
    %v9304 = vadd.f32 0.0, %v9303
    %v9305 = vpop.f32.mrb[0].mxu0
    %v9306 = vpop.f32.mrb[0].mxu0
    %v9307 = vpop.f32.mrb[0].mxu0
    %9308 = vdwg.mxu0
    %v9325 = vunpack.c.l.b16 %v9103
    %v9326 = vunpack.c.l.b16 %v9104
    %v9327 = vunpack.c.l.b16 %v9105
    %v9328 = vunpack.c.l.b16 %v9106
    %v9329 = vunpack.c.l.b16 %v9107
    %v9330 = vunpack.c.l.b16 %v9108
    %v9331 = vunpack.c.l.b16 %v9109
    %v9332 = vunpack.c.l.b16 %v9110
    %v9333 = vunpack.c.l.b16 %v9111
    %v9334 = vunpack.c.l.b16 %v9112
    %v9335 = vunpack.c.l.b16 %v9113
    %v9336 = vunpack.c.l.b16 %v9114
    %v9337 = vunpack.c.l.b16 %v9115
    %v9338 = vunpack.c.l.b16 %v9116
    %v9339 = vunpack.c.l.b16 %v9117
    %v9340 = vunpack.c.l.b16 %v9118
    %v9341 = vpack.c.b16 %v9326, %v9325
    %v9342 = vpack.c.b16 %v9328, %v9327
    %v9343 = vpack.c.b16 %v9330, %v9329
    %v9344 = vpack.c.b16 %v9332, %v9331
    %v9345 = vpack.c.b16 %v9334, %v9333
    %v9346 = vpack.c.b16 %v9336, %v9335
    %v9347 = vpack.c.b16 %v9338, %v9337
    %v9348 = vpack.c.b16 %v9340, %v9339
    %9357 = vmatprep.subr.bf16.mxu0 0
    %9358 = vmatpush1.bf16.msra.mxu0 %v9341
    %9359 = vmatprep.subr.bf16.mxu0 0
    %9360 = vmatpush1.bf16.msra.mxu0 %v9342
    %9361 = vmatprep.subr.bf16.mxu0 0
    %9362 = vmatpush1.bf16.msra.mxu0 %v9343
    %9363 = vmatprep.subr.bf16.mxu0 0
    %9364 = vmatpush1.bf16.msra.mxu0 %v9344
    %9365 = vmatprep.subr.bf16.mxu0 0
    %9366 = vmatpush1.bf16.msra.mxu0 %v9345
    %9367 = vmatprep.subr.bf16.mxu0 0
    %9368 = vmatpush1.bf16.msra.mxu0 %v9346
    %9369 = vmatprep.subr.bf16.mxu0 0
    %9370 = vmatpush1.bf16.msra.mxu0 %v9347
    %9371 = vmatprep.subr.bf16.mxu0 0
    %9372 = vmatpush1.bf16.msra.mxu0 %v9348
    %9373 = vmatprep.subr.bf16.mxu0 0
    %9374 = vmatpush1.bf16.msra.mxu0 0
    %9375 = vmatprep.subr.bf16.mxu0 0
    %9376 = vmatpush1.bf16.msra.mxu0 0
    %9377 = vmatprep.subr.bf16.mxu0 0
    %9378 = vmatpush1.bf16.msra.mxu0 0
    %9379 = vmatprep.subr.bf16.mxu0 0
    %9380 = vmatpush1.bf16.msra.mxu0 0
    %9381 = vmatprep.subr.bf16.mxu0 0
    %9382 = vmatpush1.bf16.msra.mxu0 0
    %9383 = vmatprep.subr.bf16.mxu0 0
    %9384 = vmatpush1.bf16.msra.mxu0 0
    %9385 = vmatprep.subr.bf16.mxu0 0
    %9386 = vmatpush1.bf16.msra.mxu0 0
    %9387 = vmatprep.subr.bf16.mxu0 0
    %9388 = vmatpush1.bf16.msra.mxu0 0
    %9389 = vmatprep.mubr.bf16.mxu0 0
    %9390 = vmatmul.mubr.bf16.gmra.mrb[0].mxu0 %v9102
    %v9391 = vpop.f32.mrb[0].mxu0
    %v9392 = vadd.f32 %v9304, %v9391
    %v9393 = vpop.f32.mrb[0].mxu0
    %v9394 = vpop.f32.mrb[0].mxu0
    %v9395 = vpop.f32.mrb[0].mxu0
    %9396 = vdwg.mxu0
    %v9397 = vld [vmem:[#allocation3] sm:$0x66]
    %v9398 = vld [vmem:[#allocation8 + $0xc0] sm:$0xf]
    %v9399 = vld [vmem:[#allocation8 + $0xc4] sm:$0xf]
    %v9400 = vld [vmem:[#allocation8 + $0xc8] sm:$0xf]
    %v9401 = vld [vmem:[#allocation8 + $0xcc] sm:$0xf]
    %v9402 = vld [vmem:[#allocation8 + $0xd0] sm:$0xf]
    %v9403 = vld [vmem:[#allocation8 + $0xd4] sm:$0xf]
    %v9404 = vld [vmem:[#allocation8 + $0xd8] sm:$0xf]
    %v9405 = vld [vmem:[#allocation8 + $0xdc] sm:$0xf]
    %v9406 = vld [vmem:[#allocation8 + $0xe0] sm:$0xf]
    %v9407 = vld [vmem:[#allocation8 + $0xe4] sm:$0xf]
    %v9408 = vld [vmem:[#allocation8 + $0xe8] sm:$0xf]
    %v9409 = vld [vmem:[#allocation8 + $0xec] sm:$0xf]
    %v9410 = vld [vmem:[#allocation8 + $0xf0] sm:$0xf]
    %v9411 = vld [vmem:[#allocation8 + $0xf4] sm:$0xf]
    %v9412 = vld [vmem:[#allocation8 + $0xf8] sm:$0xf]
    %v9413 = vld [vmem:[#allocation8 + $0xfc] sm:$0xf]
    %v9414 = vld [vmem:[#allocation8 + $0x100] sm:$0xf]
    %v9415 = vld [vmem:[#allocation8 + $0x104] sm:$0xf]
    %v9416 = vld [vmem:[#allocation8 + $0x108] sm:$0xf]
    %v9417 = vld [vmem:[#allocation8 + $0x10c] sm:$0xf]
    %v9418 = vld [vmem:[#allocation8 + $0x110] sm:$0xf]
    %v9419 = vld [vmem:[#allocation8 + $0x114] sm:$0xf]
    %v9420 = vld [vmem:[#allocation8 + $0x118] sm:$0xf]
    %v9421 = vld [vmem:[#allocation8 + $0x11c] sm:$0xf]
    %v9422 = vld [vmem:[#allocation8 + $0x120] sm:$0xf]
    %v9423 = vld [vmem:[#allocation8 + $0x124] sm:$0xf]
    %v9424 = vld [vmem:[#allocation8 + $0x128] sm:$0xf]
    %v9425 = vld [vmem:[#allocation8 + $0x12c] sm:$0xf]
    %v9426 = vld [vmem:[#allocation8 + $0x130] sm:$0xf]
    %v9427 = vld [vmem:[#allocation8 + $0x134] sm:$0xf]
    %v9428 = vld [vmem:[#allocation8 + $0x138] sm:$0xf]
    %v9429 = vld [vmem:[#allocation8 + $0x13c] sm:$0xf]
    %v9431 = vunpack.c.l.b16 %v9397
    %v9432 = vunpack.c.h.b16 %v9397
    %v9433 = vpack.c.b16 %v9431, %v9431
    %v9434 = vpack.c.b16 %v9432, %v9432
    %v9435 = vrot.slane %v9433, 1
    %v9436 = vrot.slane %v9434, 1
    %v9471 = vunpack.c.l.b16 %v9398
    %v9472 = vunpack.c.l.b16 %v9399
    %v9473 = vunpack.c.l.b16 %v9400
    %v9474 = vunpack.c.l.b16 %v9401
    %v9475 = vunpack.c.l.b16 %v9402
    %v9476 = vunpack.c.l.b16 %v9403
    %v9477 = vunpack.c.l.b16 %v9404
    %v9478 = vunpack.c.l.b16 %v9405
    %v9479 = vunpack.c.l.b16 %v9406
    %v9480 = vunpack.c.l.b16 %v9407
    %v9481 = vunpack.c.l.b16 %v9408
    %v9482 = vunpack.c.l.b16 %v9409
    %v9483 = vunpack.c.l.b16 %v9410
    %v9484 = vunpack.c.l.b16 %v9411
    %v9485 = vunpack.c.l.b16 %v9412
    %v9486 = vunpack.c.l.b16 %v9413
    %v9487 = vunpack.c.l.b16 %v9414
    %v9488 = vunpack.c.l.b16 %v9415
    %v9489 = vunpack.c.l.b16 %v9416
    %v9490 = vunpack.c.l.b16 %v9417
    %v9491 = vunpack.c.l.b16 %v9418
    %v9492 = vunpack.c.l.b16 %v9419
    %v9493 = vunpack.c.l.b16 %v9420
    %v9494 = vunpack.c.l.b16 %v9421
    %v9495 = vunpack.c.l.b16 %v9422
    %v9496 = vunpack.c.l.b16 %v9423
    %v9497 = vunpack.c.l.b16 %v9424
    %v9498 = vunpack.c.l.b16 %v9425
    %v9499 = vunpack.c.l.b16 %v9426
    %v9500 = vunpack.c.l.b16 %v9427
    %v9501 = vunpack.c.l.b16 %v9428
    %v9502 = vunpack.c.l.b16 %v9429
    %v9503 = vpack.c.b16 %v9472, %v9471
    %v9504 = vpack.c.b16 %v9474, %v9473
    %v9505 = vpack.c.b16 %v9476, %v9475
    %v9506 = vpack.c.b16 %v9478, %v9477
    %v9507 = vpack.c.b16 %v9480, %v9479
    %v9508 = vpack.c.b16 %v9482, %v9481
    %v9509 = vpack.c.b16 %v9484, %v9483
    %v9510 = vpack.c.b16 %v9486, %v9485
    %v9511 = vpack.c.b16 %v9488, %v9487
    %v9512 = vpack.c.b16 %v9490, %v9489
    %v9513 = vpack.c.b16 %v9492, %v9491
    %v9514 = vpack.c.b16 %v9494, %v9493
    %v9515 = vpack.c.b16 %v9496, %v9495
    %v9516 = vpack.c.b16 %v9498, %v9497
    %v9517 = vpack.c.b16 %v9500, %v9499
    %v9518 = vpack.c.b16 %v9502, %v9501
    %9535 = vmatprep.subr.bf16.mxu0 0
    %9536 = vmatpush1.bf16.msra.mxu0 %v9503
    %9537 = vmatprep.subr.bf16.mxu0 0
    %9538 = vmatpush1.bf16.msra.mxu0 %v9504
    %9539 = vmatprep.subr.bf16.mxu0 0
    %9540 = vmatpush1.bf16.msra.mxu0 %v9505
    %9541 = vmatprep.subr.bf16.mxu0 0
    %9542 = vmatpush1.bf16.msra.mxu0 %v9506
    %9543 = vmatprep.subr.bf16.mxu0 0
    %9544 = vmatpush1.bf16.msra.mxu0 %v9507
    %9545 = vmatprep.subr.bf16.mxu0 0
    %9546 = vmatpush1.bf16.msra.mxu0 %v9508
    %9547 = vmatprep.subr.bf16.mxu0 0
    %9548 = vmatpush1.bf16.msra.mxu0 %v9509
    %9549 = vmatprep.subr.bf16.mxu0 0
    %9550 = vmatpush1.bf16.msra.mxu0 %v9510
    %9551 = vmatprep.subr.bf16.mxu0 0
    %9552 = vmatpush1.bf16.msra.mxu0 %v9511
    %9553 = vmatprep.subr.bf16.mxu0 0
    %9554 = vmatpush1.bf16.msra.mxu0 %v9512
    %9555 = vmatprep.subr.bf16.mxu0 0
    %9556 = vmatpush1.bf16.msra.mxu0 %v9513
    %9557 = vmatprep.subr.bf16.mxu0 0
    %9558 = vmatpush1.bf16.msra.mxu0 %v9514
    %9559 = vmatprep.subr.bf16.mxu0 0
    %9560 = vmatpush1.bf16.msra.mxu0 %v9515
    %9561 = vmatprep.subr.bf16.mxu0 0
    %9562 = vmatpush1.bf16.msra.mxu0 %v9516
    %9563 = vmatprep.subr.bf16.mxu0 0
    %9564 = vmatpush1.bf16.msra.mxu0 %v9517
    %9565 = vmatprep.subr.bf16.mxu0 0
    %9566 = vmatpush1.bf16.msra.mxu0 %v9518
    %9567 = vmatprep.mubr.bf16.mxu0 %v9436
    %9568 = vmatmul.mubr.bf16.gmra.mrb[0].mxu0 %v9435
    %v9569 = vpop.f32.mrb[0].mxu0
    %v9570 = vadd.f32 0.0, %v9569
    %v9571 = vpop.f32.mrb[0].mxu0
    %v9572 = vpop.f32.mrb[0].mxu0
    %v9573 = vpop.f32.mrb[0].mxu0
    %9574 = vdwg.mxu0
    %v9575 = vadd.f32 %v9392, %v9570
    %v9576 = vld [vmem:[#allocation3] sm:$0xee]
    %v9577 = vld [vmem:[#allocation8 + $0x140] sm:$0xf]
    %v9578 = vld [vmem:[#allocation8 + $0x144] sm:$0xf]
    %v9579 = vld [vmem:[#allocation8 + $0x148] sm:$0xf]
    %v9580 = vld [vmem:[#allocation8 + $0x14c] sm:$0xf]
    %v9581 = vld [vmem:[#allocation8 + $0x150] sm:$0xf]
    %v9582 = vld [vmem:[#allocation8 + $0x154] sm:$0xf]
    %v9583 = vld [vmem:[#allocation8 + $0x158] sm:$0xf]
    %v9584 = vld [vmem:[#allocation8 + $0x15c] sm:$0xf]
    %v9585 = vld [vmem:[#allocation8 + $0x160] sm:$0xf]
    %v9586 = vld [vmem:[#allocation8 + $0x164] sm:$0xf]
    %v9587 = vld [vmem:[#allocation8 + $0x168] sm:$0xf]
    %v9588 = vld [vmem:[#allocation8 + $0x16c] sm:$0xf]
    %v9589 = vld [vmem:[#allocation8 + $0x170] sm:$0xf]
    %v9590 = vld [vmem:[#allocation8 + $0x174] sm:$0xf]
    %v9591 = vld [vmem:[#allocation8 + $0x178] sm:$0xf]
    %v9592 = vld [vmem:[#allocation8 + $0x17c] sm:$0xf]
    %v9593 = vld [vmem:[#allocation8 + $0x180] sm:$0xf]
    %v9594 = vld [vmem:[#allocation8 + $0x184] sm:$0xf]
    %v9595 = vld [vmem:[#allocation8 + $0x188] sm:$0xf]
    %v9596 = vld [vmem:[#allocation8 + $0x18c] sm:$0xf]
    %v9597 = vld [vmem:[#allocation8 + $0x190] sm:$0xf]
    %v9598 = vld [vmem:[#allocation8 + $0x194] sm:$0xf]
    %v9599 = vld [vmem:[#allocation8 + $0x198] sm:$0xf]
    %v9600 = vld [vmem:[#allocation8 + $0x19c] sm:$0xf]
    %v9601 = vld [vmem:[#allocation8 + $0x1a0] sm:$0xf]
    %v9602 = vld [vmem:[#allocation8 + $0x1a4] sm:$0xf]
    %v9603 = vld [vmem:[#allocation8 + $0x1a8] sm:$0xf]
    %v9604 = vld [vmem:[#allocation8 + $0x1ac] sm:$0xf]
    %v9605 = vld [vmem:[#allocation8 + $0x1b0] sm:$0xf]
    %v9606 = vld [vmem:[#allocation8 + $0x1b4] sm:$0xf]
    %v9607 = vld [vmem:[#allocation8 + $0x1b8] sm:$0xf]
    %v9608 = vld [vmem:[#allocation8 + $0x1bc] sm:$0xf]
    %v9610 = vunpack.c.l.b16 %v9576
    %v9611 = vunpack.c.h.b16 %v9576
    %v9612 = vpack.c.b16 %v9610, %v9610
    %v9613 = vpack.c.b16 %v9611, %v9611
    %v9615 = vshrl.u32 %v9612, 16
    %v9617 = vrot.slane %v9615, 1
    %v9618 = vshll.u32 %v9612, 16
    %v9620 = vrot.slane %v9618, 2
    %v9621 = vor.u32 %v9617, %v9620
    %v9623 = vshrl.u32 %v9613, 16
    %v9625 = vrot.slane %v9623, 1
    %v9626 = vshll.u32 %v9613, 16
    %v9628 = vrot.slane %v9626, 2
    %v9629 = vor.u32 %v9625, %v9628
    %v9664 = vunpack.c.l.b16 %v9577
    %v9665 = vunpack.c.l.b16 %v9578
    %v9666 = vunpack.c.l.b16 %v9579
    %v9667 = vunpack.c.l.b16 %v9580
    %v9668 = vunpack.c.l.b16 %v9581
    %v9669 = vunpack.c.l.b16 %v9582
    %v9670 = vunpack.c.l.b16 %v9583
    %v9671 = vunpack.c.l.b16 %v9584
    %v9672 = vunpack.c.l.b16 %v9585
    %v9673 = vunpack.c.l.b16 %v9586
    %v9674 = vunpack.c.l.b16 %v9587
    %v9675 = vunpack.c.l.b16 %v9588
    %v9676 = vunpack.c.l.b16 %v9589
    %v9677 = vunpack.c.l.b16 %v9590
    %v9678 = vunpack.c.l.b16 %v9591
    %v9679 = vunpack.c.l.b16 %v9592
    %v9680 = vunpack.c.l.b16 %v9593
    %v9681 = vunpack.c.l.b16 %v9594
    %v9682 = vunpack.c.l.b16 %v9595
    %v9683 = vunpack.c.l.b16 %v9596
    %v9684 = vunpack.c.l.b16 %v9597
    %v9685 = vunpack.c.l.b16 %v9598
    %v9686 = vunpack.c.l.b16 %v9599
    %v9687 = vunpack.c.l.b16 %v9600
    %v9688 = vunpack.c.l.b16 %v9601
    %v9689 = vunpack.c.l.b16 %v9602
    %v9690 = vunpack.c.l.b16 %v9603
    %v9691 = vunpack.c.l.b16 %v9604
    %v9692 = vunpack.c.l.b16 %v9605
    %v9693 = vunpack.c.l.b16 %v9606
    %v9694 = vunpack.c.l.b16 %v9607
    %v9695 = vunpack.c.l.b16 %v9608
    %v9696 = vpack.c.b16 %v9665, %v9664
    %v9697 = vpack.c.b16 %v9667, %v9666
    %v9698 = vpack.c.b16 %v9669, %v9668
    %v9699 = vpack.c.b16 %v9671, %v9670
    %v9700 = vpack.c.b16 %v9673, %v9672
    %v9701 = vpack.c.b16 %v9675, %v9674
    %v9702 = vpack.c.b16 %v9677, %v9676
    %v9703 = vpack.c.b16 %v9679, %v9678
    %v9704 = vpack.c.b16 %v9681, %v9680
    %v9705 = vpack.c.b16 %v9683, %v9682
    %v9706 = vpack.c.b16 %v9685, %v9684
    %v9707 = vpack.c.b16 %v9687, %v9686
    %v9708 = vpack.c.b16 %v9689, %v9688
    %v9709 = vpack.c.b16 %v9691, %v9690
    %v9710 = vpack.c.b16 %v9693, %v9692
    %v9711 = vpack.c.b16 %v9695, %v9694
    %9728 = vmatprep.subr.bf16.mxu0 0
    %9729 = vmatpush1.bf16.msra.mxu0 %v9696
    %9730 = vmatprep.subr.bf16.mxu0 0
    %9731 = vmatpush1.bf16.msra.mxu0 %v9697
    %9732 = vmatprep.subr.bf16.mxu0 0
    %9733 = vmatpush1.bf16.msra.mxu0 %v9698
    %9734 = vmatprep.subr.bf16.mxu0 0
    %9735 = vmatpush1.bf16.msra.mxu0 %v9699
    %9736 = vmatprep.subr.bf16.mxu0 0
    %9737 = vmatpush1.bf16.msra.mxu0 %v9700
    %9738 = vmatprep.subr.bf16.mxu0 0
    %9739 = vmatpush1.bf16.msra.mxu0 %v9701
    %9740 = vmatprep.subr.bf16.mxu0 0
    %9741 = vmatpush1.bf16.msra.mxu0 %v9702
    %9742 = vmatprep.subr.bf16.mxu0 0
    %9743 = vmatpush1.bf16.msra.mxu0 %v9703
    %9744 = vmatprep.subr.bf16.mxu0 0
    %9745 = vmatpush1.bf16.msra.mxu0 %v9704
    %9746 = vmatprep.subr.bf16.mxu0 0
    %9747 = vmatpush1.bf16.msra.mxu0 %v9705
    %9748 = vmatprep.subr.bf16.mxu0 0
    %9749 = vmatpush1.bf16.msra.mxu0 %v9706
    %9750 = vmatprep.subr.bf16.mxu0 0
    %9751 = vmatpush1.bf16.msra.mxu0 %v9707
    %9752 = vmatprep.subr.bf16.mxu0 0
    %9753 = vmatpush1.bf16.msra.mxu0 %v9708
    %9754 = vmatprep.subr.bf16.mxu0 0
    %9755 = vmatpush1.bf16.msra.mxu0 %v9709
    %9756 = vmatprep.subr.bf16.mxu0 0
    %9757 = vmatpush1.bf16.msra.mxu0 %v9710
    %9758 = vmatprep.subr.bf16.mxu0 0
    %9759 = vmatpush1.bf16.msra.mxu0 %v9711
    %9760 = vmatprep.mubr.bf16.mxu0 %v9629
    %9761 = vmatmul.mubr.bf16.gmra.mrb[0].mxu0 %v9621
    %v9762 = vpop.f32.mrb[0].mxu0
    %v9763 = vadd.f32 0.0, %v9762
    %v9764 = vpop.f32.mrb[0].mxu0
    %v9765 = vpop.f32.mrb[0].mxu0
    %v9766 = vpop.f32.mrb[0].mxu0
    %9767 = vdwg.mxu0
    %v9768 = vadd.f32 %v9575, %v9763
    %v9769 = vld [vmem:[%s6] sm:$0x1]
    %v9771 = vlaneseq
    %v9772 = vshrl.u32 %v9771, 7
    %v9773 = vsub.s32 0, %v9772
    %v9774 = vrot.slane %v9769, %v9773
    %v9776 = vadd.f32 %v9768, %v9774
    %v9777 = vmax.f32 %v9776, 0.0
    %v9778 = vpack.c.bf16 %v9777, %v9777
    %s9779 = scalar_lea.vmem %s7, 8
    %9780 = vst [vmem:[%s9779] sm:$0x3] %v9778
    %9781 = vst [vmem:[%s9779] sm:$0xc] 0
    %9782 = vst [vmem:[%s9779 + $0x4] sm:$0xf] 0
    // Predicated region
    $region42: #{encoder_forward.2} parent=1 // pred_check
      _
    $region43: #{encoder_forward.2} parent=1 // pred_check_branch
      %9784 = sbr.rel (0) target = $region45
    $region44: #{encoder_forward.2} parent=1 // pred_region
      _
    $region45: #{encoder_forward.2} parent=1 // pred_fallthru
      _
    // Predicated region
    $region46: #{encoder_forward.2} parent=1 // pred_check
      _
    $region47: #{encoder_forward.2} parent=1 // pred_check_branch
      %9786 = sbr.rel (0) target = $region49
    $region48: #{encoder_forward.2} parent=1 // pred_region
      _
    $region49: #{encoder_forward.2} parent=1 // pred_fallthru
      _
    %9787 = vsyncpa [#allocation5], 1
    %9788 = vsyncpa [#allocation7], 1

</llo_original>
